<compile_context>
chip_gen: v5e
topology: v5e:2x2
jax: 0.10.0
libtpu: 0.0.40
codegen_flags: <defaults>
</compile_context>

<pallas_src>
import jax
import jax.numpy as jnp
from jax import lax
from jax.experimental import pallas as pl
from jax.experimental.pallas import tpu as pltpu


_H, _W = 28, 28            # input spatial size (Linear(9216,128) implies 28x28)
_HO1 = 26                  # conv1 valid output height (width kept at 28, over-computed)
_HO2 = 24                  # conv2 valid output height
_ROWS1 = _HO1 * _W         # 728 conv1 output rows (row = r*28 + c, c in [0,28))
_ROWS2 = _HO2 * _W         # 672 conv2 output rows
_C1, _C2 = 32, 64
_PO = 12                   # pooled spatial size (12x12)


# ----------------------- fused conv1 + conv2 + pool kernel -------------------

def _conv_pool_kernel(p1_ref, w1_ref, b1_ref, w2_ref, b2_ref, out_ref,
                      y1_ref, y2_ref):
    # p1_ref : (1, 728, 9)   conv1 im2col patches for one sample
    # w1_ref : (9, 32)       b1_ref: (1, 32)
    # w2_ref : (288, 64)     b2_ref: (1, 64)
    # out_ref: (1, 144, 64)  pooled activation, row = i*12+j, lane = channel
    # y1_ref : VMEM (736, 32) scratch (728 rows + 8 zero pad rows)
    # y2_ref : VMEM (672, 64) scratch

    # ---- conv1: single K=9 matmul + bias + ReLU (stays in VMEM) ----
    y1 = jnp.dot(p1_ref[0], w1_ref[...], preferred_element_type=jnp.float32)
    y1 = jnp.maximum(y1 + b1_ref[...], 0.0)
    y1_ref[pl.ds(0, _ROWS1), :] = y1
    y1_ref[pl.ds(_ROWS1, 8), :] = jnp.zeros((8, _C1), jnp.float32)

    # ---- conv2: one wide-K im2col matmul (K = 9*32 = 288) + bias + ReLU ----
    taps = [y1_ref[pl.ds(kh * _W + kw, _ROWS2), :]
            for kh in range(3) for kw in range(3)]
    lhs2 = jnp.concatenate(taps, axis=-1)                      # (672, 288)
    y2 = jnp.dot(lhs2, w2_ref[...], preferred_element_type=jnp.float32)
    y2_ref[...] = jnp.maximum(y2 + b2_ref[...], 0.0)

    # ---- fused 2x2 max pool over the valid 24x24 region ----
    # y2 row index = r2*28 + c2 ; pooled output row = i*12 + j
    for i in range(_PO):
        top = (2 * i) * _W
        bot = top + _W
        a00 = y2_ref[pl.ds(top, _PO, stride=2), :]
        a01 = y2_ref[pl.ds(top + 1, _PO, stride=2), :]
        a10 = y2_ref[pl.ds(bot, _PO, stride=2), :]
        a11 = y2_ref[pl.ds(bot + 1, _PO, stride=2), :]
        out_ref[0, pl.ds(i * _PO, _PO), :] = jnp.maximum(
            jnp.maximum(a00, a01), jnp.maximum(a10, a11))


def conv_pool(patches, w1_mat, b1_row, w2_mat, b2_row):
    # patches: (N, 728, 9) -> (N, 144, 64)
    n = patches.shape[0]
    return pl.pallas_call(
        _conv_pool_kernel,
        out_shape=jax.ShapeDtypeStruct((n, _PO * _PO, _C2), jnp.float32),
        grid=(n,),
        in_specs=[
            pl.BlockSpec((1, _ROWS1, 9), lambda i: (i, 0, 0)),
            pl.BlockSpec((9, _C1), lambda i: (0, 0)),
            pl.BlockSpec((1, _C1), lambda i: (0, 0)),
            pl.BlockSpec((9 * _C1, _C2), lambda i: (0, 0)),
            pl.BlockSpec((1, _C2), lambda i: (0, 0)),
        ],
        out_specs=pl.BlockSpec((1, _PO * _PO, _C2), lambda i: (i, 0, 0)),
        scratch_shapes=[pltpu.VMEM((_ROWS1 + 8, _C1), jnp.float32),
                        pltpu.VMEM((_ROWS2, _C2), jnp.float32)],
        compiler_params=pltpu.CompilerParams(dimension_semantics=("parallel",)),
    )(patches, w1_mat, b1_row, w2_mat, b2_row)


# ----------------------------------- MLP -------------------------------------

def _mlp_kernel(x_ref, w3_ref, b3_ref, w4_ref, b4_ref, o_ref):
    # x: (TB, 9216) f32; w3: (9216, 128) bf16; w4: (128, 10) f32
    # bf16 feed to the MXU, f32 accumulation, f32 epilogue (portable to v5e).
    h = jnp.dot(x_ref[...].astype(jnp.bfloat16), w3_ref[...],
                preferred_element_type=jnp.float32)
    h = jnp.maximum(h + b3_ref[...], 0.0)
    o = jnp.dot(h, w4_ref[...], preferred_element_type=jnp.float32) + b4_ref[...]
    o_ref[...] = o.astype(o_ref.dtype)


def mlp(flat, w3_mat, b3_row, w4_mat, b4_row):
    n, d = flat.shape
    h = w3_mat.shape[1]
    out = w4_mat.shape[1]
    tb = n if n <= 128 else 128     # batch tile; weights stay VMEM-resident
    return pl.pallas_call(
        _mlp_kernel,
        out_shape=jax.ShapeDtypeStruct((n, out), jnp.float32),
        grid=(pl.cdiv(n, tb),),
        in_specs=[
            pl.BlockSpec((tb, d), lambda i: (i, 0)),
            pl.BlockSpec((d, h), lambda i: (0, 0)),
            pl.BlockSpec((1, h), lambda i: (0, 0)),
            pl.BlockSpec((h, out), lambda i: (0, 0)),
            pl.BlockSpec((1, out), lambda i: (0, 0)),
        ],
        out_specs=pl.BlockSpec((tb, out), lambda i: (i, 0)),
        compiler_params=pltpu.CompilerParams(dimension_semantics=("parallel",)),
    )(flat, w3_mat, b3_row, w4_mat, b4_row)


# ------------------------------ parameter prep -------------------------------

def prepare_params(params):
    """One-time static weight re-layout (done once, outside the jitted fwd)."""
    w1, b1, w2, b2, w3, b3, w4, b4 = params
    # conv weights -> tap-major matmul form: row index = (kh*3+kw)*Cin + cin
    w1_mat = jnp.transpose(w1, (2, 3, 1, 0)).reshape(9, _C1)          # (9, 32)
    w2_mat = jnp.transpose(w2, (2, 3, 1, 0)).reshape(9 * _C1, _C2)    # (288, 64)
    # fold the PyTorch NCHW-flatten permutation into w3 and pre-transpose:
    #   torch column = ch*144 + pos ; kernel activation column = pos*64 + ch
    w3_mat = jnp.transpose(w3.reshape(128, _C2, _PO * _PO), (2, 1, 0))
    w3_mat = w3_mat.reshape(_PO * _PO * _C2, 128).astype(jnp.bfloat16)
    w4_mat = jnp.transpose(w4)                                        # (128, 10)
    return (w1_mat, b1.reshape(1, -1), w2_mat, b2.reshape(1, -1),
            w3_mat, b3.reshape(1, -1), w4_mat, b4.reshape(1, -1))


# ------------------------------------ forward --------------------------------

def forward(x_nchw, prepped):
    """x_nchw: (N, 1, 28, 28) f32 (PyTorch layout at the module boundary)."""
    (w1_mat, b1_row, w2_mat, b2_row, w3_mat, b3_row, w4_mat, b4_row) = prepped
    n = x_nchw.shape[0]

    # conv1 im2col on the (tiny) input: (N, 784) -> zero-pad -> 9 shifted
    # slices stacked on the last axis.  Output rows span the full width 28
    # (right-edge over-compute); the garbage columns only ever feed conv2
    # outputs that the fused pool never reads.
    xf = jnp.pad(x_nchw.reshape(n, _H * _W), ((0, 0), (0, _W)))        # (N, 812)
    taps = [xf[:, kh * _W + kw: kh * _W + kw + _ROWS1]
            for kh in range(3) for kw in range(3)]
    patches = jnp.stack(taps, axis=-1)                                 # (N, 728, 9)

    # Dropout(0.25) / Dropout(0.5): identity in inference (eval) mode.
    # TODO(synk): training-mode stochastic dropout masks not implemented.

    pooled = conv_pool(patches, w1_mat, b1_row, w2_mat, b2_row)        # (N, 144, 64)
    flat = pooled.reshape(n, _PO * _PO * _C2)   # NHWC flatten; perm folded into w3_mat
    return mlp(flat, w3_mat, b3_row, w4_mat, b4_row)


# --------------------------- pure-JAX reference -------------------------------

def reference_forward(x, params):
    w1, b1, w2, b2, w3, b3, w4, b4 = params
    dn = ('NCHW', 'OIHW', 'NCHW')
    y = lax.conv_general_dilated(x, w1, (1, 1), 'VALID', dimension_numbers=dn)
    y = jnp.maximum(y + b1[None, :, None, None], 0.0)
    y = lax.conv_general_dilated(y, w2, (1, 1), 'VALID', dimension_numbers=dn)
    y = jnp.maximum(y + b2[None, :, None, None], 0.0)
    n, c, h, w = y.shape
    y = y.reshape(n, c, h // 2, 2, w // 2, 2).max(axis=(3, 5))
    y = y.reshape(n, -1)
    y = jnp.maximum(y @ w3.T + b3, 0.0)
    return y @ w4.T + b4


# ------------------------------------- main -----------------------------------

if __name__ == "__main__":
    key = jax.random.PRNGKey(0)
    ks = jax.random.split(key, 9)
    w1 = jax.random.normal(ks[0], (32, 1, 3, 3), jnp.float32) * 0.1
    b1 = jax.random.normal(ks[1], (32,), jnp.float32) * 0.1
    w2 = jax.random.normal(ks[2], (64, 32, 3, 3), jnp.float32) * 0.05
    b2 = jax.random.normal(ks[3], (64,), jnp.float32) * 0.05
    w3 = jax.random.normal(ks[4], (128, 9216), jnp.float32) * 0.01
    b3 = jax.random.normal(ks[5], (128,), jnp.float32) * 0.01
    w4 = jax.random.normal(ks[6], (10, 128), jnp.float32) * 0.05
    b4 = jax.random.normal(ks[7], (10,), jnp.float32) * 0.05
    params = (w1, b1, w2, b2, w3, b3, w4, b4)

    # MNIST-shaped input: Linear(9216,128) implies 1x28x28 inputs.
    x = jax.random.normal(ks[8], (2, 1, 28, 28), jnp.float32)

    prepped = prepare_params(params)            # static weight re-layout, once
    logits = jax.jit(forward)(x, prepped)
    logits = jax.block_until_ready(logits)

    ref = reference_forward(x, params)
    assert logits.shape == (2, 10)
    # Tolerance accounts for the bf16 MXU feed of w3 (f32 accumulation).
    err = float(jnp.max(jnp.abs(logits - ref)))
    assert bool(jnp.allclose(logits, ref, rtol=1e-2, atol=1e-2)), err
    print("KERNEL_OK")
</pallas_src>

<mosaic_0001>
module attributes {stable_mosaic.version = 11 : i64} {
  func.func @_conv_pool_kernel(%arg0: i32, %arg1: memref<1x728x9xf32, #tpu.memory_space<vmem>>, %arg2: memref<9x32xf32, #tpu.memory_space<vmem>>, %arg3: memref<1x32xf32, #tpu.memory_space<vmem>>, %arg4: memref<288x64xf32, #tpu.memory_space<vmem>>, %arg5: memref<1x64xf32, #tpu.memory_space<vmem>>, %arg6: memref<1x144x64xf32, #tpu.memory_space<vmem>>, %arg7: memref<736x32xf32, #tpu.memory_space<vmem>>, %arg8: memref<672x64xf32, #tpu.memory_space<vmem>>) attributes {dimension_semantics = [#tpu.dimension_semantics<parallel>], iteration_bounds = array<i64: 2>, scalar_prefetch = 0 : i64, scratch_operands = 2 : i64, tpu.core_type = #tpu.core_type<tc>, window_params = [{transform_indices = @transform_0, window_bounds = array<i64: 1, 728, 9>}, {pipeline_mode = #tpu.pipeline_mode<synchronous>, transform_indices = @transform_1, window_bounds = array<i64: 9, 32>}, {pipeline_mode = #tpu.pipeline_mode<synchronous>, transform_indices = @transform_2, window_bounds = array<i64: 1, 32>}, {pipeline_mode = #tpu.pipeline_mode<synchronous>, transform_indices = @transform_3, window_bounds = array<i64: 288, 64>}, {pipeline_mode = #tpu.pipeline_mode<synchronous>, transform_indices = @transform_4, window_bounds = array<i64: 1, 64>}, {transform_indices = @transform_5, window_bounds = array<i64: 1, 144, 64>}]} {
    %c0 = arith.constant 0 : index
    %c0_0 = arith.constant 0 : index
    %c0_1 = arith.constant 0 : index
    %0 = vector.load %arg1[%c0, %c0_0, %c0_1] : memref<1x728x9xf32, #tpu.memory_space<vmem>>, vector<1x728x9xf32>
    %1 = vector.shape_cast %0 : vector<1x728x9xf32> to vector<728x9xf32>
    %c0_2 = arith.constant 0 : index
    %c0_3 = arith.constant 0 : index
    %2 = vector.load %arg2[%c0_2, %c0_3] : memref<9x32xf32, #tpu.memory_space<vmem>>, vector<9x32xf32>
    %cst = arith.constant dense<0.000000e+00> : vector<728x32xf32>
    %3 = tpu.matmul %1, %2, %cst {dimension_numbers = #tpu.dot_dimension_numbers<[1], [0], [0], [1], [0, 0, 1, 1], [], []>} : vector<728x9xf32>, vector<9x32xf32>, vector<728x32xf32> -> vector<728x32xf32>
    %c0_4 = arith.constant 0 : index
    %c0_5 = arith.constant 0 : index
    %4 = vector.load %arg3[%c0_4, %c0_5] : memref<1x32xf32, #tpu.memory_space<vmem>>, vector<1x32xf32>
    %5 = vector.broadcast %4 : vector<1x32xf32> to vector<728x32xf32>
    %6 = arith.addf %3, %5 : vector<728x32xf32>
    %cst_6 = arith.constant 0.000000e+00 : f32
    %7 = vector.broadcast %cst_6 : f32 to vector<728x32xf32>
    %8 = arith.maximumf %6, %7 : vector<728x32xf32>
    %c0_7 = arith.constant 0 : index
    %c0_8 = arith.constant 0 : index
    %9 = vector.load %arg7[%c0_7, %c0_8] : memref<736x32xf32, #tpu.memory_space<vmem>>, vector<728x32xf32>
    tpu.vector_store %arg7[%c0_7, %c0_8], %8 {strides = array<i32>} : memref<736x32xf32, #tpu.memory_space<vmem>>, vector<728x32xf32>,
    %cst_9 = arith.constant 0.000000e+00 : f32
    %10 = vector.broadcast %cst_9 : f32 to vector<8x32xf32>
    %c728 = arith.constant 728 : index
    %c0_10 = arith.constant 0 : index
    %11 = vector.load %arg7[%c728, %c0_10] : memref<736x32xf32, #tpu.memory_space<vmem>>, vector<8x32xf32>
    tpu.vector_store %arg7[%c728, %c0_10], %10 {strides = array<i32>} : memref<736x32xf32, #tpu.memory_space<vmem>>, vector<8x32xf32>,
    %c0_11 = arith.constant 0 : index
    %c0_12 = arith.constant 0 : index
    %12 = vector.load %arg7[%c0_11, %c0_12] : memref<736x32xf32, #tpu.memory_space<vmem>>, vector<672x32xf32>
    %c1 = arith.constant 1 : index
    %c0_13 = arith.constant 0 : index
    %13 = vector.load %arg7[%c1, %c0_13] : memref<736x32xf32, #tpu.memory_space<vmem>>, vector<672x32xf32>
    %c2 = arith.constant 2 : index
    %c0_14 = arith.constant 0 : index
    %14 = vector.load %arg7[%c2, %c0_14] : memref<736x32xf32, #tpu.memory_space<vmem>>, vector<672x32xf32>
    %c28 = arith.constant 28 : index
    %c0_15 = arith.constant 0 : index
    %15 = vector.load %arg7[%c28, %c0_15] : memref<736x32xf32, #tpu.memory_space<vmem>>, vector<672x32xf32>
    %c29 = arith.constant 29 : index
    %c0_16 = arith.constant 0 : index
    %16 = vector.load %arg7[%c29, %c0_16] : memref<736x32xf32, #tpu.memory_space<vmem>>, vector<672x32xf32>
    %c30 = arith.constant 30 : index
    %c0_17 = arith.constant 0 : index
    %17 = vector.load %arg7[%c30, %c0_17] : memref<736x32xf32, #tpu.memory_space<vmem>>, vector<672x32xf32>
    %c56 = arith.constant 56 : index
    %c0_18 = arith.constant 0 : index
    %18 = vector.load %arg7[%c56, %c0_18] : memref<736x32xf32, #tpu.memory_space<vmem>>, vector<672x32xf32>
    %c57 = arith.constant 57 : index
    %c0_19 = arith.constant 0 : index
    %19 = vector.load %arg7[%c57, %c0_19] : memref<736x32xf32, #tpu.memory_space<vmem>>, vector<672x32xf32>
    %c58 = arith.constant 58 : index
    %c0_20 = arith.constant 0 : index
    %20 = vector.load %arg7[%c58, %c0_20] : memref<736x32xf32, #tpu.memory_space<vmem>>, vector<672x32xf32>
    %21 = tpu.concatenate %12, %13, %14, %15, %16, %17, %18, %19, %20 in 1 : vector<672x32xf32>, vector<672x32xf32>, vector<672x32xf32>, vector<672x32xf32>, vector<672x32xf32>, vector<672x32xf32>, vector<672x32xf32>, vector<672x32xf32>, vector<672x32xf32> -> vector<672x288xf32>
    %c0_21 = arith.constant 0 : index
    %c0_22 = arith.constant 0 : index
    %22 = vector.load %arg4[%c0_21, %c0_22] : memref<288x64xf32, #tpu.memory_space<vmem>>, vector<288x64xf32>
    %cst_23 = arith.constant dense<0.000000e+00> : vector<672x64xf32>
    %23 = tpu.matmul %21, %22, %cst_23 {dimension_numbers = #tpu.dot_dimension_numbers<[1], [0], [0], [1], [0, 0, 1, 1], [], []>} : vector<672x288xf32>, vector<288x64xf32>, vector<672x64xf32> -> vector<672x64xf32>
    %c0_24 = arith.constant 0 : index
    %c0_25 = arith.constant 0 : index
    %24 = vector.load %arg5[%c0_24, %c0_25] : memref<1x64xf32, #tpu.memory_space<vmem>>, vector<1x64xf32>
    %25 = vector.broadcast %24 : vector<1x64xf32> to vector<672x64xf32>
    %26 = arith.addf %23, %25 : vector<672x64xf32>
    %cst_26 = arith.constant 0.000000e+00 : f32
    %27 = vector.broadcast %cst_26 : f32 to vector<672x64xf32>
    %28 = arith.maximumf %26, %27 : vector<672x64xf32>
    %c0_27 = arith.constant 0 : index
    %c0_28 = arith.constant 0 : index
    %29 = vector.load %arg8[%c0_27, %c0_28] : memref<672x64xf32, #tpu.memory_space<vmem>>, vector<672x64xf32>
    tpu.vector_store %arg8[%c0_27, %c0_28], %28 {strides = array<i32>} : memref<672x64xf32, #tpu.memory_space<vmem>>, vector<672x64xf32>,
    %c0_29 = arith.constant 0 : index
    %c0_30 = arith.constant 0 : index
    %30 = tpu.strided_load %arg8[%c0_29, %c0_30] {strides = array<i32: 2, 1>} : memref<672x64xf32, #tpu.memory_space<vmem>>, vector<12x64xf32>
    %c1_31 = arith.constant 1 : index
    %c0_32 = arith.constant 0 : index
    %31 = tpu.strided_load %arg8[%c1_31, %c0_32] {strides = array<i32: 2, 1>} : memref<672x64xf32, #tpu.memory_space<vmem>>, vector<12x64xf32>
    %c28_33 = arith.constant 28 : index
    %c0_34 = arith.constant 0 : index
    %32 = tpu.strided_load %arg8[%c28_33, %c0_34] {strides = array<i32: 2, 1>} : memref<672x64xf32, #tpu.memory_space<vmem>>, vector<12x64xf32>
    %c29_35 = arith.constant 29 : index
    %c0_36 = arith.constant 0 : index
    %33 = tpu.strided_load %arg8[%c29_35, %c0_36] {strides = array<i32: 2, 1>} : memref<672x64xf32, #tpu.memory_space<vmem>>, vector<12x64xf32>
    %34 = arith.maximumf %30, %31 : vector<12x64xf32>
    %35 = arith.maximumf %32, %33 : vector<12x64xf32>
    %36 = arith.maximumf %34, %35 : vector<12x64xf32>
    %c0_37 = arith.constant 0 : index
    %c0_38 = arith.constant 0 : index
    %c0_39 = arith.constant 0 : index
    %37 = vector.load %arg6[%c0_37, %c0_38, %c0_39] : memref<1x144x64xf32, #tpu.memory_space<vmem>>, vector<1x12x64xf32>
    %38 = vector.shape_cast %37 : vector<1x12x64xf32> to vector<12x64xf32>
    %39 = vector.shape_cast %36 : vector<12x64xf32> to vector<1x12x64xf32>
    tpu.vector_store %arg6[%c0_37, %c0_38, %c0_39], %39 {strides = array<i32>} : memref<1x144x64xf32, #tpu.memory_space<vmem>>, vector<1x12x64xf32>,
    %c56_40 = arith.constant 56 : index
    %c0_41 = arith.constant 0 : index
    %40 = tpu.strided_load %arg8[%c56_40, %c0_41] {strides = array<i32: 2, 1>} : memref<672x64xf32, #tpu.memory_space<vmem>>, vector<12x64xf32>
    %c57_42 = arith.constant 57 : index
    %c0_43 = arith.constant 0 : index
    %41 = tpu.strided_load %arg8[%c57_42, %c0_43] {strides = array<i32: 2, 1>} : memref<672x64xf32, #tpu.memory_space<vmem>>, vector<12x64xf32>
    %c84 = arith.constant 84 : index
    %c0_44 = arith.constant 0 : index
    %42 = tpu.strided_load %arg8[%c84, %c0_44] {strides = array<i32: 2, 1>} : memref<672x64xf32, #tpu.memory_space<vmem>>, vector<12x64xf32>
    %c85 = arith.constant 85 : index
    %c0_45 = arith.constant 0 : index
    %43 = tpu.strided_load %arg8[%c85, %c0_45] {strides = array<i32: 2, 1>} : memref<672x64xf32, #tpu.memory_space<vmem>>, vector<12x64xf32>
    %44 = arith.maximumf %40, %41 : vector<12x64xf32>
    %45 = arith.maximumf %42, %43 : vector<12x64xf32>
    %46 = arith.maximumf %44, %45 : vector<12x64xf32>
    %c0_46 = arith.constant 0 : index
    %c12 = arith.constant 12 : index
    %c0_47 = arith.constant 0 : index
    %47 = vector.load %arg6[%c0_46, %c12, %c0_47] : memref<1x144x64xf32, #tpu.memory_space<vmem>>, vector<1x12x64xf32>
    %48 = vector.shape_cast %47 : vector<1x12x64xf32> to vector<12x64xf32>
    %49 = vector.shape_cast %46 : vector<12x64xf32> to vector<1x12x64xf32>
    tpu.vector_store %arg6[%c0_46, %c12, %c0_47], %49 {strides = array<i32>} : memref<1x144x64xf32, #tpu.memory_space<vmem>>, vector<1x12x64xf32>,
    %c112 = arith.constant 112 : index
    %c0_48 = arith.constant 0 : index
    %50 = tpu.strided_load %arg8[%c112, %c0_48] {strides = array<i32: 2, 1>} : memref<672x64xf32, #tpu.memory_space<vmem>>, vector<12x64xf32>
    %c113 = arith.constant 113 : index
    %c0_49 = arith.constant 0 : index
    %51 = tpu.strided_load %arg8[%c113, %c0_49] {strides = array<i32: 2, 1>} : memref<672x64xf32, #tpu.memory_space<vmem>>, vector<12x64xf32>
    %c140 = arith.constant 140 : index
    %c0_50 = arith.constant 0 : index
    %52 = tpu.strided_load %arg8[%c140, %c0_50] {strides = array<i32: 2, 1>} : memref<672x64xf32, #tpu.memory_space<vmem>>, vector<12x64xf32>
    %c141 = arith.constant 141 : index
    %c0_51 = arith.constant 0 : index
    %53 = tpu.strided_load %arg8[%c141, %c0_51] {strides = array<i32: 2, 1>} : memref<672x64xf32, #tpu.memory_space<vmem>>, vector<12x64xf32>
    %54 = arith.maximumf %50, %51 : vector<12x64xf32>
    %55 = arith.maximumf %52, %53 : vector<12x64xf32>
    %56 = arith.maximumf %54, %55 : vector<12x64xf32>
    %c0_52 = arith.constant 0 : index
    %c24 = arith.constant 24 : index
    %c0_53 = arith.constant 0 : index
    %57 = vector.load %arg6[%c0_52, %c24, %c0_53] : memref<1x144x64xf32, #tpu.memory_space<vmem>>, vector<1x12x64xf32>
    %58 = vector.shape_cast %57 : vector<1x12x64xf32> to vector<12x64xf32>
    %59 = vector.shape_cast %56 : vector<12x64xf32> to vector<1x12x64xf32>
    tpu.vector_store %arg6[%c0_52, %c24, %c0_53], %59 {strides = array<i32>} : memref<1x144x64xf32, #tpu.memory_space<vmem>>, vector<1x12x64xf32>,
    %c168 = arith.constant 168 : index
    %c0_54 = arith.constant 0 : index
    %60 = tpu.strided_load %arg8[%c168, %c0_54] {strides = array<i32: 2, 1>} : memref<672x64xf32, #tpu.memory_space<vmem>>, vector<12x64xf32>
    %c169 = arith.constant 169 : index
    %c0_55 = arith.constant 0 : index
    %61 = tpu.strided_load %arg8[%c169, %c0_55] {strides = array<i32: 2, 1>} : memref<672x64xf32, #tpu.memory_space<vmem>>, vector<12x64xf32>
    %c196 = arith.constant 196 : index
    %c0_56 = arith.constant 0 : index
    %62 = tpu.strided_load %arg8[%c196, %c0_56] {strides = array<i32: 2, 1>} : memref<672x64xf32, #tpu.memory_space<vmem>>, vector<12x64xf32>
    %c197 = arith.constant 197 : index
    %c0_57 = arith.constant 0 : index
    %63 = tpu.strided_load %arg8[%c197, %c0_57] {strides = array<i32: 2, 1>} : memref<672x64xf32, #tpu.memory_space<vmem>>, vector<12x64xf32>
    %64 = arith.maximumf %60, %61 : vector<12x64xf32>
    %65 = arith.maximumf %62, %63 : vector<12x64xf32>
    %66 = arith.maximumf %64, %65 : vector<12x64xf32>
    %c0_58 = arith.constant 0 : index
    %c36 = arith.constant 36 : index
    %c0_59 = arith.constant 0 : index
    %67 = vector.load %arg6[%c0_58, %c36, %c0_59] : memref<1x144x64xf32, #tpu.memory_space<vmem>>, vector<1x12x64xf32>
    %68 = vector.shape_cast %67 : vector<1x12x64xf32> to vector<12x64xf32>
    %69 = vector.shape_cast %66 : vector<12x64xf32> to vector<1x12x64xf32>
    tpu.vector_store %arg6[%c0_58, %c36, %c0_59], %69 {strides = array<i32>} : memref<1x144x64xf32, #tpu.memory_space<vmem>>, vector<1x12x64xf32>,
    %c224 = arith.constant 224 : index
    %c0_60 = arith.constant 0 : index
    %70 = tpu.strided_load %arg8[%c224, %c0_60] {strides = array<i32: 2, 1>} : memref<672x64xf32, #tpu.memory_space<vmem>>, vector<12x64xf32>
    %c225 = arith.constant 225 : index
    %c0_61 = arith.constant 0 : index
    %71 = tpu.strided_load %arg8[%c225, %c0_61] {strides = array<i32: 2, 1>} : memref<672x64xf32, #tpu.memory_space<vmem>>, vector<12x64xf32>
    %c252 = arith.constant 252 : index
    %c0_62 = arith.constant 0 : index
    %72 = tpu.strided_load %arg8[%c252, %c0_62] {strides = array<i32: 2, 1>} : memref<672x64xf32, #tpu.memory_space<vmem>>, vector<12x64xf32>
    %c253 = arith.constant 253 : index
    %c0_63 = arith.constant 0 : index
    %73 = tpu.strided_load %arg8[%c253, %c0_63] {strides = array<i32: 2, 1>} : memref<672x64xf32, #tpu.memory_space<vmem>>, vector<12x64xf32>
    %74 = arith.maximumf %70, %71 : vector<12x64xf32>
    %75 = arith.maximumf %72, %73 : vector<12x64xf32>
    %76 = arith.maximumf %74, %75 : vector<12x64xf32>
    %c0_64 = arith.constant 0 : index
    %c48 = arith.constant 48 : index
    %c0_65 = arith.constant 0 : index
    %77 = vector.load %arg6[%c0_64, %c48, %c0_65] : memref<1x144x64xf32, #tpu.memory_space<vmem>>, vector<1x12x64xf32>
    %78 = vector.shape_cast %77 : vector<1x12x64xf32> to vector<12x64xf32>
    %79 = vector.shape_cast %76 : vector<12x64xf32> to vector<1x12x64xf32>
    tpu.vector_store %arg6[%c0_64, %c48, %c0_65], %79 {strides = array<i32>} : memref<1x144x64xf32, #tpu.memory_space<vmem>>, vector<1x12x64xf32>,
    %c280 = arith.constant 280 : index
    %c0_66 = arith.constant 0 : index
    %80 = tpu.strided_load %arg8[%c280, %c0_66] {strides = array<i32: 2, 1>} : memref<672x64xf32, #tpu.memory_space<vmem>>, vector<12x64xf32>
    %c281 = arith.constant 281 : index
    %c0_67 = arith.constant 0 : index
    %81 = tpu.strided_load %arg8[%c281, %c0_67] {strides = array<i32: 2, 1>} : memref<672x64xf32, #tpu.memory_space<vmem>>, vector<12x64xf32>
    %c308 = arith.constant 308 : index
    %c0_68 = arith.constant 0 : index
    %82 = tpu.strided_load %arg8[%c308, %c0_68] {strides = array<i32: 2, 1>} : memref<672x64xf32, #tpu.memory_space<vmem>>, vector<12x64xf32>
    %c309 = arith.constant 309 : index
    %c0_69 = arith.constant 0 : index
    %83 = tpu.strided_load %arg8[%c309, %c0_69] {strides = array<i32: 2, 1>} : memref<672x64xf32, #tpu.memory_space<vmem>>, vector<12x64xf32>
    %84 = arith.maximumf %80, %81 : vector<12x64xf32>
    %85 = arith.maximumf %82, %83 : vector<12x64xf32>
    %86 = arith.maximumf %84, %85 : vector<12x64xf32>
    %c0_70 = arith.constant 0 : index
    %c60 = arith.constant 60 : index
    %c0_71 = arith.constant 0 : index
    %87 = vector.load %arg6[%c0_70, %c60, %c0_71] : memref<1x144x64xf32, #tpu.memory_space<vmem>>, vector<1x12x64xf32>
    %88 = vector.shape_cast %87 : vector<1x12x64xf32> to vector<12x64xf32>
    %89 = vector.shape_cast %86 : vector<12x64xf32> to vector<1x12x64xf32>
    tpu.vector_store %arg6[%c0_70, %c60, %c0_71], %89 {strides = array<i32>} : memref<1x144x64xf32, #tpu.memory_space<vmem>>, vector<1x12x64xf32>,
    %c336 = arith.constant 336 : index
    %c0_72 = arith.constant 0 : index
    %90 = tpu.strided_load %arg8[%c336, %c0_72] {strides = array<i32: 2, 1>} : memref<672x64xf32, #tpu.memory_space<vmem>>, vector<12x64xf32>
    %c337 = arith.constant 337 : index
    %c0_73 = arith.constant 0 : index
    %91 = tpu.strided_load %arg8[%c337, %c0_73] {strides = array<i32: 2, 1>} : memref<672x64xf32, #tpu.memory_space<vmem>>, vector<12x64xf32>
    %c364 = arith.constant 364 : index
    %c0_74 = arith.constant 0 : index
    %92 = tpu.strided_load %arg8[%c364, %c0_74] {strides = array<i32: 2, 1>} : memref<672x64xf32, #tpu.memory_space<vmem>>, vector<12x64xf32>
    %c365 = arith.constant 365 : index
    %c0_75 = arith.constant 0 : index
    %93 = tpu.strided_load %arg8[%c365, %c0_75] {strides = array<i32: 2, 1>} : memref<672x64xf32, #tpu.memory_space<vmem>>, vector<12x64xf32>
    %94 = arith.maximumf %90, %91 : vector<12x64xf32>
    %95 = arith.maximumf %92, %93 : vector<12x64xf32>
    %96 = arith.maximumf %94, %95 : vector<12x64xf32>
    %c0_76 = arith.constant 0 : index
    %c72 = arith.constant 72 : index
    %c0_77 = arith.constant 0 : index
    %97 = vector.load %arg6[%c0_76, %c72, %c0_77] : memref<1x144x64xf32, #tpu.memory_space<vmem>>, vector<1x12x64xf32>
    %98 = vector.shape_cast %97 : vector<1x12x64xf32> to vector<12x64xf32>
    %99 = vector.shape_cast %96 : vector<12x64xf32> to vector<1x12x64xf32>
    tpu.vector_store %arg6[%c0_76, %c72, %c0_77], %99 {strides = array<i32>} : memref<1x144x64xf32, #tpu.memory_space<vmem>>, vector<1x12x64xf32>,
    %c392 = arith.constant 392 : index
    %c0_78 = arith.constant 0 : index
    %100 = tpu.strided_load %arg8[%c392, %c0_78] {strides = array<i32: 2, 1>} : memref<672x64xf32, #tpu.memory_space<vmem>>, vector<12x64xf32>
    %c393 = arith.constant 393 : index
    %c0_79 = arith.constant 0 : index
    %101 = tpu.strided_load %arg8[%c393, %c0_79] {strides = array<i32: 2, 1>} : memref<672x64xf32, #tpu.memory_space<vmem>>, vector<12x64xf32>
    %c420 = arith.constant 420 : index
    %c0_80 = arith.constant 0 : index
    %102 = tpu.strided_load %arg8[%c420, %c0_80] {strides = array<i32: 2, 1>} : memref<672x64xf32, #tpu.memory_space<vmem>>, vector<12x64xf32>
    %c421 = arith.constant 421 : index
    %c0_81 = arith.constant 0 : index
    %103 = tpu.strided_load %arg8[%c421, %c0_81] {strides = array<i32: 2, 1>} : memref<672x64xf32, #tpu.memory_space<vmem>>, vector<12x64xf32>
    %104 = arith.maximumf %100, %101 : vector<12x64xf32>
    %105 = arith.maximumf %102, %103 : vector<12x64xf32>
    %106 = arith.maximumf %104, %105 : vector<12x64xf32>
    %c0_82 = arith.constant 0 : index
    %c84_83 = arith.constant 84 : index
    %c0_84 = arith.constant 0 : index
    %107 = vector.load %arg6[%c0_82, %c84_83, %c0_84] : memref<1x144x64xf32, #tpu.memory_space<vmem>>, vector<1x12x64xf32>
    %108 = vector.shape_cast %107 : vector<1x12x64xf32> to vector<12x64xf32>
    %109 = vector.shape_cast %106 : vector<12x64xf32> to vector<1x12x64xf32>
    tpu.vector_store %arg6[%c0_82, %c84_83, %c0_84], %109 {strides = array<i32>} : memref<1x144x64xf32, #tpu.memory_space<vmem>>, vector<1x12x64xf32>,
    %c448 = arith.constant 448 : index
    %c0_85 = arith.constant 0 : index
    %110 = tpu.strided_load %arg8[%c448, %c0_85] {strides = array<i32: 2, 1>} : memref<672x64xf32, #tpu.memory_space<vmem>>, vector<12x64xf32>
    %c449 = arith.constant 449 : index
    %c0_86 = arith.constant 0 : index
    %111 = tpu.strided_load %arg8[%c449, %c0_86] {strides = array<i32: 2, 1>} : memref<672x64xf32, #tpu.memory_space<vmem>>, vector<12x64xf32>
    %c476 = arith.constant 476 : index
    %c0_87 = arith.constant 0 : index
    %112 = tpu.strided_load %arg8[%c476, %c0_87] {strides = array<i32: 2, 1>} : memref<672x64xf32, #tpu.memory_space<vmem>>, vector<12x64xf32>
    %c477 = arith.constant 477 : index
    %c0_88 = arith.constant 0 : index
    %113 = tpu.strided_load %arg8[%c477, %c0_88] {strides = array<i32: 2, 1>} : memref<672x64xf32, #tpu.memory_space<vmem>>, vector<12x64xf32>
    %114 = arith.maximumf %110, %111 : vector<12x64xf32>
    %115 = arith.maximumf %112, %113 : vector<12x64xf32>
    %116 = arith.maximumf %114, %115 : vector<12x64xf32>
    %c0_89 = arith.constant 0 : index
    %c96 = arith.constant 96 : index
    %c0_90 = arith.constant 0 : index
    %117 = vector.load %arg6[%c0_89, %c96, %c0_90] : memref<1x144x64xf32, #tpu.memory_space<vmem>>, vector<1x12x64xf32>
    %118 = vector.shape_cast %117 : vector<1x12x64xf32> to vector<12x64xf32>
    %119 = vector.shape_cast %116 : vector<12x64xf32> to vector<1x12x64xf32>
    tpu.vector_store %arg6[%c0_89, %c96, %c0_90], %119 {strides = array<i32>} : memref<1x144x64xf32, #tpu.memory_space<vmem>>, vector<1x12x64xf32>,
    %c504 = arith.constant 504 : index
    %c0_91 = arith.constant 0 : index
    %120 = tpu.strided_load %arg8[%c504, %c0_91] {strides = array<i32: 2, 1>} : memref<672x64xf32, #tpu.memory_space<vmem>>, vector<12x64xf32>
    %c505 = arith.constant 505 : index
    %c0_92 = arith.constant 0 : index
    %121 = tpu.strided_load %arg8[%c505, %c0_92] {strides = array<i32: 2, 1>} : memref<672x64xf32, #tpu.memory_space<vmem>>, vector<12x64xf32>
    %c532 = arith.constant 532 : index
    %c0_93 = arith.constant 0 : index
    %122 = tpu.strided_load %arg8[%c532, %c0_93] {strides = array<i32: 2, 1>} : memref<672x64xf32, #tpu.memory_space<vmem>>, vector<12x64xf32>
    %c533 = arith.constant 533 : index
    %c0_94 = arith.constant 0 : index
    %123 = tpu.strided_load %arg8[%c533, %c0_94] {strides = array<i32: 2, 1>} : memref<672x64xf32, #tpu.memory_space<vmem>>, vector<12x64xf32>
    %124 = arith.maximumf %120, %121 : vector<12x64xf32>
    %125 = arith.maximumf %122, %123 : vector<12x64xf32>
    %126 = arith.maximumf %124, %125 : vector<12x64xf32>
    %c0_95 = arith.constant 0 : index
    %c108 = arith.constant 108 : index
    %c0_96 = arith.constant 0 : index
    %127 = vector.load %arg6[%c0_95, %c108, %c0_96] : memref<1x144x64xf32, #tpu.memory_space<vmem>>, vector<1x12x64xf32>
    %128 = vector.shape_cast %127 : vector<1x12x64xf32> to vector<12x64xf32>
    %129 = vector.shape_cast %126 : vector<12x64xf32> to vector<1x12x64xf32>
    tpu.vector_store %arg6[%c0_95, %c108, %c0_96], %129 {strides = array<i32>} : memref<1x144x64xf32, #tpu.memory_space<vmem>>, vector<1x12x64xf32>,
    %c560 = arith.constant 560 : index
    %c0_97 = arith.constant 0 : index
    %130 = tpu.strided_load %arg8[%c560, %c0_97] {strides = array<i32: 2, 1>} : memref<672x64xf32, #tpu.memory_space<vmem>>, vector<12x64xf32>
    %c561 = arith.constant 561 : index
    %c0_98 = arith.constant 0 : index
    %131 = tpu.strided_load %arg8[%c561, %c0_98] {strides = array<i32: 2, 1>} : memref<672x64xf32, #tpu.memory_space<vmem>>, vector<12x64xf32>
    %c588 = arith.constant 588 : index
    %c0_99 = arith.constant 0 : index
    %132 = tpu.strided_load %arg8[%c588, %c0_99] {strides = array<i32: 2, 1>} : memref<672x64xf32, #tpu.memory_space<vmem>>, vector<12x64xf32>
    %c589 = arith.constant 589 : index
    %c0_100 = arith.constant 0 : index
    %133 = tpu.strided_load %arg8[%c589, %c0_100] {strides = array<i32: 2, 1>} : memref<672x64xf32, #tpu.memory_space<vmem>>, vector<12x64xf32>
    %134 = arith.maximumf %130, %131 : vector<12x64xf32>
    %135 = arith.maximumf %132, %133 : vector<12x64xf32>
    %136 = arith.maximumf %134, %135 : vector<12x64xf32>
    %c0_101 = arith.constant 0 : index
    %c120 = arith.constant 120 : index
    %c0_102 = arith.constant 0 : index
    %137 = vector.load %arg6[%c0_101, %c120, %c0_102] : memref<1x144x64xf32, #tpu.memory_space<vmem>>, vector<1x12x64xf32>
    %138 = vector.shape_cast %137 : vector<1x12x64xf32> to vector<12x64xf32>
    %139 = vector.shape_cast %136 : vector<12x64xf32> to vector<1x12x64xf32>
    tpu.vector_store %arg6[%c0_101, %c120, %c0_102], %139 {strides = array<i32>} : memref<1x144x64xf32, #tpu.memory_space<vmem>>, vector<1x12x64xf32>,
    %c616 = arith.constant 616 : index
    %c0_103 = arith.constant 0 : index
    %140 = tpu.strided_load %arg8[%c616, %c0_103] {strides = array<i32: 2, 1>} : memref<672x64xf32, #tpu.memory_space<vmem>>, vector<12x64xf32>
    %c617 = arith.constant 617 : index
    %c0_104 = arith.constant 0 : index
    %141 = tpu.strided_load %arg8[%c617, %c0_104] {strides = array<i32: 2, 1>} : memref<672x64xf32, #tpu.memory_space<vmem>>, vector<12x64xf32>
    %c644 = arith.constant 644 : index
    %c0_105 = arith.constant 0 : index
    %142 = tpu.strided_load %arg8[%c644, %c0_105] {strides = array<i32: 2, 1>} : memref<672x64xf32, #tpu.memory_space<vmem>>, vector<12x64xf32>
    %c645 = arith.constant 645 : index
    %c0_106 = arith.constant 0 : index
    %143 = tpu.strided_load %arg8[%c645, %c0_106] {strides = array<i32: 2, 1>} : memref<672x64xf32, #tpu.memory_space<vmem>>, vector<12x64xf32>
    %144 = arith.maximumf %140, %141 : vector<12x64xf32>
    %145 = arith.maximumf %142, %143 : vector<12x64xf32>
    %146 = arith.maximumf %144, %145 : vector<12x64xf32>
    %c0_107 = arith.constant 0 : index
    %c132 = arith.constant 132 : index
    %c0_108 = arith.constant 0 : index
    %147 = vector.load %arg6[%c0_107, %c132, %c0_108] : memref<1x144x64xf32, #tpu.memory_space<vmem>>, vector<1x12x64xf32>
    %148 = vector.shape_cast %147 : vector<1x12x64xf32> to vector<12x64xf32>
    %149 = vector.shape_cast %146 : vector<12x64xf32> to vector<1x12x64xf32>
    tpu.vector_store %arg6[%c0_107, %c132, %c0_108], %149 {strides = array<i32>} : memref<1x144x64xf32, #tpu.memory_space<vmem>>, vector<1x12x64xf32>,
    return
  }
  func.func @transform_0(%arg0: i32) -> (i32, i32, i32) {
    %c0_i32 = arith.constant 0 : i32
    %c0_i32_0 = arith.constant 0 : i32
    %c0_i32_1 = arith.constant 0 : i32
    return %arg0, %c0_i32, %c0_i32_0 : i32, i32, i32
  }
  func.func @transform_1(%arg0: i32) -> (i32, i32) {
    %c0_i32 = arith.constant 0 : i32
    %c0_i32_0 = arith.constant 0 : i32
    %c0_i32_1 = arith.constant 0 : i32
    return %c0_i32, %c0_i32_0 : i32, i32
  }
  func.func @transform_2(%arg0: i32) -> (i32, i32) {
    %c0_i32 = arith.constant 0 : i32
    %c0_i32_0 = arith.constant 0 : i32
    %c0_i32_1 = arith.constant 0 : i32
    return %c0_i32, %c0_i32_0 : i32, i32
  }
  func.func @transform_3(%arg0: i32) -> (i32, i32) {
    %c0_i32 = arith.constant 0 : i32
    %c0_i32_0 = arith.constant 0 : i32
    %c0_i32_1 = arith.constant 0 : i32
    return %c0_i32, %c0_i32_0 : i32, i32
  }
  func.func @transform_4(%arg0: i32) -> (i32, i32) {
    %c0_i32 = arith.constant 0 : i32
    %c0_i32_0 = arith.constant 0 : i32
    %c0_i32_1 = arith.constant 0 : i32
    return %c0_i32, %c0_i32_0 : i32, i32
  }
  func.func @transform_5(%arg0: i32) -> (i32, i32, i32) {
    %c0_i32 = arith.constant 0 : i32
    %c0_i32_0 = arith.constant 0 : i32
    %c0_i32_1 = arith.constant 0 : i32
    return %arg0, %c0_i32, %c0_i32_0 : i32, i32, i32
  }
}

module attributes {stable_mosaic.version = 11 : i64} {
  func.func @_mlp_kernel(%arg0: i32, %arg1: memref<2x9216xf32, #tpu.memory_space<vmem>>, %arg2: memref<9216x128xbf16, #tpu.memory_space<vmem>>, %arg3: memref<1x128xf32, #tpu.memory_space<vmem>>, %arg4: memref<128x10xf32, #tpu.memory_space<vmem>>, %arg5: memref<1x10xf32, #tpu.memory_space<vmem>>, %arg6: memref<2x10xf32, #tpu.memory_space<vmem>>) attributes {dimension_semantics = [#tpu.dimension_semantics<parallel>], iteration_bounds = array<i64: 1>, scalar_prefetch = 0 : i64, scratch_operands = 0 : i64, tpu.core_type = #tpu.core_type<tc>, window_params = [{transform_indices = @transform_0, window_bounds = array<i64: 2, 9216>}, {pipeline_mode = #tpu.pipeline_mode<synchronous>, transform_indices = @transform_1, window_bounds = array<i64: 9216, 128>}, {pipeline_mode = #tpu.pipeline_mode<synchronous>, transform_indices = @transform_2, window_bounds = array<i64: 1, 128>}, {pipeline_mode = #tpu.pipeline_mode<synchronous>, transform_indices = @transform_3, window_bounds = array<i64: 128, 10>}, {pipeline_mode = #tpu.pipeline_mode<synchronous>, transform_indices = @transform_4, window_bounds = array<i64: 1, 10>}, {transform_indices = @transform_5, window_bounds = array<i64: 2, 10>}]} {
    %c0 = arith.constant 0 : index
    %c0_0 = arith.constant 0 : index
    %0 = vector.load %arg1[%c0, %c0_0] : memref<2x9216xf32, #tpu.memory_space<vmem>>, vector<2x9216xf32>
    %1 = arith.truncf %0 : vector<2x9216xf32> to vector<2x9216xbf16>
    %c0_1 = arith.constant 0 : index
    %c0_2 = arith.constant 0 : index
    %2 = vector.load %arg2[%c0_1, %c0_2] : memref<9216x128xbf16, #tpu.memory_space<vmem>>, vector<9216x128xbf16>
    %cst = arith.constant dense<0.000000e+00> : vector<2x128xf32>
    %3 = tpu.matmul %1, %2, %cst {dimension_numbers = #tpu.dot_dimension_numbers<[1], [0], [0], [1], [0, 0, 1, 1], [], []>} : vector<2x9216xbf16>, vector<9216x128xbf16>, vector<2x128xf32> -> vector<2x128xf32>
    %c0_3 = arith.constant 0 : index
    %c0_4 = arith.constant 0 : index
    %4 = vector.load %arg3[%c0_3, %c0_4] : memref<1x128xf32, #tpu.memory_space<vmem>>, vector<1x128xf32>
    %5 = vector.broadcast %4 : vector<1x128xf32> to vector<2x128xf32>
    %6 = arith.addf %3, %5 : vector<2x128xf32>
    %cst_5 = arith.constant 0.000000e+00 : f32
    %7 = vector.broadcast %cst_5 : f32 to vector<2x128xf32>
    %8 = arith.maximumf %6, %7 : vector<2x128xf32>
    %c0_6 = arith.constant 0 : index
    %c0_7 = arith.constant 0 : index
    %9 = vector.load %arg4[%c0_6, %c0_7] : memref<128x10xf32, #tpu.memory_space<vmem>>, vector<128x10xf32>
    %cst_8 = arith.constant dense<0.000000e+00> : vector<2x10xf32>
    %10 = tpu.matmul %8, %9, %cst_8 {dimension_numbers = #tpu.dot_dimension_numbers<[1], [0], [0], [1], [0, 0, 1, 1], [], []>} : vector<2x128xf32>, vector<128x10xf32>, vector<2x10xf32> -> vector<2x10xf32>
    %c0_9 = arith.constant 0 : index
    %c0_10 = arith.constant 0 : index
    %11 = vector.load %arg5[%c0_9, %c0_10] : memref<1x10xf32, #tpu.memory_space<vmem>>, vector<1x10xf32>
    %12 = vector.broadcast %11 : vector<1x10xf32> to vector<2x10xf32>
    %13 = arith.addf %10, %12 : vector<2x10xf32>
    %c0_11 = arith.constant 0 : index
    %c0_12 = arith.constant 0 : index
    %14 = vector.load %arg6[%c0_11, %c0_12] : memref<2x10xf32, #tpu.memory_space<vmem>>, vector<2x10xf32>
    tpu.vector_store %arg6[%c0_11, %c0_12], %13 {strides = array<i32>} : memref<2x10xf32, #tpu.memory_space<vmem>>, vector<2x10xf32>,
    return
  }
  func.func @transform_0(%arg0: i32) -> (i32, i32) {
    %c0_i32 = arith.constant 0 : i32
    %c0_i32_0 = arith.constant 0 : i32
    return %arg0, %c0_i32 : i32, i32
  }
  func.func @transform_1(%arg0: i32) -> (i32, i32) {
    %c0_i32 = arith.constant 0 : i32
    %c0_i32_0 = arith.constant 0 : i32
    %c0_i32_1 = arith.constant 0 : i32
    return %c0_i32, %c0_i32_0 : i32, i32
  }
  func.func @transform_2(%arg0: i32) -> (i32, i32) {
    %c0_i32 = arith.constant 0 : i32
    %c0_i32_0 = arith.constant 0 : i32
    %c0_i32_1 = arith.constant 0 : i32
    return %c0_i32, %c0_i32_0 : i32, i32
  }
  func.func @transform_3(%arg0: i32) -> (i32, i32) {
    %c0_i32 = arith.constant 0 : i32
    %c0_i32_0 = arith.constant 0 : i32
    %c0_i32_1 = arith.constant 0 : i32
    return %c0_i32, %c0_i32_0 : i32, i32
  }
  func.func @transform_4(%arg0: i32) -> (i32, i32) {
    %c0_i32 = arith.constant 0 : i32
    %c0_i32_0 = arith.constant 0 : i32
    %c0_i32_1 = arith.constant 0 : i32
    return %c0_i32, %c0_i32_0 : i32, i32
  }
  func.func @transform_5(%arg0: i32) -> (i32, i32) {
    %c0_i32 = arith.constant 0 : i32
    %c0_i32_0 = arith.constant 0 : i32
    return %arg0, %c0_i32 : i32, i32
  }
}

</mosaic_0001>

<llo_original>
// kernel: forward.2
$region0: #{forward.2}
  #allocation0 [shape = 'u32[]', space=smem, size = 0x4, offset = 0x4, fixed_abs, tag = 'smem constant byte address 0x4 - core index']
  #allocation1 [shape = 'u32[72,128]{1,0:T(1,128)}', space=vmem, size = 0x9000, scoped, tag = 'internal scratch']
  #allocation2 [shape = 'f32[736,32]{1,0:T(8,128)}', space=vmem, size = 0x5c000, scoped, tag = 'scratch operand']
  #allocation3 [shape = 'f32[672,64]{1,0:T(8,128)}', space=vmem, size = 0x54000, scoped, tag = 'scratch operand']
  %s0 = inlined_call_operand.vmem [shape: f32[2,728,9], index: 0, kind: input, shape index: {}]
  %s1 = inlined_call_operand.hbm [shape: f32[9,32], index: 1, kind: input, shape index: {}]
  %s2 = inlined_call_operand.hbm [shape: f32[1,32], index: 2, kind: input, shape index: {}]
  %s3 = inlined_call_operand.vmem [shape: f32[288,64], index: 3, kind: input, shape index: {}]
  %s4 = inlined_call_operand.hbm [shape: f32[1,64], index: 4, kind: input, shape index: {}]
  %s5 = inlined_call_operand.vmem [shape: f32[2,144,64], index: 5, kind: output, shape index: {}]
  %s6 = sld [smem:[#allocation0]]
  $region65: #{forward.2} parent=0
    _
  %s8 = ssub.s32 1, %s6
  %s9 = scalar_select 0, %s8, %s6
  $region1: #{forward.2} parent=0
    #allocation4 [shape = 'u8[8192]{0}', space=vmem, size = 0x2000, scoped, tag = 'input window, operand 1, single buffered']
    #allocation5 [shape = 's32[2]{0}', space=sflag, size = 0x8, scoped, tag = 'scoped memory for forward.2']
    #allocation6 [shape = 'u8[512]{0}', space=vmem, size = 0x400, scoped, tag = 'input window, operand 2, single buffered']
    #allocation7 [shape = 's32[1]{0}', space=sflag, size = 0x4, scoped, tag = 'scoped memory for forward.2']
    #allocation8 [shape = 'u8[512]{0}', space=vmem, size = 0x400, scoped, tag = 'input window, operand 4, single buffered']
    %10 = vsyncpa [#allocation5], 0
    %11 = vsyncpa [#allocation7], 0
    loop: start=0, step=1, limit=4
    $region2: #{forward.2} parent=1 // loop_pre_header
      _
    $region3: #{forward.2} parent=1 // loop_header
      %s13 = sphi 0, %s17
      %p14 = scmp.ge.s32.totalorder %s13, 4
      %s23 = sphi 0, %s25
      %s26 = sphi 0, %s23
      %s27 = sphi 0, %s26
      %s43 = sphi 0, %s27
      %s47 = sphi 0, %s47
      %s49 = sphi 0, %s47
      %s50 = sphi 0, %s49
      %s64 = sphi 0, %s50
      %s68 = sphi 0, %s68
      %s70 = sphi 0, %s68
      %s71 = sphi 0, %s70
      %s85 = sphi 0, %s71
      %s89 = sphi 0, %s89
      %s91 = sphi 0, %s89
      %s92 = sphi 0, %s91
      %s106 = sphi 0, %s92
      %s110 = sphi 0, %s110
      %s112 = sphi 0, %s110
      %s113 = sphi 0, %s112
      %s127 = sphi 0, %s113
      %s133 = sphi 0, %s135
      %s136 = sphi 0, %s133
      %s137 = sphi 0, %s136
      %s153 = sphi 0, %s137
    $region4: #{forward.2} parent=1 // loop_header_branch
      %16 = sbr.rel (%p14) target = $region8
    $region5: #{forward.2} parent=1 // loop_body
      %s18 = ssub.s32 %s13, 1
      %s19 = ssub.s32 %s13, 2
      %s20 = sadd.s32 %s13, 1
      %s21 = ssub.s32 %s13, %s20
      %p22 = scmp.eq.s32.totalorder %s21, 0
      %s24 = sadd.s32 %s23, 1
      %s25 = scalar_select %p22, %s23, %s24
      %p28 = pneg %p22
      %p29 = scmp.eq.s32.totalorder %s13, 1
      %p30 = por %p28, %p29
      %p31 = scmp.ne.s32.totalorder %s23, %s26
      %p32 = scmp.eq.s32.totalorder %s13, 0
      %p33 = por %p31, %p32
      %p34 = scmp.ne.s32.totalorder %s23, %s26
      %p35 = scmp.eq.s32.totalorder %s18, 1
      %p36 = por %p34, %p35
      %p37 = scmp.ne.s32.totalorder %s26, %s27
      %p38 = scmp.eq.s32.totalorder %s18, 0
      %p39 = por %p37, %p38
      %p40 = scmp.ne.s32.totalorder %s26, %s27
      %p41 = scmp.eq.s32.totalorder %s19, 1
      %p42 = por %p40, %p41
      %p44 = scmp.ne.s32.totalorder %s27, %s43
      %p45 = scmp.eq.s32.totalorder %s19, 0
      %p46 = por %p44, %p45
      %s48 = sadd.s32 %s47, 1
      %p51 = scmp.eq.s32.totalorder %s13, 1
      %p52 = scmp.ne.s32.totalorder %s47, %s49
      %p53 = scmp.eq.s32.totalorder %s13, 0
      %p54 = por %p52, %p53
      %p55 = scmp.ne.s32.totalorder %s47, %s49
      %p56 = scmp.eq.s32.totalorder %s18, 1
      %p57 = por %p55, %p56
      %p58 = scmp.ne.s32.totalorder %s49, %s50
      %p59 = scmp.eq.s32.totalorder %s18, 0
      %p60 = por %p58, %p59
      %p61 = scmp.ne.s32.totalorder %s49, %s50
      %p62 = scmp.eq.s32.totalorder %s19, 1
      %p63 = por %p61, %p62
      %p65 = scmp.ne.s32.totalorder %s50, %s64
      %p66 = scmp.eq.s32.totalorder %s19, 0
      %p67 = por %p65, %p66
      %s69 = sadd.s32 %s68, 1
      %p72 = scmp.eq.s32.totalorder %s13, 1
      %p73 = scmp.ne.s32.totalorder %s68, %s70
      %p74 = scmp.eq.s32.totalorder %s13, 0
      %p75 = por %p73, %p74
      %p76 = scmp.ne.s32.totalorder %s68, %s70
      %p77 = scmp.eq.s32.totalorder %s18, 1
      %p78 = por %p76, %p77
      %p79 = scmp.ne.s32.totalorder %s70, %s71
      %p80 = scmp.eq.s32.totalorder %s18, 0
      %p81 = por %p79, %p80
      %p82 = scmp.ne.s32.totalorder %s70, %s71
      %p83 = scmp.eq.s32.totalorder %s19, 1
      %p84 = por %p82, %p83
      %p86 = scmp.ne.s32.totalorder %s71, %s85
      %p87 = scmp.eq.s32.totalorder %s19, 0
      %p88 = por %p86, %p87
      %s90 = sadd.s32 %s89, 1
      %p93 = scmp.eq.s32.totalorder %s13, 1
      %p94 = scmp.ne.s32.totalorder %s89, %s91
      %p95 = scmp.eq.s32.totalorder %s13, 0
      %p96 = por %p94, %p95
      %p97 = scmp.ne.s32.totalorder %s89, %s91
      %p98 = scmp.eq.s32.totalorder %s18, 1
      %p99 = por %p97, %p98
      %p100 = scmp.ne.s32.totalorder %s91, %s92
      %p101 = scmp.eq.s32.totalorder %s18, 0
      %p102 = por %p100, %p101
      %p103 = scmp.ne.s32.totalorder %s91, %s92
      %p104 = scmp.eq.s32.totalorder %s19, 1
      %p105 = por %p103, %p104
      %p107 = scmp.ne.s32.totalorder %s92, %s106
      %p108 = scmp.eq.s32.totalorder %s19, 0
      %p109 = por %p107, %p108
      %s111 = sadd.s32 %s110, 1
      %p114 = scmp.eq.s32.totalorder %s13, 1
      %p115 = scmp.ne.s32.totalorder %s110, %s112
      %p116 = scmp.eq.s32.totalorder %s13, 0
      %p117 = por %p115, %p116
      %p118 = scmp.ne.s32.totalorder %s110, %s112
      %p119 = scmp.eq.s32.totalorder %s18, 1
      %p120 = por %p118, %p119
      %p121 = scmp.ne.s32.totalorder %s112, %s113
      %p122 = scmp.eq.s32.totalorder %s18, 0
      %p123 = por %p121, %p122
      %p124 = scmp.ne.s32.totalorder %s112, %s113
      %p125 = scmp.eq.s32.totalorder %s19, 1
      %p126 = por %p124, %p125
      %p128 = scmp.ne.s32.totalorder %s113, %s127
      %p129 = scmp.eq.s32.totalorder %s19, 0
      %p130 = por %p128, %p129
      %s131 = ssub.s32 %s13, %s20
      %p132 = scmp.eq.s32.totalorder %s131, 0
      %s134 = sadd.s32 %s133, 1
      %s135 = scalar_select %p132, %s133, %s134
      %p138 = pneg %p132
      %p139 = scmp.eq.s32.totalorder %s13, 1
      %p140 = por %p138, %p139
      %p141 = scmp.ne.s32.totalorder %s133, %s136
      %p142 = scmp.eq.s32.totalorder %s13, 0
      %p143 = por %p141, %p142
      %p144 = scmp.ne.s32.totalorder %s133, %s136
      %p145 = scmp.eq.s32.totalorder %s18, 1
      %p146 = por %p144, %p145
      %p147 = scmp.ne.s32.totalorder %s136, %s137
      %p148 = scmp.eq.s32.totalorder %s18, 0
      %p149 = por %p147, %p148
      %p150 = scmp.ne.s32.totalorder %s136, %s137
      %p151 = scmp.eq.s32.totalorder %s19, 1
      %p152 = por %p150, %p151
      %p154 = scmp.ne.s32.totalorder %s137, %s153
      %p155 = scmp.eq.s32.totalorder %s19, 0
      %p156 = por %p154, %p155
      %p157 = scmp.le.s32.totalorder 1, %s13
      %p158 = scmp.lt.s32.totalorder %s13, 3
      %p159 = pnand %p157, %p158
      %p160 = pneg %p159
      // Predicated region
      $region9: #{forward.2} parent=5 // pred_check
        _
      $region10: #{forward.2} parent=5 // pred_check_branch
        %162 = sbr.rel (%p159) target = $region12
      $region11: #{forward.2} parent=5 // pred_region
        %s163 = ssub.s32 %s13, 1
        // Predicated region
        $region13: #{forward.2} parent=11 // pred_check
          %p164 = pneg %p60
        $region14: #{forward.2} parent=11 // pred_check_branch
          %166 = sbr.rel (%p164) target = $region16
        $region15: #{forward.2} parent=11 // pred_region
          %168 = vsyncadd [#allocation5], 0
          %s169 = sshll.u32 %s1, 4
          %s170 = int_to_ptr.hbm [resolvable:$true] %s169
          %s171 = sshll.u32 [#allocation4], 4
          %s172 = int_to_ptr.vmem [resolvable:$true] %s171
          %177 = dma.hbm_to_vmem [thread:$0]  %s170, 256, %s172, [#allocation5], 128, 128, 8
        $region16: #{forward.2} parent=11 // pred_fallthru
          _
        // Predicated region
        $region17: #{forward.2} parent=11 // pred_check
          %p178 = pneg %p81
        $region18: #{forward.2} parent=11 // pred_check_branch
          %180 = sbr.rel (%p178) target = $region20
        $region19: #{forward.2} parent=11 // pred_region
          %182 = vsyncadd [#allocation7], 0
          %s184 = sshll.u32 %s2, 4
          %s185 = int_to_ptr.hbm [resolvable:$true] %s184
          %s186 = sshll.u32 [#allocation6], 4
          %s187 = int_to_ptr.vmem [resolvable:$true] %s186
          %189 = dma.hbm_to_vmem [thread:$0]  %s185, 16, %s187, [#allocation7]
        $region20: #{forward.2} parent=11 // pred_fallthru
          _
        // Predicated region
        $region21: #{forward.2} parent=11 // pred_check
          %p190 = pneg %p102
        $region22: #{forward.2} parent=11 // pred_check_branch
          %192 = sbr.rel (%p190) target = $region24
        $region23: #{forward.2} parent=11 // pred_region
          _
        $region24: #{forward.2} parent=11 // pred_fallthru
          _
        // Predicated region
        $region25: #{forward.2} parent=11 // pred_check
          %p193 = pneg %p123
        $region26: #{forward.2} parent=11 // pred_check_branch
          %195 = sbr.rel (%p193) target = $region28
        $region27: #{forward.2} parent=11 // pred_region
          %197 = vsyncadd [#allocation7], 0
          %s199 = sshll.u32 %s4, 4
          %s200 = int_to_ptr.hbm [resolvable:$true] %s199
          %s201 = sshll.u32 [#allocation8], 4
          %s202 = int_to_ptr.vmem [resolvable:$true] %s201
          %204 = dma.hbm_to_vmem [thread:$0]  %s200, 16, %s202, [#allocation7]
        $region28: #{forward.2} parent=11 // pred_fallthru
          _
      $region12: #{forward.2} parent=5 // pred_fallthru
        _
      %p205 = scmp.lt.s32.totalorder %s13, 2
      // Predicated region
      $region29: #{forward.2} parent=5 // pred_check
        %p206 = pneg %p205
      $region30: #{forward.2} parent=5 // pred_check_branch
        %208 = sbr.rel (%p206) target = $region32
      $region31: #{forward.2} parent=5 // pred_region
        // Predicated region
        $region33: #{forward.2} parent=31 // pred_check
          %p209 = pneg %p33
        $region34: #{forward.2} parent=31 // pred_check_branch
          %211 = sbr.rel (%p209) target = $region36
        $region35: #{forward.2} parent=31 // pred_region
          %p212 = scmp.lt.s32.totalorder %s13, 1
          %s213 = scalar_select %p212, %s13, 1
          %s214 = smul.addr %s213, 91
          %s215 = smul.addr %s214, 8
          %s216 = scalar_lea.vmem %s0, %s215
        $region36: #{forward.2} parent=31 // pred_fallthru
          _
      $region32: #{forward.2} parent=5 // pred_fallthru
        _
      %p217 = scmp.le.s32.totalorder 1, %s13
      %p218 = scmp.lt.s32.totalorder %s13, 3
      %p219 = pnand %p217, %p218
      %p220 = pneg %p219
      // Predicated region
      $region37: #{forward.2} parent=5 // pred_check
        _
      $region38: #{forward.2} parent=5 // pred_check_branch
        %222 = sbr.rel (%p219) target = $region40
      $region39: #{forward.2} parent=5 // pred_region
        %s223 = ssub.s32 %s13, 1
        // Predicated region
        $region41: #{forward.2} parent=39 // pred_check
          %p224 = pneg %p60
        $region42: #{forward.2} parent=39 // pred_check_branch
          %226 = sbr.rel (%p224) target = $region44
        $region43: #{forward.2} parent=39 // pred_region
          %228 = dma.done [#allocation5], 256
        $region44: #{forward.2} parent=39 // pred_fallthru
          _
        // Predicated region
        $region45: #{forward.2} parent=39 // pred_check
          %p229 = pneg %p81
        $region46: #{forward.2} parent=39 // pred_check_branch
          %231 = sbr.rel (%p229) target = $region48
        $region47: #{forward.2} parent=39 // pred_region
          %233 = dma.done [#allocation7], 16
        $region48: #{forward.2} parent=39 // pred_fallthru
          _
        // Predicated region
        $region49: #{forward.2} parent=39 // pred_check
          %p234 = pneg %p123
        $region50: #{forward.2} parent=39 // pred_check_branch
          %236 = sbr.rel (%p234) target = $region52
        $region51: #{forward.2} parent=39 // pred_region
          %238 = dma.done [#allocation7], 16
        $region52: #{forward.2} parent=39 // pred_fallthru
          _
        %p239 = scmp.lt.s32.totalorder %s18, 1
        %s240 = scalar_select %p239, %s18, 1
        %s241 = smul.addr %s240, 91
        %s242 = smul.addr %s241, 8
        %s243 = scalar_lea.vmem %s0, %s242
        %p244 = pneg %p39
        %p245 = pneg %p36
        %p246 = pneg %p60
        %p247 = pneg %p57
        %p248 = pneg %p81
        %p249 = pneg %p78
        %p250 = pneg %p102
        %p251 = pneg %p99
        %p252 = pneg %p123
        %p253 = pneg %p120
        %p254 = pneg %p149
        %p255 = pneg %p146
        %p256 = scmp.lt.s32.totalorder %s18, 1
        %s257 = scalar_select %p256, %s18, 1
        %s258 = smul.addr %s257, 18
        %s259 = smul.addr %s258, 8
        %s260 = scalar_lea.vmem %s5, %s259
        %p261 = scmp.lt.s32.totalorder %s18, 1
        %s262 = scalar_select %p261, %s18, 1
        %s263 = smul.addr %s262, 91
        %s264 = smul.addr %s263, 8
        %s265 = scalar_lea.vmem %s0, %s264
        %p266 = scmp.lt.s32.totalorder %s18, 1
        %s267 = scalar_select %p266, %s18, 1
        %s268 = smul.addr %s267, 18
        %s269 = smul.addr %s268, 8
        %s270 = scalar_lea.vmem %s5, %s269
        %v271 = vld [vmem:[%s265] sm:$0xff]
        %v272 = vld [vmem:[%s265 + $0x8] sm:$0xff]
        %v273 = vld [vmem:[%s265 + $0x10] sm:$0xff]
        %v274 = vld [vmem:[%s265 + $0x18] sm:$0xff]
        %v275 = vld [vmem:[%s265 + $0x20] sm:$0xff]
        %v276 = vld [vmem:[%s265 + $0x28] sm:$0xff]
        %v277 = vld [vmem:[%s265 + $0x30] sm:$0xff]
        %v278 = vld [vmem:[%s265 + $0x38] sm:$0xff]
        %v279 = vld [vmem:[%s265 + $0x40] sm:$0xff]
        %v280 = vld [vmem:[%s265 + $0x48] sm:$0xff]
        %v281 = vld [vmem:[%s265 + $0x50] sm:$0xff]
        %v282 = vld [vmem:[%s265 + $0x58] sm:$0xff]
        %v283 = vld [vmem:[%s265 + $0x60] sm:$0xff]
        %v284 = vld [vmem:[%s265 + $0x68] sm:$0xff]
        %v285 = vld [vmem:[%s265 + $0x70] sm:$0xff]
        %v286 = vld [vmem:[%s265 + $0x78] sm:$0xff]
        %v287 = vld [vmem:[%s265 + $0x80] sm:$0xff]
        %v288 = vld [vmem:[%s265 + $0x88] sm:$0xff]
        %v289 = vld [vmem:[%s265 + $0x90] sm:$0xff]
        %v290 = vld [vmem:[%s265 + $0x98] sm:$0xff]
        %v291 = vld [vmem:[%s265 + $0xa0] sm:$0xff]
        %v292 = vld [vmem:[%s265 + $0xa8] sm:$0xff]
        %v293 = vld [vmem:[%s265 + $0xb0] sm:$0xff]
        %v294 = vld [vmem:[%s265 + $0xb8] sm:$0xff]
        %v295 = vld [vmem:[%s265 + $0xc0] sm:$0xff]
        %v296 = vld [vmem:[%s265 + $0xc8] sm:$0xff]
        %v297 = vld [vmem:[%s265 + $0xd0] sm:$0xff]
        %v298 = vld [vmem:[%s265 + $0xd8] sm:$0xff]
        %v299 = vld [vmem:[%s265 + $0xe0] sm:$0xff]
        %v300 = vld [vmem:[%s265 + $0xe8] sm:$0xff]
        %v301 = vld [vmem:[%s265 + $0xf0] sm:$0xff]
        %v302 = vld [vmem:[%s265 + $0xf8] sm:$0xff]
        %v303 = vld [vmem:[%s265 + $0x100] sm:$0xff]
        %v304 = vld [vmem:[%s265 + $0x108] sm:$0xff]
        %v305 = vld [vmem:[%s265 + $0x110] sm:$0xff]
        %v306 = vld [vmem:[%s265 + $0x118] sm:$0xff]
        %v307 = vld [vmem:[%s265 + $0x120] sm:$0xff]
        %v308 = vld [vmem:[%s265 + $0x128] sm:$0xff]
        %v309 = vld [vmem:[%s265 + $0x130] sm:$0xff]
        %v310 = vld [vmem:[%s265 + $0x138] sm:$0xff]
        %v311 = vld [vmem:[%s265 + $0x140] sm:$0xff]
        %v312 = vld [vmem:[%s265 + $0x148] sm:$0xff]
        %v313 = vld [vmem:[%s265 + $0x150] sm:$0xff]
        %v314 = vld [vmem:[%s265 + $0x158] sm:$0xff]
        %v315 = vld [vmem:[%s265 + $0x160] sm:$0xff]
        %v316 = vld [vmem:[%s265 + $0x168] sm:$0xff]
        %v317 = vld [vmem:[%s265 + $0x170] sm:$0xff]
        %v318 = vld [vmem:[%s265 + $0x178] sm:$0xff]
        %v319 = vld [vmem:[%s265 + $0x180] sm:$0xff]
        %v320 = vld [vmem:[%s265 + $0x188] sm:$0xff]
        %v321 = vld [vmem:[%s265 + $0x190] sm:$0xff]
        %v322 = vld [vmem:[%s265 + $0x198] sm:$0xff]
        %v323 = vld [vmem:[%s265 + $0x1a0] sm:$0xff]
        %v324 = vld [vmem:[%s265 + $0x1a8] sm:$0xff]
        %v325 = vld [vmem:[%s265 + $0x1b0] sm:$0xff]
        %v326 = vld [vmem:[%s265 + $0x1b8] sm:$0xff]
        %v327 = vld [vmem:[%s265 + $0x1c0] sm:$0xff]
        %v328 = vld [vmem:[%s265 + $0x1c8] sm:$0xff]
        %v329 = vld [vmem:[%s265 + $0x1d0] sm:$0xff]
        %v330 = vld [vmem:[%s265 + $0x1d8] sm:$0xff]
        %v331 = vld [vmem:[%s265 + $0x1e0] sm:$0xff]
        %v332 = vld [vmem:[%s265 + $0x1e8] sm:$0xff]
        %v333 = vld [vmem:[%s265 + $0x1f0] sm:$0xff]
        %v334 = vld [vmem:[%s265 + $0x1f8] sm:$0xff]
        %v335 = vld [vmem:[%s265 + $0x200] sm:$0xff]
        %v336 = vld [vmem:[%s265 + $0x208] sm:$0xff]
        %v337 = vld [vmem:[%s265 + $0x210] sm:$0xff]
        %v338 = vld [vmem:[%s265 + $0x218] sm:$0xff]
        %v339 = vld [vmem:[%s265 + $0x220] sm:$0xff]
        %v340 = vld [vmem:[%s265 + $0x228] sm:$0xff]
        %v341 = vld [vmem:[%s265 + $0x230] sm:$0xff]
        %v342 = vld [vmem:[%s265 + $0x238] sm:$0xff]
        %v343 = vld [vmem:[%s265 + $0x240] sm:$0xff]
        %v344 = vld [vmem:[%s265 + $0x248] sm:$0xff]
        %v345 = vld [vmem:[%s265 + $0x250] sm:$0xff]
        %v346 = vld [vmem:[%s265 + $0x258] sm:$0xff]
        %v347 = vld [vmem:[%s265 + $0x260] sm:$0xff]
        %v348 = vld [vmem:[%s265 + $0x268] sm:$0xff]
        %v349 = vld [vmem:[%s265 + $0x270] sm:$0xff]
        %v350 = vld [vmem:[%s265 + $0x278] sm:$0xff]
        %v351 = vld [vmem:[%s265 + $0x280] sm:$0xff]
        %v352 = vld [vmem:[%s265 + $0x288] sm:$0xff]
        %v353 = vld [vmem:[%s265 + $0x290] sm:$0xff]
        %v354 = vld [vmem:[%s265 + $0x298] sm:$0xff]
        %v355 = vld [vmem:[%s265 + $0x2a0] sm:$0xff]
        %v356 = vld [vmem:[%s265 + $0x2a8] sm:$0xff]
        %v357 = vld [vmem:[%s265 + $0x2b0] sm:$0xff]
        %v358 = vld [vmem:[%s265 + $0x2b8] sm:$0xff]
        %v359 = vld [vmem:[%s265 + $0x2c0] sm:$0xff]
        %v360 = vld [vmem:[%s265 + $0x2c8] sm:$0xff]
        %v361 = vld [vmem:[%s265 + $0x2d0] sm:$0xff]
        %v362 = vld [vmem:[#allocation4] sm:$0xff]
        %v363 = vld [vmem:[#allocation4 + $0x8] sm:$0x1]
        %v364 = vld [vmem:[#allocation6] sm:$0x1]
        %v366 = vperm.slane %v364, 0
        %vm368 = vcmask 72704
        %v370 = vsel %vm368, %v271, 0
        %v373 = vsel %vm368, %v272, 0
        %v376 = vsel %vm368, %v273, 0
        %v379 = vsel %vm368, %v274, 0
        %v382 = vsel %vm368, %v275, 0
        %v385 = vsel %vm368, %v276, 0
        %v388 = vsel %vm368, %v277, 0
        %v391 = vsel %vm368, %v278, 0
        %v394 = vsel %vm368, %v279, 0
        %v397 = vsel %vm368, %v280, 0
        %v400 = vsel %vm368, %v281, 0
        %v403 = vsel %vm368, %v282, 0
        %v406 = vsel %vm368, %v283, 0
        %v409 = vsel %vm368, %v284, 0
        %v412 = vsel %vm368, %v285, 0
        %v415 = vsel %vm368, %v286, 0
        %v418 = vsel %vm368, %v287, 0
        %v421 = vsel %vm368, %v288, 0
        %v424 = vsel %vm368, %v289, 0
        %v427 = vsel %vm368, %v290, 0
        %v430 = vsel %vm368, %v291, 0
        %v433 = vsel %vm368, %v292, 0
        %v436 = vsel %vm368, %v293, 0
        %v439 = vsel %vm368, %v294, 0
        %v442 = vsel %vm368, %v295, 0
        %v445 = vsel %vm368, %v296, 0
        %v448 = vsel %vm368, %v297, 0
        %v451 = vsel %vm368, %v298, 0
        %v454 = vsel %vm368, %v299, 0
        %v457 = vsel %vm368, %v300, 0
        %v460 = vsel %vm368, %v301, 0
        %v463 = vsel %vm368, %v302, 0
        %v466 = vsel %vm368, %v303, 0
        %v469 = vsel %vm368, %v304, 0
        %v472 = vsel %vm368, %v305, 0
        %v475 = vsel %vm368, %v306, 0
        %v478 = vsel %vm368, %v307, 0
        %v481 = vsel %vm368, %v308, 0
        %v484 = vsel %vm368, %v309, 0
        %v487 = vsel %vm368, %v310, 0
        %v490 = vsel %vm368, %v311, 0
        %v493 = vsel %vm368, %v312, 0
        %v496 = vsel %vm368, %v313, 0
        %v499 = vsel %vm368, %v314, 0
        %v502 = vsel %vm368, %v315, 0
        %v505 = vsel %vm368, %v316, 0
        %v508 = vsel %vm368, %v317, 0
        %v511 = vsel %vm368, %v318, 0
        %v514 = vsel %vm368, %v319, 0
        %v517 = vsel %vm368, %v320, 0
        %v520 = vsel %vm368, %v321, 0
        %v523 = vsel %vm368, %v322, 0
        %v526 = vsel %vm368, %v323, 0
        %v529 = vsel %vm368, %v324, 0
        %v532 = vsel %vm368, %v325, 0
        %v535 = vsel %vm368, %v326, 0
        %v538 = vsel %vm368, %v327, 0
        %v541 = vsel %vm368, %v328, 0
        %v544 = vsel %vm368, %v329, 0
        %v547 = vsel %vm368, %v330, 0
        %v550 = vsel %vm368, %v331, 0
        %v553 = vsel %vm368, %v332, 0
        %v556 = vsel %vm368, %v333, 0
        %v559 = vsel %vm368, %v334, 0
        %v562 = vsel %vm368, %v335, 0
        %v565 = vsel %vm368, %v336, 0
        %v568 = vsel %vm368, %v337, 0
        %v571 = vsel %vm368, %v338, 0
        %v574 = vsel %vm368, %v339, 0
        %v577 = vsel %vm368, %v340, 0
        %v580 = vsel %vm368, %v341, 0
        %v583 = vsel %vm368, %v342, 0
        %v586 = vsel %vm368, %v343, 0
        %v589 = vsel %vm368, %v344, 0
        %v592 = vsel %vm368, %v345, 0
        %v595 = vsel %vm368, %v346, 0
        %v598 = vsel %vm368, %v347, 0
        %v601 = vsel %vm368, %v348, 0
        %v604 = vsel %vm368, %v349, 0
        %v607 = vsel %vm368, %v350, 0
        %v610 = vsel %vm368, %v351, 0
        %v613 = vsel %vm368, %v352, 0
        %v616 = vsel %vm368, %v353, 0
        %v619 = vsel %vm368, %v354, 0
        %v622 = vsel %vm368, %v355, 0
        %v625 = vsel %vm368, %v356, 0
        %v628 = vsel %vm368, %v357, 0
        %v631 = vsel %vm368, %v358, 0
        %v634 = vsel %vm368, %v359, 0
        %v637 = vsel %vm368, %v360, 0
        %v640 = vsel %vm368, %v361, 0
        %vm642 = vcmask 1040384
        %v644 = vsel %vm642, %v363, 0
        %646 = vmatpush.msra.mxu0 0.0
        %647 = vmatpush.msra.mxu0 0.0
        %648 = vmatpush.msra.mxu0 0.0
        %649 = vmatpush.msra.mxu0 0.0
        %650 = vmatpush.msra.mxu0 0.0
        %651 = vmatpush.msra.mxu0 0.0
        %652 = vmatpush.msra.mxu0 0.0
        %653 = vmatpush.msra.mxu0 0.0
        %654 = vmatpush.msra.mxu0 0.0
        %655 = vmatpush.msra.mxu0 0.0
        %656 = vmatpush.msra.mxu0 0.0
        %657 = vmatpush.msra.mxu0 0.0
        %658 = vmatpush.msra.mxu0 0.0
        %659 = vmatpush.msra.mxu0 0.0
        %660 = vmatpush.msra.mxu0 %v644
        %661 = vmatpush.msra.mxu0 %v362
        %662 = vmatmul.f32.gmra.mxu0 %v370
        %v663 = vpop.f32.mrf.mxu0
        %v664 = vadd.f32 %v366, %v663
        %665 = vmatmul.f32.gmra.mxu0 %v373
        %v666 = vpop.f32.mrf.mxu0
        %v667 = vadd.f32 %v366, %v666
        %668 = vmatmul.f32.gmra.mxu0 %v376
        %v669 = vpop.f32.mrf.mxu0
        %v670 = vadd.f32 %v366, %v669
        %671 = vmatmul.f32.gmra.mxu0 %v379
        %v672 = vpop.f32.mrf.mxu0
        %v673 = vadd.f32 %v366, %v672
        %674 = vmatmul.f32.gmra.mxu0 %v382
        %v675 = vpop.f32.mrf.mxu0
        %v676 = vadd.f32 %v366, %v675
        %677 = vmatmul.f32.gmra.mxu0 %v385
        %v678 = vpop.f32.mrf.mxu0
        %v679 = vadd.f32 %v366, %v678
        %680 = vmatmul.f32.gmra.mxu0 %v388
        %v681 = vpop.f32.mrf.mxu0
        %v682 = vadd.f32 %v366, %v681
        %683 = vmatmul.f32.gmra.mxu0 %v391
        %v684 = vpop.f32.mrf.mxu0
        %v685 = vadd.f32 %v366, %v684
        %686 = vmatmul.f32.gmra.mxu0 %v394
        %v687 = vpop.f32.mrf.mxu0
        %v688 = vadd.f32 %v366, %v687
        %689 = vmatmul.f32.gmra.mxu0 %v397
        %v690 = vpop.f32.mrf.mxu0
        %v691 = vadd.f32 %v366, %v690
        %692 = vmatmul.f32.gmra.mxu0 %v400
        %v693 = vpop.f32.mrf.mxu0
        %v694 = vadd.f32 %v366, %v693
        %695 = vmatmul.f32.gmra.mxu0 %v403
        %v696 = vpop.f32.mrf.mxu0
        %v697 = vadd.f32 %v366, %v696
        %698 = vmatmul.f32.gmra.mxu0 %v406
        %v699 = vpop.f32.mrf.mxu0
        %v700 = vadd.f32 %v366, %v699
        %701 = vmatmul.f32.gmra.mxu0 %v409
        %v702 = vpop.f32.mrf.mxu0
        %v703 = vadd.f32 %v366, %v702
        %704 = vmatmul.f32.gmra.mxu0 %v412
        %v705 = vpop.f32.mrf.mxu0
        %v706 = vadd.f32 %v366, %v705
        %707 = vmatmul.f32.gmra.mxu0 %v415
        %v708 = vpop.f32.mrf.mxu0
        %v709 = vadd.f32 %v366, %v708
        %710 = vmatmul.f32.gmra.mxu0 %v418
        %v711 = vpop.f32.mrf.mxu0
        %v712 = vadd.f32 %v366, %v711
        %713 = vmatmul.f32.gmra.mxu0 %v421
        %v714 = vpop.f32.mrf.mxu0
        %v715 = vadd.f32 %v366, %v714
        %716 = vmatmul.f32.gmra.mxu0 %v424
        %v717 = vpop.f32.mrf.mxu0
        %v718 = vadd.f32 %v366, %v717
        %719 = vmatmul.f32.gmra.mxu0 %v427
        %v720 = vpop.f32.mrf.mxu0
        %v721 = vadd.f32 %v366, %v720
        %722 = vmatmul.f32.gmra.mxu0 %v430
        %v723 = vpop.f32.mrf.mxu0
        %v724 = vadd.f32 %v366, %v723
        %725 = vmatmul.f32.gmra.mxu0 %v433
        %v726 = vpop.f32.mrf.mxu0
        %v727 = vadd.f32 %v366, %v726
        %728 = vmatmul.f32.gmra.mxu0 %v436
        %v729 = vpop.f32.mrf.mxu0
        %v730 = vadd.f32 %v366, %v729
        %731 = vmatmul.f32.gmra.mxu0 %v439
        %v732 = vpop.f32.mrf.mxu0
        %v733 = vadd.f32 %v366, %v732
        %734 = vmatmul.f32.gmra.mxu0 %v442
        %v735 = vpop.f32.mrf.mxu0
        %v736 = vadd.f32 %v366, %v735
        %737 = vmatmul.f32.gmra.mxu0 %v445
        %v738 = vpop.f32.mrf.mxu0
        %v739 = vadd.f32 %v366, %v738
        %740 = vmatmul.f32.gmra.mxu0 %v448
        %v741 = vpop.f32.mrf.mxu0
        %v742 = vadd.f32 %v366, %v741
        %743 = vmatmul.f32.gmra.mxu0 %v451
        %v744 = vpop.f32.mrf.mxu0
        %v745 = vadd.f32 %v366, %v744
        %746 = vmatmul.f32.gmra.mxu0 %v454
        %v747 = vpop.f32.mrf.mxu0
        %v748 = vadd.f32 %v366, %v747
        %749 = vmatmul.f32.gmra.mxu0 %v457
        %v750 = vpop.f32.mrf.mxu0
        %v751 = vadd.f32 %v366, %v750
        %752 = vmatmul.f32.gmra.mxu0 %v460
        %v753 = vpop.f32.mrf.mxu0
        %v754 = vadd.f32 %v366, %v753
        %755 = vmatmul.f32.gmra.mxu0 %v463
        %v756 = vpop.f32.mrf.mxu0
        %v757 = vadd.f32 %v366, %v756
        %758 = vmatmul.f32.gmra.mxu0 %v466
        %v759 = vpop.f32.mrf.mxu0
        %v760 = vadd.f32 %v366, %v759
        %761 = vmatmul.f32.gmra.mxu0 %v469
        %v762 = vpop.f32.mrf.mxu0
        %v763 = vadd.f32 %v366, %v762
        %764 = vmatmul.f32.gmra.mxu0 %v472
        %v765 = vpop.f32.mrf.mxu0
        %v766 = vadd.f32 %v366, %v765
        %767 = vmatmul.f32.gmra.mxu0 %v475
        %v768 = vpop.f32.mrf.mxu0
        %v769 = vadd.f32 %v366, %v768
        %770 = vmatmul.f32.gmra.mxu0 %v478
        %v771 = vpop.f32.mrf.mxu0
        %v772 = vadd.f32 %v366, %v771
        %773 = vmatmul.f32.gmra.mxu0 %v481
        %v774 = vpop.f32.mrf.mxu0
        %v775 = vadd.f32 %v366, %v774
        %776 = vmatmul.f32.gmra.mxu0 %v484
        %v777 = vpop.f32.mrf.mxu0
        %v778 = vadd.f32 %v366, %v777
        %779 = vmatmul.f32.gmra.mxu0 %v487
        %v780 = vpop.f32.mrf.mxu0
        %v781 = vadd.f32 %v366, %v780
        %782 = vmatmul.f32.gmra.mxu0 %v490
        %v783 = vpop.f32.mrf.mxu0
        %v784 = vadd.f32 %v366, %v783
        %785 = vmatmul.f32.gmra.mxu0 %v493
        %v786 = vpop.f32.mrf.mxu0
        %v787 = vadd.f32 %v366, %v786
        %788 = vmatmul.f32.gmra.mxu0 %v496
        %v789 = vpop.f32.mrf.mxu0
        %v790 = vadd.f32 %v366, %v789
        %791 = vmatmul.f32.gmra.mxu0 %v499
        %v792 = vpop.f32.mrf.mxu0
        %v793 = vadd.f32 %v366, %v792
        %794 = vmatmul.f32.gmra.mxu0 %v502
        %v795 = vpop.f32.mrf.mxu0
        %v796 = vadd.f32 %v366, %v795
        %797 = vmatmul.f32.gmra.mxu0 %v505
        %v798 = vpop.f32.mrf.mxu0
        %v799 = vadd.f32 %v366, %v798
        %800 = vmatmul.f32.gmra.mxu0 %v508
        %v801 = vpop.f32.mrf.mxu0
        %v802 = vadd.f32 %v366, %v801
        %803 = vmatmul.f32.gmra.mxu0 %v511
        %v804 = vpop.f32.mrf.mxu0
        %v805 = vadd.f32 %v366, %v804
        %806 = vmatmul.f32.gmra.mxu0 %v514
        %v807 = vpop.f32.mrf.mxu0
        %v808 = vadd.f32 %v366, %v807
        %809 = vmatmul.f32.gmra.mxu0 %v517
        %v810 = vpop.f32.mrf.mxu0
        %v811 = vadd.f32 %v366, %v810
        %812 = vmatmul.f32.gmra.mxu0 %v520
        %v813 = vpop.f32.mrf.mxu0
        %v814 = vadd.f32 %v366, %v813
        %815 = vmatmul.f32.gmra.mxu0 %v523
        %v816 = vpop.f32.mrf.mxu0
        %v817 = vadd.f32 %v366, %v816
        %818 = vmatmul.f32.gmra.mxu0 %v526
        %v819 = vpop.f32.mrf.mxu0
        %v820 = vadd.f32 %v366, %v819
        %821 = vmatmul.f32.gmra.mxu0 %v529
        %v822 = vpop.f32.mrf.mxu0
        %v823 = vadd.f32 %v366, %v822
        %824 = vmatmul.f32.gmra.mxu0 %v532
        %v825 = vpop.f32.mrf.mxu0
        %v826 = vadd.f32 %v366, %v825
        %827 = vmatmul.f32.gmra.mxu0 %v535
        %v828 = vpop.f32.mrf.mxu0
        %v829 = vadd.f32 %v366, %v828
        %830 = vmatmul.f32.gmra.mxu0 %v538
        %v831 = vpop.f32.mrf.mxu0
        %v832 = vadd.f32 %v366, %v831
        %833 = vmatmul.f32.gmra.mxu0 %v541
        %v834 = vpop.f32.mrf.mxu0
        %v835 = vadd.f32 %v366, %v834
        %836 = vmatmul.f32.gmra.mxu0 %v544
        %v837 = vpop.f32.mrf.mxu0
        %v838 = vadd.f32 %v366, %v837
        %839 = vmatmul.f32.gmra.mxu0 %v547
        %v840 = vpop.f32.mrf.mxu0
        %v841 = vadd.f32 %v366, %v840
        %842 = vmatmul.f32.gmra.mxu0 %v550
        %v843 = vpop.f32.mrf.mxu0
        %v844 = vadd.f32 %v366, %v843
        %845 = vmatmul.f32.gmra.mxu0 %v553
        %v846 = vpop.f32.mrf.mxu0
        %v847 = vadd.f32 %v366, %v846
        %848 = vmatmul.f32.gmra.mxu0 %v556
        %v849 = vpop.f32.mrf.mxu0
        %v850 = vadd.f32 %v366, %v849
        %851 = vmatmul.f32.gmra.mxu0 %v559
        %v852 = vpop.f32.mrf.mxu0
        %v853 = vadd.f32 %v366, %v852
        %854 = vmatmul.f32.gmra.mxu0 %v562
        %v855 = vpop.f32.mrf.mxu0
        %v856 = vadd.f32 %v366, %v855
        %857 = vmatmul.f32.gmra.mxu0 %v565
        %v858 = vpop.f32.mrf.mxu0
        %v859 = vadd.f32 %v366, %v858
        %860 = vmatmul.f32.gmra.mxu0 %v568
        %v861 = vpop.f32.mrf.mxu0
        %v862 = vadd.f32 %v366, %v861
        %863 = vmatmul.f32.gmra.mxu0 %v571
        %v864 = vpop.f32.mrf.mxu0
        %v865 = vadd.f32 %v366, %v864
        %866 = vmatmul.f32.gmra.mxu0 %v574
        %v867 = vpop.f32.mrf.mxu0
        %v868 = vadd.f32 %v366, %v867
        %869 = vmatmul.f32.gmra.mxu0 %v577
        %v870 = vpop.f32.mrf.mxu0
        %v871 = vadd.f32 %v366, %v870
        %872 = vmatmul.f32.gmra.mxu0 %v580
        %v873 = vpop.f32.mrf.mxu0
        %v874 = vadd.f32 %v366, %v873
        %875 = vmatmul.f32.gmra.mxu0 %v583
        %v876 = vpop.f32.mrf.mxu0
        %v877 = vadd.f32 %v366, %v876
        %878 = vmatmul.f32.gmra.mxu0 %v586
        %v879 = vpop.f32.mrf.mxu0
        %v880 = vadd.f32 %v366, %v879
        %881 = vmatmul.f32.gmra.mxu0 %v589
        %v882 = vpop.f32.mrf.mxu0
        %v883 = vadd.f32 %v366, %v882
        %884 = vmatmul.f32.gmra.mxu0 %v592
        %v885 = vpop.f32.mrf.mxu0
        %v886 = vadd.f32 %v366, %v885
        %887 = vmatmul.f32.gmra.mxu0 %v595
        %v888 = vpop.f32.mrf.mxu0
        %v889 = vadd.f32 %v366, %v888
        %890 = vmatmul.f32.gmra.mxu0 %v598
        %v891 = vpop.f32.mrf.mxu0
        %v892 = vadd.f32 %v366, %v891
        %893 = vmatmul.f32.gmra.mxu0 %v601
        %v894 = vpop.f32.mrf.mxu0
        %v895 = vadd.f32 %v366, %v894
        %896 = vmatmul.f32.gmra.mxu0 %v604
        %v897 = vpop.f32.mrf.mxu0
        %v898 = vadd.f32 %v366, %v897
        %899 = vmatmul.f32.gmra.mxu0 %v607
        %v900 = vpop.f32.mrf.mxu0
        %v901 = vadd.f32 %v366, %v900
        %902 = vmatmul.f32.gmra.mxu0 %v610
        %v903 = vpop.f32.mrf.mxu0
        %v904 = vadd.f32 %v366, %v903
        %905 = vmatmul.f32.gmra.mxu0 %v613
        %v906 = vpop.f32.mrf.mxu0
        %v907 = vadd.f32 %v366, %v906
        %908 = vmatmul.f32.gmra.mxu0 %v616
        %v909 = vpop.f32.mrf.mxu0
        %v910 = vadd.f32 %v366, %v909
        %911 = vmatmul.f32.gmra.mxu0 %v619
        %v912 = vpop.f32.mrf.mxu0
        %v913 = vadd.f32 %v366, %v912
        %914 = vmatmul.f32.gmra.mxu0 %v622
        %v915 = vpop.f32.mrf.mxu0
        %v916 = vadd.f32 %v366, %v915
        %917 = vmatmul.f32.gmra.mxu0 %v625
        %v918 = vpop.f32.mrf.mxu0
        %v919 = vadd.f32 %v366, %v918
        %920 = vmatmul.f32.gmra.mxu0 %v628
        %v921 = vpop.f32.mrf.mxu0
        %v922 = vadd.f32 %v366, %v921
        %923 = vmatmul.f32.gmra.mxu0 %v631
        %v924 = vpop.f32.mrf.mxu0
        %v925 = vadd.f32 %v366, %v924
        %926 = vmatmul.f32.gmra.mxu0 %v634
        %v927 = vpop.f32.mrf.mxu0
        %v928 = vadd.f32 %v366, %v927
        %929 = vmatmul.f32.gmra.mxu0 %v637
        %v930 = vpop.f32.mrf.mxu0
        %v931 = vadd.f32 %v366, %v930
        %932 = vmatmul.f32.gmra.mxu0 %v640
        %v933 = vpop.f32.mrf.mxu0
        %v934 = vadd.f32 %v366, %v933
        %935 = vdwg.mxu0
        %v936 = vmax.f32 %v664, 0.0
        %v937 = vmax.f32 %v667, 0.0
        %v938 = vmax.f32 %v670, 0.0
        %v939 = vmax.f32 %v673, 0.0
        %v940 = vmax.f32 %v676, 0.0
        %v941 = vmax.f32 %v679, 0.0
        %v942 = vmax.f32 %v682, 0.0
        %v943 = vmax.f32 %v685, 0.0
        %v944 = vmax.f32 %v688, 0.0
        %v945 = vmax.f32 %v691, 0.0
        %v946 = vmax.f32 %v694, 0.0
        %v947 = vmax.f32 %v697, 0.0
        %v948 = vmax.f32 %v700, 0.0
        %v949 = vmax.f32 %v703, 0.0
        %v950 = vmax.f32 %v706, 0.0
        %v951 = vmax.f32 %v709, 0.0
        %v952 = vmax.f32 %v712, 0.0
        %v953 = vmax.f32 %v715, 0.0
        %v954 = vmax.f32 %v718, 0.0
        %v955 = vmax.f32 %v721, 0.0
        %v956 = vmax.f32 %v724, 0.0
        %v957 = vmax.f32 %v727, 0.0
        %v958 = vmax.f32 %v730, 0.0
        %v959 = vmax.f32 %v733, 0.0
        %v960 = vmax.f32 %v736, 0.0
        %v961 = vmax.f32 %v739, 0.0
        %v962 = vmax.f32 %v742, 0.0
        %v963 = vmax.f32 %v745, 0.0
        %v964 = vmax.f32 %v748, 0.0
        %v965 = vmax.f32 %v751, 0.0
        %v966 = vmax.f32 %v754, 0.0
        %v967 = vmax.f32 %v757, 0.0
        %v968 = vmax.f32 %v760, 0.0
        %v969 = vmax.f32 %v763, 0.0
        %v970 = vmax.f32 %v766, 0.0
        %v971 = vmax.f32 %v769, 0.0
        %v972 = vmax.f32 %v772, 0.0
        %v973 = vmax.f32 %v775, 0.0
        %v974 = vmax.f32 %v778, 0.0
        %v975 = vmax.f32 %v781, 0.0
        %v976 = vmax.f32 %v784, 0.0
        %v977 = vmax.f32 %v787, 0.0
        %v978 = vmax.f32 %v790, 0.0
        %v979 = vmax.f32 %v793, 0.0
        %v980 = vmax.f32 %v796, 0.0
        %v981 = vmax.f32 %v799, 0.0
        %v982 = vmax.f32 %v802, 0.0
        %v983 = vmax.f32 %v805, 0.0
        %v984 = vmax.f32 %v808, 0.0
        %v985 = vmax.f32 %v811, 0.0
        %v986 = vmax.f32 %v814, 0.0
        %v987 = vmax.f32 %v817, 0.0
        %v988 = vmax.f32 %v820, 0.0
        %v989 = vmax.f32 %v823, 0.0
        %v990 = vmax.f32 %v826, 0.0
        %v991 = vmax.f32 %v829, 0.0
        %v992 = vmax.f32 %v832, 0.0
        %v993 = vmax.f32 %v835, 0.0
        %v994 = vmax.f32 %v838, 0.0
        %v995 = vmax.f32 %v841, 0.0
        %v996 = vmax.f32 %v844, 0.0
        %v997 = vmax.f32 %v847, 0.0
        %v998 = vmax.f32 %v850, 0.0
        %v999 = vmax.f32 %v853, 0.0
        %v1000 = vmax.f32 %v856, 0.0
        %v1001 = vmax.f32 %v859, 0.0
        %v1002 = vmax.f32 %v862, 0.0
        %v1003 = vmax.f32 %v865, 0.0
        %v1004 = vmax.f32 %v868, 0.0
        %v1005 = vmax.f32 %v871, 0.0
        %v1006 = vmax.f32 %v874, 0.0
        %v1007 = vmax.f32 %v877, 0.0
        %v1008 = vmax.f32 %v880, 0.0
        %v1009 = vmax.f32 %v883, 0.0
        %v1010 = vmax.f32 %v886, 0.0
        %v1011 = vmax.f32 %v889, 0.0
        %v1012 = vmax.f32 %v892, 0.0
        %v1013 = vmax.f32 %v895, 0.0
        %v1014 = vmax.f32 %v898, 0.0
        %v1015 = vmax.f32 %v901, 0.0
        %v1016 = vmax.f32 %v904, 0.0
        %v1017 = vmax.f32 %v907, 0.0
        %v1018 = vmax.f32 %v910, 0.0
        %v1019 = vmax.f32 %v913, 0.0
        %v1020 = vmax.f32 %v916, 0.0
        %v1021 = vmax.f32 %v919, 0.0
        %v1022 = vmax.f32 %v922, 0.0
        %v1023 = vmax.f32 %v925, 0.0
        %v1024 = vmax.f32 %v928, 0.0
        %v1025 = vmax.f32 %v931, 0.0
        %v1026 = vmax.f32 %v934, 0.0
        %vm1027 = vcmask 261120
        %1028 = vst.msk [vmem:[#allocation2] sm:$0xff] %vm1027, %v936
        %1029 = vst.msk [vmem:[#allocation2 + $0x8] sm:$0xff] %vm1027, %v937
        %1030 = vst.msk [vmem:[#allocation2 + $0x10] sm:$0xff] %vm1027, %v938
        %1031 = vst.msk [vmem:[#allocation2 + $0x18] sm:$0xff] %vm1027, %v939
        %1032 = vst.msk [vmem:[#allocation2 + $0x20] sm:$0xff] %vm1027, %v940
        %1033 = vst.msk [vmem:[#allocation2 + $0x28] sm:$0xff] %vm1027, %v941
        %1034 = vst.msk [vmem:[#allocation2 + $0x30] sm:$0xff] %vm1027, %v942
        %1035 = vst.msk [vmem:[#allocation2 + $0x38] sm:$0xff] %vm1027, %v943
        %1036 = vst.msk [vmem:[#allocation2 + $0x40] sm:$0xff] %vm1027, %v944
        %1037 = vst.msk [vmem:[#allocation2 + $0x48] sm:$0xff] %vm1027, %v945
        %1038 = vst.msk [vmem:[#allocation2 + $0x50] sm:$0xff] %vm1027, %v946
        %1039 = vst.msk [vmem:[#allocation2 + $0x58] sm:$0xff] %vm1027, %v947
        %1040 = vst.msk [vmem:[#allocation2 + $0x60] sm:$0xff] %vm1027, %v948
        %1041 = vst.msk [vmem:[#allocation2 + $0x68] sm:$0xff] %vm1027, %v949
        %1042 = vst.msk [vmem:[#allocation2 + $0x70] sm:$0xff] %vm1027, %v950
        %1043 = vst.msk [vmem:[#allocation2 + $0x78] sm:$0xff] %vm1027, %v951
        %1044 = vst.msk [vmem:[#allocation2 + $0x80] sm:$0xff] %vm1027, %v952
        %1045 = vst.msk [vmem:[#allocation2 + $0x88] sm:$0xff] %vm1027, %v953
        %1046 = vst.msk [vmem:[#allocation2 + $0x90] sm:$0xff] %vm1027, %v954
        %1047 = vst.msk [vmem:[#allocation2 + $0x98] sm:$0xff] %vm1027, %v955
        %1048 = vst.msk [vmem:[#allocation2 + $0xa0] sm:$0xff] %vm1027, %v956
        %1049 = vst.msk [vmem:[#allocation2 + $0xa8] sm:$0xff] %vm1027, %v957
        %1050 = vst.msk [vmem:[#allocation2 + $0xb0] sm:$0xff] %vm1027, %v958
        %1051 = vst.msk [vmem:[#allocation2 + $0xb8] sm:$0xff] %vm1027, %v959
        %1052 = vst.msk [vmem:[#allocation2 + $0xc0] sm:$0xff] %vm1027, %v960
        %1053 = vst.msk [vmem:[#allocation2 + $0xc8] sm:$0xff] %vm1027, %v961
        %1054 = vst.msk [vmem:[#allocation2 + $0xd0] sm:$0xff] %vm1027, %v962
        %1055 = vst.msk [vmem:[#allocation2 + $0xd8] sm:$0xff] %vm1027, %v963
        %1056 = vst.msk [vmem:[#allocation2 + $0xe0] sm:$0xff] %vm1027, %v964
        %1057 = vst.msk [vmem:[#allocation2 + $0xe8] sm:$0xff] %vm1027, %v965
        %1058 = vst.msk [vmem:[#allocation2 + $0xf0] sm:$0xff] %vm1027, %v966
        %1059 = vst.msk [vmem:[#allocation2 + $0xf8] sm:$0xff] %vm1027, %v967
        %1060 = vst.msk [vmem:[#allocation2 + $0x100] sm:$0xff] %vm1027, %v968
        %1061 = vst.msk [vmem:[#allocation2 + $0x108] sm:$0xff] %vm1027, %v969
        %1062 = vst.msk [vmem:[#allocation2 + $0x110] sm:$0xff] %vm1027, %v970
        %1063 = vst.msk [vmem:[#allocation2 + $0x118] sm:$0xff] %vm1027, %v971
        %1064 = vst.msk [vmem:[#allocation2 + $0x120] sm:$0xff] %vm1027, %v972
        %1065 = vst.msk [vmem:[#allocation2 + $0x128] sm:$0xff] %vm1027, %v973
        %1066 = vst.msk [vmem:[#allocation2 + $0x130] sm:$0xff] %vm1027, %v974
        %1067 = vst.msk [vmem:[#allocation2 + $0x138] sm:$0xff] %vm1027, %v975
        %1068 = vst.msk [vmem:[#allocation2 + $0x140] sm:$0xff] %vm1027, %v976
        %1069 = vst.msk [vmem:[#allocation2 + $0x148] sm:$0xff] %vm1027, %v977
        %1070 = vst.msk [vmem:[#allocation2 + $0x150] sm:$0xff] %vm1027, %v978
        %1071 = vst.msk [vmem:[#allocation2 + $0x158] sm:$0xff] %vm1027, %v979
        %1072 = vst.msk [vmem:[#allocation2 + $0x160] sm:$0xff] %vm1027, %v980
        %1073 = vst.msk [vmem:[#allocation2 + $0x168] sm:$0xff] %vm1027, %v981
        %1074 = vst.msk [vmem:[#allocation2 + $0x170] sm:$0xff] %vm1027, %v982
        %1075 = vst.msk [vmem:[#allocation2 + $0x178] sm:$0xff] %vm1027, %v983
        %1076 = vst.msk [vmem:[#allocation2 + $0x180] sm:$0xff] %vm1027, %v984
        %1077 = vst.msk [vmem:[#allocation2 + $0x188] sm:$0xff] %vm1027, %v985
        %1078 = vst.msk [vmem:[#allocation2 + $0x190] sm:$0xff] %vm1027, %v986
        %1079 = vst.msk [vmem:[#allocation2 + $0x198] sm:$0xff] %vm1027, %v987
        %1080 = vst.msk [vmem:[#allocation2 + $0x1a0] sm:$0xff] %vm1027, %v988
        %1081 = vst.msk [vmem:[#allocation2 + $0x1a8] sm:$0xff] %vm1027, %v989
        %1082 = vst.msk [vmem:[#allocation2 + $0x1b0] sm:$0xff] %vm1027, %v990
        %1083 = vst.msk [vmem:[#allocation2 + $0x1b8] sm:$0xff] %vm1027, %v991
        %1084 = vst.msk [vmem:[#allocation2 + $0x1c0] sm:$0xff] %vm1027, %v992
        %1085 = vst.msk [vmem:[#allocation2 + $0x1c8] sm:$0xff] %vm1027, %v993
        %1086 = vst.msk [vmem:[#allocation2 + $0x1d0] sm:$0xff] %vm1027, %v994
        %1087 = vst.msk [vmem:[#allocation2 + $0x1d8] sm:$0xff] %vm1027, %v995
        %1088 = vst.msk [vmem:[#allocation2 + $0x1e0] sm:$0xff] %vm1027, %v996
        %1089 = vst.msk [vmem:[#allocation2 + $0x1e8] sm:$0xff] %vm1027, %v997
        %1090 = vst.msk [vmem:[#allocation2 + $0x1f0] sm:$0xff] %vm1027, %v998
        %1091 = vst.msk [vmem:[#allocation2 + $0x1f8] sm:$0xff] %vm1027, %v999
        %1092 = vst.msk [vmem:[#allocation2 + $0x200] sm:$0xff] %vm1027, %v1000
        %1093 = vst.msk [vmem:[#allocation2 + $0x208] sm:$0xff] %vm1027, %v1001
        %1094 = vst.msk [vmem:[#allocation2 + $0x210] sm:$0xff] %vm1027, %v1002
        %1095 = vst.msk [vmem:[#allocation2 + $0x218] sm:$0xff] %vm1027, %v1003
        %1096 = vst.msk [vmem:[#allocation2 + $0x220] sm:$0xff] %vm1027, %v1004
        %1097 = vst.msk [vmem:[#allocation2 + $0x228] sm:$0xff] %vm1027, %v1005
        %1098 = vst.msk [vmem:[#allocation2 + $0x230] sm:$0xff] %vm1027, %v1006
        %1099 = vst.msk [vmem:[#allocation2 + $0x238] sm:$0xff] %vm1027, %v1007
        %1100 = vst.msk [vmem:[#allocation2 + $0x240] sm:$0xff] %vm1027, %v1008
        %1101 = vst.msk [vmem:[#allocation2 + $0x248] sm:$0xff] %vm1027, %v1009
        %1102 = vst.msk [vmem:[#allocation2 + $0x250] sm:$0xff] %vm1027, %v1010
        %1103 = vst.msk [vmem:[#allocation2 + $0x258] sm:$0xff] %vm1027, %v1011
        %1104 = vst.msk [vmem:[#allocation2 + $0x260] sm:$0xff] %vm1027, %v1012
        %1105 = vst.msk [vmem:[#allocation2 + $0x268] sm:$0xff] %vm1027, %v1013
        %1106 = vst.msk [vmem:[#allocation2 + $0x270] sm:$0xff] %vm1027, %v1014
        %1107 = vst.msk [vmem:[#allocation2 + $0x278] sm:$0xff] %vm1027, %v1015
        %1108 = vst.msk [vmem:[#allocation2 + $0x280] sm:$0xff] %vm1027, %v1016
        %1109 = vst.msk [vmem:[#allocation2 + $0x288] sm:$0xff] %vm1027, %v1017
        %1110 = vst.msk [vmem:[#allocation2 + $0x290] sm:$0xff] %vm1027, %v1018
        %1111 = vst.msk [vmem:[#allocation2 + $0x298] sm:$0xff] %vm1027, %v1019
        %1112 = vst.msk [vmem:[#allocation2 + $0x2a0] sm:$0xff] %vm1027, %v1020
        %1113 = vst.msk [vmem:[#allocation2 + $0x2a8] sm:$0xff] %vm1027, %v1021
        %1114 = vst.msk [vmem:[#allocation2 + $0x2b0] sm:$0xff] %vm1027, %v1022
        %1115 = vst.msk [vmem:[#allocation2 + $0x2b8] sm:$0xff] %vm1027, %v1023
        %1116 = vst.msk [vmem:[#allocation2 + $0x2c0] sm:$0xff] %vm1027, %v1024
        %1117 = vst.msk [vmem:[#allocation2 + $0x2c8] sm:$0xff] %vm1027, %v1025
        %1118 = vst.msk [vmem:[#allocation2 + $0x2d0] sm:$0xff] %vm1027, %v1026
        %1119 = vst.msk [vmem:[#allocation2 + $0x2d8] sm:$0xff] %vm1027, 0.0
        %v1120 = vld [vmem:[#allocation2] sm:$0xff]
        %v1121 = vld [vmem:[#allocation2 + $0x8] sm:$0xff]
        %v1122 = vld [vmem:[#allocation2 + $0x10] sm:$0xff]
        %v1123 = vld [vmem:[#allocation2 + $0x18] sm:$0xff]
        %v1124 = vld [vmem:[#allocation2 + $0x20] sm:$0xff]
        %v1125 = vld [vmem:[#allocation2 + $0x28] sm:$0xff]
        %v1126 = vld [vmem:[#allocation2 + $0x30] sm:$0xff]
        %v1127 = vld [vmem:[#allocation2 + $0x38] sm:$0xff]
        %v1128 = vld [vmem:[#allocation2 + $0x40] sm:$0xff]
        %v1129 = vld [vmem:[#allocation2 + $0x48] sm:$0xff]
        %v1130 = vld [vmem:[#allocation2 + $0x50] sm:$0xff]
        %v1131 = vld [vmem:[#allocation2 + $0x58] sm:$0xff]
        %v1132 = vld [vmem:[#allocation2 + $0x60] sm:$0xff]
        %v1133 = vld [vmem:[#allocation2 + $0x68] sm:$0xff]
        %v1134 = vld [vmem:[#allocation2 + $0x70] sm:$0xff]
        %v1135 = vld [vmem:[#allocation2 + $0x78] sm:$0xff]
        %v1136 = vld [vmem:[#allocation2 + $0x80] sm:$0xff]
        %v1137 = vld [vmem:[#allocation2 + $0x88] sm:$0xff]
        %v1138 = vld [vmem:[#allocation2 + $0x90] sm:$0xff]
        %v1139 = vld [vmem:[#allocation2 + $0x98] sm:$0xff]
        %v1140 = vld [vmem:[#allocation2 + $0xa0] sm:$0xff]
        %v1141 = vld [vmem:[#allocation2 + $0xa8] sm:$0xff]
        %v1142 = vld [vmem:[#allocation2 + $0xb0] sm:$0xff]
        %v1143 = vld [vmem:[#allocation2 + $0xb8] sm:$0xff]
        %v1144 = vld [vmem:[#allocation2 + $0xc0] sm:$0xff]
        %v1145 = vld [vmem:[#allocation2 + $0xc8] sm:$0xff]
        %v1146 = vld [vmem:[#allocation2 + $0xd0] sm:$0xff]
        %v1147 = vld [vmem:[#allocation2 + $0xd8] sm:$0xff]
        %v1148 = vld [vmem:[#allocation2 + $0xe0] sm:$0xff]
        %v1149 = vld [vmem:[#allocation2 + $0xe8] sm:$0xff]
        %v1150 = vld [vmem:[#allocation2 + $0xf0] sm:$0xff]
        %v1151 = vld [vmem:[#allocation2 + $0xf8] sm:$0xff]
        %v1152 = vld [vmem:[#allocation2 + $0x100] sm:$0xff]
        %v1153 = vld [vmem:[#allocation2 + $0x108] sm:$0xff]
        %v1154 = vld [vmem:[#allocation2 + $0x110] sm:$0xff]
        %v1155 = vld [vmem:[#allocation2 + $0x118] sm:$0xff]
        %v1156 = vld [vmem:[#allocation2 + $0x120] sm:$0xff]
        %v1157 = vld [vmem:[#allocation2 + $0x128] sm:$0xff]
        %v1158 = vld [vmem:[#allocation2 + $0x130] sm:$0xff]
        %v1159 = vld [vmem:[#allocation2 + $0x138] sm:$0xff]
        %v1160 = vld [vmem:[#allocation2 + $0x140] sm:$0xff]
        %v1161 = vld [vmem:[#allocation2 + $0x148] sm:$0xff]
        %v1162 = vld [vmem:[#allocation2 + $0x150] sm:$0xff]
        %v1163 = vld [vmem:[#allocation2 + $0x158] sm:$0xff]
        %v1164 = vld [vmem:[#allocation2 + $0x160] sm:$0xff]
        %v1165 = vld [vmem:[#allocation2 + $0x168] sm:$0xff]
        %v1166 = vld [vmem:[#allocation2 + $0x170] sm:$0xff]
        %v1167 = vld [vmem:[#allocation2 + $0x178] sm:$0xff]
        %v1168 = vld [vmem:[#allocation2 + $0x180] sm:$0xff]
        %v1169 = vld [vmem:[#allocation2 + $0x188] sm:$0xff]
        %v1170 = vld [vmem:[#allocation2 + $0x190] sm:$0xff]
        %v1171 = vld [vmem:[#allocation2 + $0x198] sm:$0xff]
        %v1172 = vld [vmem:[#allocation2 + $0x1a0] sm:$0xff]
        %v1173 = vld [vmem:[#allocation2 + $0x1a8] sm:$0xff]
        %v1174 = vld [vmem:[#allocation2 + $0x1b0] sm:$0xff]
        %v1175 = vld [vmem:[#allocation2 + $0x1b8] sm:$0xff]
        %v1176 = vld [vmem:[#allocation2 + $0x1c0] sm:$0xff]
        %v1177 = vld [vmem:[#allocation2 + $0x1c8] sm:$0xff]
        %v1178 = vld [vmem:[#allocation2 + $0x1d0] sm:$0xff]
        %v1179 = vld [vmem:[#allocation2 + $0x1d8] sm:$0xff]
        %v1180 = vld [vmem:[#allocation2 + $0x1e0] sm:$0xff]
        %v1181 = vld [vmem:[#allocation2 + $0x1e8] sm:$0xff]
        %v1182 = vld [vmem:[#allocation2 + $0x1f0] sm:$0xff]
        %v1183 = vld [vmem:[#allocation2 + $0x1f8] sm:$0xff]
        %v1184 = vld [vmem:[#allocation2 + $0x200] sm:$0xff]
        %v1185 = vld [vmem:[#allocation2 + $0x208] sm:$0xff]
        %v1186 = vld [vmem:[#allocation2 + $0x210] sm:$0xff]
        %v1187 = vld [vmem:[#allocation2 + $0x218] sm:$0xff]
        %v1188 = vld [vmem:[#allocation2 + $0x220] sm:$0xff]
        %v1189 = vld [vmem:[#allocation2 + $0x228] sm:$0xff]
        %v1190 = vld [vmem:[#allocation2 + $0x230] sm:$0xff]
        %v1191 = vld [vmem:[#allocation2 + $0x238] sm:$0xff]
        %v1192 = vld [vmem:[#allocation2 + $0x240] sm:$0xff]
        %v1193 = vld [vmem:[#allocation2 + $0x248] sm:$0xff]
        %v1194 = vld [vmem:[#allocation2 + $0x250] sm:$0xff]
        %v1195 = vld [vmem:[#allocation2 + $0x258] sm:$0xff]
        %v1196 = vld [vmem:[#allocation2 + $0x260] sm:$0xff]
        %v1197 = vld [vmem:[#allocation2 + $0x268] sm:$0xff]
        %v1198 = vld [vmem:[#allocation2 + $0x270] sm:$0xff]
        %v1199 = vld [vmem:[#allocation2 + $0x278] sm:$0xff]
        %v1200 = vld [vmem:[#allocation2 + $0x280] sm:$0xff]
        %v1201 = vld [vmem:[#allocation2 + $0x288] sm:$0xff]
        %v1202 = vld [vmem:[#allocation2 + $0x290] sm:$0xff]
        %v1203 = vld [vmem:[#allocation2 + $0x298] sm:$0xff]
        %v1204 = vld [vmem:[#allocation2 + $0x1] sm:$0xff]
        %v1205 = vld [vmem:[#allocation2 + $0x9] sm:$0xff]
        %v1206 = vld [vmem:[#allocation2 + $0x11] sm:$0xff]
        %v1207 = vld [vmem:[#allocation2 + $0x19] sm:$0xff]
        %v1208 = vld [vmem:[#allocation2 + $0x21] sm:$0xff]
        %v1209 = vld [vmem:[#allocation2 + $0x29] sm:$0xff]
        %v1210 = vld [vmem:[#allocation2 + $0x31] sm:$0xff]
        %v1211 = vld [vmem:[#allocation2 + $0x39] sm:$0xff]
        %v1212 = vld [vmem:[#allocation2 + $0x41] sm:$0xff]
        %v1213 = vld [vmem:[#allocation2 + $0x49] sm:$0xff]
        %v1214 = vld [vmem:[#allocation2 + $0x51] sm:$0xff]
        %v1215 = vld [vmem:[#allocation2 + $0x59] sm:$0xff]
        %v1216 = vld [vmem:[#allocation2 + $0x61] sm:$0xff]
        %v1217 = vld [vmem:[#allocation2 + $0x69] sm:$0xff]
        %v1218 = vld [vmem:[#allocation2 + $0x71] sm:$0xff]
        %v1219 = vld [vmem:[#allocation2 + $0x79] sm:$0xff]
        %v1220 = vld [vmem:[#allocation2 + $0x81] sm:$0xff]
        %v1221 = vld [vmem:[#allocation2 + $0x89] sm:$0xff]
        %v1222 = vld [vmem:[#allocation2 + $0x91] sm:$0xff]
        %v1223 = vld [vmem:[#allocation2 + $0x99] sm:$0xff]
        %v1224 = vld [vmem:[#allocation2 + $0xa1] sm:$0xff]
        %v1225 = vld [vmem:[#allocation2 + $0xa9] sm:$0xff]
        %v1226 = vld [vmem:[#allocation2 + $0xb1] sm:$0xff]
        %v1227 = vld [vmem:[#allocation2 + $0xb9] sm:$0xff]
        %v1228 = vld [vmem:[#allocation2 + $0xc1] sm:$0xff]
        %v1229 = vld [vmem:[#allocation2 + $0xc9] sm:$0xff]
        %v1230 = vld [vmem:[#allocation2 + $0xd1] sm:$0xff]
        %v1231 = vld [vmem:[#allocation2 + $0xd9] sm:$0xff]
        %v1232 = vld [vmem:[#allocation2 + $0xe1] sm:$0xff]
        %v1233 = vld [vmem:[#allocation2 + $0xe9] sm:$0xff]
        %v1234 = vld [vmem:[#allocation2 + $0xf1] sm:$0xff]
        %v1235 = vld [vmem:[#allocation2 + $0xf9] sm:$0xff]
        %v1236 = vld [vmem:[#allocation2 + $0x101] sm:$0xff]
        %v1237 = vld [vmem:[#allocation2 + $0x109] sm:$0xff]
        %v1238 = vld [vmem:[#allocation2 + $0x111] sm:$0xff]
        %v1239 = vld [vmem:[#allocation2 + $0x119] sm:$0xff]
        %v1240 = vld [vmem:[#allocation2 + $0x121] sm:$0xff]
        %v1241 = vld [vmem:[#allocation2 + $0x129] sm:$0xff]
        %v1242 = vld [vmem:[#allocation2 + $0x131] sm:$0xff]
        %v1243 = vld [vmem:[#allocation2 + $0x139] sm:$0xff]
        %v1244 = vld [vmem:[#allocation2 + $0x141] sm:$0xff]
        %v1245 = vld [vmem:[#allocation2 + $0x149] sm:$0xff]
        %v1246 = vld [vmem:[#allocation2 + $0x151] sm:$0xff]
        %v1247 = vld [vmem:[#allocation2 + $0x159] sm:$0xff]
        %v1248 = vld [vmem:[#allocation2 + $0x161] sm:$0xff]
        %v1249 = vld [vmem:[#allocation2 + $0x169] sm:$0xff]
        %v1250 = vld [vmem:[#allocation2 + $0x171] sm:$0xff]
        %v1251 = vld [vmem:[#allocation2 + $0x179] sm:$0xff]
        %v1252 = vld [vmem:[#allocation2 + $0x181] sm:$0xff]
        %v1253 = vld [vmem:[#allocation2 + $0x189] sm:$0xff]
        %v1254 = vld [vmem:[#allocation2 + $0x191] sm:$0xff]
        %v1255 = vld [vmem:[#allocation2 + $0x199] sm:$0xff]
        %v1256 = vld [vmem:[#allocation2 + $0x1a1] sm:$0xff]
        %v1257 = vld [vmem:[#allocation2 + $0x1a9] sm:$0xff]
        %v1258 = vld [vmem:[#allocation2 + $0x1b1] sm:$0xff]
        %v1259 = vld [vmem:[#allocation2 + $0x1b9] sm:$0xff]
        %v1260 = vld [vmem:[#allocation2 + $0x1c1] sm:$0xff]
        %v1261 = vld [vmem:[#allocation2 + $0x1c9] sm:$0xff]
        %v1262 = vld [vmem:[#allocation2 + $0x1d1] sm:$0xff]
        %v1263 = vld [vmem:[#allocation2 + $0x1d9] sm:$0xff]
        %v1264 = vld [vmem:[#allocation2 + $0x1e1] sm:$0xff]
        %v1265 = vld [vmem:[#allocation2 + $0x1e9] sm:$0xff]
        %v1266 = vld [vmem:[#allocation2 + $0x1f1] sm:$0xff]
        %v1267 = vld [vmem:[#allocation2 + $0x1f9] sm:$0xff]
        %v1268 = vld [vmem:[#allocation2 + $0x201] sm:$0xff]
        %v1269 = vld [vmem:[#allocation2 + $0x209] sm:$0xff]
        %v1270 = vld [vmem:[#allocation2 + $0x211] sm:$0xff]
        %v1271 = vld [vmem:[#allocation2 + $0x219] sm:$0xff]
        %v1272 = vld [vmem:[#allocation2 + $0x221] sm:$0xff]
        %v1273 = vld [vmem:[#allocation2 + $0x229] sm:$0xff]
        %v1274 = vld [vmem:[#allocation2 + $0x231] sm:$0xff]
        %v1275 = vld [vmem:[#allocation2 + $0x239] sm:$0xff]
        %v1276 = vld [vmem:[#allocation2 + $0x241] sm:$0xff]
        %v1277 = vld [vmem:[#allocation2 + $0x249] sm:$0xff]
        %v1278 = vld [vmem:[#allocation2 + $0x251] sm:$0xff]
        %v1279 = vld [vmem:[#allocation2 + $0x259] sm:$0xff]
        %v1280 = vld [vmem:[#allocation2 + $0x261] sm:$0xff]
        %v1281 = vld [vmem:[#allocation2 + $0x269] sm:$0xff]
        %v1282 = vld [vmem:[#allocation2 + $0x271] sm:$0xff]
        %v1283 = vld [vmem:[#allocation2 + $0x279] sm:$0xff]
        %v1284 = vld [vmem:[#allocation2 + $0x281] sm:$0xff]
        %v1285 = vld [vmem:[#allocation2 + $0x289] sm:$0xff]
        %v1286 = vld [vmem:[#allocation2 + $0x291] sm:$0xff]
        %v1287 = vld [vmem:[#allocation2 + $0x299] sm:$0xff]
        %v1288 = vld [vmem:[#allocation2 + $0x2] sm:$0xff]
        %v1289 = vld [vmem:[#allocation2 + $0xa] sm:$0xff]
        %v1290 = vld [vmem:[#allocation2 + $0x12] sm:$0xff]
        %v1291 = vld [vmem:[#allocation2 + $0x1a] sm:$0xff]
        %v1292 = vld [vmem:[#allocation2 + $0x22] sm:$0xff]
        %v1293 = vld [vmem:[#allocation2 + $0x2a] sm:$0xff]
        %v1294 = vld [vmem:[#allocation2 + $0x32] sm:$0xff]
        %v1295 = vld [vmem:[#allocation2 + $0x3a] sm:$0xff]
        %v1296 = vld [vmem:[#allocation2 + $0x42] sm:$0xff]
        %v1297 = vld [vmem:[#allocation2 + $0x4a] sm:$0xff]
        %v1298 = vld [vmem:[#allocation2 + $0x52] sm:$0xff]
        %v1299 = vld [vmem:[#allocation2 + $0x5a] sm:$0xff]
        %v1300 = vld [vmem:[#allocation2 + $0x62] sm:$0xff]
        %v1301 = vld [vmem:[#allocation2 + $0x6a] sm:$0xff]
        %v1302 = vld [vmem:[#allocation2 + $0x72] sm:$0xff]
        %v1303 = vld [vmem:[#allocation2 + $0x7a] sm:$0xff]
        %v1304 = vld [vmem:[#allocation2 + $0x82] sm:$0xff]
        %v1305 = vld [vmem:[#allocation2 + $0x8a] sm:$0xff]
        %v1306 = vld [vmem:[#allocation2 + $0x92] sm:$0xff]
        %v1307 = vld [vmem:[#allocation2 + $0x9a] sm:$0xff]
        %v1308 = vld [vmem:[#allocation2 + $0xa2] sm:$0xff]
        %v1309 = vld [vmem:[#allocation2 + $0xaa] sm:$0xff]
        %v1310 = vld [vmem:[#allocation2 + $0xb2] sm:$0xff]
        %v1311 = vld [vmem:[#allocation2 + $0xba] sm:$0xff]
        %v1312 = vld [vmem:[#allocation2 + $0xc2] sm:$0xff]
        %v1313 = vld [vmem:[#allocation2 + $0xca] sm:$0xff]
        %v1314 = vld [vmem:[#allocation2 + $0xd2] sm:$0xff]
        %v1315 = vld [vmem:[#allocation2 + $0xda] sm:$0xff]
        %v1316 = vld [vmem:[#allocation2 + $0xe2] sm:$0xff]
        %v1317 = vld [vmem:[#allocation2 + $0xea] sm:$0xff]
        %v1318 = vld [vmem:[#allocation2 + $0xf2] sm:$0xff]
        %v1319 = vld [vmem:[#allocation2 + $0xfa] sm:$0xff]
        %v1320 = vld [vmem:[#allocation2 + $0x102] sm:$0xff]
        %v1321 = vld [vmem:[#allocation2 + $0x10a] sm:$0xff]
        %v1322 = vld [vmem:[#allocation2 + $0x112] sm:$0xff]
        %v1323 = vld [vmem:[#allocation2 + $0x11a] sm:$0xff]
        %v1324 = vld [vmem:[#allocation2 + $0x122] sm:$0xff]
        %v1325 = vld [vmem:[#allocation2 + $0x12a] sm:$0xff]
        %v1326 = vld [vmem:[#allocation2 + $0x132] sm:$0xff]
        %v1327 = vld [vmem:[#allocation2 + $0x13a] sm:$0xff]
        %v1328 = vld [vmem:[#allocation2 + $0x142] sm:$0xff]
        %v1329 = vld [vmem:[#allocation2 + $0x14a] sm:$0xff]
        %v1330 = vld [vmem:[#allocation2 + $0x152] sm:$0xff]
        %v1331 = vld [vmem:[#allocation2 + $0x15a] sm:$0xff]
        %v1332 = vld [vmem:[#allocation2 + $0x162] sm:$0xff]
        %v1333 = vld [vmem:[#allocation2 + $0x16a] sm:$0xff]
        %v1334 = vld [vmem:[#allocation2 + $0x172] sm:$0xff]
        %v1335 = vld [vmem:[#allocation2 + $0x17a] sm:$0xff]
        %v1336 = vld [vmem:[#allocation2 + $0x182] sm:$0xff]
        %v1337 = vld [vmem:[#allocation2 + $0x18a] sm:$0xff]
        %v1338 = vld [vmem:[#allocation2 + $0x192] sm:$0xff]
        %v1339 = vld [vmem:[#allocation2 + $0x19a] sm:$0xff]
        %v1340 = vld [vmem:[#allocation2 + $0x1a2] sm:$0xff]
        %v1341 = vld [vmem:[#allocation2 + $0x1aa] sm:$0xff]
        %v1342 = vld [vmem:[#allocation2 + $0x1b2] sm:$0xff]
        %v1343 = vld [vmem:[#allocation2 + $0x1ba] sm:$0xff]
        %v1344 = vld [vmem:[#allocation2 + $0x1c2] sm:$0xff]
        %v1345 = vld [vmem:[#allocation2 + $0x1ca] sm:$0xff]
        %v1346 = vld [vmem:[#allocation2 + $0x1d2] sm:$0xff]
        %v1347 = vld [vmem:[#allocation2 + $0x1da] sm:$0xff]
        %v1348 = vld [vmem:[#allocation2 + $0x1e2] sm:$0xff]
        %v1349 = vld [vmem:[#allocation2 + $0x1ea] sm:$0xff]
        %v1350 = vld [vmem:[#allocation2 + $0x1f2] sm:$0xff]
        %v1351 = vld [vmem:[#allocation2 + $0x1fa] sm:$0xff]
        %v1352 = vld [vmem:[#allocation2 + $0x202] sm:$0xff]
        %v1353 = vld [vmem:[#allocation2 + $0x20a] sm:$0xff]
        %v1354 = vld [vmem:[#allocation2 + $0x212] sm:$0xff]
        %v1355 = vld [vmem:[#allocation2 + $0x21a] sm:$0xff]
        %v1356 = vld [vmem:[#allocation2 + $0x222] sm:$0xff]
        %v1357 = vld [vmem:[#allocation2 + $0x22a] sm:$0xff]
        %v1358 = vld [vmem:[#allocation2 + $0x232] sm:$0xff]
        %v1359 = vld [vmem:[#allocation2 + $0x23a] sm:$0xff]
        %v1360 = vld [vmem:[#allocation2 + $0x242] sm:$0xff]
        %v1361 = vld [vmem:[#allocation2 + $0x24a] sm:$0xff]
        %v1362 = vld [vmem:[#allocation2 + $0x252] sm:$0xff]
        %v1363 = vld [vmem:[#allocation2 + $0x25a] sm:$0xff]
        %v1364 = vld [vmem:[#allocation2 + $0x262] sm:$0xff]
        %v1365 = vld [vmem:[#allocation2 + $0x26a] sm:$0xff]
        %v1366 = vld [vmem:[#allocation2 + $0x272] sm:$0xff]
        %v1367 = vld [vmem:[#allocation2 + $0x27a] sm:$0xff]
        %v1368 = vld [vmem:[#allocation2 + $0x282] sm:$0xff]
        %v1369 = vld [vmem:[#allocation2 + $0x28a] sm:$0xff]
        %v1370 = vld [vmem:[#allocation2 + $0x292] sm:$0xff]
        %v1371 = vld [vmem:[#allocation2 + $0x29a] sm:$0xff]
        %v1372 = vld [vmem:[#allocation2 + $0x1c] sm:$0xff]
        %v1373 = vld [vmem:[#allocation2 + $0x24] sm:$0xff]
        %v1374 = vld [vmem:[#allocation2 + $0x2c] sm:$0xff]
        %v1375 = vld [vmem:[#allocation2 + $0x34] sm:$0xff]
        %v1376 = vld [vmem:[#allocation2 + $0x3c] sm:$0xff]
        %v1377 = vld [vmem:[#allocation2 + $0x44] sm:$0xff]
        %v1378 = vld [vmem:[#allocation2 + $0x4c] sm:$0xff]
        %v1379 = vld [vmem:[#allocation2 + $0x54] sm:$0xff]
        %v1380 = vld [vmem:[#allocation2 + $0x5c] sm:$0xff]
        %v1381 = vld [vmem:[#allocation2 + $0x64] sm:$0xff]
        %v1382 = vld [vmem:[#allocation2 + $0x6c] sm:$0xff]
        %v1383 = vld [vmem:[#allocation2 + $0x74] sm:$0xff]
        %v1384 = vld [vmem:[#allocation2 + $0x7c] sm:$0xff]
        %v1385 = vld [vmem:[#allocation2 + $0x84] sm:$0xff]
        %v1386 = vld [vmem:[#allocation2 + $0x8c] sm:$0xff]
        %v1387 = vld [vmem:[#allocation2 + $0x94] sm:$0xff]
        %v1388 = vld [vmem:[#allocation2 + $0x9c] sm:$0xff]
        %v1389 = vld [vmem:[#allocation2 + $0xa4] sm:$0xff]
        %v1390 = vld [vmem:[#allocation2 + $0xac] sm:$0xff]
        %v1391 = vld [vmem:[#allocation2 + $0xb4] sm:$0xff]
        %v1392 = vld [vmem:[#allocation2 + $0xbc] sm:$0xff]
        %v1393 = vld [vmem:[#allocation2 + $0xc4] sm:$0xff]
        %v1394 = vld [vmem:[#allocation2 + $0xcc] sm:$0xff]
        %v1395 = vld [vmem:[#allocation2 + $0xd4] sm:$0xff]
        %v1396 = vld [vmem:[#allocation2 + $0xdc] sm:$0xff]
        %v1397 = vld [vmem:[#allocation2 + $0xe4] sm:$0xff]
        %v1398 = vld [vmem:[#allocation2 + $0xec] sm:$0xff]
        %v1399 = vld [vmem:[#allocation2 + $0xf4] sm:$0xff]
        %v1400 = vld [vmem:[#allocation2 + $0xfc] sm:$0xff]
        %v1401 = vld [vmem:[#allocation2 + $0x104] sm:$0xff]
        %v1402 = vld [vmem:[#allocation2 + $0x10c] sm:$0xff]
        %v1403 = vld [vmem:[#allocation2 + $0x114] sm:$0xff]
        %v1404 = vld [vmem:[#allocation2 + $0x11c] sm:$0xff]
        %v1405 = vld [vmem:[#allocation2 + $0x124] sm:$0xff]
        %v1406 = vld [vmem:[#allocation2 + $0x12c] sm:$0xff]
        %v1407 = vld [vmem:[#allocation2 + $0x134] sm:$0xff]
        %v1408 = vld [vmem:[#allocation2 + $0x13c] sm:$0xff]
        %v1409 = vld [vmem:[#allocation2 + $0x144] sm:$0xff]
        %v1410 = vld [vmem:[#allocation2 + $0x14c] sm:$0xff]
        %v1411 = vld [vmem:[#allocation2 + $0x154] sm:$0xff]
        %v1412 = vld [vmem:[#allocation2 + $0x15c] sm:$0xff]
        %v1413 = vld [vmem:[#allocation2 + $0x164] sm:$0xff]
        %v1414 = vld [vmem:[#allocation2 + $0x16c] sm:$0xff]
        %v1415 = vld [vmem:[#allocation2 + $0x174] sm:$0xff]
        %v1416 = vld [vmem:[#allocation2 + $0x17c] sm:$0xff]
        %v1417 = vld [vmem:[#allocation2 + $0x184] sm:$0xff]
        %v1418 = vld [vmem:[#allocation2 + $0x18c] sm:$0xff]
        %v1419 = vld [vmem:[#allocation2 + $0x194] sm:$0xff]
        %v1420 = vld [vmem:[#allocation2 + $0x19c] sm:$0xff]
        %v1421 = vld [vmem:[#allocation2 + $0x1a4] sm:$0xff]
        %v1422 = vld [vmem:[#allocation2 + $0x1ac] sm:$0xff]
        %v1423 = vld [vmem:[#allocation2 + $0x1b4] sm:$0xff]
        %v1424 = vld [vmem:[#allocation2 + $0x1bc] sm:$0xff]
        %v1425 = vld [vmem:[#allocation2 + $0x1c4] sm:$0xff]
        %v1426 = vld [vmem:[#allocation2 + $0x1cc] sm:$0xff]
        %v1427 = vld [vmem:[#allocation2 + $0x1d4] sm:$0xff]
        %v1428 = vld [vmem:[#allocation2 + $0x1dc] sm:$0xff]
        %v1429 = vld [vmem:[#allocation2 + $0x1e4] sm:$0xff]
        %v1430 = vld [vmem:[#allocation2 + $0x1ec] sm:$0xff]
        %v1431 = vld [vmem:[#allocation2 + $0x1f4] sm:$0xff]
        %v1432 = vld [vmem:[#allocation2 + $0x1fc] sm:$0xff]
        %v1433 = vld [vmem:[#allocation2 + $0x204] sm:$0xff]
        %v1434 = vld [vmem:[#allocation2 + $0x20c] sm:$0xff]
        %v1435 = vld [vmem:[#allocation2 + $0x214] sm:$0xff]
        %v1436 = vld [vmem:[#allocation2 + $0x21c] sm:$0xff]
        %v1437 = vld [vmem:[#allocation2 + $0x224] sm:$0xff]
        %v1438 = vld [vmem:[#allocation2 + $0x22c] sm:$0xff]
        %v1439 = vld [vmem:[#allocation2 + $0x234] sm:$0xff]
        %v1440 = vld [vmem:[#allocation2 + $0x23c] sm:$0xff]
        %v1441 = vld [vmem:[#allocation2 + $0x244] sm:$0xff]
        %v1442 = vld [vmem:[#allocation2 + $0x24c] sm:$0xff]
        %v1443 = vld [vmem:[#allocation2 + $0x254] sm:$0xff]
        %v1444 = vld [vmem:[#allocation2 + $0x25c] sm:$0xff]
        %v1445 = vld [vmem:[#allocation2 + $0x264] sm:$0xff]
        %v1446 = vld [vmem:[#allocation2 + $0x26c] sm:$0xff]
        %v1447 = vld [vmem:[#allocation2 + $0x274] sm:$0xff]
        %v1448 = vld [vmem:[#allocation2 + $0x27c] sm:$0xff]
        %v1449 = vld [vmem:[#allocation2 + $0x284] sm:$0xff]
        %v1450 = vld [vmem:[#allocation2 + $0x28c] sm:$0xff]
        %v1451 = vld [vmem:[#allocation2 + $0x294] sm:$0xff]
        %v1452 = vld [vmem:[#allocation2 + $0x29c] sm:$0xff]
        %v1453 = vld [vmem:[#allocation2 + $0x2a4] sm:$0xff]
        %v1454 = vld [vmem:[#allocation2 + $0x2ac] sm:$0xff]
        %v1455 = vld [vmem:[#allocation2 + $0x2b4] sm:$0xff]
        %v1456 = vld [vmem:[#allocation2 + $0x1d] sm:$0xff]
        %v1457 = vld [vmem:[#allocation2 + $0x25] sm:$0xff]
        %v1458 = vld [vmem:[#allocation2 + $0x2d] sm:$0xff]
        %v1459 = vld [vmem:[#allocation2 + $0x35] sm:$0xff]
        %v1460 = vld [vmem:[#allocation2 + $0x3d] sm:$0xff]
        %v1461 = vld [vmem:[#allocation2 + $0x45] sm:$0xff]
        %v1462 = vld [vmem:[#allocation2 + $0x4d] sm:$0xff]
        %v1463 = vld [vmem:[#allocation2 + $0x55] sm:$0xff]
        %v1464 = vld [vmem:[#allocation2 + $0x5d] sm:$0xff]
        %v1465 = vld [vmem:[#allocation2 + $0x65] sm:$0xff]
        %v1466 = vld [vmem:[#allocation2 + $0x6d] sm:$0xff]
        %v1467 = vld [vmem:[#allocation2 + $0x75] sm:$0xff]
        %v1468 = vld [vmem:[#allocation2 + $0x7d] sm:$0xff]
        %v1469 = vld [vmem:[#allocation2 + $0x85] sm:$0xff]
        %v1470 = vld [vmem:[#allocation2 + $0x8d] sm:$0xff]
        %v1471 = vld [vmem:[#allocation2 + $0x95] sm:$0xff]
        %v1472 = vld [vmem:[#allocation2 + $0x9d] sm:$0xff]
        %v1473 = vld [vmem:[#allocation2 + $0xa5] sm:$0xff]
        %v1474 = vld [vmem:[#allocation2 + $0xad] sm:$0xff]
        %v1475 = vld [vmem:[#allocation2 + $0xb5] sm:$0xff]
        %v1476 = vld [vmem:[#allocation2 + $0xbd] sm:$0xff]
        %v1477 = vld [vmem:[#allocation2 + $0xc5] sm:$0xff]
        %v1478 = vld [vmem:[#allocation2 + $0xcd] sm:$0xff]
        %v1479 = vld [vmem:[#allocation2 + $0xd5] sm:$0xff]
        %v1480 = vld [vmem:[#allocation2 + $0xdd] sm:$0xff]
        %v1481 = vld [vmem:[#allocation2 + $0xe5] sm:$0xff]
        %v1482 = vld [vmem:[#allocation2 + $0xed] sm:$0xff]
        %v1483 = vld [vmem:[#allocation2 + $0xf5] sm:$0xff]
        %v1484 = vld [vmem:[#allocation2 + $0xfd] sm:$0xff]
        %v1485 = vld [vmem:[#allocation2 + $0x105] sm:$0xff]
        %v1486 = vld [vmem:[#allocation2 + $0x10d] sm:$0xff]
        %v1487 = vld [vmem:[#allocation2 + $0x115] sm:$0xff]
        %v1488 = vld [vmem:[#allocation2 + $0x11d] sm:$0xff]
        %v1489 = vld [vmem:[#allocation2 + $0x125] sm:$0xff]
        %v1490 = vld [vmem:[#allocation2 + $0x12d] sm:$0xff]
        %v1491 = vld [vmem:[#allocation2 + $0x135] sm:$0xff]
        %v1492 = vld [vmem:[#allocation2 + $0x13d] sm:$0xff]
        %v1493 = vld [vmem:[#allocation2 + $0x145] sm:$0xff]
        %v1494 = vld [vmem:[#allocation2 + $0x14d] sm:$0xff]
        %v1495 = vld [vmem:[#allocation2 + $0x155] sm:$0xff]
        %v1496 = vld [vmem:[#allocation2 + $0x15d] sm:$0xff]
        %v1497 = vld [vmem:[#allocation2 + $0x165] sm:$0xff]
        %v1498 = vld [vmem:[#allocation2 + $0x16d] sm:$0xff]
        %v1499 = vld [vmem:[#allocation2 + $0x175] sm:$0xff]
        %v1500 = vld [vmem:[#allocation2 + $0x17d] sm:$0xff]
        %v1501 = vld [vmem:[#allocation2 + $0x185] sm:$0xff]
        %v1502 = vld [vmem:[#allocation2 + $0x18d] sm:$0xff]
        %v1503 = vld [vmem:[#allocation2 + $0x195] sm:$0xff]
        %v1504 = vld [vmem:[#allocation2 + $0x19d] sm:$0xff]
        %v1505 = vld [vmem:[#allocation2 + $0x1a5] sm:$0xff]
        %v1506 = vld [vmem:[#allocation2 + $0x1ad] sm:$0xff]
        %v1507 = vld [vmem:[#allocation2 + $0x1b5] sm:$0xff]
        %v1508 = vld [vmem:[#allocation2 + $0x1bd] sm:$0xff]
        %v1509 = vld [vmem:[#allocation2 + $0x1c5] sm:$0xff]
        %v1510 = vld [vmem:[#allocation2 + $0x1cd] sm:$0xff]
        %v1511 = vld [vmem:[#allocation2 + $0x1d5] sm:$0xff]
        %v1512 = vld [vmem:[#allocation2 + $0x1dd] sm:$0xff]
        %v1513 = vld [vmem:[#allocation2 + $0x1e5] sm:$0xff]
        %v1514 = vld [vmem:[#allocation2 + $0x1ed] sm:$0xff]
        %v1515 = vld [vmem:[#allocation2 + $0x1f5] sm:$0xff]
        %v1516 = vld [vmem:[#allocation2 + $0x1fd] sm:$0xff]
        %v1517 = vld [vmem:[#allocation2 + $0x205] sm:$0xff]
        %v1518 = vld [vmem:[#allocation2 + $0x20d] sm:$0xff]
        %v1519 = vld [vmem:[#allocation2 + $0x215] sm:$0xff]
        %v1520 = vld [vmem:[#allocation2 + $0x21d] sm:$0xff]
        %v1521 = vld [vmem:[#allocation2 + $0x225] sm:$0xff]
        %v1522 = vld [vmem:[#allocation2 + $0x22d] sm:$0xff]
        %v1523 = vld [vmem:[#allocation2 + $0x235] sm:$0xff]
        %v1524 = vld [vmem:[#allocation2 + $0x23d] sm:$0xff]
        %v1525 = vld [vmem:[#allocation2 + $0x245] sm:$0xff]
        %v1526 = vld [vmem:[#allocation2 + $0x24d] sm:$0xff]
        %v1527 = vld [vmem:[#allocation2 + $0x255] sm:$0xff]
        %v1528 = vld [vmem:[#allocation2 + $0x25d] sm:$0xff]
        %v1529 = vld [vmem:[#allocation2 + $0x265] sm:$0xff]
        %v1530 = vld [vmem:[#allocation2 + $0x26d] sm:$0xff]
        %v1531 = vld [vmem:[#allocation2 + $0x275] sm:$0xff]
        %v1532 = vld [vmem:[#allocation2 + $0x27d] sm:$0xff]
        %v1533 = vld [vmem:[#allocation2 + $0x285] sm:$0xff]
        %v1534 = vld [vmem:[#allocation2 + $0x28d] sm:$0xff]
        %v1535 = vld [vmem:[#allocation2 + $0x295] sm:$0xff]
        %v1536 = vld [vmem:[#allocation2 + $0x29d] sm:$0xff]
        %v1537 = vld [vmem:[#allocation2 + $0x2a5] sm:$0xff]
        %v1538 = vld [vmem:[#allocation2 + $0x2ad] sm:$0xff]
        %v1539 = vld [vmem:[#allocation2 + $0x2b5] sm:$0xff]
        %v1540 = vld [vmem:[#allocation2 + $0x1e] sm:$0xff]
        %v1541 = vld [vmem:[#allocation2 + $0x26] sm:$0xff]
        %v1542 = vld [vmem:[#allocation2 + $0x2e] sm:$0xff]
        %v1543 = vld [vmem:[#allocation2 + $0x36] sm:$0xff]
        %v1544 = vld [vmem:[#allocation2 + $0x3e] sm:$0xff]
        %v1545 = vld [vmem:[#allocation2 + $0x46] sm:$0xff]
        %v1546 = vld [vmem:[#allocation2 + $0x4e] sm:$0xff]
        %v1547 = vld [vmem:[#allocation2 + $0x56] sm:$0xff]
        %v1548 = vld [vmem:[#allocation2 + $0x5e] sm:$0xff]
        %v1549 = vld [vmem:[#allocation2 + $0x66] sm:$0xff]
        %v1550 = vld [vmem:[#allocation2 + $0x6e] sm:$0xff]
        %v1551 = vld [vmem:[#allocation2 + $0x76] sm:$0xff]
        %v1552 = vld [vmem:[#allocation2 + $0x7e] sm:$0xff]
        %v1553 = vld [vmem:[#allocation2 + $0x86] sm:$0xff]
        %v1554 = vld [vmem:[#allocation2 + $0x8e] sm:$0xff]
        %v1555 = vld [vmem:[#allocation2 + $0x96] sm:$0xff]
        %v1556 = vld [vmem:[#allocation2 + $0x9e] sm:$0xff]
        %v1557 = vld [vmem:[#allocation2 + $0xa6] sm:$0xff]
        %v1558 = vld [vmem:[#allocation2 + $0xae] sm:$0xff]
        %v1559 = vld [vmem:[#allocation2 + $0xb6] sm:$0xff]
        %v1560 = vld [vmem:[#allocation2 + $0xbe] sm:$0xff]
        %v1561 = vld [vmem:[#allocation2 + $0xc6] sm:$0xff]
        %v1562 = vld [vmem:[#allocation2 + $0xce] sm:$0xff]
        %v1563 = vld [vmem:[#allocation2 + $0xd6] sm:$0xff]
        %v1564 = vld [vmem:[#allocation2 + $0xde] sm:$0xff]
        %v1565 = vld [vmem:[#allocation2 + $0xe6] sm:$0xff]
        %v1566 = vld [vmem:[#allocation2 + $0xee] sm:$0xff]
        %v1567 = vld [vmem:[#allocation2 + $0xf6] sm:$0xff]
        %v1568 = vld [vmem:[#allocation2 + $0xfe] sm:$0xff]
        %v1569 = vld [vmem:[#allocation2 + $0x106] sm:$0xff]
        %v1570 = vld [vmem:[#allocation2 + $0x10e] sm:$0xff]
        %v1571 = vld [vmem:[#allocation2 + $0x116] sm:$0xff]
        %v1572 = vld [vmem:[#allocation2 + $0x11e] sm:$0xff]
        %v1573 = vld [vmem:[#allocation2 + $0x126] sm:$0xff]
        %v1574 = vld [vmem:[#allocation2 + $0x12e] sm:$0xff]
        %v1575 = vld [vmem:[#allocation2 + $0x136] sm:$0xff]
        %v1576 = vld [vmem:[#allocation2 + $0x13e] sm:$0xff]
        %v1577 = vld [vmem:[#allocation2 + $0x146] sm:$0xff]
        %v1578 = vld [vmem:[#allocation2 + $0x14e] sm:$0xff]
        %v1579 = vld [vmem:[#allocation2 + $0x156] sm:$0xff]
        %v1580 = vld [vmem:[#allocation2 + $0x15e] sm:$0xff]
        %v1581 = vld [vmem:[#allocation2 + $0x166] sm:$0xff]
        %v1582 = vld [vmem:[#allocation2 + $0x16e] sm:$0xff]
        %v1583 = vld [vmem:[#allocation2 + $0x176] sm:$0xff]
        %v1584 = vld [vmem:[#allocation2 + $0x17e] sm:$0xff]
        %v1585 = vld [vmem:[#allocation2 + $0x186] sm:$0xff]
        %v1586 = vld [vmem:[#allocation2 + $0x18e] sm:$0xff]
        %v1587 = vld [vmem:[#allocation2 + $0x196] sm:$0xff]
        %v1588 = vld [vmem:[#allocation2 + $0x19e] sm:$0xff]
        %v1589 = vld [vmem:[#allocation2 + $0x1a6] sm:$0xff]
        %v1590 = vld [vmem:[#allocation2 + $0x1ae] sm:$0xff]
        %v1591 = vld [vmem:[#allocation2 + $0x1b6] sm:$0xff]
        %v1592 = vld [vmem:[#allocation2 + $0x1be] sm:$0xff]
        %v1593 = vld [vmem:[#allocation2 + $0x1c6] sm:$0xff]
        %v1594 = vld [vmem:[#allocation2 + $0x1ce] sm:$0xff]
        %v1595 = vld [vmem:[#allocation2 + $0x1d6] sm:$0xff]
        %v1596 = vld [vmem:[#allocation2 + $0x1de] sm:$0xff]
        %v1597 = vld [vmem:[#allocation2 + $0x1e6] sm:$0xff]
        %v1598 = vld [vmem:[#allocation2 + $0x1ee] sm:$0xff]
        %v1599 = vld [vmem:[#allocation2 + $0x1f6] sm:$0xff]
        %v1600 = vld [vmem:[#allocation2 + $0x1fe] sm:$0xff]
        %v1601 = vld [vmem:[#allocation2 + $0x206] sm:$0xff]
        %v1602 = vld [vmem:[#allocation2 + $0x20e] sm:$0xff]
        %v1603 = vld [vmem:[#allocation2 + $0x216] sm:$0xff]
        %v1604 = vld [vmem:[#allocation2 + $0x21e] sm:$0xff]
        %v1605 = vld [vmem:[#allocation2 + $0x226] sm:$0xff]
        %v1606 = vld [vmem:[#allocation2 + $0x22e] sm:$0xff]
        %v1607 = vld [vmem:[#allocation2 + $0x236] sm:$0xff]
        %v1608 = vld [vmem:[#allocation2 + $0x23e] sm:$0xff]
        %v1609 = vld [vmem:[#allocation2 + $0x246] sm:$0xff]
        %v1610 = vld [vmem:[#allocation2 + $0x24e] sm:$0xff]
        %v1611 = vld [vmem:[#allocation2 + $0x256] sm:$0xff]
        %v1612 = vld [vmem:[#allocation2 + $0x25e] sm:$0xff]
        %v1613 = vld [vmem:[#allocation2 + $0x266] sm:$0xff]
        %v1614 = vld [vmem:[#allocation2 + $0x26e] sm:$0xff]
        %v1615 = vld [vmem:[#allocation2 + $0x276] sm:$0xff]
        %v1616 = vld [vmem:[#allocation2 + $0x27e] sm:$0xff]
        %v1617 = vld [vmem:[#allocation2 + $0x286] sm:$0xff]
        %v1618 = vld [vmem:[#allocation2 + $0x28e] sm:$0xff]
        %v1619 = vld [vmem:[#allocation2 + $0x296] sm:$0xff]
        %v1620 = vld [vmem:[#allocation2 + $0x29e] sm:$0xff]
        %v1621 = vld [vmem:[#allocation2 + $0x2a6] sm:$0xff]
        %v1622 = vld [vmem:[#allocation2 + $0x2ae] sm:$0xff]
        %v1623 = vld [vmem:[#allocation2 + $0x2b6] sm:$0xff]
        %v1624 = vld [vmem:[#allocation2 + $0x2a0] sm:$0xff]
        %v1625 = vld [vmem:[#allocation2 + $0x2a8] sm:$0xff]
        %v1626 = vld [vmem:[#allocation2 + $0x2b0] sm:$0xff]
        %v1627 = vld [vmem:[#allocation2 + $0x2b8] sm:$0xff]
        %v1628 = vld [vmem:[#allocation2 + $0x2c0] sm:$0xff]
        %v1629 = vld [vmem:[#allocation2 + $0x2c8] sm:$0xff]
        %v1630 = vld [vmem:[#allocation2 + $0x2d0] sm:$0xff]
        %v1631 = vld [vmem:[#allocation2 + $0x2a1] sm:$0xff]
        %v1632 = vld [vmem:[#allocation2 + $0x2a9] sm:$0xff]
        %v1633 = vld [vmem:[#allocation2 + $0x2b1] sm:$0xff]
        %v1634 = vld [vmem:[#allocation2 + $0x2b9] sm:$0xff]
        %v1635 = vld [vmem:[#allocation2 + $0x2c1] sm:$0xff]
        %v1636 = vld [vmem:[#allocation2 + $0x2c9] sm:$0xff]
        %v1637 = vld [vmem:[#allocation2 + $0x2d1] sm:$0xff]
        %v1638 = vld [vmem:[#allocation2 + $0x2a2] sm:$0xff]
        %v1639 = vld [vmem:[#allocation2 + $0x2aa] sm:$0xff]
        %v1640 = vld [vmem:[#allocation2 + $0x2b2] sm:$0xff]
        %v1641 = vld [vmem:[#allocation2 + $0x2ba] sm:$0xff]
        %v1642 = vld [vmem:[#allocation2 + $0x2c2] sm:$0xff]
        %v1643 = vld [vmem:[#allocation2 + $0x2ca] sm:$0xff]
        %v1644 = vld [vmem:[#allocation2 + $0x2d2] sm:$0xff]
        %1729 = vrot.lane.b32.xlu0 %v1204, 32
        %v1730 = vpop.permute.xlu0 %1729
        %1731 = vrot.lane.b32.xlu0 %v1205, 32
        %v1732 = vpop.permute.xlu0 %1731
        %1733 = vrot.lane.b32.xlu0 %v1206, 32
        %v1734 = vpop.permute.xlu0 %1733
        %1735 = vrot.lane.b32.xlu0 %v1207, 32
        %v1736 = vpop.permute.xlu0 %1735
        %1737 = vrot.lane.b32.xlu0 %v1208, 32
        %v1738 = vpop.permute.xlu0 %1737
        %1739 = vrot.lane.b32.xlu0 %v1209, 32
        %v1740 = vpop.permute.xlu0 %1739
        %1741 = vrot.lane.b32.xlu0 %v1210, 32
        %v1742 = vpop.permute.xlu0 %1741
        %1743 = vrot.lane.b32.xlu0 %v1211, 32
        %v1744 = vpop.permute.xlu0 %1743
        %1745 = vrot.lane.b32.xlu0 %v1212, 32
        %v1746 = vpop.permute.xlu0 %1745
        %1747 = vrot.lane.b32.xlu0 %v1213, 32
        %v1748 = vpop.permute.xlu0 %1747
        %1749 = vrot.lane.b32.xlu0 %v1214, 32
        %v1750 = vpop.permute.xlu0 %1749
        %1751 = vrot.lane.b32.xlu0 %v1215, 32
        %v1752 = vpop.permute.xlu0 %1751
        %1753 = vrot.lane.b32.xlu0 %v1216, 32
        %v1754 = vpop.permute.xlu0 %1753
        %1755 = vrot.lane.b32.xlu0 %v1217, 32
        %v1756 = vpop.permute.xlu0 %1755
        %1757 = vrot.lane.b32.xlu0 %v1218, 32
        %v1758 = vpop.permute.xlu0 %1757
        %1759 = vrot.lane.b32.xlu0 %v1219, 32
        %v1760 = vpop.permute.xlu0 %1759
        %1761 = vrot.lane.b32.xlu0 %v1220, 32
        %v1762 = vpop.permute.xlu0 %1761
        %1763 = vrot.lane.b32.xlu0 %v1221, 32
        %v1764 = vpop.permute.xlu0 %1763
        %1765 = vrot.lane.b32.xlu0 %v1222, 32
        %v1766 = vpop.permute.xlu0 %1765
        %1767 = vrot.lane.b32.xlu0 %v1223, 32
        %v1768 = vpop.permute.xlu0 %1767
        %1769 = vrot.lane.b32.xlu0 %v1224, 32
        %v1770 = vpop.permute.xlu0 %1769
        %1771 = vrot.lane.b32.xlu0 %v1225, 32
        %v1772 = vpop.permute.xlu0 %1771
        %1773 = vrot.lane.b32.xlu0 %v1226, 32
        %v1774 = vpop.permute.xlu0 %1773
        %1775 = vrot.lane.b32.xlu0 %v1227, 32
        %v1776 = vpop.permute.xlu0 %1775
        %1777 = vrot.lane.b32.xlu0 %v1228, 32
        %v1778 = vpop.permute.xlu0 %1777
        %1779 = vrot.lane.b32.xlu0 %v1229, 32
        %v1780 = vpop.permute.xlu0 %1779
        %1781 = vrot.lane.b32.xlu0 %v1230, 32
        %v1782 = vpop.permute.xlu0 %1781
        %1783 = vrot.lane.b32.xlu0 %v1231, 32
        %v1784 = vpop.permute.xlu0 %1783
        %1785 = vrot.lane.b32.xlu0 %v1232, 32
        %v1786 = vpop.permute.xlu0 %1785
        %1787 = vrot.lane.b32.xlu0 %v1233, 32
        %v1788 = vpop.permute.xlu0 %1787
        %1789 = vrot.lane.b32.xlu0 %v1234, 32
        %v1790 = vpop.permute.xlu0 %1789
        %1791 = vrot.lane.b32.xlu0 %v1235, 32
        %v1792 = vpop.permute.xlu0 %1791
        %1793 = vrot.lane.b32.xlu0 %v1236, 32
        %v1794 = vpop.permute.xlu0 %1793
        %1795 = vrot.lane.b32.xlu0 %v1237, 32
        %v1796 = vpop.permute.xlu0 %1795
        %1797 = vrot.lane.b32.xlu0 %v1238, 32
        %v1798 = vpop.permute.xlu0 %1797
        %1799 = vrot.lane.b32.xlu0 %v1239, 32
        %v1800 = vpop.permute.xlu0 %1799
        %1801 = vrot.lane.b32.xlu0 %v1240, 32
        %v1802 = vpop.permute.xlu0 %1801
        %1803 = vrot.lane.b32.xlu0 %v1241, 32
        %v1804 = vpop.permute.xlu0 %1803
        %1805 = vrot.lane.b32.xlu0 %v1242, 32
        %v1806 = vpop.permute.xlu0 %1805
        %1807 = vrot.lane.b32.xlu0 %v1243, 32
        %v1808 = vpop.permute.xlu0 %1807
        %1809 = vrot.lane.b32.xlu0 %v1244, 32
        %v1810 = vpop.permute.xlu0 %1809
        %1811 = vrot.lane.b32.xlu0 %v1245, 32
        %v1812 = vpop.permute.xlu0 %1811
        %1813 = vrot.lane.b32.xlu0 %v1246, 32
        %v1814 = vpop.permute.xlu0 %1813
        %1815 = vrot.lane.b32.xlu0 %v1247, 32
        %v1816 = vpop.permute.xlu0 %1815
        %1817 = vrot.lane.b32.xlu0 %v1248, 32
        %v1818 = vpop.permute.xlu0 %1817
        %1819 = vrot.lane.b32.xlu0 %v1249, 32
        %v1820 = vpop.permute.xlu0 %1819
        %1821 = vrot.lane.b32.xlu0 %v1250, 32
        %v1822 = vpop.permute.xlu0 %1821
        %1823 = vrot.lane.b32.xlu0 %v1251, 32
        %v1824 = vpop.permute.xlu0 %1823
        %1825 = vrot.lane.b32.xlu0 %v1252, 32
        %v1826 = vpop.permute.xlu0 %1825
        %1827 = vrot.lane.b32.xlu0 %v1253, 32
        %v1828 = vpop.permute.xlu0 %1827
        %1829 = vrot.lane.b32.xlu0 %v1254, 32
        %v1830 = vpop.permute.xlu0 %1829
        %1831 = vrot.lane.b32.xlu0 %v1255, 32
        %v1832 = vpop.permute.xlu0 %1831
        %1833 = vrot.lane.b32.xlu0 %v1256, 32
        %v1834 = vpop.permute.xlu0 %1833
        %1835 = vrot.lane.b32.xlu0 %v1257, 32
        %v1836 = vpop.permute.xlu0 %1835
        %1837 = vrot.lane.b32.xlu0 %v1258, 32
        %v1838 = vpop.permute.xlu0 %1837
        %1839 = vrot.lane.b32.xlu0 %v1259, 32
        %v1840 = vpop.permute.xlu0 %1839
        %1841 = vrot.lane.b32.xlu0 %v1260, 32
        %v1842 = vpop.permute.xlu0 %1841
        %1843 = vrot.lane.b32.xlu0 %v1261, 32
        %v1844 = vpop.permute.xlu0 %1843
        %1845 = vrot.lane.b32.xlu0 %v1262, 32
        %v1846 = vpop.permute.xlu0 %1845
        %1847 = vrot.lane.b32.xlu0 %v1263, 32
        %v1848 = vpop.permute.xlu0 %1847
        %1849 = vrot.lane.b32.xlu0 %v1264, 32
        %v1850 = vpop.permute.xlu0 %1849
        %1851 = vrot.lane.b32.xlu0 %v1265, 32
        %v1852 = vpop.permute.xlu0 %1851
        %1853 = vrot.lane.b32.xlu0 %v1266, 32
        %v1854 = vpop.permute.xlu0 %1853
        %1855 = vrot.lane.b32.xlu0 %v1267, 32
        %v1856 = vpop.permute.xlu0 %1855
        %1857 = vrot.lane.b32.xlu0 %v1268, 32
        %v1858 = vpop.permute.xlu0 %1857
        %1859 = vrot.lane.b32.xlu0 %v1269, 32
        %v1860 = vpop.permute.xlu0 %1859
        %1861 = vrot.lane.b32.xlu0 %v1270, 32
        %v1862 = vpop.permute.xlu0 %1861
        %1863 = vrot.lane.b32.xlu0 %v1271, 32
        %v1864 = vpop.permute.xlu0 %1863
        %1865 = vrot.lane.b32.xlu0 %v1272, 32
        %v1866 = vpop.permute.xlu0 %1865
        %1867 = vrot.lane.b32.xlu0 %v1273, 32
        %v1868 = vpop.permute.xlu0 %1867
        %1869 = vrot.lane.b32.xlu0 %v1274, 32
        %v1870 = vpop.permute.xlu0 %1869
        %1871 = vrot.lane.b32.xlu0 %v1275, 32
        %v1872 = vpop.permute.xlu0 %1871
        %1873 = vrot.lane.b32.xlu0 %v1276, 32
        %v1874 = vpop.permute.xlu0 %1873
        %1875 = vrot.lane.b32.xlu0 %v1277, 32
        %v1876 = vpop.permute.xlu0 %1875
        %1877 = vrot.lane.b32.xlu0 %v1278, 32
        %v1878 = vpop.permute.xlu0 %1877
        %1879 = vrot.lane.b32.xlu0 %v1279, 32
        %v1880 = vpop.permute.xlu0 %1879
        %1881 = vrot.lane.b32.xlu0 %v1280, 32
        %v1882 = vpop.permute.xlu0 %1881
        %1883 = vrot.lane.b32.xlu0 %v1281, 32
        %v1884 = vpop.permute.xlu0 %1883
        %1885 = vrot.lane.b32.xlu0 %v1282, 32
        %v1886 = vpop.permute.xlu0 %1885
        %1887 = vrot.lane.b32.xlu0 %v1283, 32
        %v1888 = vpop.permute.xlu0 %1887
        %1889 = vrot.lane.b32.xlu0 %v1284, 32
        %v1890 = vpop.permute.xlu0 %1889
        %1891 = vrot.lane.b32.xlu0 %v1285, 32
        %v1892 = vpop.permute.xlu0 %1891
        %1893 = vrot.lane.b32.xlu0 %v1286, 32
        %v1894 = vpop.permute.xlu0 %1893
        %1895 = vrot.lane.b32.xlu0 %v1287, 32
        %v1896 = vpop.permute.xlu0 %1895
        %2065 = vrot.lane.b32.xlu0 %v1288, 64
        %v2066 = vpop.permute.xlu0 %2065
        %2067 = vrot.lane.b32.xlu0 %v1289, 64
        %v2068 = vpop.permute.xlu0 %2067
        %2069 = vrot.lane.b32.xlu0 %v1290, 64
        %v2070 = vpop.permute.xlu0 %2069
        %2071 = vrot.lane.b32.xlu0 %v1291, 64
        %v2072 = vpop.permute.xlu0 %2071
        %2073 = vrot.lane.b32.xlu0 %v1292, 64
        %v2074 = vpop.permute.xlu0 %2073
        %2075 = vrot.lane.b32.xlu0 %v1293, 64
        %v2076 = vpop.permute.xlu0 %2075
        %2077 = vrot.lane.b32.xlu0 %v1294, 64
        %v2078 = vpop.permute.xlu0 %2077
        %2079 = vrot.lane.b32.xlu0 %v1295, 64
        %v2080 = vpop.permute.xlu0 %2079
        %2081 = vrot.lane.b32.xlu0 %v1296, 64
        %v2082 = vpop.permute.xlu0 %2081
        %2083 = vrot.lane.b32.xlu0 %v1297, 64
        %v2084 = vpop.permute.xlu0 %2083
        %2085 = vrot.lane.b32.xlu0 %v1298, 64
        %v2086 = vpop.permute.xlu0 %2085
        %2087 = vrot.lane.b32.xlu0 %v1299, 64
        %v2088 = vpop.permute.xlu0 %2087
        %2089 = vrot.lane.b32.xlu0 %v1300, 64
        %v2090 = vpop.permute.xlu0 %2089
        %2091 = vrot.lane.b32.xlu0 %v1301, 64
        %v2092 = vpop.permute.xlu0 %2091
        %2093 = vrot.lane.b32.xlu0 %v1302, 64
        %v2094 = vpop.permute.xlu0 %2093
        %2095 = vrot.lane.b32.xlu0 %v1303, 64
        %v2096 = vpop.permute.xlu0 %2095
        %2097 = vrot.lane.b32.xlu0 %v1304, 64
        %v2098 = vpop.permute.xlu0 %2097
        %2099 = vrot.lane.b32.xlu0 %v1305, 64
        %v2100 = vpop.permute.xlu0 %2099
        %2101 = vrot.lane.b32.xlu0 %v1306, 64
        %v2102 = vpop.permute.xlu0 %2101
        %2103 = vrot.lane.b32.xlu0 %v1307, 64
        %v2104 = vpop.permute.xlu0 %2103
        %2105 = vrot.lane.b32.xlu0 %v1308, 64
        %v2106 = vpop.permute.xlu0 %2105
        %2107 = vrot.lane.b32.xlu0 %v1309, 64
        %v2108 = vpop.permute.xlu0 %2107
        %2109 = vrot.lane.b32.xlu0 %v1310, 64
        %v2110 = vpop.permute.xlu0 %2109
        %2111 = vrot.lane.b32.xlu0 %v1311, 64
        %v2112 = vpop.permute.xlu0 %2111
        %2113 = vrot.lane.b32.xlu0 %v1312, 64
        %v2114 = vpop.permute.xlu0 %2113
        %2115 = vrot.lane.b32.xlu0 %v1313, 64
        %v2116 = vpop.permute.xlu0 %2115
        %2117 = vrot.lane.b32.xlu0 %v1314, 64
        %v2118 = vpop.permute.xlu0 %2117
        %2119 = vrot.lane.b32.xlu0 %v1315, 64
        %v2120 = vpop.permute.xlu0 %2119
        %2121 = vrot.lane.b32.xlu0 %v1316, 64
        %v2122 = vpop.permute.xlu0 %2121
        %2123 = vrot.lane.b32.xlu0 %v1317, 64
        %v2124 = vpop.permute.xlu0 %2123
        %2125 = vrot.lane.b32.xlu0 %v1318, 64
        %v2126 = vpop.permute.xlu0 %2125
        %2127 = vrot.lane.b32.xlu0 %v1319, 64
        %v2128 = vpop.permute.xlu0 %2127
        %2129 = vrot.lane.b32.xlu0 %v1320, 64
        %v2130 = vpop.permute.xlu0 %2129
        %2131 = vrot.lane.b32.xlu0 %v1321, 64
        %v2132 = vpop.permute.xlu0 %2131
        %2133 = vrot.lane.b32.xlu0 %v1322, 64
        %v2134 = vpop.permute.xlu0 %2133
        %2135 = vrot.lane.b32.xlu0 %v1323, 64
        %v2136 = vpop.permute.xlu0 %2135
        %2137 = vrot.lane.b32.xlu0 %v1324, 64
        %v2138 = vpop.permute.xlu0 %2137
        %2139 = vrot.lane.b32.xlu0 %v1325, 64
        %v2140 = vpop.permute.xlu0 %2139
        %2141 = vrot.lane.b32.xlu0 %v1326, 64
        %v2142 = vpop.permute.xlu0 %2141
        %2143 = vrot.lane.b32.xlu0 %v1327, 64
        %v2144 = vpop.permute.xlu0 %2143
        %2145 = vrot.lane.b32.xlu0 %v1328, 64
        %v2146 = vpop.permute.xlu0 %2145
        %2147 = vrot.lane.b32.xlu0 %v1329, 64
        %v2148 = vpop.permute.xlu0 %2147
        %2149 = vrot.lane.b32.xlu0 %v1330, 64
        %v2150 = vpop.permute.xlu0 %2149
        %2151 = vrot.lane.b32.xlu0 %v1331, 64
        %v2152 = vpop.permute.xlu0 %2151
        %2153 = vrot.lane.b32.xlu0 %v1332, 64
        %v2154 = vpop.permute.xlu0 %2153
        %2155 = vrot.lane.b32.xlu0 %v1333, 64
        %v2156 = vpop.permute.xlu0 %2155
        %2157 = vrot.lane.b32.xlu0 %v1334, 64
        %v2158 = vpop.permute.xlu0 %2157
        %2159 = vrot.lane.b32.xlu0 %v1335, 64
        %v2160 = vpop.permute.xlu0 %2159
        %2161 = vrot.lane.b32.xlu0 %v1336, 64
        %v2162 = vpop.permute.xlu0 %2161
        %2163 = vrot.lane.b32.xlu0 %v1337, 64
        %v2164 = vpop.permute.xlu0 %2163
        %2165 = vrot.lane.b32.xlu0 %v1338, 64
        %v2166 = vpop.permute.xlu0 %2165
        %2167 = vrot.lane.b32.xlu0 %v1339, 64
        %v2168 = vpop.permute.xlu0 %2167
        %2169 = vrot.lane.b32.xlu0 %v1340, 64
        %v2170 = vpop.permute.xlu0 %2169
        %2171 = vrot.lane.b32.xlu0 %v1341, 64
        %v2172 = vpop.permute.xlu0 %2171
        %2173 = vrot.lane.b32.xlu0 %v1342, 64
        %v2174 = vpop.permute.xlu0 %2173
        %2175 = vrot.lane.b32.xlu0 %v1343, 64
        %v2176 = vpop.permute.xlu0 %2175
        %2177 = vrot.lane.b32.xlu0 %v1344, 64
        %v2178 = vpop.permute.xlu0 %2177
        %2179 = vrot.lane.b32.xlu0 %v1345, 64
        %v2180 = vpop.permute.xlu0 %2179
        %2181 = vrot.lane.b32.xlu0 %v1346, 64
        %v2182 = vpop.permute.xlu0 %2181
        %2183 = vrot.lane.b32.xlu0 %v1347, 64
        %v2184 = vpop.permute.xlu0 %2183
        %2185 = vrot.lane.b32.xlu0 %v1348, 64
        %v2186 = vpop.permute.xlu0 %2185
        %2187 = vrot.lane.b32.xlu0 %v1349, 64
        %v2188 = vpop.permute.xlu0 %2187
        %2189 = vrot.lane.b32.xlu0 %v1350, 64
        %v2190 = vpop.permute.xlu0 %2189
        %2191 = vrot.lane.b32.xlu0 %v1351, 64
        %v2192 = vpop.permute.xlu0 %2191
        %2193 = vrot.lane.b32.xlu0 %v1352, 64
        %v2194 = vpop.permute.xlu0 %2193
        %2195 = vrot.lane.b32.xlu0 %v1353, 64
        %v2196 = vpop.permute.xlu0 %2195
        %2197 = vrot.lane.b32.xlu0 %v1354, 64
        %v2198 = vpop.permute.xlu0 %2197
        %2199 = vrot.lane.b32.xlu0 %v1355, 64
        %v2200 = vpop.permute.xlu0 %2199
        %2201 = vrot.lane.b32.xlu0 %v1356, 64
        %v2202 = vpop.permute.xlu0 %2201
        %2203 = vrot.lane.b32.xlu0 %v1357, 64
        %v2204 = vpop.permute.xlu0 %2203
        %2205 = vrot.lane.b32.xlu0 %v1358, 64
        %v2206 = vpop.permute.xlu0 %2205
        %2207 = vrot.lane.b32.xlu0 %v1359, 64
        %v2208 = vpop.permute.xlu0 %2207
        %2209 = vrot.lane.b32.xlu0 %v1360, 64
        %v2210 = vpop.permute.xlu0 %2209
        %2211 = vrot.lane.b32.xlu0 %v1361, 64
        %v2212 = vpop.permute.xlu0 %2211
        %2213 = vrot.lane.b32.xlu0 %v1362, 64
        %v2214 = vpop.permute.xlu0 %2213
        %2215 = vrot.lane.b32.xlu0 %v1363, 64
        %v2216 = vpop.permute.xlu0 %2215
        %2217 = vrot.lane.b32.xlu0 %v1364, 64
        %v2218 = vpop.permute.xlu0 %2217
        %2219 = vrot.lane.b32.xlu0 %v1365, 64
        %v2220 = vpop.permute.xlu0 %2219
        %2221 = vrot.lane.b32.xlu0 %v1366, 64
        %v2222 = vpop.permute.xlu0 %2221
        %2223 = vrot.lane.b32.xlu0 %v1367, 64
        %v2224 = vpop.permute.xlu0 %2223
        %2225 = vrot.lane.b32.xlu0 %v1368, 64
        %v2226 = vpop.permute.xlu0 %2225
        %2227 = vrot.lane.b32.xlu0 %v1369, 64
        %v2228 = vpop.permute.xlu0 %2227
        %2229 = vrot.lane.b32.xlu0 %v1370, 64
        %v2230 = vpop.permute.xlu0 %2229
        %2231 = vrot.lane.b32.xlu0 %v1371, 64
        %v2232 = vpop.permute.xlu0 %2231
        %2401 = vrot.lane.b32.xlu0 %v1372, 96
        %v2402 = vpop.permute.xlu0 %2401
        %2403 = vrot.lane.b32.xlu0 %v1373, 96
        %v2404 = vpop.permute.xlu0 %2403
        %2405 = vrot.lane.b32.xlu0 %v1374, 96
        %v2406 = vpop.permute.xlu0 %2405
        %2407 = vrot.lane.b32.xlu0 %v1375, 96
        %v2408 = vpop.permute.xlu0 %2407
        %2409 = vrot.lane.b32.xlu0 %v1376, 96
        %v2410 = vpop.permute.xlu0 %2409
        %2411 = vrot.lane.b32.xlu0 %v1377, 96
        %v2412 = vpop.permute.xlu0 %2411
        %2413 = vrot.lane.b32.xlu0 %v1378, 96
        %v2414 = vpop.permute.xlu0 %2413
        %2415 = vrot.lane.b32.xlu0 %v1379, 96
        %v2416 = vpop.permute.xlu0 %2415
        %2417 = vrot.lane.b32.xlu0 %v1380, 96
        %v2418 = vpop.permute.xlu0 %2417
        %2419 = vrot.lane.b32.xlu0 %v1381, 96
        %v2420 = vpop.permute.xlu0 %2419
        %2421 = vrot.lane.b32.xlu0 %v1382, 96
        %v2422 = vpop.permute.xlu0 %2421
        %2423 = vrot.lane.b32.xlu0 %v1383, 96
        %v2424 = vpop.permute.xlu0 %2423
        %2425 = vrot.lane.b32.xlu0 %v1384, 96
        %v2426 = vpop.permute.xlu0 %2425
        %2427 = vrot.lane.b32.xlu0 %v1385, 96
        %v2428 = vpop.permute.xlu0 %2427
        %2429 = vrot.lane.b32.xlu0 %v1386, 96
        %v2430 = vpop.permute.xlu0 %2429
        %2431 = vrot.lane.b32.xlu0 %v1387, 96
        %v2432 = vpop.permute.xlu0 %2431
        %2433 = vrot.lane.b32.xlu0 %v1388, 96
        %v2434 = vpop.permute.xlu0 %2433
        %2435 = vrot.lane.b32.xlu0 %v1389, 96
        %v2436 = vpop.permute.xlu0 %2435
        %2437 = vrot.lane.b32.xlu0 %v1390, 96
        %v2438 = vpop.permute.xlu0 %2437
        %2439 = vrot.lane.b32.xlu0 %v1391, 96
        %v2440 = vpop.permute.xlu0 %2439
        %2441 = vrot.lane.b32.xlu0 %v1392, 96
        %v2442 = vpop.permute.xlu0 %2441
        %2443 = vrot.lane.b32.xlu0 %v1393, 96
        %v2444 = vpop.permute.xlu0 %2443
        %2445 = vrot.lane.b32.xlu0 %v1394, 96
        %v2446 = vpop.permute.xlu0 %2445
        %2447 = vrot.lane.b32.xlu0 %v1395, 96
        %v2448 = vpop.permute.xlu0 %2447
        %2449 = vrot.lane.b32.xlu0 %v1396, 96
        %v2450 = vpop.permute.xlu0 %2449
        %2451 = vrot.lane.b32.xlu0 %v1397, 96
        %v2452 = vpop.permute.xlu0 %2451
        %2453 = vrot.lane.b32.xlu0 %v1398, 96
        %v2454 = vpop.permute.xlu0 %2453
        %2455 = vrot.lane.b32.xlu0 %v1399, 96
        %v2456 = vpop.permute.xlu0 %2455
        %2457 = vrot.lane.b32.xlu0 %v1400, 96
        %v2458 = vpop.permute.xlu0 %2457
        %2459 = vrot.lane.b32.xlu0 %v1401, 96
        %v2460 = vpop.permute.xlu0 %2459
        %2461 = vrot.lane.b32.xlu0 %v1402, 96
        %v2462 = vpop.permute.xlu0 %2461
        %2463 = vrot.lane.b32.xlu0 %v1403, 96
        %v2464 = vpop.permute.xlu0 %2463
        %2465 = vrot.lane.b32.xlu0 %v1404, 96
        %v2466 = vpop.permute.xlu0 %2465
        %2467 = vrot.lane.b32.xlu0 %v1405, 96
        %v2468 = vpop.permute.xlu0 %2467
        %2469 = vrot.lane.b32.xlu0 %v1406, 96
        %v2470 = vpop.permute.xlu0 %2469
        %2471 = vrot.lane.b32.xlu0 %v1407, 96
        %v2472 = vpop.permute.xlu0 %2471
        %2473 = vrot.lane.b32.xlu0 %v1408, 96
        %v2474 = vpop.permute.xlu0 %2473
        %2475 = vrot.lane.b32.xlu0 %v1409, 96
        %v2476 = vpop.permute.xlu0 %2475
        %2477 = vrot.lane.b32.xlu0 %v1410, 96
        %v2478 = vpop.permute.xlu0 %2477
        %2479 = vrot.lane.b32.xlu0 %v1411, 96
        %v2480 = vpop.permute.xlu0 %2479
        %2481 = vrot.lane.b32.xlu0 %v1412, 96
        %v2482 = vpop.permute.xlu0 %2481
        %2483 = vrot.lane.b32.xlu0 %v1413, 96
        %v2484 = vpop.permute.xlu0 %2483
        %2485 = vrot.lane.b32.xlu0 %v1414, 96
        %v2486 = vpop.permute.xlu0 %2485
        %2487 = vrot.lane.b32.xlu0 %v1415, 96
        %v2488 = vpop.permute.xlu0 %2487
        %2489 = vrot.lane.b32.xlu0 %v1416, 96
        %v2490 = vpop.permute.xlu0 %2489
        %2491 = vrot.lane.b32.xlu0 %v1417, 96
        %v2492 = vpop.permute.xlu0 %2491
        %2493 = vrot.lane.b32.xlu0 %v1418, 96
        %v2494 = vpop.permute.xlu0 %2493
        %2495 = vrot.lane.b32.xlu0 %v1419, 96
        %v2496 = vpop.permute.xlu0 %2495
        %2497 = vrot.lane.b32.xlu0 %v1420, 96
        %v2498 = vpop.permute.xlu0 %2497
        %2499 = vrot.lane.b32.xlu0 %v1421, 96
        %v2500 = vpop.permute.xlu0 %2499
        %2501 = vrot.lane.b32.xlu0 %v1422, 96
        %v2502 = vpop.permute.xlu0 %2501
        %2503 = vrot.lane.b32.xlu0 %v1423, 96
        %v2504 = vpop.permute.xlu0 %2503
        %2505 = vrot.lane.b32.xlu0 %v1424, 96
        %v2506 = vpop.permute.xlu0 %2505
        %2507 = vrot.lane.b32.xlu0 %v1425, 96
        %v2508 = vpop.permute.xlu0 %2507
        %2509 = vrot.lane.b32.xlu0 %v1426, 96
        %v2510 = vpop.permute.xlu0 %2509
        %2511 = vrot.lane.b32.xlu0 %v1427, 96
        %v2512 = vpop.permute.xlu0 %2511
        %2513 = vrot.lane.b32.xlu0 %v1428, 96
        %v2514 = vpop.permute.xlu0 %2513
        %2515 = vrot.lane.b32.xlu0 %v1429, 96
        %v2516 = vpop.permute.xlu0 %2515
        %2517 = vrot.lane.b32.xlu0 %v1430, 96
        %v2518 = vpop.permute.xlu0 %2517
        %2519 = vrot.lane.b32.xlu0 %v1431, 96
        %v2520 = vpop.permute.xlu0 %2519
        %2521 = vrot.lane.b32.xlu0 %v1432, 96
        %v2522 = vpop.permute.xlu0 %2521
        %2523 = vrot.lane.b32.xlu0 %v1433, 96
        %v2524 = vpop.permute.xlu0 %2523
        %2525 = vrot.lane.b32.xlu0 %v1434, 96
        %v2526 = vpop.permute.xlu0 %2525
        %2527 = vrot.lane.b32.xlu0 %v1435, 96
        %v2528 = vpop.permute.xlu0 %2527
        %2529 = vrot.lane.b32.xlu0 %v1436, 96
        %v2530 = vpop.permute.xlu0 %2529
        %2531 = vrot.lane.b32.xlu0 %v1437, 96
        %v2532 = vpop.permute.xlu0 %2531
        %2533 = vrot.lane.b32.xlu0 %v1438, 96
        %v2534 = vpop.permute.xlu0 %2533
        %2535 = vrot.lane.b32.xlu0 %v1439, 96
        %v2536 = vpop.permute.xlu0 %2535
        %2537 = vrot.lane.b32.xlu0 %v1440, 96
        %v2538 = vpop.permute.xlu0 %2537
        %2539 = vrot.lane.b32.xlu0 %v1441, 96
        %v2540 = vpop.permute.xlu0 %2539
        %2541 = vrot.lane.b32.xlu0 %v1442, 96
        %v2542 = vpop.permute.xlu0 %2541
        %2543 = vrot.lane.b32.xlu0 %v1443, 96
        %v2544 = vpop.permute.xlu0 %2543
        %2545 = vrot.lane.b32.xlu0 %v1444, 96
        %v2546 = vpop.permute.xlu0 %2545
        %2547 = vrot.lane.b32.xlu0 %v1445, 96
        %v2548 = vpop.permute.xlu0 %2547
        %2549 = vrot.lane.b32.xlu0 %v1446, 96
        %v2550 = vpop.permute.xlu0 %2549
        %2551 = vrot.lane.b32.xlu0 %v1447, 96
        %v2552 = vpop.permute.xlu0 %2551
        %2553 = vrot.lane.b32.xlu0 %v1448, 96
        %v2554 = vpop.permute.xlu0 %2553
        %2555 = vrot.lane.b32.xlu0 %v1449, 96
        %v2556 = vpop.permute.xlu0 %2555
        %2557 = vrot.lane.b32.xlu0 %v1450, 96
        %v2558 = vpop.permute.xlu0 %2557
        %2559 = vrot.lane.b32.xlu0 %v1451, 96
        %v2560 = vpop.permute.xlu0 %2559
        %2561 = vrot.lane.b32.xlu0 %v1452, 96
        %v2562 = vpop.permute.xlu0 %2561
        %2563 = vrot.lane.b32.xlu0 %v1453, 96
        %v2564 = vpop.permute.xlu0 %2563
        %2565 = vrot.lane.b32.xlu0 %v1454, 96
        %v2566 = vpop.permute.xlu0 %2565
        %2567 = vrot.lane.b32.xlu0 %v1455, 96
        %v2568 = vpop.permute.xlu0 %2567
        %2737 = vrot.lane.b32.xlu0 %v1540, 32
        %v2738 = vpop.permute.xlu0 %2737
        %2739 = vrot.lane.b32.xlu0 %v1541, 32
        %v2740 = vpop.permute.xlu0 %2739
        %2741 = vrot.lane.b32.xlu0 %v1542, 32
        %v2742 = vpop.permute.xlu0 %2741
        %2743 = vrot.lane.b32.xlu0 %v1543, 32
        %v2744 = vpop.permute.xlu0 %2743
        %2745 = vrot.lane.b32.xlu0 %v1544, 32
        %v2746 = vpop.permute.xlu0 %2745
        %2747 = vrot.lane.b32.xlu0 %v1545, 32
        %v2748 = vpop.permute.xlu0 %2747
        %2749 = vrot.lane.b32.xlu0 %v1546, 32
        %v2750 = vpop.permute.xlu0 %2749
        %2751 = vrot.lane.b32.xlu0 %v1547, 32
        %v2752 = vpop.permute.xlu0 %2751
        %2753 = vrot.lane.b32.xlu0 %v1548, 32
        %v2754 = vpop.permute.xlu0 %2753
        %2755 = vrot.lane.b32.xlu0 %v1549, 32
        %v2756 = vpop.permute.xlu0 %2755
        %2757 = vrot.lane.b32.xlu0 %v1550, 32
        %v2758 = vpop.permute.xlu0 %2757
        %2759 = vrot.lane.b32.xlu0 %v1551, 32
        %v2760 = vpop.permute.xlu0 %2759
        %2761 = vrot.lane.b32.xlu0 %v1552, 32
        %v2762 = vpop.permute.xlu0 %2761
        %2763 = vrot.lane.b32.xlu0 %v1553, 32
        %v2764 = vpop.permute.xlu0 %2763
        %2765 = vrot.lane.b32.xlu0 %v1554, 32
        %v2766 = vpop.permute.xlu0 %2765
        %2767 = vrot.lane.b32.xlu0 %v1555, 32
        %v2768 = vpop.permute.xlu0 %2767
        %2769 = vrot.lane.b32.xlu0 %v1556, 32
        %v2770 = vpop.permute.xlu0 %2769
        %2771 = vrot.lane.b32.xlu0 %v1557, 32
        %v2772 = vpop.permute.xlu0 %2771
        %2773 = vrot.lane.b32.xlu0 %v1558, 32
        %v2774 = vpop.permute.xlu0 %2773
        %2775 = vrot.lane.b32.xlu0 %v1559, 32
        %v2776 = vpop.permute.xlu0 %2775
        %2777 = vrot.lane.b32.xlu0 %v1560, 32
        %v2778 = vpop.permute.xlu0 %2777
        %2779 = vrot.lane.b32.xlu0 %v1561, 32
        %v2780 = vpop.permute.xlu0 %2779
        %2781 = vrot.lane.b32.xlu0 %v1562, 32
        %v2782 = vpop.permute.xlu0 %2781
        %2783 = vrot.lane.b32.xlu0 %v1563, 32
        %v2784 = vpop.permute.xlu0 %2783
        %2785 = vrot.lane.b32.xlu0 %v1564, 32
        %v2786 = vpop.permute.xlu0 %2785
        %2787 = vrot.lane.b32.xlu0 %v1565, 32
        %v2788 = vpop.permute.xlu0 %2787
        %2789 = vrot.lane.b32.xlu0 %v1566, 32
        %v2790 = vpop.permute.xlu0 %2789
        %2791 = vrot.lane.b32.xlu0 %v1567, 32
        %v2792 = vpop.permute.xlu0 %2791
        %2793 = vrot.lane.b32.xlu0 %v1568, 32
        %v2794 = vpop.permute.xlu0 %2793
        %2795 = vrot.lane.b32.xlu0 %v1569, 32
        %v2796 = vpop.permute.xlu0 %2795
        %2797 = vrot.lane.b32.xlu0 %v1570, 32
        %v2798 = vpop.permute.xlu0 %2797
        %2799 = vrot.lane.b32.xlu0 %v1571, 32
        %v2800 = vpop.permute.xlu0 %2799
        %2801 = vrot.lane.b32.xlu0 %v1572, 32
        %v2802 = vpop.permute.xlu0 %2801
        %2803 = vrot.lane.b32.xlu0 %v1573, 32
        %v2804 = vpop.permute.xlu0 %2803
        %2805 = vrot.lane.b32.xlu0 %v1574, 32
        %v2806 = vpop.permute.xlu0 %2805
        %2807 = vrot.lane.b32.xlu0 %v1575, 32
        %v2808 = vpop.permute.xlu0 %2807
        %2809 = vrot.lane.b32.xlu0 %v1576, 32
        %v2810 = vpop.permute.xlu0 %2809
        %2811 = vrot.lane.b32.xlu0 %v1577, 32
        %v2812 = vpop.permute.xlu0 %2811
        %2813 = vrot.lane.b32.xlu0 %v1578, 32
        %v2814 = vpop.permute.xlu0 %2813
        %2815 = vrot.lane.b32.xlu0 %v1579, 32
        %v2816 = vpop.permute.xlu0 %2815
        %2817 = vrot.lane.b32.xlu0 %v1580, 32
        %v2818 = vpop.permute.xlu0 %2817
        %2819 = vrot.lane.b32.xlu0 %v1581, 32
        %v2820 = vpop.permute.xlu0 %2819
        %2821 = vrot.lane.b32.xlu0 %v1582, 32
        %v2822 = vpop.permute.xlu0 %2821
        %2823 = vrot.lane.b32.xlu0 %v1583, 32
        %v2824 = vpop.permute.xlu0 %2823
        %2825 = vrot.lane.b32.xlu0 %v1584, 32
        %v2826 = vpop.permute.xlu0 %2825
        %2827 = vrot.lane.b32.xlu0 %v1585, 32
        %v2828 = vpop.permute.xlu0 %2827
        %2829 = vrot.lane.b32.xlu0 %v1586, 32
        %v2830 = vpop.permute.xlu0 %2829
        %2831 = vrot.lane.b32.xlu0 %v1587, 32
        %v2832 = vpop.permute.xlu0 %2831
        %2833 = vrot.lane.b32.xlu0 %v1588, 32
        %v2834 = vpop.permute.xlu0 %2833
        %2835 = vrot.lane.b32.xlu0 %v1589, 32
        %v2836 = vpop.permute.xlu0 %2835
        %2837 = vrot.lane.b32.xlu0 %v1590, 32
        %v2838 = vpop.permute.xlu0 %2837
        %2839 = vrot.lane.b32.xlu0 %v1591, 32
        %v2840 = vpop.permute.xlu0 %2839
        %2841 = vrot.lane.b32.xlu0 %v1592, 32
        %v2842 = vpop.permute.xlu0 %2841
        %2843 = vrot.lane.b32.xlu0 %v1593, 32
        %v2844 = vpop.permute.xlu0 %2843
        %2845 = vrot.lane.b32.xlu0 %v1594, 32
        %v2846 = vpop.permute.xlu0 %2845
        %2847 = vrot.lane.b32.xlu0 %v1595, 32
        %v2848 = vpop.permute.xlu0 %2847
        %2849 = vrot.lane.b32.xlu0 %v1596, 32
        %v2850 = vpop.permute.xlu0 %2849
        %2851 = vrot.lane.b32.xlu0 %v1597, 32
        %v2852 = vpop.permute.xlu0 %2851
        %2853 = vrot.lane.b32.xlu0 %v1598, 32
        %v2854 = vpop.permute.xlu0 %2853
        %2855 = vrot.lane.b32.xlu0 %v1599, 32
        %v2856 = vpop.permute.xlu0 %2855
        %2857 = vrot.lane.b32.xlu0 %v1600, 32
        %v2858 = vpop.permute.xlu0 %2857
        %2859 = vrot.lane.b32.xlu0 %v1601, 32
        %v2860 = vpop.permute.xlu0 %2859
        %2861 = vrot.lane.b32.xlu0 %v1602, 32
        %v2862 = vpop.permute.xlu0 %2861
        %2863 = vrot.lane.b32.xlu0 %v1603, 32
        %v2864 = vpop.permute.xlu0 %2863
        %2865 = vrot.lane.b32.xlu0 %v1604, 32
        %v2866 = vpop.permute.xlu0 %2865
        %2867 = vrot.lane.b32.xlu0 %v1605, 32
        %v2868 = vpop.permute.xlu0 %2867
        %2869 = vrot.lane.b32.xlu0 %v1606, 32
        %v2870 = vpop.permute.xlu0 %2869
        %2871 = vrot.lane.b32.xlu0 %v1607, 32
        %v2872 = vpop.permute.xlu0 %2871
        %2873 = vrot.lane.b32.xlu0 %v1608, 32
        %v2874 = vpop.permute.xlu0 %2873
        %2875 = vrot.lane.b32.xlu0 %v1609, 32
        %v2876 = vpop.permute.xlu0 %2875
        %2877 = vrot.lane.b32.xlu0 %v1610, 32
        %v2878 = vpop.permute.xlu0 %2877
        %2879 = vrot.lane.b32.xlu0 %v1611, 32
        %v2880 = vpop.permute.xlu0 %2879
        %2881 = vrot.lane.b32.xlu0 %v1612, 32
        %v2882 = vpop.permute.xlu0 %2881
        %2883 = vrot.lane.b32.xlu0 %v1613, 32
        %v2884 = vpop.permute.xlu0 %2883
        %2885 = vrot.lane.b32.xlu0 %v1614, 32
        %v2886 = vpop.permute.xlu0 %2885
        %2887 = vrot.lane.b32.xlu0 %v1615, 32
        %v2888 = vpop.permute.xlu0 %2887
        %2889 = vrot.lane.b32.xlu0 %v1616, 32
        %v2890 = vpop.permute.xlu0 %2889
        %2891 = vrot.lane.b32.xlu0 %v1617, 32
        %v2892 = vpop.permute.xlu0 %2891
        %2893 = vrot.lane.b32.xlu0 %v1618, 32
        %v2894 = vpop.permute.xlu0 %2893
        %2895 = vrot.lane.b32.xlu0 %v1619, 32
        %v2896 = vpop.permute.xlu0 %2895
        %2897 = vrot.lane.b32.xlu0 %v1620, 32
        %v2898 = vpop.permute.xlu0 %2897
        %2899 = vrot.lane.b32.xlu0 %v1621, 32
        %v2900 = vpop.permute.xlu0 %2899
        %2901 = vrot.lane.b32.xlu0 %v1622, 32
        %v2902 = vpop.permute.xlu0 %2901
        %2903 = vrot.lane.b32.xlu0 %v1623, 32
        %v2904 = vpop.permute.xlu0 %2903
        %3073 = vrot.lane.b32.xlu0 %v1127, 64
        %v3074 = vpop.permute.xlu0 %3073
        %3075 = vrot.lane.b32.xlu0 %v1128, 64
        %v3076 = vpop.permute.xlu0 %3075
        %3077 = vrot.lane.b32.xlu0 %v1129, 64
        %v3078 = vpop.permute.xlu0 %3077
        %3079 = vrot.lane.b32.xlu0 %v1130, 64
        %v3080 = vpop.permute.xlu0 %3079
        %3081 = vrot.lane.b32.xlu0 %v1131, 64
        %v3082 = vpop.permute.xlu0 %3081
        %3083 = vrot.lane.b32.xlu0 %v1132, 64
        %v3084 = vpop.permute.xlu0 %3083
        %3085 = vrot.lane.b32.xlu0 %v1133, 64
        %v3086 = vpop.permute.xlu0 %3085
        %3087 = vrot.lane.b32.xlu0 %v1134, 64
        %v3088 = vpop.permute.xlu0 %3087
        %3089 = vrot.lane.b32.xlu0 %v1135, 64
        %v3090 = vpop.permute.xlu0 %3089
        %3091 = vrot.lane.b32.xlu0 %v1136, 64
        %v3092 = vpop.permute.xlu0 %3091
        %3093 = vrot.lane.b32.xlu0 %v1137, 64
        %v3094 = vpop.permute.xlu0 %3093
        %3095 = vrot.lane.b32.xlu0 %v1138, 64
        %v3096 = vpop.permute.xlu0 %3095
        %3097 = vrot.lane.b32.xlu0 %v1139, 64
        %v3098 = vpop.permute.xlu0 %3097
        %3099 = vrot.lane.b32.xlu0 %v1140, 64
        %v3100 = vpop.permute.xlu0 %3099
        %3101 = vrot.lane.b32.xlu0 %v1141, 64
        %v3102 = vpop.permute.xlu0 %3101
        %3103 = vrot.lane.b32.xlu0 %v1142, 64
        %v3104 = vpop.permute.xlu0 %3103
        %3105 = vrot.lane.b32.xlu0 %v1143, 64
        %v3106 = vpop.permute.xlu0 %3105
        %3107 = vrot.lane.b32.xlu0 %v1144, 64
        %v3108 = vpop.permute.xlu0 %3107
        %3109 = vrot.lane.b32.xlu0 %v1145, 64
        %v3110 = vpop.permute.xlu0 %3109
        %3111 = vrot.lane.b32.xlu0 %v1146, 64
        %v3112 = vpop.permute.xlu0 %3111
        %3113 = vrot.lane.b32.xlu0 %v1147, 64
        %v3114 = vpop.permute.xlu0 %3113
        %3115 = vrot.lane.b32.xlu0 %v1148, 64
        %v3116 = vpop.permute.xlu0 %3115
        %3117 = vrot.lane.b32.xlu0 %v1149, 64
        %v3118 = vpop.permute.xlu0 %3117
        %3119 = vrot.lane.b32.xlu0 %v1150, 64
        %v3120 = vpop.permute.xlu0 %3119
        %3121 = vrot.lane.b32.xlu0 %v1151, 64
        %v3122 = vpop.permute.xlu0 %3121
        %3123 = vrot.lane.b32.xlu0 %v1152, 64
        %v3124 = vpop.permute.xlu0 %3123
        %3125 = vrot.lane.b32.xlu0 %v1153, 64
        %v3126 = vpop.permute.xlu0 %3125
        %3127 = vrot.lane.b32.xlu0 %v1154, 64
        %v3128 = vpop.permute.xlu0 %3127
        %3129 = vrot.lane.b32.xlu0 %v1155, 64
        %v3130 = vpop.permute.xlu0 %3129
        %3131 = vrot.lane.b32.xlu0 %v1156, 64
        %v3132 = vpop.permute.xlu0 %3131
        %3133 = vrot.lane.b32.xlu0 %v1157, 64
        %v3134 = vpop.permute.xlu0 %3133
        %3135 = vrot.lane.b32.xlu0 %v1158, 64
        %v3136 = vpop.permute.xlu0 %3135
        %3137 = vrot.lane.b32.xlu0 %v1159, 64
        %v3138 = vpop.permute.xlu0 %3137
        %3139 = vrot.lane.b32.xlu0 %v1160, 64
        %v3140 = vpop.permute.xlu0 %3139
        %3141 = vrot.lane.b32.xlu0 %v1161, 64
        %v3142 = vpop.permute.xlu0 %3141
        %3143 = vrot.lane.b32.xlu0 %v1162, 64
        %v3144 = vpop.permute.xlu0 %3143
        %3145 = vrot.lane.b32.xlu0 %v1163, 64
        %v3146 = vpop.permute.xlu0 %3145
        %3147 = vrot.lane.b32.xlu0 %v1164, 64
        %v3148 = vpop.permute.xlu0 %3147
        %3149 = vrot.lane.b32.xlu0 %v1165, 64
        %v3150 = vpop.permute.xlu0 %3149
        %3151 = vrot.lane.b32.xlu0 %v1166, 64
        %v3152 = vpop.permute.xlu0 %3151
        %3153 = vrot.lane.b32.xlu0 %v1167, 64
        %v3154 = vpop.permute.xlu0 %3153
        %3155 = vrot.lane.b32.xlu0 %v1168, 64
        %v3156 = vpop.permute.xlu0 %3155
        %3157 = vrot.lane.b32.xlu0 %v1169, 64
        %v3158 = vpop.permute.xlu0 %3157
        %3159 = vrot.lane.b32.xlu0 %v1170, 64
        %v3160 = vpop.permute.xlu0 %3159
        %3161 = vrot.lane.b32.xlu0 %v1171, 64
        %v3162 = vpop.permute.xlu0 %3161
        %3163 = vrot.lane.b32.xlu0 %v1172, 64
        %v3164 = vpop.permute.xlu0 %3163
        %3165 = vrot.lane.b32.xlu0 %v1173, 64
        %v3166 = vpop.permute.xlu0 %3165
        %3167 = vrot.lane.b32.xlu0 %v1174, 64
        %v3168 = vpop.permute.xlu0 %3167
        %3169 = vrot.lane.b32.xlu0 %v1175, 64
        %v3170 = vpop.permute.xlu0 %3169
        %3171 = vrot.lane.b32.xlu0 %v1176, 64
        %v3172 = vpop.permute.xlu0 %3171
        %3173 = vrot.lane.b32.xlu0 %v1177, 64
        %v3174 = vpop.permute.xlu0 %3173
        %3175 = vrot.lane.b32.xlu0 %v1178, 64
        %v3176 = vpop.permute.xlu0 %3175
        %3177 = vrot.lane.b32.xlu0 %v1179, 64
        %v3178 = vpop.permute.xlu0 %3177
        %3179 = vrot.lane.b32.xlu0 %v1180, 64
        %v3180 = vpop.permute.xlu0 %3179
        %3181 = vrot.lane.b32.xlu0 %v1181, 64
        %v3182 = vpop.permute.xlu0 %3181
        %3183 = vrot.lane.b32.xlu0 %v1182, 64
        %v3184 = vpop.permute.xlu0 %3183
        %3185 = vrot.lane.b32.xlu0 %v1183, 64
        %v3186 = vpop.permute.xlu0 %3185
        %3187 = vrot.lane.b32.xlu0 %v1184, 64
        %v3188 = vpop.permute.xlu0 %3187
        %3189 = vrot.lane.b32.xlu0 %v1185, 64
        %v3190 = vpop.permute.xlu0 %3189
        %3191 = vrot.lane.b32.xlu0 %v1186, 64
        %v3192 = vpop.permute.xlu0 %3191
        %3193 = vrot.lane.b32.xlu0 %v1187, 64
        %v3194 = vpop.permute.xlu0 %3193
        %3195 = vrot.lane.b32.xlu0 %v1188, 64
        %v3196 = vpop.permute.xlu0 %3195
        %3197 = vrot.lane.b32.xlu0 %v1189, 64
        %v3198 = vpop.permute.xlu0 %3197
        %3199 = vrot.lane.b32.xlu0 %v1190, 64
        %v3200 = vpop.permute.xlu0 %3199
        %3201 = vrot.lane.b32.xlu0 %v1191, 64
        %v3202 = vpop.permute.xlu0 %3201
        %3203 = vrot.lane.b32.xlu0 %v1192, 64
        %v3204 = vpop.permute.xlu0 %3203
        %3205 = vrot.lane.b32.xlu0 %v1193, 64
        %v3206 = vpop.permute.xlu0 %3205
        %3207 = vrot.lane.b32.xlu0 %v1194, 64
        %v3208 = vpop.permute.xlu0 %3207
        %3209 = vrot.lane.b32.xlu0 %v1195, 64
        %v3210 = vpop.permute.xlu0 %3209
        %3211 = vrot.lane.b32.xlu0 %v1196, 64
        %v3212 = vpop.permute.xlu0 %3211
        %3213 = vrot.lane.b32.xlu0 %v1197, 64
        %v3214 = vpop.permute.xlu0 %3213
        %3215 = vrot.lane.b32.xlu0 %v1198, 64
        %v3216 = vpop.permute.xlu0 %3215
        %3217 = vrot.lane.b32.xlu0 %v1199, 64
        %v3218 = vpop.permute.xlu0 %3217
        %3219 = vrot.lane.b32.xlu0 %v1200, 64
        %v3220 = vpop.permute.xlu0 %3219
        %3221 = vrot.lane.b32.xlu0 %v1201, 64
        %v3222 = vpop.permute.xlu0 %3221
        %3223 = vrot.lane.b32.xlu0 %v1202, 64
        %v3224 = vpop.permute.xlu0 %3223
        %3225 = vrot.lane.b32.xlu0 %v1203, 64
        %v3226 = vpop.permute.xlu0 %3225
        %3227 = vrot.lane.b32.xlu0 %v1624, 64
        %v3228 = vpop.permute.xlu0 %3227
        %3229 = vrot.lane.b32.xlu0 %v1625, 64
        %v3230 = vpop.permute.xlu0 %3229
        %3231 = vrot.lane.b32.xlu0 %v1626, 64
        %v3232 = vpop.permute.xlu0 %3231
        %3233 = vrot.lane.b32.xlu0 %v1627, 64
        %v3234 = vpop.permute.xlu0 %3233
        %3235 = vrot.lane.b32.xlu0 %v1628, 64
        %v3236 = vpop.permute.xlu0 %3235
        %3237 = vrot.lane.b32.xlu0 %v1629, 64
        %v3238 = vpop.permute.xlu0 %3237
        %3239 = vrot.lane.b32.xlu0 %v1630, 64
        %v3240 = vpop.permute.xlu0 %3239
        %3332 = vrot.lane.b32.xlu0 %v1211, 96
        %v3333 = vpop.permute.xlu0 %3332
        %3334 = vrot.lane.b32.xlu0 %v1212, 96
        %v3335 = vpop.permute.xlu0 %3334
        %3336 = vrot.lane.b32.xlu0 %v1213, 96
        %v3337 = vpop.permute.xlu0 %3336
        %3338 = vrot.lane.b32.xlu0 %v1214, 96
        %v3339 = vpop.permute.xlu0 %3338
        %3340 = vrot.lane.b32.xlu0 %v1215, 96
        %v3341 = vpop.permute.xlu0 %3340
        %3342 = vrot.lane.b32.xlu0 %v1216, 96
        %v3343 = vpop.permute.xlu0 %3342
        %3344 = vrot.lane.b32.xlu0 %v1217, 96
        %v3345 = vpop.permute.xlu0 %3344
        %3346 = vrot.lane.b32.xlu0 %v1218, 96
        %v3347 = vpop.permute.xlu0 %3346
        %3348 = vrot.lane.b32.xlu0 %v1219, 96
        %v3349 = vpop.permute.xlu0 %3348
        %3350 = vrot.lane.b32.xlu0 %v1220, 96
        %v3351 = vpop.permute.xlu0 %3350
        %3352 = vrot.lane.b32.xlu0 %v1221, 96
        %v3353 = vpop.permute.xlu0 %3352
        %3354 = vrot.lane.b32.xlu0 %v1222, 96
        %v3355 = vpop.permute.xlu0 %3354
        %3356 = vrot.lane.b32.xlu0 %v1223, 96
        %v3357 = vpop.permute.xlu0 %3356
        %3358 = vrot.lane.b32.xlu0 %v1224, 96
        %v3359 = vpop.permute.xlu0 %3358
        %3360 = vrot.lane.b32.xlu0 %v1225, 96
        %v3361 = vpop.permute.xlu0 %3360
        %3362 = vrot.lane.b32.xlu0 %v1226, 96
        %v3363 = vpop.permute.xlu0 %3362
        %3364 = vrot.lane.b32.xlu0 %v1227, 96
        %v3365 = vpop.permute.xlu0 %3364
        %3366 = vrot.lane.b32.xlu0 %v1228, 96
        %v3367 = vpop.permute.xlu0 %3366
        %3368 = vrot.lane.b32.xlu0 %v1229, 96
        %v3369 = vpop.permute.xlu0 %3368
        %3370 = vrot.lane.b32.xlu0 %v1230, 96
        %v3371 = vpop.permute.xlu0 %3370
        %3372 = vrot.lane.b32.xlu0 %v1231, 96
        %v3373 = vpop.permute.xlu0 %3372
        %3374 = vrot.lane.b32.xlu0 %v1232, 96
        %v3375 = vpop.permute.xlu0 %3374
        %3376 = vrot.lane.b32.xlu0 %v1233, 96
        %v3377 = vpop.permute.xlu0 %3376
        %3378 = vrot.lane.b32.xlu0 %v1234, 96
        %v3379 = vpop.permute.xlu0 %3378
        %3380 = vrot.lane.b32.xlu0 %v1235, 96
        %v3381 = vpop.permute.xlu0 %3380
        %3382 = vrot.lane.b32.xlu0 %v1236, 96
        %v3383 = vpop.permute.xlu0 %3382
        %3384 = vrot.lane.b32.xlu0 %v1237, 96
        %v3385 = vpop.permute.xlu0 %3384
        %3386 = vrot.lane.b32.xlu0 %v1238, 96
        %v3387 = vpop.permute.xlu0 %3386
        %3388 = vrot.lane.b32.xlu0 %v1239, 96
        %v3389 = vpop.permute.xlu0 %3388
        %3390 = vrot.lane.b32.xlu0 %v1240, 96
        %v3391 = vpop.permute.xlu0 %3390
        %3392 = vrot.lane.b32.xlu0 %v1241, 96
        %v3393 = vpop.permute.xlu0 %3392
        %3394 = vrot.lane.b32.xlu0 %v1242, 96
        %v3395 = vpop.permute.xlu0 %3394
        %3396 = vrot.lane.b32.xlu0 %v1243, 96
        %v3397 = vpop.permute.xlu0 %3396
        %3398 = vrot.lane.b32.xlu0 %v1244, 96
        %v3399 = vpop.permute.xlu0 %3398
        %3400 = vrot.lane.b32.xlu0 %v1245, 96
        %v3401 = vpop.permute.xlu0 %3400
        %3402 = vrot.lane.b32.xlu0 %v1246, 96
        %v3403 = vpop.permute.xlu0 %3402
        %3404 = vrot.lane.b32.xlu0 %v1247, 96
        %v3405 = vpop.permute.xlu0 %3404
        %3406 = vrot.lane.b32.xlu0 %v1248, 96
        %v3407 = vpop.permute.xlu0 %3406
        %3408 = vrot.lane.b32.xlu0 %v1249, 96
        %v3409 = vpop.permute.xlu0 %3408
        %3410 = vrot.lane.b32.xlu0 %v1250, 96
        %v3411 = vpop.permute.xlu0 %3410
        %3412 = vrot.lane.b32.xlu0 %v1251, 96
        %v3413 = vpop.permute.xlu0 %3412
        %3414 = vrot.lane.b32.xlu0 %v1252, 96
        %v3415 = vpop.permute.xlu0 %3414
        %3416 = vrot.lane.b32.xlu0 %v1253, 96
        %v3417 = vpop.permute.xlu0 %3416
        %3418 = vrot.lane.b32.xlu0 %v1254, 96
        %v3419 = vpop.permute.xlu0 %3418
        %3420 = vrot.lane.b32.xlu0 %v1255, 96
        %v3421 = vpop.permute.xlu0 %3420
        %3422 = vrot.lane.b32.xlu0 %v1256, 96
        %v3423 = vpop.permute.xlu0 %3422
        %3424 = vrot.lane.b32.xlu0 %v1257, 96
        %v3425 = vpop.permute.xlu0 %3424
        %3426 = vrot.lane.b32.xlu0 %v1258, 96
        %v3427 = vpop.permute.xlu0 %3426
        %3428 = vrot.lane.b32.xlu0 %v1259, 96
        %v3429 = vpop.permute.xlu0 %3428
        %3430 = vrot.lane.b32.xlu0 %v1260, 96
        %v3431 = vpop.permute.xlu0 %3430
        %3432 = vrot.lane.b32.xlu0 %v1261, 96
        %v3433 = vpop.permute.xlu0 %3432
        %3434 = vrot.lane.b32.xlu0 %v1262, 96
        %v3435 = vpop.permute.xlu0 %3434
        %3436 = vrot.lane.b32.xlu0 %v1263, 96
        %v3437 = vpop.permute.xlu0 %3436
        %3438 = vrot.lane.b32.xlu0 %v1264, 96
        %v3439 = vpop.permute.xlu0 %3438
        %3440 = vrot.lane.b32.xlu0 %v1265, 96
        %v3441 = vpop.permute.xlu0 %3440
        %3442 = vrot.lane.b32.xlu0 %v1266, 96
        %v3443 = vpop.permute.xlu0 %3442
        %3444 = vrot.lane.b32.xlu0 %v1267, 96
        %v3445 = vpop.permute.xlu0 %3444
        %3446 = vrot.lane.b32.xlu0 %v1268, 96
        %v3447 = vpop.permute.xlu0 %3446
        %3448 = vrot.lane.b32.xlu0 %v1269, 96
        %v3449 = vpop.permute.xlu0 %3448
        %3450 = vrot.lane.b32.xlu0 %v1270, 96
        %v3451 = vpop.permute.xlu0 %3450
        %3452 = vrot.lane.b32.xlu0 %v1271, 96
        %v3453 = vpop.permute.xlu0 %3452
        %3454 = vrot.lane.b32.xlu0 %v1272, 96
        %v3455 = vpop.permute.xlu0 %3454
        %3456 = vrot.lane.b32.xlu0 %v1273, 96
        %v3457 = vpop.permute.xlu0 %3456
        %3458 = vrot.lane.b32.xlu0 %v1274, 96
        %v3459 = vpop.permute.xlu0 %3458
        %3460 = vrot.lane.b32.xlu0 %v1275, 96
        %v3461 = vpop.permute.xlu0 %3460
        %3462 = vrot.lane.b32.xlu0 %v1276, 96
        %v3463 = vpop.permute.xlu0 %3462
        %3464 = vrot.lane.b32.xlu0 %v1277, 96
        %v3465 = vpop.permute.xlu0 %3464
        %3466 = vrot.lane.b32.xlu0 %v1278, 96
        %v3467 = vpop.permute.xlu0 %3466
        %3468 = vrot.lane.b32.xlu0 %v1279, 96
        %v3469 = vpop.permute.xlu0 %3468
        %3470 = vrot.lane.b32.xlu0 %v1280, 96
        %v3471 = vpop.permute.xlu0 %3470
        %3472 = vrot.lane.b32.xlu0 %v1281, 96
        %v3473 = vpop.permute.xlu0 %3472
        %3474 = vrot.lane.b32.xlu0 %v1282, 96
        %v3475 = vpop.permute.xlu0 %3474
        %3476 = vrot.lane.b32.xlu0 %v1283, 96
        %v3477 = vpop.permute.xlu0 %3476
        %3478 = vrot.lane.b32.xlu0 %v1284, 96
        %v3479 = vpop.permute.xlu0 %3478
        %3480 = vrot.lane.b32.xlu0 %v1285, 96
        %v3481 = vpop.permute.xlu0 %3480
        %3482 = vrot.lane.b32.xlu0 %v1286, 96
        %v3483 = vpop.permute.xlu0 %3482
        %3484 = vrot.lane.b32.xlu0 %v1287, 96
        %v3485 = vpop.permute.xlu0 %3484
        %3486 = vrot.lane.b32.xlu0 %v1631, 96
        %v3487 = vpop.permute.xlu0 %3486
        %3488 = vrot.lane.b32.xlu0 %v1632, 96
        %v3489 = vpop.permute.xlu0 %3488
        %3490 = vrot.lane.b32.xlu0 %v1633, 96
        %v3491 = vpop.permute.xlu0 %3490
        %3492 = vrot.lane.b32.xlu0 %v1634, 96
        %v3493 = vpop.permute.xlu0 %3492
        %3494 = vrot.lane.b32.xlu0 %v1635, 96
        %v3495 = vpop.permute.xlu0 %3494
        %3496 = vrot.lane.b32.xlu0 %v1636, 96
        %v3497 = vpop.permute.xlu0 %3496
        %3498 = vrot.lane.b32.xlu0 %v1637, 96
        %v3499 = vpop.permute.xlu0 %3498
        %v3584 = vsel %vm1027, %v1120, %v1730
        %v3585 = vsel %vm1027, %v1121, %v1732
        %v3586 = vsel %vm1027, %v1122, %v1734
        %v3587 = vsel %vm1027, %v1123, %v1736
        %v3588 = vsel %vm1027, %v1124, %v1738
        %v3589 = vsel %vm1027, %v1125, %v1740
        %v3590 = vsel %vm1027, %v1126, %v1742
        %v3591 = vsel %vm1027, %v1127, %v1744
        %v3592 = vsel %vm1027, %v1128, %v1746
        %v3593 = vsel %vm1027, %v1129, %v1748
        %v3594 = vsel %vm1027, %v1130, %v1750
        %v3595 = vsel %vm1027, %v1131, %v1752
        %v3596 = vsel %vm1027, %v1132, %v1754
        %v3597 = vsel %vm1027, %v1133, %v1756
        %v3598 = vsel %vm1027, %v1134, %v1758
        %v3599 = vsel %vm1027, %v1135, %v1760
        %v3600 = vsel %vm1027, %v1136, %v1762
        %v3601 = vsel %vm1027, %v1137, %v1764
        %v3602 = vsel %vm1027, %v1138, %v1766
        %v3603 = vsel %vm1027, %v1139, %v1768
        %v3604 = vsel %vm1027, %v1140, %v1770
        %v3605 = vsel %vm1027, %v1141, %v1772
        %v3606 = vsel %vm1027, %v1142, %v1774
        %v3607 = vsel %vm1027, %v1143, %v1776
        %v3608 = vsel %vm1027, %v1144, %v1778
        %v3609 = vsel %vm1027, %v1145, %v1780
        %v3610 = vsel %vm1027, %v1146, %v1782
        %v3611 = vsel %vm1027, %v1147, %v1784
        %v3612 = vsel %vm1027, %v1148, %v1786
        %v3613 = vsel %vm1027, %v1149, %v1788
        %v3614 = vsel %vm1027, %v1150, %v1790
        %v3615 = vsel %vm1027, %v1151, %v1792
        %v3616 = vsel %vm1027, %v1152, %v1794
        %v3617 = vsel %vm1027, %v1153, %v1796
        %v3618 = vsel %vm1027, %v1154, %v1798
        %v3619 = vsel %vm1027, %v1155, %v1800
        %v3620 = vsel %vm1027, %v1156, %v1802
        %v3621 = vsel %vm1027, %v1157, %v1804
        %v3622 = vsel %vm1027, %v1158, %v1806
        %v3623 = vsel %vm1027, %v1159, %v1808
        %v3624 = vsel %vm1027, %v1160, %v1810
        %v3625 = vsel %vm1027, %v1161, %v1812
        %v3626 = vsel %vm1027, %v1162, %v1814
        %v3627 = vsel %vm1027, %v1163, %v1816
        %v3628 = vsel %vm1027, %v1164, %v1818
        %v3629 = vsel %vm1027, %v1165, %v1820
        %v3630 = vsel %vm1027, %v1166, %v1822
        %v3631 = vsel %vm1027, %v1167, %v1824
        %v3632 = vsel %vm1027, %v1168, %v1826
        %v3633 = vsel %vm1027, %v1169, %v1828
        %v3634 = vsel %vm1027, %v1170, %v1830
        %v3635 = vsel %vm1027, %v1171, %v1832
        %v3636 = vsel %vm1027, %v1172, %v1834
        %v3637 = vsel %vm1027, %v1173, %v1836
        %v3638 = vsel %vm1027, %v1174, %v1838
        %v3639 = vsel %vm1027, %v1175, %v1840
        %v3640 = vsel %vm1027, %v1176, %v1842
        %v3641 = vsel %vm1027, %v1177, %v1844
        %v3642 = vsel %vm1027, %v1178, %v1846
        %v3643 = vsel %vm1027, %v1179, %v1848
        %v3644 = vsel %vm1027, %v1180, %v1850
        %v3645 = vsel %vm1027, %v1181, %v1852
        %v3646 = vsel %vm1027, %v1182, %v1854
        %v3647 = vsel %vm1027, %v1183, %v1856
        %v3648 = vsel %vm1027, %v1184, %v1858
        %v3649 = vsel %vm1027, %v1185, %v1860
        %v3650 = vsel %vm1027, %v1186, %v1862
        %v3651 = vsel %vm1027, %v1187, %v1864
        %v3652 = vsel %vm1027, %v1188, %v1866
        %v3653 = vsel %vm1027, %v1189, %v1868
        %v3654 = vsel %vm1027, %v1190, %v1870
        %v3655 = vsel %vm1027, %v1191, %v1872
        %v3656 = vsel %vm1027, %v1192, %v1874
        %v3657 = vsel %vm1027, %v1193, %v1876
        %v3658 = vsel %vm1027, %v1194, %v1878
        %v3659 = vsel %vm1027, %v1195, %v1880
        %v3660 = vsel %vm1027, %v1196, %v1882
        %v3661 = vsel %vm1027, %v1197, %v1884
        %v3662 = vsel %vm1027, %v1198, %v1886
        %v3663 = vsel %vm1027, %v1199, %v1888
        %v3664 = vsel %vm1027, %v1200, %v1890
        %v3665 = vsel %vm1027, %v1201, %v1892
        %v3666 = vsel %vm1027, %v1202, %v1894
        %v3667 = vsel %vm1027, %v1203, %v1896
        %vm3668 = vcmask 523264
        %v3669 = vsel %vm3668, %v3584, %v2066
        %v3670 = vsel %vm3668, %v3585, %v2068
        %v3671 = vsel %vm3668, %v3586, %v2070
        %v3672 = vsel %vm3668, %v3587, %v2072
        %v3673 = vsel %vm3668, %v3588, %v2074
        %v3674 = vsel %vm3668, %v3589, %v2076
        %v3675 = vsel %vm3668, %v3590, %v2078
        %v3676 = vsel %vm3668, %v3591, %v2080
        %v3677 = vsel %vm3668, %v3592, %v2082
        %v3678 = vsel %vm3668, %v3593, %v2084
        %v3679 = vsel %vm3668, %v3594, %v2086
        %v3680 = vsel %vm3668, %v3595, %v2088
        %v3681 = vsel %vm3668, %v3596, %v2090
        %v3682 = vsel %vm3668, %v3597, %v2092
        %v3683 = vsel %vm3668, %v3598, %v2094
        %v3684 = vsel %vm3668, %v3599, %v2096
        %v3685 = vsel %vm3668, %v3600, %v2098
        %v3686 = vsel %vm3668, %v3601, %v2100
        %v3687 = vsel %vm3668, %v3602, %v2102
        %v3688 = vsel %vm3668, %v3603, %v2104
        %v3689 = vsel %vm3668, %v3604, %v2106
        %v3690 = vsel %vm3668, %v3605, %v2108
        %v3691 = vsel %vm3668, %v3606, %v2110
        %v3692 = vsel %vm3668, %v3607, %v2112
        %v3693 = vsel %vm3668, %v3608, %v2114
        %v3694 = vsel %vm3668, %v3609, %v2116
        %v3695 = vsel %vm3668, %v3610, %v2118
        %v3696 = vsel %vm3668, %v3611, %v2120
        %v3697 = vsel %vm3668, %v3612, %v2122
        %v3698 = vsel %vm3668, %v3613, %v2124
        %v3699 = vsel %vm3668, %v3614, %v2126
        %v3700 = vsel %vm3668, %v3615, %v2128
        %v3701 = vsel %vm3668, %v3616, %v2130
        %v3702 = vsel %vm3668, %v3617, %v2132
        %v3703 = vsel %vm3668, %v3618, %v2134
        %v3704 = vsel %vm3668, %v3619, %v2136
        %v3705 = vsel %vm3668, %v3620, %v2138
        %v3706 = vsel %vm3668, %v3621, %v2140
        %v3707 = vsel %vm3668, %v3622, %v2142
        %v3708 = vsel %vm3668, %v3623, %v2144
        %v3709 = vsel %vm3668, %v3624, %v2146
        %v3710 = vsel %vm3668, %v3625, %v2148
        %v3711 = vsel %vm3668, %v3626, %v2150
        %v3712 = vsel %vm3668, %v3627, %v2152
        %v3713 = vsel %vm3668, %v3628, %v2154
        %v3714 = vsel %vm3668, %v3629, %v2156
        %v3715 = vsel %vm3668, %v3630, %v2158
        %v3716 = vsel %vm3668, %v3631, %v2160
        %v3717 = vsel %vm3668, %v3632, %v2162
        %v3718 = vsel %vm3668, %v3633, %v2164
        %v3719 = vsel %vm3668, %v3634, %v2166
        %v3720 = vsel %vm3668, %v3635, %v2168
        %v3721 = vsel %vm3668, %v3636, %v2170
        %v3722 = vsel %vm3668, %v3637, %v2172
        %v3723 = vsel %vm3668, %v3638, %v2174
        %v3724 = vsel %vm3668, %v3639, %v2176
        %v3725 = vsel %vm3668, %v3640, %v2178
        %v3726 = vsel %vm3668, %v3641, %v2180
        %v3727 = vsel %vm3668, %v3642, %v2182
        %v3728 = vsel %vm3668, %v3643, %v2184
        %v3729 = vsel %vm3668, %v3644, %v2186
        %v3730 = vsel %vm3668, %v3645, %v2188
        %v3731 = vsel %vm3668, %v3646, %v2190
        %v3732 = vsel %vm3668, %v3647, %v2192
        %v3733 = vsel %vm3668, %v3648, %v2194
        %v3734 = vsel %vm3668, %v3649, %v2196
        %v3735 = vsel %vm3668, %v3650, %v2198
        %v3736 = vsel %vm3668, %v3651, %v2200
        %v3737 = vsel %vm3668, %v3652, %v2202
        %v3738 = vsel %vm3668, %v3653, %v2204
        %v3739 = vsel %vm3668, %v3654, %v2206
        %v3740 = vsel %vm3668, %v3655, %v2208
        %v3741 = vsel %vm3668, %v3656, %v2210
        %v3742 = vsel %vm3668, %v3657, %v2212
        %v3743 = vsel %vm3668, %v3658, %v2214
        %v3744 = vsel %vm3668, %v3659, %v2216
        %v3745 = vsel %vm3668, %v3660, %v2218
        %v3746 = vsel %vm3668, %v3661, %v2220
        %v3747 = vsel %vm3668, %v3662, %v2222
        %v3748 = vsel %vm3668, %v3663, %v2224
        %v3749 = vsel %vm3668, %v3664, %v2226
        %v3750 = vsel %vm3668, %v3665, %v2228
        %v3751 = vsel %vm3668, %v3666, %v2230
        %v3752 = vsel %vm3668, %v3667, %v2232
        %vm3753 = vcmask 785408
        %v3754 = vsel %vm3753, %v3669, %v2402
        %v3755 = vsel %vm3753, %v3670, %v2404
        %v3756 = vsel %vm3753, %v3671, %v2406
        %v3757 = vsel %vm3753, %v3672, %v2408
        %v3758 = vsel %vm3753, %v3673, %v2410
        %v3759 = vsel %vm3753, %v3674, %v2412
        %v3760 = vsel %vm3753, %v3675, %v2414
        %v3761 = vsel %vm3753, %v3676, %v2416
        %v3762 = vsel %vm3753, %v3677, %v2418
        %v3763 = vsel %vm3753, %v3678, %v2420
        %v3764 = vsel %vm3753, %v3679, %v2422
        %v3765 = vsel %vm3753, %v3680, %v2424
        %v3766 = vsel %vm3753, %v3681, %v2426
        %v3767 = vsel %vm3753, %v3682, %v2428
        %v3768 = vsel %vm3753, %v3683, %v2430
        %v3769 = vsel %vm3753, %v3684, %v2432
        %v3770 = vsel %vm3753, %v3685, %v2434
        %v3771 = vsel %vm3753, %v3686, %v2436
        %v3772 = vsel %vm3753, %v3687, %v2438
        %v3773 = vsel %vm3753, %v3688, %v2440
        %v3774 = vsel %vm3753, %v3689, %v2442
        %v3775 = vsel %vm3753, %v3690, %v2444
        %v3776 = vsel %vm3753, %v3691, %v2446
        %v3777 = vsel %vm3753, %v3692, %v2448
        %v3778 = vsel %vm3753, %v3693, %v2450
        %v3779 = vsel %vm3753, %v3694, %v2452
        %v3780 = vsel %vm3753, %v3695, %v2454
        %v3781 = vsel %vm3753, %v3696, %v2456
        %v3782 = vsel %vm3753, %v3697, %v2458
        %v3783 = vsel %vm3753, %v3698, %v2460
        %v3784 = vsel %vm3753, %v3699, %v2462
        %v3785 = vsel %vm3753, %v3700, %v2464
        %v3786 = vsel %vm3753, %v3701, %v2466
        %v3787 = vsel %vm3753, %v3702, %v2468
        %v3788 = vsel %vm3753, %v3703, %v2470
        %v3789 = vsel %vm3753, %v3704, %v2472
        %v3790 = vsel %vm3753, %v3705, %v2474
        %v3791 = vsel %vm3753, %v3706, %v2476
        %v3792 = vsel %vm3753, %v3707, %v2478
        %v3793 = vsel %vm3753, %v3708, %v2480
        %v3794 = vsel %vm3753, %v3709, %v2482
        %v3795 = vsel %vm3753, %v3710, %v2484
        %v3796 = vsel %vm3753, %v3711, %v2486
        %v3797 = vsel %vm3753, %v3712, %v2488
        %v3798 = vsel %vm3753, %v3713, %v2490
        %v3799 = vsel %vm3753, %v3714, %v2492
        %v3800 = vsel %vm3753, %v3715, %v2494
        %v3801 = vsel %vm3753, %v3716, %v2496
        %v3802 = vsel %vm3753, %v3717, %v2498
        %v3803 = vsel %vm3753, %v3718, %v2500
        %v3804 = vsel %vm3753, %v3719, %v2502
        %v3805 = vsel %vm3753, %v3720, %v2504
        %v3806 = vsel %vm3753, %v3721, %v2506
        %v3807 = vsel %vm3753, %v3722, %v2508
        %v3808 = vsel %vm3753, %v3723, %v2510
        %v3809 = vsel %vm3753, %v3724, %v2512
        %v3810 = vsel %vm3753, %v3725, %v2514
        %v3811 = vsel %vm3753, %v3726, %v2516
        %v3812 = vsel %vm3753, %v3727, %v2518
        %v3813 = vsel %vm3753, %v3728, %v2520
        %v3814 = vsel %vm3753, %v3729, %v2522
        %v3815 = vsel %vm3753, %v3730, %v2524
        %v3816 = vsel %vm3753, %v3731, %v2526
        %v3817 = vsel %vm3753, %v3732, %v2528
        %v3818 = vsel %vm3753, %v3733, %v2530
        %v3819 = vsel %vm3753, %v3734, %v2532
        %v3820 = vsel %vm3753, %v3735, %v2534
        %v3821 = vsel %vm3753, %v3736, %v2536
        %v3822 = vsel %vm3753, %v3737, %v2538
        %v3823 = vsel %vm3753, %v3738, %v2540
        %v3824 = vsel %vm3753, %v3739, %v2542
        %v3825 = vsel %vm3753, %v3740, %v2544
        %v3826 = vsel %vm3753, %v3741, %v2546
        %v3827 = vsel %vm3753, %v3742, %v2548
        %v3828 = vsel %vm3753, %v3743, %v2550
        %v3829 = vsel %vm3753, %v3744, %v2552
        %v3830 = vsel %vm3753, %v3745, %v2554
        %v3831 = vsel %vm3753, %v3746, %v2556
        %v3832 = vsel %vm3753, %v3747, %v2558
        %v3833 = vsel %vm3753, %v3748, %v2560
        %v3834 = vsel %vm3753, %v3749, %v2562
        %v3835 = vsel %vm3753, %v3750, %v2564
        %v3836 = vsel %vm3753, %v3751, %v2566
        %v3837 = vsel %vm3753, %v3752, %v2568
        %v3838 = vsel %vm1027, %v1456, %v2738
        %v3839 = vsel %vm1027, %v1457, %v2740
        %v3840 = vsel %vm1027, %v1458, %v2742
        %v3841 = vsel %vm1027, %v1459, %v2744
        %v3842 = vsel %vm1027, %v1460, %v2746
        %v3843 = vsel %vm1027, %v1461, %v2748
        %v3844 = vsel %vm1027, %v1462, %v2750
        %v3845 = vsel %vm1027, %v1463, %v2752
        %v3846 = vsel %vm1027, %v1464, %v2754
        %v3847 = vsel %vm1027, %v1465, %v2756
        %v3848 = vsel %vm1027, %v1466, %v2758
        %v3849 = vsel %vm1027, %v1467, %v2760
        %v3850 = vsel %vm1027, %v1468, %v2762
        %v3851 = vsel %vm1027, %v1469, %v2764
        %v3852 = vsel %vm1027, %v1470, %v2766
        %v3853 = vsel %vm1027, %v1471, %v2768
        %v3854 = vsel %vm1027, %v1472, %v2770
        %v3855 = vsel %vm1027, %v1473, %v2772
        %v3856 = vsel %vm1027, %v1474, %v2774
        %v3857 = vsel %vm1027, %v1475, %v2776
        %v3858 = vsel %vm1027, %v1476, %v2778
        %v3859 = vsel %vm1027, %v1477, %v2780
        %v3860 = vsel %vm1027, %v1478, %v2782
        %v3861 = vsel %vm1027, %v1479, %v2784
        %v3862 = vsel %vm1027, %v1480, %v2786
        %v3863 = vsel %vm1027, %v1481, %v2788
        %v3864 = vsel %vm1027, %v1482, %v2790
        %v3865 = vsel %vm1027, %v1483, %v2792
        %v3866 = vsel %vm1027, %v1484, %v2794
        %v3867 = vsel %vm1027, %v1485, %v2796
        %v3868 = vsel %vm1027, %v1486, %v2798
        %v3869 = vsel %vm1027, %v1487, %v2800
        %v3870 = vsel %vm1027, %v1488, %v2802
        %v3871 = vsel %vm1027, %v1489, %v2804
        %v3872 = vsel %vm1027, %v1490, %v2806
        %v3873 = vsel %vm1027, %v1491, %v2808
        %v3874 = vsel %vm1027, %v1492, %v2810
        %v3875 = vsel %vm1027, %v1493, %v2812
        %v3876 = vsel %vm1027, %v1494, %v2814
        %v3877 = vsel %vm1027, %v1495, %v2816
        %v3878 = vsel %vm1027, %v1496, %v2818
        %v3879 = vsel %vm1027, %v1497, %v2820
        %v3880 = vsel %vm1027, %v1498, %v2822
        %v3881 = vsel %vm1027, %v1499, %v2824
        %v3882 = vsel %vm1027, %v1500, %v2826
        %v3883 = vsel %vm1027, %v1501, %v2828
        %v3884 = vsel %vm1027, %v1502, %v2830
        %v3885 = vsel %vm1027, %v1503, %v2832
        %v3886 = vsel %vm1027, %v1504, %v2834
        %v3887 = vsel %vm1027, %v1505, %v2836
        %v3888 = vsel %vm1027, %v1506, %v2838
        %v3889 = vsel %vm1027, %v1507, %v2840
        %v3890 = vsel %vm1027, %v1508, %v2842
        %v3891 = vsel %vm1027, %v1509, %v2844
        %v3892 = vsel %vm1027, %v1510, %v2846
        %v3893 = vsel %vm1027, %v1511, %v2848
        %v3894 = vsel %vm1027, %v1512, %v2850
        %v3895 = vsel %vm1027, %v1513, %v2852
        %v3896 = vsel %vm1027, %v1514, %v2854
        %v3897 = vsel %vm1027, %v1515, %v2856
        %v3898 = vsel %vm1027, %v1516, %v2858
        %v3899 = vsel %vm1027, %v1517, %v2860
        %v3900 = vsel %vm1027, %v1518, %v2862
        %v3901 = vsel %vm1027, %v1519, %v2864
        %v3902 = vsel %vm1027, %v1520, %v2866
        %v3903 = vsel %vm1027, %v1521, %v2868
        %v3904 = vsel %vm1027, %v1522, %v2870
        %v3905 = vsel %vm1027, %v1523, %v2872
        %v3906 = vsel %vm1027, %v1524, %v2874
        %v3907 = vsel %vm1027, %v1525, %v2876
        %v3908 = vsel %vm1027, %v1526, %v2878
        %v3909 = vsel %vm1027, %v1527, %v2880
        %v3910 = vsel %vm1027, %v1528, %v2882
        %v3911 = vsel %vm1027, %v1529, %v2884
        %v3912 = vsel %vm1027, %v1530, %v2886
        %v3913 = vsel %vm1027, %v1531, %v2888
        %v3914 = vsel %vm1027, %v1532, %v2890
        %v3915 = vsel %vm1027, %v1533, %v2892
        %v3916 = vsel %vm1027, %v1534, %v2894
        %v3917 = vsel %vm1027, %v1535, %v2896
        %v3918 = vsel %vm1027, %v1536, %v2898
        %v3919 = vsel %vm1027, %v1537, %v2900
        %v3920 = vsel %vm1027, %v1538, %v2902
        %v3921 = vsel %vm1027, %v1539, %v2904
        %v3922 = vsel %vm3668, %v3838, %v3074
        %v3923 = vsel %vm3668, %v3839, %v3076
        %v3924 = vsel %vm3668, %v3840, %v3078
        %v3925 = vsel %vm3668, %v3841, %v3080
        %v3926 = vsel %vm3668, %v3842, %v3082
        %v3927 = vsel %vm3668, %v3843, %v3084
        %v3928 = vsel %vm3668, %v3844, %v3086
        %v3929 = vsel %vm3668, %v3845, %v3088
        %v3930 = vsel %vm3668, %v3846, %v3090
        %v3931 = vsel %vm3668, %v3847, %v3092
        %v3932 = vsel %vm3668, %v3848, %v3094
        %v3933 = vsel %vm3668, %v3849, %v3096
        %v3934 = vsel %vm3668, %v3850, %v3098
        %v3935 = vsel %vm3668, %v3851, %v3100
        %v3936 = vsel %vm3668, %v3852, %v3102
        %v3937 = vsel %vm3668, %v3853, %v3104
        %v3938 = vsel %vm3668, %v3854, %v3106
        %v3939 = vsel %vm3668, %v3855, %v3108
        %v3940 = vsel %vm3668, %v3856, %v3110
        %v3941 = vsel %vm3668, %v3857, %v3112
        %v3942 = vsel %vm3668, %v3858, %v3114
        %v3943 = vsel %vm3668, %v3859, %v3116
        %v3944 = vsel %vm3668, %v3860, %v3118
        %v3945 = vsel %vm3668, %v3861, %v3120
        %v3946 = vsel %vm3668, %v3862, %v3122
        %v3947 = vsel %vm3668, %v3863, %v3124
        %v3948 = vsel %vm3668, %v3864, %v3126
        %v3949 = vsel %vm3668, %v3865, %v3128
        %v3950 = vsel %vm3668, %v3866, %v3130
        %v3951 = vsel %vm3668, %v3867, %v3132
        %v3952 = vsel %vm3668, %v3868, %v3134
        %v3953 = vsel %vm3668, %v3869, %v3136
        %v3954 = vsel %vm3668, %v3870, %v3138
        %v3955 = vsel %vm3668, %v3871, %v3140
        %v3956 = vsel %vm3668, %v3872, %v3142
        %v3957 = vsel %vm3668, %v3873, %v3144
        %v3958 = vsel %vm3668, %v3874, %v3146
        %v3959 = vsel %vm3668, %v3875, %v3148
        %v3960 = vsel %vm3668, %v3876, %v3150
        %v3961 = vsel %vm3668, %v3877, %v3152
        %v3962 = vsel %vm3668, %v3878, %v3154
        %v3963 = vsel %vm3668, %v3879, %v3156
        %v3964 = vsel %vm3668, %v3880, %v3158
        %v3965 = vsel %vm3668, %v3881, %v3160
        %v3966 = vsel %vm3668, %v3882, %v3162
        %v3967 = vsel %vm3668, %v3883, %v3164
        %v3968 = vsel %vm3668, %v3884, %v3166
        %v3969 = vsel %vm3668, %v3885, %v3168
        %v3970 = vsel %vm3668, %v3886, %v3170
        %v3971 = vsel %vm3668, %v3887, %v3172
        %v3972 = vsel %vm3668, %v3888, %v3174
        %v3973 = vsel %vm3668, %v3889, %v3176
        %v3974 = vsel %vm3668, %v3890, %v3178
        %v3975 = vsel %vm3668, %v3891, %v3180
        %v3976 = vsel %vm3668, %v3892, %v3182
        %v3977 = vsel %vm3668, %v3893, %v3184
        %v3978 = vsel %vm3668, %v3894, %v3186
        %v3979 = vsel %vm3668, %v3895, %v3188
        %v3980 = vsel %vm3668, %v3896, %v3190
        %v3981 = vsel %vm3668, %v3897, %v3192
        %v3982 = vsel %vm3668, %v3898, %v3194
        %v3983 = vsel %vm3668, %v3899, %v3196
        %v3984 = vsel %vm3668, %v3900, %v3198
        %v3985 = vsel %vm3668, %v3901, %v3200
        %v3986 = vsel %vm3668, %v3902, %v3202
        %v3987 = vsel %vm3668, %v3903, %v3204
        %v3988 = vsel %vm3668, %v3904, %v3206
        %v3989 = vsel %vm3668, %v3905, %v3208
        %v3990 = vsel %vm3668, %v3906, %v3210
        %v3991 = vsel %vm3668, %v3907, %v3212
        %v3992 = vsel %vm3668, %v3908, %v3214
        %v3993 = vsel %vm3668, %v3909, %v3216
        %v3994 = vsel %vm3668, %v3910, %v3218
        %v3995 = vsel %vm3668, %v3911, %v3220
        %v3996 = vsel %vm3668, %v3912, %v3222
        %v3997 = vsel %vm3668, %v3913, %v3224
        %v3998 = vsel %vm3668, %v3914, %v3226
        %v3999 = vsel %vm3668, %v3915, %v3228
        %v4000 = vsel %vm3668, %v3916, %v3230
        %v4001 = vsel %vm3668, %v3917, %v3232
        %v4002 = vsel %vm3668, %v3918, %v3234
        %v4003 = vsel %vm3668, %v3919, %v3236
        %v4004 = vsel %vm3668, %v3920, %v3238
        %v4005 = vsel %vm3668, %v3921, %v3240
        %v4006 = vsel %vm3753, %v3922, %v3333
        %v4007 = vsel %vm3753, %v3923, %v3335
        %v4008 = vsel %vm3753, %v3924, %v3337
        %v4009 = vsel %vm3753, %v3925, %v3339
        %v4010 = vsel %vm3753, %v3926, %v3341
        %v4011 = vsel %vm3753, %v3927, %v3343
        %v4012 = vsel %vm3753, %v3928, %v3345
        %v4013 = vsel %vm3753, %v3929, %v3347
        %v4014 = vsel %vm3753, %v3930, %v3349
        %v4015 = vsel %vm3753, %v3931, %v3351
        %v4016 = vsel %vm3753, %v3932, %v3353
        %v4017 = vsel %vm3753, %v3933, %v3355
        %v4018 = vsel %vm3753, %v3934, %v3357
        %v4019 = vsel %vm3753, %v3935, %v3359
        %v4020 = vsel %vm3753, %v3936, %v3361
        %v4021 = vsel %vm3753, %v3937, %v3363
        %v4022 = vsel %vm3753, %v3938, %v3365
        %v4023 = vsel %vm3753, %v3939, %v3367
        %v4024 = vsel %vm3753, %v3940, %v3369
        %v4025 = vsel %vm3753, %v3941, %v3371
        %v4026 = vsel %vm3753, %v3942, %v3373
        %v4027 = vsel %vm3753, %v3943, %v3375
        %v4028 = vsel %vm3753, %v3944, %v3377
        %v4029 = vsel %vm3753, %v3945, %v3379
        %v4030 = vsel %vm3753, %v3946, %v3381
        %v4031 = vsel %vm3753, %v3947, %v3383
        %v4032 = vsel %vm3753, %v3948, %v3385
        %v4033 = vsel %vm3753, %v3949, %v3387
        %v4034 = vsel %vm3753, %v3950, %v3389
        %v4035 = vsel %vm3753, %v3951, %v3391
        %v4036 = vsel %vm3753, %v3952, %v3393
        %v4037 = vsel %vm3753, %v3953, %v3395
        %v4038 = vsel %vm3753, %v3954, %v3397
        %v4039 = vsel %vm3753, %v3955, %v3399
        %v4040 = vsel %vm3753, %v3956, %v3401
        %v4041 = vsel %vm3753, %v3957, %v3403
        %v4042 = vsel %vm3753, %v3958, %v3405
        %v4043 = vsel %vm3753, %v3959, %v3407
        %v4044 = vsel %vm3753, %v3960, %v3409
        %v4045 = vsel %vm3753, %v3961, %v3411
        %v4046 = vsel %vm3753, %v3962, %v3413
        %v4047 = vsel %vm3753, %v3963, %v3415
        %v4048 = vsel %vm3753, %v3964, %v3417
        %v4049 = vsel %vm3753, %v3965, %v3419
        %v4050 = vsel %vm3753, %v3966, %v3421
        %v4051 = vsel %vm3753, %v3967, %v3423
        %v4052 = vsel %vm3753, %v3968, %v3425
        %v4053 = vsel %vm3753, %v3969, %v3427
        %v4054 = vsel %vm3753, %v3970, %v3429
        %v4055 = vsel %vm3753, %v3971, %v3431
        %v4056 = vsel %vm3753, %v3972, %v3433
        %v4057 = vsel %vm3753, %v3973, %v3435
        %v4058 = vsel %vm3753, %v3974, %v3437
        %v4059 = vsel %vm3753, %v3975, %v3439
        %v4060 = vsel %vm3753, %v3976, %v3441
        %v4061 = vsel %vm3753, %v3977, %v3443
        %v4062 = vsel %vm3753, %v3978, %v3445
        %v4063 = vsel %vm3753, %v3979, %v3447
        %v4064 = vsel %vm3753, %v3980, %v3449
        %v4065 = vsel %vm3753, %v3981, %v3451
        %v4066 = vsel %vm3753, %v3982, %v3453
        %v4067 = vsel %vm3753, %v3983, %v3455
        %v4068 = vsel %vm3753, %v3984, %v3457
        %v4069 = vsel %vm3753, %v3985, %v3459
        %v4070 = vsel %vm3753, %v3986, %v3461
        %v4071 = vsel %vm3753, %v3987, %v3463
        %v4072 = vsel %vm3753, %v3988, %v3465
        %v4073 = vsel %vm3753, %v3989, %v3467
        %v4074 = vsel %vm3753, %v3990, %v3469
        %v4075 = vsel %vm3753, %v3991, %v3471
        %v4076 = vsel %vm3753, %v3992, %v3473
        %v4077 = vsel %vm3753, %v3993, %v3475
        %v4078 = vsel %vm3753, %v3994, %v3477
        %v4079 = vsel %vm3753, %v3995, %v3479
        %v4080 = vsel %vm3753, %v3996, %v3481
        %v4081 = vsel %vm3753, %v3997, %v3483
        %v4082 = vsel %vm3753, %v3998, %v3485
        %v4083 = vsel %vm3753, %v3999, %v3487
        %v4084 = vsel %vm3753, %v4000, %v3489
        %v4085 = vsel %vm3753, %v4001, %v3491
        %v4086 = vsel %vm3753, %v4002, %v3493
        %v4087 = vsel %vm3753, %v4003, %v3495
        %v4088 = vsel %vm3753, %v4004, %v3497
        %v4089 = vsel %vm3753, %v4005, %v3499
        %v4090 = vld [vmem:[%s3] sm:$0xff]
        %v4091 = vld [vmem:[%s3 + $0x8] sm:$0xff]
        %v4092 = vld [vmem:[%s3 + $0x10] sm:$0xff]
        %v4093 = vld [vmem:[%s3 + $0x18] sm:$0xff]
        %v4094 = vld [vmem:[%s3 + $0x20] sm:$0xff]
        %v4095 = vld [vmem:[%s3 + $0x28] sm:$0xff]
        %v4096 = vld [vmem:[%s3 + $0x30] sm:$0xff]
        %v4097 = vld [vmem:[%s3 + $0x38] sm:$0xff]
        %v4098 = vld [vmem:[%s3 + $0x40] sm:$0xff]
        %v4099 = vld [vmem:[%s3 + $0x48] sm:$0xff]
        %v4100 = vld [vmem:[%s3 + $0x50] sm:$0xff]
        %v4101 = vld [vmem:[%s3 + $0x58] sm:$0xff]
        %v4102 = vld [vmem:[%s3 + $0x60] sm:$0xff]
        %v4103 = vld [vmem:[%s3 + $0x68] sm:$0xff]
        %v4104 = vld [vmem:[%s3 + $0x70] sm:$0xff]
        %v4105 = vld [vmem:[%s3 + $0x78] sm:$0xff]
        %v4106 = vld [vmem:[%s3 + $0x80] sm:$0xff]
        %v4107 = vld [vmem:[%s3 + $0x88] sm:$0xff]
        %v4108 = vld [vmem:[%s3 + $0x90] sm:$0xff]
        %v4109 = vld [vmem:[%s3 + $0x98] sm:$0xff]
        %v4110 = vld [vmem:[%s3 + $0xa0] sm:$0xff]
        %v4111 = vld [vmem:[%s3 + $0xa8] sm:$0xff]
        %v4112 = vld [vmem:[%s3 + $0xb0] sm:$0xff]
        %v4113 = vld [vmem:[%s3 + $0xb8] sm:$0xff]
        %v4114 = vld [vmem:[%s3 + $0xc0] sm:$0xff]
        %v4115 = vld [vmem:[%s3 + $0xc8] sm:$0xff]
        %v4116 = vld [vmem:[%s3 + $0xd0] sm:$0xff]
        %v4117 = vld [vmem:[%s3 + $0xd8] sm:$0xff]
        %v4118 = vld [vmem:[%s3 + $0xe0] sm:$0xff]
        %v4119 = vld [vmem:[%s3 + $0xe8] sm:$0xff]
        %v4120 = vld [vmem:[%s3 + $0xf0] sm:$0xff]
        %v4121 = vld [vmem:[%s3 + $0xf8] sm:$0xff]
        %v4122 = vld [vmem:[%s3 + $0x100] sm:$0xff]
        %v4123 = vld [vmem:[%s3 + $0x108] sm:$0xff]
        %v4124 = vld [vmem:[%s3 + $0x110] sm:$0xff]
        %v4125 = vld [vmem:[%s3 + $0x118] sm:$0xff]
        %v4126 = vld [vmem:[#allocation8] sm:$0x1]
        %v4128 = vperm.slane %v4126, 0
        %v4130 = vsel %vm1027, %v1295, 0
        %v4132 = vsel %vm1027, %v1296, 0
        %v4134 = vsel %vm1027, %v1297, 0
        %v4136 = vsel %vm1027, %v1298, 0
        %v4138 = vsel %vm1027, %v1299, 0
        %v4140 = vsel %vm1027, %v1300, 0
        %v4142 = vsel %vm1027, %v1301, 0
        %v4144 = vsel %vm1027, %v1302, 0
        %v4146 = vsel %vm1027, %v1303, 0
        %v4148 = vsel %vm1027, %v1304, 0
        %v4150 = vsel %vm1027, %v1305, 0
        %v4152 = vsel %vm1027, %v1306, 0
        %v4154 = vsel %vm1027, %v1307, 0
        %v4156 = vsel %vm1027, %v1308, 0
        %v4158 = vsel %vm1027, %v1309, 0
        %v4160 = vsel %vm1027, %v1310, 0
        %v4162 = vsel %vm1027, %v1311, 0
        %v4164 = vsel %vm1027, %v1312, 0
        %v4166 = vsel %vm1027, %v1313, 0
        %v4168 = vsel %vm1027, %v1314, 0
        %v4170 = vsel %vm1027, %v1315, 0
        %v4172 = vsel %vm1027, %v1316, 0
        %v4174 = vsel %vm1027, %v1317, 0
        %v4176 = vsel %vm1027, %v1318, 0
        %v4178 = vsel %vm1027, %v1319, 0
        %v4180 = vsel %vm1027, %v1320, 0
        %v4182 = vsel %vm1027, %v1321, 0
        %v4184 = vsel %vm1027, %v1322, 0
        %v4186 = vsel %vm1027, %v1323, 0
        %v4188 = vsel %vm1027, %v1324, 0
        %v4190 = vsel %vm1027, %v1325, 0
        %v4192 = vsel %vm1027, %v1326, 0
        %v4194 = vsel %vm1027, %v1327, 0
        %v4196 = vsel %vm1027, %v1328, 0
        %v4198 = vsel %vm1027, %v1329, 0
        %v4200 = vsel %vm1027, %v1330, 0
        %v4202 = vsel %vm1027, %v1331, 0
        %v4204 = vsel %vm1027, %v1332, 0
        %v4206 = vsel %vm1027, %v1333, 0
        %v4208 = vsel %vm1027, %v1334, 0
        %v4210 = vsel %vm1027, %v1335, 0
        %v4212 = vsel %vm1027, %v1336, 0
        %v4214 = vsel %vm1027, %v1337, 0
        %v4216 = vsel %vm1027, %v1338, 0
        %v4218 = vsel %vm1027, %v1339, 0
        %v4220 = vsel %vm1027, %v1340, 0
        %v4222 = vsel %vm1027, %v1341, 0
        %v4224 = vsel %vm1027, %v1342, 0
        %v4226 = vsel %vm1027, %v1343, 0
        %v4228 = vsel %vm1027, %v1344, 0
        %v4230 = vsel %vm1027, %v1345, 0
        %v4232 = vsel %vm1027, %v1346, 0
        %v4234 = vsel %vm1027, %v1347, 0
        %v4236 = vsel %vm1027, %v1348, 0
        %v4238 = vsel %vm1027, %v1349, 0
        %v4240 = vsel %vm1027, %v1350, 0
        %v4242 = vsel %vm1027, %v1351, 0
        %v4244 = vsel %vm1027, %v1352, 0
        %v4246 = vsel %vm1027, %v1353, 0
        %v4248 = vsel %vm1027, %v1354, 0
        %v4250 = vsel %vm1027, %v1355, 0
        %v4252 = vsel %vm1027, %v1356, 0
        %v4254 = vsel %vm1027, %v1357, 0
        %v4256 = vsel %vm1027, %v1358, 0
        %v4258 = vsel %vm1027, %v1359, 0
        %v4260 = vsel %vm1027, %v1360, 0
        %v4262 = vsel %vm1027, %v1361, 0
        %v4264 = vsel %vm1027, %v1362, 0
        %v4266 = vsel %vm1027, %v1363, 0
        %v4268 = vsel %vm1027, %v1364, 0
        %v4270 = vsel %vm1027, %v1365, 0
        %v4272 = vsel %vm1027, %v1366, 0
        %v4274 = vsel %vm1027, %v1367, 0
        %v4276 = vsel %vm1027, %v1368, 0
        %v4278 = vsel %vm1027, %v1369, 0
        %v4280 = vsel %vm1027, %v1370, 0
        %v4282 = vsel %vm1027, %v1371, 0
        %v4285 = vsel %vm1027, %v1638, 0
        %v4288 = vsel %vm1027, %v1639, 0
        %v4291 = vsel %vm1027, %v1640, 0
        %v4294 = vsel %vm1027, %v1641, 0
        %v4297 = vsel %vm1027, %v1642, 0
        %v4300 = vsel %vm1027, %v1643, 0
        %v4303 = vsel %vm1027, %v1644, 0
        %4305 = vmatpush.msra.mxu0 %v4105
        %4306 = vmatpush.msra.mxu0 %v4104
        %4307 = vmatpush.msra.mxu0 %v4103
        %4308 = vmatpush.msra.mxu0 %v4102
        %4309 = vmatpush.msra.mxu0 %v4101
        %4310 = vmatpush.msra.mxu0 %v4100
        %4311 = vmatpush.msra.mxu0 %v4099
        %4312 = vmatpush.msra.mxu0 %v4098
        %4313 = vmatpush.msra.mxu0 %v4097
        %4314 = vmatpush.msra.mxu0 %v4096
        %4315 = vmatpush.msra.mxu0 %v4095
        %4316 = vmatpush.msra.mxu0 %v4094
        %4317 = vmatpush.msra.mxu0 %v4093
        %4318 = vmatpush.msra.mxu0 %v4092
        %4319 = vmatpush.msra.mxu0 %v4091
        %4320 = vmatpush.msra.mxu0 %v4090
        %4321 = vmatmul.f32.gmra.mxu0 %v3754
        %v4322 = vpop.f32.mrf.mxu0
        %v4323 = vadd.f32 %v4128, %v4322
        %4324 = vmatmul.f32.gmra.mxu0 %v3755
        %v4325 = vpop.f32.mrf.mxu0
        %v4326 = vadd.f32 %v4128, %v4325
        %4327 = vmatmul.f32.gmra.mxu0 %v3756
        %v4328 = vpop.f32.mrf.mxu0
        %v4329 = vadd.f32 %v4128, %v4328
        %4330 = vmatmul.f32.gmra.mxu0 %v3757
        %v4331 = vpop.f32.mrf.mxu0
        %v4332 = vadd.f32 %v4128, %v4331
        %4333 = vmatmul.f32.gmra.mxu0 %v3758
        %v4334 = vpop.f32.mrf.mxu0
        %v4335 = vadd.f32 %v4128, %v4334
        %4336 = vmatmul.f32.gmra.mxu0 %v3759
        %v4337 = vpop.f32.mrf.mxu0
        %v4338 = vadd.f32 %v4128, %v4337
        %4339 = vmatmul.f32.gmra.mxu0 %v3760
        %v4340 = vpop.f32.mrf.mxu0
        %v4341 = vadd.f32 %v4128, %v4340
        %4342 = vmatmul.f32.gmra.mxu0 %v3761
        %v4343 = vpop.f32.mrf.mxu0
        %v4344 = vadd.f32 %v4128, %v4343
        %4345 = vmatmul.f32.gmra.mxu0 %v3762
        %v4346 = vpop.f32.mrf.mxu0
        %v4347 = vadd.f32 %v4128, %v4346
        %4348 = vmatmul.f32.gmra.mxu0 %v3763
        %v4349 = vpop.f32.mrf.mxu0
        %v4350 = vadd.f32 %v4128, %v4349
        %4351 = vmatmul.f32.gmra.mxu0 %v3764
        %v4352 = vpop.f32.mrf.mxu0
        %v4353 = vadd.f32 %v4128, %v4352
        %4354 = vmatmul.f32.gmra.mxu0 %v3765
        %v4355 = vpop.f32.mrf.mxu0
        %v4356 = vadd.f32 %v4128, %v4355
        %4357 = vmatmul.f32.gmra.mxu0 %v3766
        %v4358 = vpop.f32.mrf.mxu0
        %v4359 = vadd.f32 %v4128, %v4358
        %4360 = vmatmul.f32.gmra.mxu0 %v3767
        %v4361 = vpop.f32.mrf.mxu0
        %v4362 = vadd.f32 %v4128, %v4361
        %4363 = vmatmul.f32.gmra.mxu0 %v3768
        %v4364 = vpop.f32.mrf.mxu0
        %v4365 = vadd.f32 %v4128, %v4364
        %4366 = vmatmul.f32.gmra.mxu0 %v3769
        %v4367 = vpop.f32.mrf.mxu0
        %v4368 = vadd.f32 %v4128, %v4367
        %4369 = vmatmul.f32.gmra.mxu0 %v3770
        %v4370 = vpop.f32.mrf.mxu0
        %v4371 = vadd.f32 %v4128, %v4370
        %4372 = vmatmul.f32.gmra.mxu0 %v3771
        %v4373 = vpop.f32.mrf.mxu0
        %v4374 = vadd.f32 %v4128, %v4373
        %4375 = vmatmul.f32.gmra.mxu0 %v3772
        %v4376 = vpop.f32.mrf.mxu0
        %v4377 = vadd.f32 %v4128, %v4376
        %4378 = vmatmul.f32.gmra.mxu0 %v3773
        %v4379 = vpop.f32.mrf.mxu0
        %v4380 = vadd.f32 %v4128, %v4379
        %4381 = vmatmul.f32.gmra.mxu0 %v3774
        %v4382 = vpop.f32.mrf.mxu0
        %v4383 = vadd.f32 %v4128, %v4382
        %4384 = vmatmul.f32.gmra.mxu0 %v3775
        %v4385 = vpop.f32.mrf.mxu0
        %v4386 = vadd.f32 %v4128, %v4385
        %4387 = vmatmul.f32.gmra.mxu0 %v3776
        %v4388 = vpop.f32.mrf.mxu0
        %v4389 = vadd.f32 %v4128, %v4388
        %4390 = vmatmul.f32.gmra.mxu0 %v3777
        %v4391 = vpop.f32.mrf.mxu0
        %v4392 = vadd.f32 %v4128, %v4391
        %4393 = vmatmul.f32.gmra.mxu0 %v3778
        %v4394 = vpop.f32.mrf.mxu0
        %v4395 = vadd.f32 %v4128, %v4394
        %4396 = vmatmul.f32.gmra.mxu0 %v3779
        %v4397 = vpop.f32.mrf.mxu0
        %v4398 = vadd.f32 %v4128, %v4397
        %4399 = vmatmul.f32.gmra.mxu0 %v3780
        %v4400 = vpop.f32.mrf.mxu0
        %v4401 = vadd.f32 %v4128, %v4400
        %4402 = vmatmul.f32.gmra.mxu0 %v3781
        %v4403 = vpop.f32.mrf.mxu0
        %v4404 = vadd.f32 %v4128, %v4403
        %4405 = vmatmul.f32.gmra.mxu0 %v3782
        %v4406 = vpop.f32.mrf.mxu0
        %v4407 = vadd.f32 %v4128, %v4406
        %4408 = vmatmul.f32.gmra.mxu0 %v3783
        %v4409 = vpop.f32.mrf.mxu0
        %v4410 = vadd.f32 %v4128, %v4409
        %4411 = vmatmul.f32.gmra.mxu0 %v3784
        %v4412 = vpop.f32.mrf.mxu0
        %v4413 = vadd.f32 %v4128, %v4412
        %4414 = vmatmul.f32.gmra.mxu0 %v3785
        %v4415 = vpop.f32.mrf.mxu0
        %v4416 = vadd.f32 %v4128, %v4415
        %4417 = vmatmul.f32.gmra.mxu0 %v3786
        %v4418 = vpop.f32.mrf.mxu0
        %v4419 = vadd.f32 %v4128, %v4418
        %4420 = vmatmul.f32.gmra.mxu0 %v3787
        %v4421 = vpop.f32.mrf.mxu0
        %v4422 = vadd.f32 %v4128, %v4421
        %4423 = vmatmul.f32.gmra.mxu0 %v3788
        %v4424 = vpop.f32.mrf.mxu0
        %v4425 = vadd.f32 %v4128, %v4424
        %4426 = vmatmul.f32.gmra.mxu0 %v3789
        %v4427 = vpop.f32.mrf.mxu0
        %v4428 = vadd.f32 %v4128, %v4427
        %4429 = vmatmul.f32.gmra.mxu0 %v3790
        %v4430 = vpop.f32.mrf.mxu0
        %v4431 = vadd.f32 %v4128, %v4430
        %4432 = vmatmul.f32.gmra.mxu0 %v3791
        %v4433 = vpop.f32.mrf.mxu0
        %v4434 = vadd.f32 %v4128, %v4433
        %4435 = vmatmul.f32.gmra.mxu0 %v3792
        %v4436 = vpop.f32.mrf.mxu0
        %v4437 = vadd.f32 %v4128, %v4436
        %4438 = vmatmul.f32.gmra.mxu0 %v3793
        %v4439 = vpop.f32.mrf.mxu0
        %v4440 = vadd.f32 %v4128, %v4439
        %4441 = vmatmul.f32.gmra.mxu0 %v3794
        %v4442 = vpop.f32.mrf.mxu0
        %v4443 = vadd.f32 %v4128, %v4442
        %4444 = vmatmul.f32.gmra.mxu0 %v3795
        %v4445 = vpop.f32.mrf.mxu0
        %v4446 = vadd.f32 %v4128, %v4445
        %4447 = vmatmul.f32.gmra.mxu0 %v3796
        %v4448 = vpop.f32.mrf.mxu0
        %v4449 = vadd.f32 %v4128, %v4448
        %4450 = vmatmul.f32.gmra.mxu0 %v3797
        %v4451 = vpop.f32.mrf.mxu0
        %v4452 = vadd.f32 %v4128, %v4451
        %4453 = vmatmul.f32.gmra.mxu0 %v3798
        %v4454 = vpop.f32.mrf.mxu0
        %v4455 = vadd.f32 %v4128, %v4454
        %4456 = vmatmul.f32.gmra.mxu0 %v3799
        %v4457 = vpop.f32.mrf.mxu0
        %v4458 = vadd.f32 %v4128, %v4457
        %4459 = vmatmul.f32.gmra.mxu0 %v3800
        %v4460 = vpop.f32.mrf.mxu0
        %v4461 = vadd.f32 %v4128, %v4460
        %4462 = vmatmul.f32.gmra.mxu0 %v3801
        %v4463 = vpop.f32.mrf.mxu0
        %v4464 = vadd.f32 %v4128, %v4463
        %4465 = vmatmul.f32.gmra.mxu0 %v3802
        %v4466 = vpop.f32.mrf.mxu0
        %v4467 = vadd.f32 %v4128, %v4466
        %4468 = vmatmul.f32.gmra.mxu0 %v3803
        %v4469 = vpop.f32.mrf.mxu0
        %v4470 = vadd.f32 %v4128, %v4469
        %4471 = vmatmul.f32.gmra.mxu0 %v3804
        %v4472 = vpop.f32.mrf.mxu0
        %v4473 = vadd.f32 %v4128, %v4472
        %4474 = vmatmul.f32.gmra.mxu0 %v3805
        %v4475 = vpop.f32.mrf.mxu0
        %v4476 = vadd.f32 %v4128, %v4475
        %4477 = vmatmul.f32.gmra.mxu0 %v3806
        %v4478 = vpop.f32.mrf.mxu0
        %v4479 = vadd.f32 %v4128, %v4478
        %4480 = vmatmul.f32.gmra.mxu0 %v3807
        %v4481 = vpop.f32.mrf.mxu0
        %v4482 = vadd.f32 %v4128, %v4481
        %4483 = vmatmul.f32.gmra.mxu0 %v3808
        %v4484 = vpop.f32.mrf.mxu0
        %v4485 = vadd.f32 %v4128, %v4484
        %4486 = vmatmul.f32.gmra.mxu0 %v3809
        %v4487 = vpop.f32.mrf.mxu0
        %v4488 = vadd.f32 %v4128, %v4487
        %4489 = vmatmul.f32.gmra.mxu0 %v3810
        %v4490 = vpop.f32.mrf.mxu0
        %v4491 = vadd.f32 %v4128, %v4490
        %4492 = vmatmul.f32.gmra.mxu0 %v3811
        %v4493 = vpop.f32.mrf.mxu0
        %v4494 = vadd.f32 %v4128, %v4493
        %4495 = vmatmul.f32.gmra.mxu0 %v3812
        %v4496 = vpop.f32.mrf.mxu0
        %v4497 = vadd.f32 %v4128, %v4496
        %4498 = vmatmul.f32.gmra.mxu0 %v3813
        %v4499 = vpop.f32.mrf.mxu0
        %v4500 = vadd.f32 %v4128, %v4499
        %4501 = vmatmul.f32.gmra.mxu0 %v3814
        %v4502 = vpop.f32.mrf.mxu0
        %v4503 = vadd.f32 %v4128, %v4502
        %4504 = vmatmul.f32.gmra.mxu0 %v3815
        %v4505 = vpop.f32.mrf.mxu0
        %v4506 = vadd.f32 %v4128, %v4505
        %4507 = vmatmul.f32.gmra.mxu0 %v3816
        %v4508 = vpop.f32.mrf.mxu0
        %v4509 = vadd.f32 %v4128, %v4508
        %4510 = vmatmul.f32.gmra.mxu0 %v3817
        %v4511 = vpop.f32.mrf.mxu0
        %v4512 = vadd.f32 %v4128, %v4511
        %4513 = vmatmul.f32.gmra.mxu0 %v3818
        %v4514 = vpop.f32.mrf.mxu0
        %v4515 = vadd.f32 %v4128, %v4514
        %4516 = vmatmul.f32.gmra.mxu0 %v3819
        %v4517 = vpop.f32.mrf.mxu0
        %v4518 = vadd.f32 %v4128, %v4517
        %4519 = vmatmul.f32.gmra.mxu0 %v3820
        %v4520 = vpop.f32.mrf.mxu0
        %v4521 = vadd.f32 %v4128, %v4520
        %4522 = vmatmul.f32.gmra.mxu0 %v3821
        %v4523 = vpop.f32.mrf.mxu0
        %v4524 = vadd.f32 %v4128, %v4523
        %4525 = vmatmul.f32.gmra.mxu0 %v3822
        %v4526 = vpop.f32.mrf.mxu0
        %v4527 = vadd.f32 %v4128, %v4526
        %4528 = vmatmul.f32.gmra.mxu0 %v3823
        %v4529 = vpop.f32.mrf.mxu0
        %v4530 = vadd.f32 %v4128, %v4529
        %4531 = vmatmul.f32.gmra.mxu0 %v3824
        %v4532 = vpop.f32.mrf.mxu0
        %v4533 = vadd.f32 %v4128, %v4532
        %4534 = vmatmul.f32.gmra.mxu0 %v3825
        %v4535 = vpop.f32.mrf.mxu0
        %v4536 = vadd.f32 %v4128, %v4535
        %4537 = vmatmul.f32.gmra.mxu0 %v3826
        %v4538 = vpop.f32.mrf.mxu0
        %v4539 = vadd.f32 %v4128, %v4538
        %4540 = vmatmul.f32.gmra.mxu0 %v3827
        %v4541 = vpop.f32.mrf.mxu0
        %v4542 = vadd.f32 %v4128, %v4541
        %4543 = vmatmul.f32.gmra.mxu0 %v3828
        %v4544 = vpop.f32.mrf.mxu0
        %v4545 = vadd.f32 %v4128, %v4544
        %4546 = vmatmul.f32.gmra.mxu0 %v3829
        %v4547 = vpop.f32.mrf.mxu0
        %v4548 = vadd.f32 %v4128, %v4547
        %4549 = vmatmul.f32.gmra.mxu0 %v3830
        %v4550 = vpop.f32.mrf.mxu0
        %v4551 = vadd.f32 %v4128, %v4550
        %4552 = vmatmul.f32.gmra.mxu0 %v3831
        %v4553 = vpop.f32.mrf.mxu0
        %v4554 = vadd.f32 %v4128, %v4553
        %4555 = vmatmul.f32.gmra.mxu0 %v3832
        %v4556 = vpop.f32.mrf.mxu0
        %v4557 = vadd.f32 %v4128, %v4556
        %4558 = vmatmul.f32.gmra.mxu0 %v3833
        %v4559 = vpop.f32.mrf.mxu0
        %v4560 = vadd.f32 %v4128, %v4559
        %4561 = vmatmul.f32.gmra.mxu0 %v3834
        %v4562 = vpop.f32.mrf.mxu0
        %v4563 = vadd.f32 %v4128, %v4562
        %4564 = vmatmul.f32.gmra.mxu0 %v3835
        %v4565 = vpop.f32.mrf.mxu0
        %v4566 = vadd.f32 %v4128, %v4565
        %4567 = vmatmul.f32.gmra.mxu0 %v3836
        %v4568 = vpop.f32.mrf.mxu0
        %v4569 = vadd.f32 %v4128, %v4568
        %4570 = vmatmul.f32.gmra.mxu0 %v3837
        %v4571 = vpop.f32.mrf.mxu0
        %v4572 = vadd.f32 %v4128, %v4571
        %4573 = vdwg.mxu0
        %4574 = vmatpush.msra.mxu0 %v4121
        %4575 = vmatpush.msra.mxu0 %v4120
        %4576 = vmatpush.msra.mxu0 %v4119
        %4577 = vmatpush.msra.mxu0 %v4118
        %4578 = vmatpush.msra.mxu0 %v4117
        %4579 = vmatpush.msra.mxu0 %v4116
        %4580 = vmatpush.msra.mxu0 %v4115
        %4581 = vmatpush.msra.mxu0 %v4114
        %4582 = vmatpush.msra.mxu0 %v4113
        %4583 = vmatpush.msra.mxu0 %v4112
        %4584 = vmatpush.msra.mxu0 %v4111
        %4585 = vmatpush.msra.mxu0 %v4110
        %4586 = vmatpush.msra.mxu0 %v4109
        %4587 = vmatpush.msra.mxu0 %v4108
        %4588 = vmatpush.msra.mxu0 %v4107
        %4589 = vmatpush.msra.mxu0 %v4106
        %4590 = vmatmul.f32.gmra.mxu0 %v4006
        %v4591 = vpop.f32.mrf.mxu0
        %v4592 = vadd.f32 %v4323, %v4591
        %4593 = vmatmul.f32.gmra.mxu0 %v4007
        %v4594 = vpop.f32.mrf.mxu0
        %v4595 = vadd.f32 %v4326, %v4594
        %4596 = vmatmul.f32.gmra.mxu0 %v4008
        %v4597 = vpop.f32.mrf.mxu0
        %v4598 = vadd.f32 %v4329, %v4597
        %4599 = vmatmul.f32.gmra.mxu0 %v4009
        %v4600 = vpop.f32.mrf.mxu0
        %v4601 = vadd.f32 %v4332, %v4600
        %4602 = vmatmul.f32.gmra.mxu0 %v4010
        %v4603 = vpop.f32.mrf.mxu0
        %v4604 = vadd.f32 %v4335, %v4603
        %4605 = vmatmul.f32.gmra.mxu0 %v4011
        %v4606 = vpop.f32.mrf.mxu0
        %v4607 = vadd.f32 %v4338, %v4606
        %4608 = vmatmul.f32.gmra.mxu0 %v4012
        %v4609 = vpop.f32.mrf.mxu0
        %v4610 = vadd.f32 %v4341, %v4609
        %4611 = vmatmul.f32.gmra.mxu0 %v4013
        %v4612 = vpop.f32.mrf.mxu0
        %v4613 = vadd.f32 %v4344, %v4612
        %4614 = vmatmul.f32.gmra.mxu0 %v4014
        %v4615 = vpop.f32.mrf.mxu0
        %v4616 = vadd.f32 %v4347, %v4615
        %4617 = vmatmul.f32.gmra.mxu0 %v4015
        %v4618 = vpop.f32.mrf.mxu0
        %v4619 = vadd.f32 %v4350, %v4618
        %4620 = vmatmul.f32.gmra.mxu0 %v4016
        %v4621 = vpop.f32.mrf.mxu0
        %v4622 = vadd.f32 %v4353, %v4621
        %4623 = vmatmul.f32.gmra.mxu0 %v4017
        %v4624 = vpop.f32.mrf.mxu0
        %v4625 = vadd.f32 %v4356, %v4624
        %4626 = vmatmul.f32.gmra.mxu0 %v4018
        %v4627 = vpop.f32.mrf.mxu0
        %v4628 = vadd.f32 %v4359, %v4627
        %4629 = vmatmul.f32.gmra.mxu0 %v4019
        %v4630 = vpop.f32.mrf.mxu0
        %v4631 = vadd.f32 %v4362, %v4630
        %4632 = vmatmul.f32.gmra.mxu0 %v4020
        %v4633 = vpop.f32.mrf.mxu0
        %v4634 = vadd.f32 %v4365, %v4633
        %4635 = vmatmul.f32.gmra.mxu0 %v4021
        %v4636 = vpop.f32.mrf.mxu0
        %v4637 = vadd.f32 %v4368, %v4636
        %4638 = vmatmul.f32.gmra.mxu0 %v4022
        %v4639 = vpop.f32.mrf.mxu0
        %v4640 = vadd.f32 %v4371, %v4639
        %4641 = vmatmul.f32.gmra.mxu0 %v4023
        %v4642 = vpop.f32.mrf.mxu0
        %v4643 = vadd.f32 %v4374, %v4642
        %4644 = vmatmul.f32.gmra.mxu0 %v4024
        %v4645 = vpop.f32.mrf.mxu0
        %v4646 = vadd.f32 %v4377, %v4645
        %4647 = vmatmul.f32.gmra.mxu0 %v4025
        %v4648 = vpop.f32.mrf.mxu0
        %v4649 = vadd.f32 %v4380, %v4648
        %4650 = vmatmul.f32.gmra.mxu0 %v4026
        %v4651 = vpop.f32.mrf.mxu0
        %v4652 = vadd.f32 %v4383, %v4651
        %4653 = vmatmul.f32.gmra.mxu0 %v4027
        %v4654 = vpop.f32.mrf.mxu0
        %v4655 = vadd.f32 %v4386, %v4654
        %4656 = vmatmul.f32.gmra.mxu0 %v4028
        %v4657 = vpop.f32.mrf.mxu0
        %v4658 = vadd.f32 %v4389, %v4657
        %4659 = vmatmul.f32.gmra.mxu0 %v4029
        %v4660 = vpop.f32.mrf.mxu0
        %v4661 = vadd.f32 %v4392, %v4660
        %4662 = vmatmul.f32.gmra.mxu0 %v4030
        %v4663 = vpop.f32.mrf.mxu0
        %v4664 = vadd.f32 %v4395, %v4663
        %4665 = vmatmul.f32.gmra.mxu0 %v4031
        %v4666 = vpop.f32.mrf.mxu0
        %v4667 = vadd.f32 %v4398, %v4666
        %4668 = vmatmul.f32.gmra.mxu0 %v4032
        %v4669 = vpop.f32.mrf.mxu0
        %v4670 = vadd.f32 %v4401, %v4669
        %4671 = vmatmul.f32.gmra.mxu0 %v4033
        %v4672 = vpop.f32.mrf.mxu0
        %v4673 = vadd.f32 %v4404, %v4672
        %4674 = vmatmul.f32.gmra.mxu0 %v4034
        %v4675 = vpop.f32.mrf.mxu0
        %v4676 = vadd.f32 %v4407, %v4675
        %4677 = vmatmul.f32.gmra.mxu0 %v4035
        %v4678 = vpop.f32.mrf.mxu0
        %v4679 = vadd.f32 %v4410, %v4678
        %4680 = vmatmul.f32.gmra.mxu0 %v4036
        %v4681 = vpop.f32.mrf.mxu0
        %v4682 = vadd.f32 %v4413, %v4681
        %4683 = vmatmul.f32.gmra.mxu0 %v4037
        %v4684 = vpop.f32.mrf.mxu0
        %v4685 = vadd.f32 %v4416, %v4684
        %4686 = vmatmul.f32.gmra.mxu0 %v4038
        %v4687 = vpop.f32.mrf.mxu0
        %v4688 = vadd.f32 %v4419, %v4687
        %4689 = vmatmul.f32.gmra.mxu0 %v4039
        %v4690 = vpop.f32.mrf.mxu0
        %v4691 = vadd.f32 %v4422, %v4690
        %4692 = vmatmul.f32.gmra.mxu0 %v4040
        %v4693 = vpop.f32.mrf.mxu0
        %v4694 = vadd.f32 %v4425, %v4693
        %4695 = vmatmul.f32.gmra.mxu0 %v4041
        %v4696 = vpop.f32.mrf.mxu0
        %v4697 = vadd.f32 %v4428, %v4696
        %4698 = vmatmul.f32.gmra.mxu0 %v4042
        %v4699 = vpop.f32.mrf.mxu0
        %v4700 = vadd.f32 %v4431, %v4699
        %4701 = vmatmul.f32.gmra.mxu0 %v4043
        %v4702 = vpop.f32.mrf.mxu0
        %v4703 = vadd.f32 %v4434, %v4702
        %4704 = vmatmul.f32.gmra.mxu0 %v4044
        %v4705 = vpop.f32.mrf.mxu0
        %v4706 = vadd.f32 %v4437, %v4705
        %4707 = vmatmul.f32.gmra.mxu0 %v4045
        %v4708 = vpop.f32.mrf.mxu0
        %v4709 = vadd.f32 %v4440, %v4708
        %4710 = vmatmul.f32.gmra.mxu0 %v4046
        %v4711 = vpop.f32.mrf.mxu0
        %v4712 = vadd.f32 %v4443, %v4711
        %4713 = vmatmul.f32.gmra.mxu0 %v4047
        %v4714 = vpop.f32.mrf.mxu0
        %v4715 = vadd.f32 %v4446, %v4714
        %4716 = vmatmul.f32.gmra.mxu0 %v4048
        %v4717 = vpop.f32.mrf.mxu0
        %v4718 = vadd.f32 %v4449, %v4717
        %4719 = vmatmul.f32.gmra.mxu0 %v4049
        %v4720 = vpop.f32.mrf.mxu0
        %v4721 = vadd.f32 %v4452, %v4720
        %4722 = vmatmul.f32.gmra.mxu0 %v4050
        %v4723 = vpop.f32.mrf.mxu0
        %v4724 = vadd.f32 %v4455, %v4723
        %4725 = vmatmul.f32.gmra.mxu0 %v4051
        %v4726 = vpop.f32.mrf.mxu0
        %v4727 = vadd.f32 %v4458, %v4726
        %4728 = vmatmul.f32.gmra.mxu0 %v4052
        %v4729 = vpop.f32.mrf.mxu0
        %v4730 = vadd.f32 %v4461, %v4729
        %4731 = vmatmul.f32.gmra.mxu0 %v4053
        %v4732 = vpop.f32.mrf.mxu0
        %v4733 = vadd.f32 %v4464, %v4732
        %4734 = vmatmul.f32.gmra.mxu0 %v4054
        %v4735 = vpop.f32.mrf.mxu0
        %v4736 = vadd.f32 %v4467, %v4735
        %4737 = vmatmul.f32.gmra.mxu0 %v4055
        %v4738 = vpop.f32.mrf.mxu0
        %v4739 = vadd.f32 %v4470, %v4738
        %4740 = vmatmul.f32.gmra.mxu0 %v4056
        %v4741 = vpop.f32.mrf.mxu0
        %v4742 = vadd.f32 %v4473, %v4741
        %4743 = vmatmul.f32.gmra.mxu0 %v4057
        %v4744 = vpop.f32.mrf.mxu0
        %v4745 = vadd.f32 %v4476, %v4744
        %4746 = vmatmul.f32.gmra.mxu0 %v4058
        %v4747 = vpop.f32.mrf.mxu0
        %v4748 = vadd.f32 %v4479, %v4747
        %4749 = vmatmul.f32.gmra.mxu0 %v4059
        %v4750 = vpop.f32.mrf.mxu0
        %v4751 = vadd.f32 %v4482, %v4750
        %4752 = vmatmul.f32.gmra.mxu0 %v4060
        %v4753 = vpop.f32.mrf.mxu0
        %v4754 = vadd.f32 %v4485, %v4753
        %4755 = vmatmul.f32.gmra.mxu0 %v4061
        %v4756 = vpop.f32.mrf.mxu0
        %v4757 = vadd.f32 %v4488, %v4756
        %4758 = vmatmul.f32.gmra.mxu0 %v4062
        %v4759 = vpop.f32.mrf.mxu0
        %v4760 = vadd.f32 %v4491, %v4759
        %4761 = vmatmul.f32.gmra.mxu0 %v4063
        %v4762 = vpop.f32.mrf.mxu0
        %v4763 = vadd.f32 %v4494, %v4762
        %4764 = vmatmul.f32.gmra.mxu0 %v4064
        %v4765 = vpop.f32.mrf.mxu0
        %v4766 = vadd.f32 %v4497, %v4765
        %4767 = vmatmul.f32.gmra.mxu0 %v4065
        %v4768 = vpop.f32.mrf.mxu0
        %v4769 = vadd.f32 %v4500, %v4768
        %4770 = vmatmul.f32.gmra.mxu0 %v4066
        %v4771 = vpop.f32.mrf.mxu0
        %v4772 = vadd.f32 %v4503, %v4771
        %4773 = vmatmul.f32.gmra.mxu0 %v4067
        %v4774 = vpop.f32.mrf.mxu0
        %v4775 = vadd.f32 %v4506, %v4774
        %4776 = vmatmul.f32.gmra.mxu0 %v4068
        %v4777 = vpop.f32.mrf.mxu0
        %v4778 = vadd.f32 %v4509, %v4777
        %4779 = vmatmul.f32.gmra.mxu0 %v4069
        %v4780 = vpop.f32.mrf.mxu0
        %v4781 = vadd.f32 %v4512, %v4780
        %4782 = vmatmul.f32.gmra.mxu0 %v4070
        %v4783 = vpop.f32.mrf.mxu0
        %v4784 = vadd.f32 %v4515, %v4783
        %4785 = vmatmul.f32.gmra.mxu0 %v4071
        %v4786 = vpop.f32.mrf.mxu0
        %v4787 = vadd.f32 %v4518, %v4786
        %4788 = vmatmul.f32.gmra.mxu0 %v4072
        %v4789 = vpop.f32.mrf.mxu0
        %v4790 = vadd.f32 %v4521, %v4789
        %4791 = vmatmul.f32.gmra.mxu0 %v4073
        %v4792 = vpop.f32.mrf.mxu0
        %v4793 = vadd.f32 %v4524, %v4792
        %4794 = vmatmul.f32.gmra.mxu0 %v4074
        %v4795 = vpop.f32.mrf.mxu0
        %v4796 = vadd.f32 %v4527, %v4795
        %4797 = vmatmul.f32.gmra.mxu0 %v4075
        %v4798 = vpop.f32.mrf.mxu0
        %v4799 = vadd.f32 %v4530, %v4798
        %4800 = vmatmul.f32.gmra.mxu0 %v4076
        %v4801 = vpop.f32.mrf.mxu0
        %v4802 = vadd.f32 %v4533, %v4801
        %4803 = vmatmul.f32.gmra.mxu0 %v4077
        %v4804 = vpop.f32.mrf.mxu0
        %v4805 = vadd.f32 %v4536, %v4804
        %4806 = vmatmul.f32.gmra.mxu0 %v4078
        %v4807 = vpop.f32.mrf.mxu0
        %v4808 = vadd.f32 %v4539, %v4807
        %4809 = vmatmul.f32.gmra.mxu0 %v4079
        %v4810 = vpop.f32.mrf.mxu0
        %v4811 = vadd.f32 %v4542, %v4810
        %4812 = vmatmul.f32.gmra.mxu0 %v4080
        %v4813 = vpop.f32.mrf.mxu0
        %v4814 = vadd.f32 %v4545, %v4813
        %4815 = vmatmul.f32.gmra.mxu0 %v4081
        %v4816 = vpop.f32.mrf.mxu0
        %v4817 = vadd.f32 %v4548, %v4816
        %4818 = vmatmul.f32.gmra.mxu0 %v4082
        %v4819 = vpop.f32.mrf.mxu0
        %v4820 = vadd.f32 %v4551, %v4819
        %4821 = vmatmul.f32.gmra.mxu0 %v4083
        %v4822 = vpop.f32.mrf.mxu0
        %v4823 = vadd.f32 %v4554, %v4822
        %4824 = vmatmul.f32.gmra.mxu0 %v4084
        %v4825 = vpop.f32.mrf.mxu0
        %v4826 = vadd.f32 %v4557, %v4825
        %4827 = vmatmul.f32.gmra.mxu0 %v4085
        %v4828 = vpop.f32.mrf.mxu0
        %v4829 = vadd.f32 %v4560, %v4828
        %4830 = vmatmul.f32.gmra.mxu0 %v4086
        %v4831 = vpop.f32.mrf.mxu0
        %v4832 = vadd.f32 %v4563, %v4831
        %4833 = vmatmul.f32.gmra.mxu0 %v4087
        %v4834 = vpop.f32.mrf.mxu0
        %v4835 = vadd.f32 %v4566, %v4834
        %4836 = vmatmul.f32.gmra.mxu0 %v4088
        %v4837 = vpop.f32.mrf.mxu0
        %v4838 = vadd.f32 %v4569, %v4837
        %4839 = vmatmul.f32.gmra.mxu0 %v4089
        %v4840 = vpop.f32.mrf.mxu0
        %v4841 = vadd.f32 %v4572, %v4840
        %4842 = vdwg.mxu0
        %4843 = vmatpush.msra.mxu0 0.0
        %4844 = vmatpush.msra.mxu0 0.0
        %4845 = vmatpush.msra.mxu0 0.0
        %4846 = vmatpush.msra.mxu0 0.0
        %4847 = vmatpush.msra.mxu0 0.0
        %4848 = vmatpush.msra.mxu0 0.0
        %4849 = vmatpush.msra.mxu0 0.0
        %4850 = vmatpush.msra.mxu0 0.0
        %4851 = vmatpush.msra.mxu0 0.0
        %4852 = vmatpush.msra.mxu0 0.0
        %4853 = vmatpush.msra.mxu0 0.0
        %4854 = vmatpush.msra.mxu0 0.0
        %4855 = vmatpush.msra.mxu0 %v4125
        %4856 = vmatpush.msra.mxu0 %v4124
        %4857 = vmatpush.msra.mxu0 %v4123
        %4858 = vmatpush.msra.mxu0 %v4122
        %4859 = vmatmul.f32.gmra.mxu0 %v4130
        %v4860 = vpop.f32.mrf.mxu0
        %v4861 = vadd.f32 %v4592, %v4860
        %4862 = vmatmul.f32.gmra.mxu0 %v4132
        %v4863 = vpop.f32.mrf.mxu0
        %v4864 = vadd.f32 %v4595, %v4863
        %4865 = vmatmul.f32.gmra.mxu0 %v4134
        %v4866 = vpop.f32.mrf.mxu0
        %v4867 = vadd.f32 %v4598, %v4866
        %4868 = vmatmul.f32.gmra.mxu0 %v4136
        %v4869 = vpop.f32.mrf.mxu0
        %v4870 = vadd.f32 %v4601, %v4869
        %4871 = vmatmul.f32.gmra.mxu0 %v4138
        %v4872 = vpop.f32.mrf.mxu0
        %v4873 = vadd.f32 %v4604, %v4872
        %4874 = vmatmul.f32.gmra.mxu0 %v4140
        %v4875 = vpop.f32.mrf.mxu0
        %v4876 = vadd.f32 %v4607, %v4875
        %4877 = vmatmul.f32.gmra.mxu0 %v4142
        %v4878 = vpop.f32.mrf.mxu0
        %v4879 = vadd.f32 %v4610, %v4878
        %4880 = vmatmul.f32.gmra.mxu0 %v4144
        %v4881 = vpop.f32.mrf.mxu0
        %v4882 = vadd.f32 %v4613, %v4881
        %4883 = vmatmul.f32.gmra.mxu0 %v4146
        %v4884 = vpop.f32.mrf.mxu0
        %v4885 = vadd.f32 %v4616, %v4884
        %4886 = vmatmul.f32.gmra.mxu0 %v4148
        %v4887 = vpop.f32.mrf.mxu0
        %v4888 = vadd.f32 %v4619, %v4887
        %4889 = vmatmul.f32.gmra.mxu0 %v4150
        %v4890 = vpop.f32.mrf.mxu0
        %v4891 = vadd.f32 %v4622, %v4890
        %4892 = vmatmul.f32.gmra.mxu0 %v4152
        %v4893 = vpop.f32.mrf.mxu0
        %v4894 = vadd.f32 %v4625, %v4893
        %4895 = vmatmul.f32.gmra.mxu0 %v4154
        %v4896 = vpop.f32.mrf.mxu0
        %v4897 = vadd.f32 %v4628, %v4896
        %4898 = vmatmul.f32.gmra.mxu0 %v4156
        %v4899 = vpop.f32.mrf.mxu0
        %v4900 = vadd.f32 %v4631, %v4899
        %4901 = vmatmul.f32.gmra.mxu0 %v4158
        %v4902 = vpop.f32.mrf.mxu0
        %v4903 = vadd.f32 %v4634, %v4902
        %4904 = vmatmul.f32.gmra.mxu0 %v4160
        %v4905 = vpop.f32.mrf.mxu0
        %v4906 = vadd.f32 %v4637, %v4905
        %4907 = vmatmul.f32.gmra.mxu0 %v4162
        %v4908 = vpop.f32.mrf.mxu0
        %v4909 = vadd.f32 %v4640, %v4908
        %4910 = vmatmul.f32.gmra.mxu0 %v4164
        %v4911 = vpop.f32.mrf.mxu0
        %v4912 = vadd.f32 %v4643, %v4911
        %4913 = vmatmul.f32.gmra.mxu0 %v4166
        %v4914 = vpop.f32.mrf.mxu0
        %v4915 = vadd.f32 %v4646, %v4914
        %4916 = vmatmul.f32.gmra.mxu0 %v4168
        %v4917 = vpop.f32.mrf.mxu0
        %v4918 = vadd.f32 %v4649, %v4917
        %4919 = vmatmul.f32.gmra.mxu0 %v4170
        %v4920 = vpop.f32.mrf.mxu0
        %v4921 = vadd.f32 %v4652, %v4920
        %4922 = vmatmul.f32.gmra.mxu0 %v4172
        %v4923 = vpop.f32.mrf.mxu0
        %v4924 = vadd.f32 %v4655, %v4923
        %4925 = vmatmul.f32.gmra.mxu0 %v4174
        %v4926 = vpop.f32.mrf.mxu0
        %v4927 = vadd.f32 %v4658, %v4926
        %4928 = vmatmul.f32.gmra.mxu0 %v4176
        %v4929 = vpop.f32.mrf.mxu0
        %v4930 = vadd.f32 %v4661, %v4929
        %4931 = vmatmul.f32.gmra.mxu0 %v4178
        %v4932 = vpop.f32.mrf.mxu0
        %v4933 = vadd.f32 %v4664, %v4932
        %4934 = vmatmul.f32.gmra.mxu0 %v4180
        %v4935 = vpop.f32.mrf.mxu0
        %v4936 = vadd.f32 %v4667, %v4935
        %4937 = vmatmul.f32.gmra.mxu0 %v4182
        %v4938 = vpop.f32.mrf.mxu0
        %v4939 = vadd.f32 %v4670, %v4938
        %4940 = vmatmul.f32.gmra.mxu0 %v4184
        %v4941 = vpop.f32.mrf.mxu0
        %v4942 = vadd.f32 %v4673, %v4941
        %4943 = vmatmul.f32.gmra.mxu0 %v4186
        %v4944 = vpop.f32.mrf.mxu0
        %v4945 = vadd.f32 %v4676, %v4944
        %4946 = vmatmul.f32.gmra.mxu0 %v4188
        %v4947 = vpop.f32.mrf.mxu0
        %v4948 = vadd.f32 %v4679, %v4947
        %4949 = vmatmul.f32.gmra.mxu0 %v4190
        %v4950 = vpop.f32.mrf.mxu0
        %v4951 = vadd.f32 %v4682, %v4950
        %4952 = vmatmul.f32.gmra.mxu0 %v4192
        %v4953 = vpop.f32.mrf.mxu0
        %v4954 = vadd.f32 %v4685, %v4953
        %4955 = vmatmul.f32.gmra.mxu0 %v4194
        %v4956 = vpop.f32.mrf.mxu0
        %v4957 = vadd.f32 %v4688, %v4956
        %4958 = vmatmul.f32.gmra.mxu0 %v4196
        %v4959 = vpop.f32.mrf.mxu0
        %v4960 = vadd.f32 %v4691, %v4959
        %4961 = vmatmul.f32.gmra.mxu0 %v4198
        %v4962 = vpop.f32.mrf.mxu0
        %v4963 = vadd.f32 %v4694, %v4962
        %4964 = vmatmul.f32.gmra.mxu0 %v4200
        %v4965 = vpop.f32.mrf.mxu0
        %v4966 = vadd.f32 %v4697, %v4965
        %4967 = vmatmul.f32.gmra.mxu0 %v4202
        %v4968 = vpop.f32.mrf.mxu0
        %v4969 = vadd.f32 %v4700, %v4968
        %4970 = vmatmul.f32.gmra.mxu0 %v4204
        %v4971 = vpop.f32.mrf.mxu0
        %v4972 = vadd.f32 %v4703, %v4971
        %4973 = vmatmul.f32.gmra.mxu0 %v4206
        %v4974 = vpop.f32.mrf.mxu0
        %v4975 = vadd.f32 %v4706, %v4974
        %4976 = vmatmul.f32.gmra.mxu0 %v4208
        %v4977 = vpop.f32.mrf.mxu0
        %v4978 = vadd.f32 %v4709, %v4977
        %4979 = vmatmul.f32.gmra.mxu0 %v4210
        %v4980 = vpop.f32.mrf.mxu0
        %v4981 = vadd.f32 %v4712, %v4980
        %4982 = vmatmul.f32.gmra.mxu0 %v4212
        %v4983 = vpop.f32.mrf.mxu0
        %v4984 = vadd.f32 %v4715, %v4983
        %4985 = vmatmul.f32.gmra.mxu0 %v4214
        %v4986 = vpop.f32.mrf.mxu0
        %v4987 = vadd.f32 %v4718, %v4986
        %4988 = vmatmul.f32.gmra.mxu0 %v4216
        %v4989 = vpop.f32.mrf.mxu0
        %v4990 = vadd.f32 %v4721, %v4989
        %4991 = vmatmul.f32.gmra.mxu0 %v4218
        %v4992 = vpop.f32.mrf.mxu0
        %v4993 = vadd.f32 %v4724, %v4992
        %4994 = vmatmul.f32.gmra.mxu0 %v4220
        %v4995 = vpop.f32.mrf.mxu0
        %v4996 = vadd.f32 %v4727, %v4995
        %4997 = vmatmul.f32.gmra.mxu0 %v4222
        %v4998 = vpop.f32.mrf.mxu0
        %v4999 = vadd.f32 %v4730, %v4998
        %5000 = vmatmul.f32.gmra.mxu0 %v4224
        %v5001 = vpop.f32.mrf.mxu0
        %v5002 = vadd.f32 %v4733, %v5001
        %5003 = vmatmul.f32.gmra.mxu0 %v4226
        %v5004 = vpop.f32.mrf.mxu0
        %v5005 = vadd.f32 %v4736, %v5004
        %5006 = vmatmul.f32.gmra.mxu0 %v4228
        %v5007 = vpop.f32.mrf.mxu0
        %v5008 = vadd.f32 %v4739, %v5007
        %5009 = vmatmul.f32.gmra.mxu0 %v4230
        %v5010 = vpop.f32.mrf.mxu0
        %v5011 = vadd.f32 %v4742, %v5010
        %5012 = vmatmul.f32.gmra.mxu0 %v4232
        %v5013 = vpop.f32.mrf.mxu0
        %v5014 = vadd.f32 %v4745, %v5013
        %5015 = vmatmul.f32.gmra.mxu0 %v4234
        %v5016 = vpop.f32.mrf.mxu0
        %v5017 = vadd.f32 %v4748, %v5016
        %5018 = vmatmul.f32.gmra.mxu0 %v4236
        %v5019 = vpop.f32.mrf.mxu0
        %v5020 = vadd.f32 %v4751, %v5019
        %5021 = vmatmul.f32.gmra.mxu0 %v4238
        %v5022 = vpop.f32.mrf.mxu0
        %v5023 = vadd.f32 %v4754, %v5022
        %5024 = vmatmul.f32.gmra.mxu0 %v4240
        %v5025 = vpop.f32.mrf.mxu0
        %v5026 = vadd.f32 %v4757, %v5025
        %5027 = vmatmul.f32.gmra.mxu0 %v4242
        %v5028 = vpop.f32.mrf.mxu0
        %v5029 = vadd.f32 %v4760, %v5028
        %5030 = vmatmul.f32.gmra.mxu0 %v4244
        %v5031 = vpop.f32.mrf.mxu0
        %v5032 = vadd.f32 %v4763, %v5031
        %5033 = vmatmul.f32.gmra.mxu0 %v4246
        %v5034 = vpop.f32.mrf.mxu0
        %v5035 = vadd.f32 %v4766, %v5034
        %5036 = vmatmul.f32.gmra.mxu0 %v4248
        %v5037 = vpop.f32.mrf.mxu0
        %v5038 = vadd.f32 %v4769, %v5037
        %5039 = vmatmul.f32.gmra.mxu0 %v4250
        %v5040 = vpop.f32.mrf.mxu0
        %v5041 = vadd.f32 %v4772, %v5040
        %5042 = vmatmul.f32.gmra.mxu0 %v4252
        %v5043 = vpop.f32.mrf.mxu0
        %v5044 = vadd.f32 %v4775, %v5043
        %5045 = vmatmul.f32.gmra.mxu0 %v4254
        %v5046 = vpop.f32.mrf.mxu0
        %v5047 = vadd.f32 %v4778, %v5046
        %5048 = vmatmul.f32.gmra.mxu0 %v4256
        %v5049 = vpop.f32.mrf.mxu0
        %v5050 = vadd.f32 %v4781, %v5049
        %5051 = vmatmul.f32.gmra.mxu0 %v4258
        %v5052 = vpop.f32.mrf.mxu0
        %v5053 = vadd.f32 %v4784, %v5052
        %5054 = vmatmul.f32.gmra.mxu0 %v4260
        %v5055 = vpop.f32.mrf.mxu0
        %v5056 = vadd.f32 %v4787, %v5055
        %5057 = vmatmul.f32.gmra.mxu0 %v4262
        %v5058 = vpop.f32.mrf.mxu0
        %v5059 = vadd.f32 %v4790, %v5058
        %5060 = vmatmul.f32.gmra.mxu0 %v4264
        %v5061 = vpop.f32.mrf.mxu0
        %v5062 = vadd.f32 %v4793, %v5061
        %5063 = vmatmul.f32.gmra.mxu0 %v4266
        %v5064 = vpop.f32.mrf.mxu0
        %v5065 = vadd.f32 %v4796, %v5064
        %5066 = vmatmul.f32.gmra.mxu0 %v4268
        %v5067 = vpop.f32.mrf.mxu0
        %v5068 = vadd.f32 %v4799, %v5067
        %5069 = vmatmul.f32.gmra.mxu0 %v4270
        %v5070 = vpop.f32.mrf.mxu0
        %v5071 = vadd.f32 %v4802, %v5070
        %5072 = vmatmul.f32.gmra.mxu0 %v4272
        %v5073 = vpop.f32.mrf.mxu0
        %v5074 = vadd.f32 %v4805, %v5073
        %5075 = vmatmul.f32.gmra.mxu0 %v4274
        %v5076 = vpop.f32.mrf.mxu0
        %v5077 = vadd.f32 %v4808, %v5076
        %5078 = vmatmul.f32.gmra.mxu0 %v4276
        %v5079 = vpop.f32.mrf.mxu0
        %v5080 = vadd.f32 %v4811, %v5079
        %5081 = vmatmul.f32.gmra.mxu0 %v4278
        %v5082 = vpop.f32.mrf.mxu0
        %v5083 = vadd.f32 %v4814, %v5082
        %5084 = vmatmul.f32.gmra.mxu0 %v4280
        %v5085 = vpop.f32.mrf.mxu0
        %v5086 = vadd.f32 %v4817, %v5085
        %5087 = vmatmul.f32.gmra.mxu0 %v4282
        %v5088 = vpop.f32.mrf.mxu0
        %v5089 = vadd.f32 %v4820, %v5088
        %5090 = vmatmul.f32.gmra.mxu0 %v4285
        %v5091 = vpop.f32.mrf.mxu0
        %v5092 = vadd.f32 %v4823, %v5091
        %5093 = vmatmul.f32.gmra.mxu0 %v4288
        %v5094 = vpop.f32.mrf.mxu0
        %v5095 = vadd.f32 %v4826, %v5094
        %5096 = vmatmul.f32.gmra.mxu0 %v4291
        %v5097 = vpop.f32.mrf.mxu0
        %v5098 = vadd.f32 %v4829, %v5097
        %5099 = vmatmul.f32.gmra.mxu0 %v4294
        %v5100 = vpop.f32.mrf.mxu0
        %v5101 = vadd.f32 %v4832, %v5100
        %5102 = vmatmul.f32.gmra.mxu0 %v4297
        %v5103 = vpop.f32.mrf.mxu0
        %v5104 = vadd.f32 %v4835, %v5103
        %5105 = vmatmul.f32.gmra.mxu0 %v4300
        %v5106 = vpop.f32.mrf.mxu0
        %v5107 = vadd.f32 %v4838, %v5106
        %5108 = vmatmul.f32.gmra.mxu0 %v4303
        %v5109 = vpop.f32.mrf.mxu0
        %v5110 = vadd.f32 %v4841, %v5109
        %5111 = vdwg.mxu0
        %v5112 = vmax.f32 %v4861, 0.0
        %v5113 = vmax.f32 %v4864, 0.0
        %v5114 = vmax.f32 %v4867, 0.0
        %v5115 = vmax.f32 %v4870, 0.0
        %v5116 = vmax.f32 %v4873, 0.0
        %v5117 = vmax.f32 %v4876, 0.0
        %v5118 = vmax.f32 %v4879, 0.0
        %v5119 = vmax.f32 %v4882, 0.0
        %v5120 = vmax.f32 %v4885, 0.0
        %v5121 = vmax.f32 %v4888, 0.0
        %v5122 = vmax.f32 %v4891, 0.0
        %v5123 = vmax.f32 %v4894, 0.0
        %v5124 = vmax.f32 %v4897, 0.0
        %v5125 = vmax.f32 %v4900, 0.0
        %v5126 = vmax.f32 %v4903, 0.0
        %v5127 = vmax.f32 %v4906, 0.0
        %v5128 = vmax.f32 %v4909, 0.0
        %v5129 = vmax.f32 %v4912, 0.0
        %v5130 = vmax.f32 %v4915, 0.0
        %v5131 = vmax.f32 %v4918, 0.0
        %v5132 = vmax.f32 %v4921, 0.0
        %v5133 = vmax.f32 %v4924, 0.0
        %v5134 = vmax.f32 %v4927, 0.0
        %v5135 = vmax.f32 %v4930, 0.0
        %v5136 = vmax.f32 %v4933, 0.0
        %v5137 = vmax.f32 %v4936, 0.0
        %v5138 = vmax.f32 %v4939, 0.0
        %v5139 = vmax.f32 %v4942, 0.0
        %v5140 = vmax.f32 %v4945, 0.0
        %v5141 = vmax.f32 %v4948, 0.0
        %v5142 = vmax.f32 %v4951, 0.0
        %v5143 = vmax.f32 %v4954, 0.0
        %v5144 = vmax.f32 %v4957, 0.0
        %v5145 = vmax.f32 %v4960, 0.0
        %v5146 = vmax.f32 %v4963, 0.0
        %v5147 = vmax.f32 %v4966, 0.0
        %v5148 = vmax.f32 %v4969, 0.0
        %v5149 = vmax.f32 %v4972, 0.0
        %v5150 = vmax.f32 %v4975, 0.0
        %v5151 = vmax.f32 %v4978, 0.0
        %v5152 = vmax.f32 %v4981, 0.0
        %v5153 = vmax.f32 %v4984, 0.0
        %v5154 = vmax.f32 %v4987, 0.0
        %v5155 = vmax.f32 %v4990, 0.0
        %v5156 = vmax.f32 %v4993, 0.0
        %v5157 = vmax.f32 %v4996, 0.0
        %v5158 = vmax.f32 %v4999, 0.0
        %v5159 = vmax.f32 %v5002, 0.0
        %v5160 = vmax.f32 %v5005, 0.0
        %v5161 = vmax.f32 %v5008, 0.0
        %v5162 = vmax.f32 %v5011, 0.0
        %v5163 = vmax.f32 %v5014, 0.0
        %v5164 = vmax.f32 %v5017, 0.0
        %v5165 = vmax.f32 %v5020, 0.0
        %v5166 = vmax.f32 %v5023, 0.0
        %v5167 = vmax.f32 %v5026, 0.0
        %v5168 = vmax.f32 %v5029, 0.0
        %v5169 = vmax.f32 %v5032, 0.0
        %v5170 = vmax.f32 %v5035, 0.0
        %v5171 = vmax.f32 %v5038, 0.0
        %v5172 = vmax.f32 %v5041, 0.0
        %v5173 = vmax.f32 %v5044, 0.0
        %v5174 = vmax.f32 %v5047, 0.0
        %v5175 = vmax.f32 %v5050, 0.0
        %v5176 = vmax.f32 %v5053, 0.0
        %v5177 = vmax.f32 %v5056, 0.0
        %v5178 = vmax.f32 %v5059, 0.0
        %v5179 = vmax.f32 %v5062, 0.0
        %v5180 = vmax.f32 %v5065, 0.0
        %v5181 = vmax.f32 %v5068, 0.0
        %v5182 = vmax.f32 %v5071, 0.0
        %v5183 = vmax.f32 %v5074, 0.0
        %v5184 = vmax.f32 %v5077, 0.0
        %v5185 = vmax.f32 %v5080, 0.0
        %v5186 = vmax.f32 %v5083, 0.0
        %v5187 = vmax.f32 %v5086, 0.0
        %v5188 = vmax.f32 %v5089, 0.0
        %v5189 = vmax.f32 %v5092, 0.0
        %v5190 = vmax.f32 %v5095, 0.0
        %v5191 = vmax.f32 %v5098, 0.0
        %v5192 = vmax.f32 %v5101, 0.0
        %v5193 = vmax.f32 %v5104, 0.0
        %v5194 = vmax.f32 %v5107, 0.0
        %v5195 = vmax.f32 %v5110, 0.0
        %5196 = vst.msk [vmem:[#allocation3] sm:$0xff] %vm3668, %v5112
        %5197 = vst.msk [vmem:[#allocation3 + $0x8] sm:$0xff] %vm3668, %v5113
        %5198 = vst.msk [vmem:[#allocation3 + $0x10] sm:$0xff] %vm3668, %v5114
        %5199 = vst.msk [vmem:[#allocation3 + $0x18] sm:$0xff] %vm3668, %v5115
        %5200 = vst.msk [vmem:[#allocation3 + $0x20] sm:$0xff] %vm3668, %v5116
        %5201 = vst.msk [vmem:[#allocation3 + $0x28] sm:$0xff] %vm3668, %v5117
        %5202 = vst.msk [vmem:[#allocation3 + $0x30] sm:$0xff] %vm3668, %v5118
        %5203 = vst.msk [vmem:[#allocation3 + $0x38] sm:$0xff] %vm3668, %v5119
        %5204 = vst.msk [vmem:[#allocation3 + $0x40] sm:$0xff] %vm3668, %v5120
        %5205 = vst.msk [vmem:[#allocation3 + $0x48] sm:$0xff] %vm3668, %v5121
        %5206 = vst.msk [vmem:[#allocation3 + $0x50] sm:$0xff] %vm3668, %v5122
        %5207 = vst.msk [vmem:[#allocation3 + $0x58] sm:$0xff] %vm3668, %v5123
        %5208 = vst.msk [vmem:[#allocation3 + $0x60] sm:$0xff] %vm3668, %v5124
        %5209 = vst.msk [vmem:[#allocation3 + $0x68] sm:$0xff] %vm3668, %v5125
        %5210 = vst.msk [vmem:[#allocation3 + $0x70] sm:$0xff] %vm3668, %v5126
        %5211 = vst.msk [vmem:[#allocation3 + $0x78] sm:$0xff] %vm3668, %v5127
        %5212 = vst.msk [vmem:[#allocation3 + $0x80] sm:$0xff] %vm3668, %v5128
        %5213 = vst.msk [vmem:[#allocation3 + $0x88] sm:$0xff] %vm3668, %v5129
        %5214 = vst.msk [vmem:[#allocation3 + $0x90] sm:$0xff] %vm3668, %v5130
        %5215 = vst.msk [vmem:[#allocation3 + $0x98] sm:$0xff] %vm3668, %v5131
        %5216 = vst.msk [vmem:[#allocation3 + $0xa0] sm:$0xff] %vm3668, %v5132
        %5217 = vst.msk [vmem:[#allocation3 + $0xa8] sm:$0xff] %vm3668, %v5133
        %5218 = vst.msk [vmem:[#allocation3 + $0xb0] sm:$0xff] %vm3668, %v5134
        %5219 = vst.msk [vmem:[#allocation3 + $0xb8] sm:$0xff] %vm3668, %v5135
        %5220 = vst.msk [vmem:[#allocation3 + $0xc0] sm:$0xff] %vm3668, %v5136
        %5221 = vst.msk [vmem:[#allocation3 + $0xc8] sm:$0xff] %vm3668, %v5137
        %5222 = vst.msk [vmem:[#allocation3 + $0xd0] sm:$0xff] %vm3668, %v5138
        %5223 = vst.msk [vmem:[#allocation3 + $0xd8] sm:$0xff] %vm3668, %v5139
        %5224 = vst.msk [vmem:[#allocation3 + $0xe0] sm:$0xff] %vm3668, %v5140
        %5225 = vst.msk [vmem:[#allocation3 + $0xe8] sm:$0xff] %vm3668, %v5141
        %5226 = vst.msk [vmem:[#allocation3 + $0xf0] sm:$0xff] %vm3668, %v5142
        %5227 = vst.msk [vmem:[#allocation3 + $0xf8] sm:$0xff] %vm3668, %v5143
        %5228 = vst.msk [vmem:[#allocation3 + $0x100] sm:$0xff] %vm3668, %v5144
        %5229 = vst.msk [vmem:[#allocation3 + $0x108] sm:$0xff] %vm3668, %v5145
        %5230 = vst.msk [vmem:[#allocation3 + $0x110] sm:$0xff] %vm3668, %v5146
        %5231 = vst.msk [vmem:[#allocation3 + $0x118] sm:$0xff] %vm3668, %v5147
        %5232 = vst.msk [vmem:[#allocation3 + $0x120] sm:$0xff] %vm3668, %v5148
        %5233 = vst.msk [vmem:[#allocation3 + $0x128] sm:$0xff] %vm3668, %v5149
        %5234 = vst.msk [vmem:[#allocation3 + $0x130] sm:$0xff] %vm3668, %v5150
        %5235 = vst.msk [vmem:[#allocation3 + $0x138] sm:$0xff] %vm3668, %v5151
        %5236 = vst.msk [vmem:[#allocation3 + $0x140] sm:$0xff] %vm3668, %v5152
        %5237 = vst.msk [vmem:[#allocation3 + $0x148] sm:$0xff] %vm3668, %v5153
        %5238 = vst.msk [vmem:[#allocation3 + $0x150] sm:$0xff] %vm3668, %v5154
        %5239 = vst.msk [vmem:[#allocation3 + $0x158] sm:$0xff] %vm3668, %v5155
        %5240 = vst.msk [vmem:[#allocation3 + $0x160] sm:$0xff] %vm3668, %v5156
        %5241 = vst.msk [vmem:[#allocation3 + $0x168] sm:$0xff] %vm3668, %v5157
        %5242 = vst.msk [vmem:[#allocation3 + $0x170] sm:$0xff] %vm3668, %v5158
        %5243 = vst.msk [vmem:[#allocation3 + $0x178] sm:$0xff] %vm3668, %v5159
        %5244 = vst.msk [vmem:[#allocation3 + $0x180] sm:$0xff] %vm3668, %v5160
        %5245 = vst.msk [vmem:[#allocation3 + $0x188] sm:$0xff] %vm3668, %v5161
        %5246 = vst.msk [vmem:[#allocation3 + $0x190] sm:$0xff] %vm3668, %v5162
        %5247 = vst.msk [vmem:[#allocation3 + $0x198] sm:$0xff] %vm3668, %v5163
        %5248 = vst.msk [vmem:[#allocation3 + $0x1a0] sm:$0xff] %vm3668, %v5164
        %5249 = vst.msk [vmem:[#allocation3 + $0x1a8] sm:$0xff] %vm3668, %v5165
        %5250 = vst.msk [vmem:[#allocation3 + $0x1b0] sm:$0xff] %vm3668, %v5166
        %5251 = vst.msk [vmem:[#allocation3 + $0x1b8] sm:$0xff] %vm3668, %v5167
        %5252 = vst.msk [vmem:[#allocation3 + $0x1c0] sm:$0xff] %vm3668, %v5168
        %5253 = vst.msk [vmem:[#allocation3 + $0x1c8] sm:$0xff] %vm3668, %v5169
        %5254 = vst.msk [vmem:[#allocation3 + $0x1d0] sm:$0xff] %vm3668, %v5170
        %5255 = vst.msk [vmem:[#allocation3 + $0x1d8] sm:$0xff] %vm3668, %v5171
        %5256 = vst.msk [vmem:[#allocation3 + $0x1e0] sm:$0xff] %vm3668, %v5172
        %5257 = vst.msk [vmem:[#allocation3 + $0x1e8] sm:$0xff] %vm3668, %v5173
        %5258 = vst.msk [vmem:[#allocation3 + $0x1f0] sm:$0xff] %vm3668, %v5174
        %5259 = vst.msk [vmem:[#allocation3 + $0x1f8] sm:$0xff] %vm3668, %v5175
        %5260 = vst.msk [vmem:[#allocation3 + $0x200] sm:$0xff] %vm3668, %v5176
        %5261 = vst.msk [vmem:[#allocation3 + $0x208] sm:$0xff] %vm3668, %v5177
        %5262 = vst.msk [vmem:[#allocation3 + $0x210] sm:$0xff] %vm3668, %v5178
        %5263 = vst.msk [vmem:[#allocation3 + $0x218] sm:$0xff] %vm3668, %v5179
        %5264 = vst.msk [vmem:[#allocation3 + $0x220] sm:$0xff] %vm3668, %v5180
        %5265 = vst.msk [vmem:[#allocation3 + $0x228] sm:$0xff] %vm3668, %v5181
        %5266 = vst.msk [vmem:[#allocation3 + $0x230] sm:$0xff] %vm3668, %v5182
        %5267 = vst.msk [vmem:[#allocation3 + $0x238] sm:$0xff] %vm3668, %v5183
        %5268 = vst.msk [vmem:[#allocation3 + $0x240] sm:$0xff] %vm3668, %v5184
        %5269 = vst.msk [vmem:[#allocation3 + $0x248] sm:$0xff] %vm3668, %v5185
        %5270 = vst.msk [vmem:[#allocation3 + $0x250] sm:$0xff] %vm3668, %v5186
        %5271 = vst.msk [vmem:[#allocation3 + $0x258] sm:$0xff] %vm3668, %v5187
        %5272 = vst.msk [vmem:[#allocation3 + $0x260] sm:$0xff] %vm3668, %v5188
        %5273 = vst.msk [vmem:[#allocation3 + $0x268] sm:$0xff] %vm3668, %v5189
        %5274 = vst.msk [vmem:[#allocation3 + $0x270] sm:$0xff] %vm3668, %v5190
        %5275 = vst.msk [vmem:[#allocation3 + $0x278] sm:$0xff] %vm3668, %v5191
        %5276 = vst.msk [vmem:[#allocation3 + $0x280] sm:$0xff] %vm3668, %v5192
        %5277 = vst.msk [vmem:[#allocation3 + $0x288] sm:$0xff] %vm3668, %v5193
        %5278 = vst.msk [vmem:[#allocation3 + $0x290] sm:$0xff] %vm3668, %v5194
        %5279 = vst.msk [vmem:[#allocation3 + $0x298] sm:$0xff] %vm3668, %v5195
        %v5280 = vld [vmem:[#allocation3] ss:$2 sm:$0xff]
        %s5281 = scalar_lea.vmem [#allocation3], 16
        %v5282 = vld [vmem:[%s5281] ss:$2 sm:$0xf]
        %s5283 = scalar_lea.vmem [#allocation3], 1
        %v5284 = vld [vmem:[%s5283] ss:$2 sm:$0xff]
        %s5285 = scalar_lea.vmem [#allocation3], 17
        %v5286 = vld [vmem:[%s5285] ss:$2 sm:$0xf]
        %s5287 = scalar_lea.vmem [#allocation3], 28
        %v5288 = vld [vmem:[%s5287] ss:$2 sm:$0xff]
        %s5289 = scalar_lea.vmem [#allocation3], 44
        %v5290 = vld [vmem:[%s5289] ss:$2 sm:$0xf]
        %s5291 = scalar_lea.vmem [#allocation3], 29
        %v5292 = vld [vmem:[%s5291] ss:$2 sm:$0xff]
        %s5293 = scalar_lea.vmem [#allocation3], 45
        %v5294 = vld [vmem:[%s5293] ss:$2 sm:$0xf]
        %v5295 = vmax.f32 %v5280, %v5284
        %v5296 = vmax.f32 %v5282, %v5286
        %v5297 = vmax.f32 %v5288, %v5292
        %v5298 = vmax.f32 %v5290, %v5294
        %v5299 = vmax.f32 %v5295, %v5297
        %v5300 = vmax.f32 %v5296, %v5298
        %5301 = vst.msk [vmem:[%s270] sm:$0xff] %vm3668, %v5299
        %vm5302 = vcmask 519168
        %5303 = vst.msk [vmem:[%s270 + $0x8] sm:$0xf] %vm5302, %v5300
        %s5304 = scalar_lea.vmem [#allocation3], 56
        %v5305 = vld [vmem:[%s5304] ss:$2 sm:$0xff]
        %s5306 = scalar_lea.vmem [#allocation3], 72
        %v5307 = vld [vmem:[%s5306] ss:$2 sm:$0xf]
        %s5308 = scalar_lea.vmem [#allocation3], 57
        %v5309 = vld [vmem:[%s5308] ss:$2 sm:$0xff]
        %s5310 = scalar_lea.vmem [#allocation3], 73
        %v5311 = vld [vmem:[%s5310] ss:$2 sm:$0xf]
        %s5312 = scalar_lea.vmem [#allocation3], 84
        %v5313 = vld [vmem:[%s5312] ss:$2 sm:$0xff]
        %s5314 = scalar_lea.vmem [#allocation3], 100
        %v5315 = vld [vmem:[%s5314] ss:$2 sm:$0xf]
        %s5316 = scalar_lea.vmem [#allocation3], 85
        %v5317 = vld [vmem:[%s5316] ss:$2 sm:$0xff]
        %s5318 = scalar_lea.vmem [#allocation3], 101
        %v5319 = vld [vmem:[%s5318] ss:$2 sm:$0xf]
        %v5320 = vmax.f32 %v5305, %v5309
        %v5321 = vmax.f32 %v5307, %v5311
        %v5322 = vmax.f32 %v5313, %v5317
        %v5323 = vmax.f32 %v5315, %v5319
        %v5324 = vmax.f32 %v5320, %v5322
        %v5325 = vmax.f32 %v5321, %v5323
        %5326 = vst.msk [vmem:[%s270 + $0xc] sm:$0xff] %vm3668, %v5324
        %5327 = vst.msk [vmem:[%s270 + $0x14] sm:$0xf] %vm5302, %v5325
        %s5328 = scalar_lea.vmem [#allocation3], 112
        %v5329 = vld [vmem:[%s5328] ss:$2 sm:$0xff]
        %s5330 = scalar_lea.vmem [#allocation3], 128
        %v5331 = vld [vmem:[%s5330] ss:$2 sm:$0xf]
        %s5332 = scalar_lea.vmem [#allocation3], 113
        %v5333 = vld [vmem:[%s5332] ss:$2 sm:$0xff]
        %s5334 = scalar_lea.vmem [#allocation3], 129
        %v5335 = vld [vmem:[%s5334] ss:$2 sm:$0xf]
        %s5336 = scalar_lea.vmem [#allocation3], 140
        %v5337 = vld [vmem:[%s5336] ss:$2 sm:$0xff]
        %s5338 = scalar_lea.vmem [#allocation3], 156
        %v5339 = vld [vmem:[%s5338] ss:$2 sm:$0xf]
        %s5340 = scalar_lea.vmem [#allocation3], 141
        %v5341 = vld [vmem:[%s5340] ss:$2 sm:$0xff]
        %s5342 = scalar_lea.vmem [#allocation3], 157
        %v5343 = vld [vmem:[%s5342] ss:$2 sm:$0xf]
        %v5344 = vmax.f32 %v5329, %v5333
        %v5345 = vmax.f32 %v5331, %v5335
        %v5346 = vmax.f32 %v5337, %v5341
        %v5347 = vmax.f32 %v5339, %v5343
        %v5348 = vmax.f32 %v5344, %v5346
        %v5349 = vmax.f32 %v5345, %v5347
        %5350 = vst.msk [vmem:[%s270 + $0x18] sm:$0xff] %vm3668, %v5348
        %5351 = vst.msk [vmem:[%s270 + $0x20] sm:$0xf] %vm5302, %v5349
        %s5352 = scalar_lea.vmem [#allocation3], 168
        %v5353 = vld [vmem:[%s5352] ss:$2 sm:$0xff]
        %s5354 = scalar_lea.vmem [#allocation3], 184
        %v5355 = vld [vmem:[%s5354] ss:$2 sm:$0xf]
        %s5356 = scalar_lea.vmem [#allocation3], 169
        %v5357 = vld [vmem:[%s5356] ss:$2 sm:$0xff]
        %s5358 = scalar_lea.vmem [#allocation3], 185
        %v5359 = vld [vmem:[%s5358] ss:$2 sm:$0xf]
        %s5360 = scalar_lea.vmem [#allocation3], 196
        %v5361 = vld [vmem:[%s5360] ss:$2 sm:$0xff]
        %s5362 = scalar_lea.vmem [#allocation3], 212
        %v5363 = vld [vmem:[%s5362] ss:$2 sm:$0xf]
        %s5364 = scalar_lea.vmem [#allocation3], 197
        %v5365 = vld [vmem:[%s5364] ss:$2 sm:$0xff]
        %s5366 = scalar_lea.vmem [#allocation3], 213
        %v5367 = vld [vmem:[%s5366] ss:$2 sm:$0xf]
        %v5368 = vmax.f32 %v5353, %v5357
        %v5369 = vmax.f32 %v5355, %v5359
        %v5370 = vmax.f32 %v5361, %v5365
        %v5371 = vmax.f32 %v5363, %v5367
        %v5372 = vmax.f32 %v5368, %v5370
        %v5373 = vmax.f32 %v5369, %v5371
        %5374 = vst.msk [vmem:[%s270 + $0x24] sm:$0xff] %vm3668, %v5372
        %5375 = vst.msk [vmem:[%s270 + $0x2c] sm:$0xf] %vm5302, %v5373
        %s5376 = scalar_lea.vmem [#allocation3], 224
        %v5377 = vld [vmem:[%s5376] ss:$2 sm:$0xff]
        %s5378 = scalar_lea.vmem [#allocation3], 240
        %v5379 = vld [vmem:[%s5378] ss:$2 sm:$0xf]
        %s5380 = scalar_lea.vmem [#allocation3], 225
        %v5381 = vld [vmem:[%s5380] ss:$2 sm:$0xff]
        %s5382 = scalar_lea.vmem [#allocation3], 241
        %v5383 = vld [vmem:[%s5382] ss:$2 sm:$0xf]
        %s5384 = scalar_lea.vmem [#allocation3], 252
        %v5385 = vld [vmem:[%s5384] ss:$2 sm:$0xff]
        %s5386 = scalar_lea.vmem [#allocation3], 268
        %v5387 = vld [vmem:[%s5386] ss:$2 sm:$0xf]
        %s5388 = scalar_lea.vmem [#allocation3], 253
        %v5389 = vld [vmem:[%s5388] ss:$2 sm:$0xff]
        %s5390 = scalar_lea.vmem [#allocation3], 269
        %v5391 = vld [vmem:[%s5390] ss:$2 sm:$0xf]
        %v5392 = vmax.f32 %v5377, %v5381
        %v5393 = vmax.f32 %v5379, %v5383
        %v5394 = vmax.f32 %v5385, %v5389
        %v5395 = vmax.f32 %v5387, %v5391
        %v5396 = vmax.f32 %v5392, %v5394
        %v5397 = vmax.f32 %v5393, %v5395
        %5398 = vst.msk [vmem:[%s270 + $0x30] sm:$0xff] %vm3668, %v5396
        %5399 = vst.msk [vmem:[%s270 + $0x38] sm:$0xf] %vm5302, %v5397
        %s5400 = scalar_lea.vmem [#allocation3], 280
        %v5401 = vld [vmem:[%s5400] ss:$2 sm:$0xff]
        %s5402 = scalar_lea.vmem [#allocation3], 296
        %v5403 = vld [vmem:[%s5402] ss:$2 sm:$0xf]
        %s5404 = scalar_lea.vmem [#allocation3], 281
        %v5405 = vld [vmem:[%s5404] ss:$2 sm:$0xff]
        %s5406 = scalar_lea.vmem [#allocation3], 297
        %v5407 = vld [vmem:[%s5406] ss:$2 sm:$0xf]
        %s5408 = scalar_lea.vmem [#allocation3], 308
        %v5409 = vld [vmem:[%s5408] ss:$2 sm:$0xff]
        %s5410 = scalar_lea.vmem [#allocation3], 324
        %v5411 = vld [vmem:[%s5410] ss:$2 sm:$0xf]
        %s5412 = scalar_lea.vmem [#allocation3], 309
        %v5413 = vld [vmem:[%s5412] ss:$2 sm:$0xff]
        %s5414 = scalar_lea.vmem [#allocation3], 325
        %v5415 = vld [vmem:[%s5414] ss:$2 sm:$0xf]
        %v5416 = vmax.f32 %v5401, %v5405
        %v5417 = vmax.f32 %v5403, %v5407
        %v5418 = vmax.f32 %v5409, %v5413
        %v5419 = vmax.f32 %v5411, %v5415
        %v5420 = vmax.f32 %v5416, %v5418
        %v5421 = vmax.f32 %v5417, %v5419
        %5422 = vst.msk [vmem:[%s270 + $0x3c] sm:$0xff] %vm3668, %v5420
        %5423 = vst.msk [vmem:[%s270 + $0x44] sm:$0xf] %vm5302, %v5421
        %s5424 = scalar_lea.vmem [#allocation3], 336
        %v5425 = vld [vmem:[%s5424] ss:$2 sm:$0xff]
        %s5426 = scalar_lea.vmem [#allocation3], 352
        %v5427 = vld [vmem:[%s5426] ss:$2 sm:$0xf]
        %s5428 = scalar_lea.vmem [#allocation3], 337
        %v5429 = vld [vmem:[%s5428] ss:$2 sm:$0xff]
        %s5430 = scalar_lea.vmem [#allocation3], 353
        %v5431 = vld [vmem:[%s5430] ss:$2 sm:$0xf]
        %s5432 = scalar_lea.vmem [#allocation3], 364
        %v5433 = vld [vmem:[%s5432] ss:$2 sm:$0xff]
        %s5434 = scalar_lea.vmem [#allocation3], 380
        %v5435 = vld [vmem:[%s5434] ss:$2 sm:$0xf]
        %s5436 = scalar_lea.vmem [#allocation3], 365
        %v5437 = vld [vmem:[%s5436] ss:$2 sm:$0xff]
        %s5438 = scalar_lea.vmem [#allocation3], 381
        %v5439 = vld [vmem:[%s5438] ss:$2 sm:$0xf]
        %v5440 = vmax.f32 %v5425, %v5429
        %v5441 = vmax.f32 %v5427, %v5431
        %v5442 = vmax.f32 %v5433, %v5437
        %v5443 = vmax.f32 %v5435, %v5439
        %v5444 = vmax.f32 %v5440, %v5442
        %v5445 = vmax.f32 %v5441, %v5443
        %5446 = vst.msk [vmem:[%s270 + $0x48] sm:$0xff] %vm3668, %v5444
        %5447 = vst.msk [vmem:[%s270 + $0x50] sm:$0xf] %vm5302, %v5445
        %s5448 = scalar_lea.vmem [#allocation3], 392
        %v5449 = vld [vmem:[%s5448] ss:$2 sm:$0xff]
        %s5450 = scalar_lea.vmem [#allocation3], 408
        %v5451 = vld [vmem:[%s5450] ss:$2 sm:$0xf]
        %s5452 = scalar_lea.vmem [#allocation3], 393
        %v5453 = vld [vmem:[%s5452] ss:$2 sm:$0xff]
        %s5454 = scalar_lea.vmem [#allocation3], 409
        %v5455 = vld [vmem:[%s5454] ss:$2 sm:$0xf]
        %s5456 = scalar_lea.vmem [#allocation3], 420
        %v5457 = vld [vmem:[%s5456] ss:$2 sm:$0xff]
        %s5458 = scalar_lea.vmem [#allocation3], 436
        %v5459 = vld [vmem:[%s5458] ss:$2 sm:$0xf]
        %s5460 = scalar_lea.vmem [#allocation3], 421
        %v5461 = vld [vmem:[%s5460] ss:$2 sm:$0xff]
        %s5462 = scalar_lea.vmem [#allocation3], 437
        %v5463 = vld [vmem:[%s5462] ss:$2 sm:$0xf]
        %v5464 = vmax.f32 %v5449, %v5453
        %v5465 = vmax.f32 %v5451, %v5455
        %v5466 = vmax.f32 %v5457, %v5461
        %v5467 = vmax.f32 %v5459, %v5463
        %v5468 = vmax.f32 %v5464, %v5466
        %v5469 = vmax.f32 %v5465, %v5467
        %5470 = vst.msk [vmem:[%s270 + $0x54] sm:$0xff] %vm3668, %v5468
        %5471 = vst.msk [vmem:[%s270 + $0x5c] sm:$0xf] %vm5302, %v5469
        %s5472 = scalar_lea.vmem [#allocation3], 448
        %v5473 = vld [vmem:[%s5472] ss:$2 sm:$0xff]
        %s5474 = scalar_lea.vmem [#allocation3], 464
        %v5475 = vld [vmem:[%s5474] ss:$2 sm:$0xf]
        %s5476 = scalar_lea.vmem [#allocation3], 449
        %v5477 = vld [vmem:[%s5476] ss:$2 sm:$0xff]
        %s5478 = scalar_lea.vmem [#allocation3], 465
        %v5479 = vld [vmem:[%s5478] ss:$2 sm:$0xf]
        %s5480 = scalar_lea.vmem [#allocation3], 476
        %v5481 = vld [vmem:[%s5480] ss:$2 sm:$0xff]
        %s5482 = scalar_lea.vmem [#allocation3], 492
        %v5483 = vld [vmem:[%s5482] ss:$2 sm:$0xf]
        %s5484 = scalar_lea.vmem [#allocation3], 477
        %v5485 = vld [vmem:[%s5484] ss:$2 sm:$0xff]
        %s5486 = scalar_lea.vmem [#allocation3], 493
        %v5487 = vld [vmem:[%s5486] ss:$2 sm:$0xf]
        %v5488 = vmax.f32 %v5473, %v5477
        %v5489 = vmax.f32 %v5475, %v5479
        %v5490 = vmax.f32 %v5481, %v5485
        %v5491 = vmax.f32 %v5483, %v5487
        %v5492 = vmax.f32 %v5488, %v5490
        %v5493 = vmax.f32 %v5489, %v5491
        %5494 = vst.msk [vmem:[%s270 + $0x60] sm:$0xff] %vm3668, %v5492
        %5495 = vst.msk [vmem:[%s270 + $0x68] sm:$0xf] %vm5302, %v5493
        %s5496 = scalar_lea.vmem [#allocation3], 504
        %v5497 = vld [vmem:[%s5496] ss:$2 sm:$0xff]
        %s5498 = scalar_lea.vmem [#allocation3], 520
        %v5499 = vld [vmem:[%s5498] ss:$2 sm:$0xf]
        %s5500 = scalar_lea.vmem [#allocation3], 505
        %v5501 = vld [vmem:[%s5500] ss:$2 sm:$0xff]
        %s5502 = scalar_lea.vmem [#allocation3], 521
        %v5503 = vld [vmem:[%s5502] ss:$2 sm:$0xf]
        %s5504 = scalar_lea.vmem [#allocation3], 532
        %v5505 = vld [vmem:[%s5504] ss:$2 sm:$0xff]
        %s5506 = scalar_lea.vmem [#allocation3], 548
        %v5507 = vld [vmem:[%s5506] ss:$2 sm:$0xf]
        %s5508 = scalar_lea.vmem [#allocation3], 533
        %v5509 = vld [vmem:[%s5508] ss:$2 sm:$0xff]
        %s5510 = scalar_lea.vmem [#allocation3], 549
        %v5511 = vld [vmem:[%s5510] ss:$2 sm:$0xf]
        %v5512 = vmax.f32 %v5497, %v5501
        %v5513 = vmax.f32 %v5499, %v5503
        %v5514 = vmax.f32 %v5505, %v5509
        %v5515 = vmax.f32 %v5507, %v5511
        %v5516 = vmax.f32 %v5512, %v5514
        %v5517 = vmax.f32 %v5513, %v5515
        %5518 = vst.msk [vmem:[%s270 + $0x6c] sm:$0xff] %vm3668, %v5516
        %5519 = vst.msk [vmem:[%s270 + $0x74] sm:$0xf] %vm5302, %v5517
        %s5520 = scalar_lea.vmem [#allocation3], 560
        %v5521 = vld [vmem:[%s5520] ss:$2 sm:$0xff]
        %s5522 = scalar_lea.vmem [#allocation3], 576
        %v5523 = vld [vmem:[%s5522] ss:$2 sm:$0xf]
        %s5524 = scalar_lea.vmem [#allocation3], 561
        %v5525 = vld [vmem:[%s5524] ss:$2 sm:$0xff]
        %s5526 = scalar_lea.vmem [#allocation3], 577
        %v5527 = vld [vmem:[%s5526] ss:$2 sm:$0xf]
        %s5528 = scalar_lea.vmem [#allocation3], 588
        %v5529 = vld [vmem:[%s5528] ss:$2 sm:$0xff]
        %s5530 = scalar_lea.vmem [#allocation3], 604
        %v5531 = vld [vmem:[%s5530] ss:$2 sm:$0xf]
        %s5532 = scalar_lea.vmem [#allocation3], 589
        %v5533 = vld [vmem:[%s5532] ss:$2 sm:$0xff]
        %s5534 = scalar_lea.vmem [#allocation3], 605
        %v5535 = vld [vmem:[%s5534] ss:$2 sm:$0xf]
        %v5536 = vmax.f32 %v5521, %v5525
        %v5537 = vmax.f32 %v5523, %v5527
        %v5538 = vmax.f32 %v5529, %v5533
        %v5539 = vmax.f32 %v5531, %v5535
        %v5540 = vmax.f32 %v5536, %v5538
        %v5541 = vmax.f32 %v5537, %v5539
        %5542 = vst.msk [vmem:[%s270 + $0x78] sm:$0xff] %vm3668, %v5540
        %5543 = vst.msk [vmem:[%s270 + $0x80] sm:$0xf] %vm5302, %v5541
        %s5544 = scalar_lea.vmem [#allocation3], 616
        %v5545 = vld [vmem:[%s5544] ss:$2 sm:$0xff]
        %s5546 = scalar_lea.vmem [#allocation3], 632
        %v5547 = vld [vmem:[%s5546] ss:$2 sm:$0xf]
        %s5548 = scalar_lea.vmem [#allocation3], 617
        %v5549 = vld [vmem:[%s5548] ss:$2 sm:$0xff]
        %s5550 = scalar_lea.vmem [#allocation3], 633
        %v5551 = vld [vmem:[%s5550] ss:$2 sm:$0xf]
        %s5552 = scalar_lea.vmem [#allocation3], 644
        %v5553 = vld [vmem:[%s5552] ss:$2 sm:$0xff]
        %s5554 = scalar_lea.vmem [#allocation3], 660
        %v5555 = vld [vmem:[%s5554] ss:$2 sm:$0xf]
        %s5556 = scalar_lea.vmem [#allocation3], 645
        %v5557 = vld [vmem:[%s5556] ss:$2 sm:$0xff]
        %s5558 = scalar_lea.vmem [#allocation3], 661
        %v5559 = vld [vmem:[%s5558] ss:$2 sm:$0xf]
        %v5560 = vmax.f32 %v5545, %v5549
        %v5561 = vmax.f32 %v5547, %v5551
        %v5562 = vmax.f32 %v5553, %v5557
        %v5563 = vmax.f32 %v5555, %v5559
        %v5564 = vmax.f32 %v5560, %v5562
        %v5565 = vmax.f32 %v5561, %v5563
        %5566 = vst.msk [vmem:[%s270 + $0x84] sm:$0xff] %vm3668, %v5564
        %5567 = vst.msk [vmem:[%s270 + $0x8c] sm:$0xf] %vm5302, %v5565
        %p5568 = scmp.lt.s32.totalorder %s18, 1
        %s5569 = scalar_select %p5568, %s18, 1
        %s5570 = smul.addr %s5569, 18
        %s5571 = smul.addr %s5570, 8
        %s5572 = scalar_lea.vmem %s5, %s5571
        // Predicated region
        $region53: #{forward.2} parent=39 // pred_check
          %p5573 = pneg %p146
        $region54: #{forward.2} parent=39 // pred_check_branch
          %5575 = sbr.rel (%p5573) target = $region56
        $region55: #{forward.2} parent=39 // pred_region
          _
        $region56: #{forward.2} parent=39 // pred_fallthru
          _
      $region40: #{forward.2} parent=5 // pred_fallthru
        _
      %p5576 = scmp.le.s32.totalorder 2, %s13
      // Predicated region
      $region57: #{forward.2} parent=5 // pred_check
        %p5577 = pneg %p5576
      $region58: #{forward.2} parent=5 // pred_check_branch
        %5579 = sbr.rel (%p5577) target = $region60
      $region59: #{forward.2} parent=5 // pred_region
        %s5580 = ssub.s32 %s13, 2
        // Predicated region
        $region61: #{forward.2} parent=59 // pred_check
          %p5581 = pneg %p152
        $region62: #{forward.2} parent=59 // pred_check_branch
          %5583 = sbr.rel (%p5581) target = $region64
        $region63: #{forward.2} parent=59 // pred_region
          %p5584 = scmp.lt.s32.totalorder %s19, 1
          %s5585 = scalar_select %p5584, %s19, 1
          %s5586 = smul.addr %s5585, 18
          %s5587 = smul.addr %s5586, 8
          %s5588 = scalar_lea.vmem %s5, %s5587
        $region64: #{forward.2} parent=59 // pred_fallthru
          _
      $region60: #{forward.2} parent=5 // pred_fallthru
        _
    $region6: #{forward.2} parent=1 // loop_footer
      %s17 = sadd.s32 1, %s13
    $region7: #{forward.2} parent=1 // loop_footer_branch
      %12 = sbr.rel target = $region3
    $region8: #{forward.2} parent=1 // loop_exit
      _
    %5589 = vsyncpa [#allocation5], 1
    %s5590 = scalar_lea.sflag [#allocation5], 1
    %5591 = vsyncpa %s5590, 1
    %5592 = vsyncpa [#allocation7], 1

// kernel: forward.3
$region0: #{forward.3}
  #allocation0 [shape = 'u32[]', space=smem, size = 0x4, offset = 0x4, fixed_abs, tag = 'smem constant byte address 0x4 - core index']
  #allocation1 [shape = 'u32[72,128]{1,0:T(1,128)}', space=vmem, size = 0x9000, scoped, tag = 'internal scratch']
  %s0 = inlined_call_operand.vmem [shape: f32[2,9216], index: 0, kind: input, shape index: {}]
  %s1 = inlined_call_operand.hbm [shape: bf16[9216,128], index: 1, kind: input, shape index: {}]
  %s2 = inlined_call_operand.hbm [shape: f32[1,128], index: 2, kind: input, shape index: {}]
  %s3 = inlined_call_operand.vmem [shape: f32[128,10], index: 3, kind: input, shape index: {}]
  %s4 = inlined_call_operand.hbm [shape: f32[1,10], index: 4, kind: input, shape index: {}]
  %s5 = inlined_call_operand.hbm [shape: f32[2,10], index: 5, kind: output, shape index: {}]
  %s6 = sld [smem:[#allocation0]]
  $region42: #{forward.3} parent=0
    _
  %s8 = ssub.s32 1, %s6
  %s9 = scalar_select 0, %s8, %s6
  $region1: #{forward.3} parent=0
    #allocation2 [shape = 'u8[2359296]{0}', space=vmem, size = 0x240000, scoped, tag = 'input window, operand 1, single buffered']
    #allocation3 [shape = 's32[1]{0}', space=sflag, size = 0x4, scoped, tag = 'scoped memory for forward.3']
    #allocation4 [shape = 's32[1]{0}', space=sflag, size = 0x4, scoped, tag = 'scoped memory for forward.3']
    #allocation5 [shape = 'u8[512]{0}', space=vmem, size = 0x400, scoped, tag = 'input window, operand 2, single buffered']
    #allocation6 [shape = 's32[1]{0}', space=sflag, size = 0x4, scoped, tag = 'scoped memory for forward.3']
    #allocation7 [shape = 'u8[512]{0}', space=vmem, size = 0x400, scoped, tag = 'input window, operand 4, single buffered']
    #allocation8 [shape = 'u8[1024]{0}', space=vmem, size = 0x400, scoped, tag = 'output window, operand 0, single buffered']
    %10 = vsyncpa [#allocation3], 0
    %11 = vsyncpa [#allocation6], 0
    %12 = vsyncpa [#allocation4], 0
    // Predicated region
    $region2: #{forward.3} parent=1 // pred_check
      _
    $region3: #{forward.3} parent=1 // pred_check_branch
      %14 = sbr.rel (0) target = $region5
    $region4: #{forward.3} parent=1 // pred_region
      _
    $region5: #{forward.3} parent=1 // pred_fallthru
      _
    // Predicated region
    $region6: #{forward.3} parent=1 // pred_check
      _
    $region7: #{forward.3} parent=1 // pred_check_branch
      %16 = sbr.rel (0) target = $region9
    $region8: #{forward.3} parent=1 // pred_region
      %18 = vsyncadd [#allocation3], 0
      %s19 = sshll.u32 %s1, 4
      %s20 = int_to_ptr.hbm [resolvable:$true] %s19
      %s21 = sshll.u32 [#allocation2], 4
      %s22 = int_to_ptr.vmem [resolvable:$true] %s21
      %27 = dma.hbm_to_vmem [thread:$0]  %s20, 73728, %s22, [#allocation3], 64, 64, 4
    $region9: #{forward.3} parent=1 // pred_fallthru
      _
    // Predicated region
    $region10: #{forward.3} parent=1 // pred_check
      _
    $region11: #{forward.3} parent=1 // pred_check_branch
      %29 = sbr.rel (0) target = $region13
    $region12: #{forward.3} parent=1 // pred_region
      %31 = vsyncadd [#allocation6], 0
      %s33 = sshll.u32 %s2, 4
      %s34 = int_to_ptr.hbm [resolvable:$true] %s33
      %s35 = sshll.u32 [#allocation5], 4
      %s36 = int_to_ptr.vmem [resolvable:$true] %s35
      %38 = dma.hbm_to_vmem [thread:$0]  %s34, 16, %s36, [#allocation6]
    $region13: #{forward.3} parent=1 // pred_fallthru
      _
    // Predicated region
    $region14: #{forward.3} parent=1 // pred_check
      _
    $region15: #{forward.3} parent=1 // pred_check_branch
      %40 = sbr.rel (0) target = $region17
    $region16: #{forward.3} parent=1 // pred_region
      _
    $region17: #{forward.3} parent=1 // pred_fallthru
      _
    // Predicated region
    $region18: #{forward.3} parent=1 // pred_check
      _
    $region19: #{forward.3} parent=1 // pred_check_branch
      %42 = sbr.rel (0) target = $region21
    $region20: #{forward.3} parent=1 // pred_region
      %44 = vsyncadd [#allocation6], 0
      %s46 = sshll.u32 %s4, 4
      %s47 = int_to_ptr.hbm [resolvable:$true] %s46
      %s48 = sshll.u32 [#allocation7], 4
      %s49 = int_to_ptr.vmem [resolvable:$true] %s48
      %51 = dma.hbm_to_vmem [thread:$0]  %s47, 16, %s49, [#allocation6]
    $region21: #{forward.3} parent=1 // pred_fallthru
      _
    // Predicated region
    $region22: #{forward.3} parent=1 // pred_check
      _
    $region23: #{forward.3} parent=1 // pred_check_branch
      %53 = sbr.rel (0) target = $region25
    $region24: #{forward.3} parent=1 // pred_region
      %55 = dma.done [#allocation3], 73728
    $region25: #{forward.3} parent=1 // pred_fallthru
      _
    // Predicated region
    $region26: #{forward.3} parent=1 // pred_check
      _
    $region27: #{forward.3} parent=1 // pred_check_branch
      %57 = sbr.rel (0) target = $region29
    $region28: #{forward.3} parent=1 // pred_region
      %59 = dma.done [#allocation6], 16
    $region29: #{forward.3} parent=1 // pred_fallthru
      _
    // Predicated region
    $region30: #{forward.3} parent=1 // pred_check
      _
    $region31: #{forward.3} parent=1 // pred_check_branch
      %61 = sbr.rel (0) target = $region33
    $region32: #{forward.3} parent=1 // pred_region
      %63 = dma.done [#allocation6], 16
    $region33: #{forward.3} parent=1 // pred_fallthru
      _
    %v64 = vld [vmem:[%s0] sm:$0xff]
    %v65 = vld [vmem:[%s0 + $0x8] sm:$0xff]
    %v66 = vld [vmem:[%s0 + $0x10] sm:$0xff]
    %v67 = vld [vmem:[%s0 + $0x18] sm:$0xff]
    %v68 = vld [vmem:[%s0 + $0x20] sm:$0xff]
    %v69 = vld [vmem:[%s0 + $0x28] sm:$0xff]
    %v70 = vld [vmem:[%s0 + $0x30] sm:$0xff]
    %v71 = vld [vmem:[%s0 + $0x38] sm:$0xff]
    %v72 = vld [vmem:[%s0 + $0x40] sm:$0xff]
    %v73 = vld [vmem:[%s0 + $0x48] sm:$0xff]
    %v74 = vld [vmem:[%s0 + $0x50] sm:$0xff]
    %v75 = vld [vmem:[%s0 + $0x58] sm:$0xff]
    %v76 = vld [vmem:[%s0 + $0x60] sm:$0xff]
    %v77 = vld [vmem:[%s0 + $0x68] sm:$0xff]
    %v78 = vld [vmem:[%s0 + $0x70] sm:$0xff]
    %v79 = vld [vmem:[%s0 + $0x78] sm:$0xff]
    %v80 = vld [vmem:[%s0 + $0x80] sm:$0xff]
    %v81 = vld [vmem:[%s0 + $0x88] sm:$0xff]
    %100 = vst [vmem:[#allocation1] ss:$4 sm:$0xff] %v64
    %s101 = scalar_lea.vmem [#allocation1], 32
    %102 = vst [vmem:[%s101] ss:$4 sm:$0xff] %v65
    %v103 = vld.sshfl [vmem:[#allocation1] sm:$0xff pattern:$0x73625140]
    %v104 = vld.sshfl [vmem:[#allocation1 + $0x8] sm:$0xff pattern:$0x73625140]
    %v105 = vld.sshfl [vmem:[#allocation1 + $0x10] sm:$0xff pattern:$0x73625140]
    %v106 = vld.sshfl [vmem:[#allocation1 + $0x18] sm:$0xff pattern:$0x73625140]
    %v107 = vld.sshfl [vmem:[#allocation1 + $0x20] sm:$0xff pattern:$0x73625140]
    %v108 = vld.sshfl [vmem:[#allocation1 + $0x28] sm:$0xff pattern:$0x73625140]
    %v109 = vld.sshfl [vmem:[#allocation1 + $0x30] sm:$0xff pattern:$0x73625140]
    %v110 = vld.sshfl [vmem:[#allocation1 + $0x38] sm:$0xff pattern:$0x73625140]
    %111 = vst [vmem:[#allocation1] ss:$4 sm:$0xff] %v66
    %112 = vst [vmem:[%s101] ss:$4 sm:$0xff] %v67
    %v113 = vld.sshfl [vmem:[#allocation1] sm:$0xff pattern:$0x73625140]
    %v114 = vld.sshfl [vmem:[#allocation1 + $0x8] sm:$0xff pattern:$0x73625140]
    %v115 = vld.sshfl [vmem:[#allocation1 + $0x10] sm:$0xff pattern:$0x73625140]
    %v116 = vld.sshfl [vmem:[#allocation1 + $0x18] sm:$0xff pattern:$0x73625140]
    %v117 = vld.sshfl [vmem:[#allocation1 + $0x20] sm:$0xff pattern:$0x73625140]
    %v118 = vld.sshfl [vmem:[#allocation1 + $0x28] sm:$0xff pattern:$0x73625140]
    %v119 = vld.sshfl [vmem:[#allocation1 + $0x30] sm:$0xff pattern:$0x73625140]
    %v120 = vld.sshfl [vmem:[#allocation1 + $0x38] sm:$0xff pattern:$0x73625140]
    %121 = vst [vmem:[#allocation1] ss:$4 sm:$0xff] %v68
    %122 = vst [vmem:[%s101] ss:$4 sm:$0xff] %v69
    %v123 = vld.sshfl [vmem:[#allocation1] sm:$0xff pattern:$0x73625140]
    %v124 = vld.sshfl [vmem:[#allocation1 + $0x8] sm:$0xff pattern:$0x73625140]
    %v125 = vld.sshfl [vmem:[#allocation1 + $0x10] sm:$0xff pattern:$0x73625140]
    %v126 = vld.sshfl [vmem:[#allocation1 + $0x18] sm:$0xff pattern:$0x73625140]
    %v127 = vld.sshfl [vmem:[#allocation1 + $0x20] sm:$0xff pattern:$0x73625140]
    %v128 = vld.sshfl [vmem:[#allocation1 + $0x28] sm:$0xff pattern:$0x73625140]
    %v129 = vld.sshfl [vmem:[#allocation1 + $0x30] sm:$0xff pattern:$0x73625140]
    %v130 = vld.sshfl [vmem:[#allocation1 + $0x38] sm:$0xff pattern:$0x73625140]
    %131 = vst [vmem:[#allocation1] ss:$4 sm:$0xff] %v70
    %132 = vst [vmem:[%s101] ss:$4 sm:$0xff] %v71
    %v133 = vld.sshfl [vmem:[#allocation1] sm:$0xff pattern:$0x73625140]
    %v134 = vld.sshfl [vmem:[#allocation1 + $0x8] sm:$0xff pattern:$0x73625140]
    %v135 = vld.sshfl [vmem:[#allocation1 + $0x10] sm:$0xff pattern:$0x73625140]
    %v136 = vld.sshfl [vmem:[#allocation1 + $0x18] sm:$0xff pattern:$0x73625140]
    %v137 = vld.sshfl [vmem:[#allocation1 + $0x20] sm:$0xff pattern:$0x73625140]
    %v138 = vld.sshfl [vmem:[#allocation1 + $0x28] sm:$0xff pattern:$0x73625140]
    %v139 = vld.sshfl [vmem:[#allocation1 + $0x30] sm:$0xff pattern:$0x73625140]
    %v140 = vld.sshfl [vmem:[#allocation1 + $0x38] sm:$0xff pattern:$0x73625140]
    %141 = vst [vmem:[#allocation1] ss:$4 sm:$0xff] %v72
    %142 = vst [vmem:[%s101] ss:$4 sm:$0xff] %v73
    %v143 = vld.sshfl [vmem:[#allocation1] sm:$0xff pattern:$0x73625140]
    %v144 = vld.sshfl [vmem:[#allocation1 + $0x8] sm:$0xff pattern:$0x73625140]
    %v145 = vld.sshfl [vmem:[#allocation1 + $0x10] sm:$0xff pattern:$0x73625140]
    %v146 = vld.sshfl [vmem:[#allocation1 + $0x18] sm:$0xff pattern:$0x73625140]
    %v147 = vld.sshfl [vmem:[#allocation1 + $0x20] sm:$0xff pattern:$0x73625140]
    %v148 = vld.sshfl [vmem:[#allocation1 + $0x28] sm:$0xff pattern:$0x73625140]
    %v149 = vld.sshfl [vmem:[#allocation1 + $0x30] sm:$0xff pattern:$0x73625140]
    %v150 = vld.sshfl [vmem:[#allocation1 + $0x38] sm:$0xff pattern:$0x73625140]
    %151 = vst [vmem:[#allocation1] ss:$4 sm:$0xff] %v74
    %152 = vst [vmem:[%s101] ss:$4 sm:$0xff] %v75
    %v153 = vld.sshfl [vmem:[#allocation1] sm:$0xff pattern:$0x73625140]
    %v154 = vld.sshfl [vmem:[#allocation1 + $0x8] sm:$0xff pattern:$0x73625140]
    %v155 = vld.sshfl [vmem:[#allocation1 + $0x10] sm:$0xff pattern:$0x73625140]
    %v156 = vld.sshfl [vmem:[#allocation1 + $0x18] sm:$0xff pattern:$0x73625140]
    %v157 = vld.sshfl [vmem:[#allocation1 + $0x20] sm:$0xff pattern:$0x73625140]
    %v158 = vld.sshfl [vmem:[#allocation1 + $0x28] sm:$0xff pattern:$0x73625140]
    %v159 = vld.sshfl [vmem:[#allocation1 + $0x30] sm:$0xff pattern:$0x73625140]
    %v160 = vld.sshfl [vmem:[#allocation1 + $0x38] sm:$0xff pattern:$0x73625140]
    %161 = vst [vmem:[#allocation1] ss:$4 sm:$0xff] %v76
    %162 = vst [vmem:[%s101] ss:$4 sm:$0xff] %v77
    %v163 = vld.sshfl [vmem:[#allocation1] sm:$0xff pattern:$0x73625140]
    %v164 = vld.sshfl [vmem:[#allocation1 + $0x8] sm:$0xff pattern:$0x73625140]
    %v165 = vld.sshfl [vmem:[#allocation1 + $0x10] sm:$0xff pattern:$0x73625140]
    %v166 = vld.sshfl [vmem:[#allocation1 + $0x18] sm:$0xff pattern:$0x73625140]
    %v167 = vld.sshfl [vmem:[#allocation1 + $0x20] sm:$0xff pattern:$0x73625140]
    %v168 = vld.sshfl [vmem:[#allocation1 + $0x28] sm:$0xff pattern:$0x73625140]
    %v169 = vld.sshfl [vmem:[#allocation1 + $0x30] sm:$0xff pattern:$0x73625140]
    %v170 = vld.sshfl [vmem:[#allocation1 + $0x38] sm:$0xff pattern:$0x73625140]
    %171 = vst [vmem:[#allocation1] ss:$4 sm:$0xff] %v78
    %172 = vst [vmem:[%s101] ss:$4 sm:$0xff] %v79
    %v173 = vld.sshfl [vmem:[#allocation1] sm:$0xff pattern:$0x73625140]
    %v174 = vld.sshfl [vmem:[#allocation1 + $0x8] sm:$0xff pattern:$0x73625140]
    %v175 = vld.sshfl [vmem:[#allocation1 + $0x10] sm:$0xff pattern:$0x73625140]
    %v176 = vld.sshfl [vmem:[#allocation1 + $0x18] sm:$0xff pattern:$0x73625140]
    %v177 = vld.sshfl [vmem:[#allocation1 + $0x20] sm:$0xff pattern:$0x73625140]
    %v178 = vld.sshfl [vmem:[#allocation1 + $0x28] sm:$0xff pattern:$0x73625140]
    %v179 = vld.sshfl [vmem:[#allocation1 + $0x30] sm:$0xff pattern:$0x73625140]
    %v180 = vld.sshfl [vmem:[#allocation1 + $0x38] sm:$0xff pattern:$0x73625140]
    %181 = vst [vmem:[#allocation1] ss:$4 sm:$0xff] %v80
    %182 = vst [vmem:[%s101] ss:$4 sm:$0xff] %v81
    %v183 = vld.sshfl [vmem:[#allocation1] sm:$0xff pattern:$0x73625140]
    %v184 = vld.sshfl [vmem:[#allocation1 + $0x8] sm:$0xff pattern:$0x73625140]
    %v185 = vld.sshfl [vmem:[#allocation1 + $0x10] sm:$0xff pattern:$0x73625140]
    %v186 = vld.sshfl [vmem:[#allocation1 + $0x18] sm:$0xff pattern:$0x73625140]
    %v187 = vld.sshfl [vmem:[#allocation1 + $0x20] sm:$0xff pattern:$0x73625140]
    %v188 = vld.sshfl [vmem:[#allocation1 + $0x28] sm:$0xff pattern:$0x73625140]
    %v189 = vld.sshfl [vmem:[#allocation1 + $0x30] sm:$0xff pattern:$0x73625140]
    %v190 = vld.sshfl [vmem:[#allocation1 + $0x38] sm:$0xff pattern:$0x73625140]
    %v263 = vpack.c.bf16 %v103, %v103
    %v264 = vpack.c.bf16 %v104, %v104
    %v265 = vpack.c.bf16 %v105, %v105
    %v266 = vpack.c.bf16 %v106, %v106
    %v267 = vpack.c.bf16 %v107, %v107
    %v268 = vpack.c.bf16 %v108, %v108
    %v269 = vpack.c.bf16 %v109, %v109
    %v270 = vpack.c.bf16 %v110, %v110
    %v271 = vpack.c.bf16 %v113, %v113
    %v272 = vpack.c.bf16 %v114, %v114
    %v273 = vpack.c.bf16 %v115, %v115
    %v274 = vpack.c.bf16 %v116, %v116
    %v275 = vpack.c.bf16 %v117, %v117
    %v276 = vpack.c.bf16 %v118, %v118
    %v277 = vpack.c.bf16 %v119, %v119
    %v278 = vpack.c.bf16 %v120, %v120
    %v279 = vpack.c.bf16 %v123, %v123
    %v280 = vpack.c.bf16 %v124, %v124
    %v281 = vpack.c.bf16 %v125, %v125
    %v282 = vpack.c.bf16 %v126, %v126
    %v283 = vpack.c.bf16 %v127, %v127
    %v284 = vpack.c.bf16 %v128, %v128
    %v285 = vpack.c.bf16 %v129, %v129
    %v286 = vpack.c.bf16 %v130, %v130
    %v287 = vpack.c.bf16 %v133, %v133
    %v288 = vpack.c.bf16 %v134, %v134
    %v289 = vpack.c.bf16 %v135, %v135
    %v290 = vpack.c.bf16 %v136, %v136
    %v291 = vpack.c.bf16 %v137, %v137
    %v292 = vpack.c.bf16 %v138, %v138
    %v293 = vpack.c.bf16 %v139, %v139
    %v294 = vpack.c.bf16 %v140, %v140
    %v295 = vpack.c.bf16 %v143, %v143
    %v296 = vpack.c.bf16 %v144, %v144
    %v297 = vpack.c.bf16 %v145, %v145
    %v298 = vpack.c.bf16 %v146, %v146
    %v299 = vpack.c.bf16 %v147, %v147
    %v300 = vpack.c.bf16 %v148, %v148
    %v301 = vpack.c.bf16 %v149, %v149
    %v302 = vpack.c.bf16 %v150, %v150
    %v303 = vpack.c.bf16 %v153, %v153
    %v304 = vpack.c.bf16 %v154, %v154
    %v305 = vpack.c.bf16 %v155, %v155
    %v306 = vpack.c.bf16 %v156, %v156
    %v307 = vpack.c.bf16 %v157, %v157
    %v308 = vpack.c.bf16 %v158, %v158
    %v309 = vpack.c.bf16 %v159, %v159
    %v310 = vpack.c.bf16 %v160, %v160
    %v311 = vpack.c.bf16 %v163, %v163
    %v312 = vpack.c.bf16 %v164, %v164
    %v313 = vpack.c.bf16 %v165, %v165
    %v314 = vpack.c.bf16 %v166, %v166
    %v315 = vpack.c.bf16 %v167, %v167
    %v316 = vpack.c.bf16 %v168, %v168
    %v317 = vpack.c.bf16 %v169, %v169
    %v318 = vpack.c.bf16 %v170, %v170
    %v319 = vpack.c.bf16 %v173, %v173
    %v320 = vpack.c.bf16 %v174, %v174
    %v321 = vpack.c.bf16 %v175, %v175
    %v322 = vpack.c.bf16 %v176, %v176
    %v323 = vpack.c.bf16 %v177, %v177
    %v324 = vpack.c.bf16 %v178, %v178
    %v325 = vpack.c.bf16 %v179, %v179
    %v326 = vpack.c.bf16 %v180, %v180
    %v327 = vpack.c.bf16 %v183, %v183
    %v328 = vpack.c.bf16 %v184, %v184
    %v329 = vpack.c.bf16 %v185, %v185
    %v330 = vpack.c.bf16 %v186, %v186
    %v331 = vpack.c.bf16 %v187, %v187
    %v332 = vpack.c.bf16 %v188, %v188
    %v333 = vpack.c.bf16 %v189, %v189
    %v334 = vpack.c.bf16 %v190, %v190
    %v335 = vld [vmem:[#allocation2] sm:$0xf]
    %v336 = vld [vmem:[#allocation2 + $0x4] sm:$0xf]
    %v337 = vld [vmem:[#allocation2 + $0x8] sm:$0xf]
    %v338 = vld [vmem:[#allocation2 + $0xc] sm:$0xf]
    %v339 = vld [vmem:[#allocation2 + $0x10] sm:$0xf]
    %v340 = vld [vmem:[#allocation2 + $0x14] sm:$0xf]
    %v341 = vld [vmem:[#allocation2 + $0x18] sm:$0xf]
    %v342 = vld [vmem:[#allocation2 + $0x1c] sm:$0xf]
    %v343 = vld [vmem:[#allocation2 + $0x20] sm:$0xf]
    %v344 = vld [vmem:[#allocation2 + $0x24] sm:$0xf]
    %v345 = vld [vmem:[#allocation2 + $0x28] sm:$0xf]
    %v346 = vld [vmem:[#allocation2 + $0x2c] sm:$0xf]
    %v347 = vld [vmem:[#allocation2 + $0x30] sm:$0xf]
    %v348 = vld [vmem:[#allocation2 + $0x34] sm:$0xf]
    %v349 = vld [vmem:[#allocation2 + $0x38] sm:$0xf]
    %v350 = vld [vmem:[#allocation2 + $0x3c] sm:$0xf]
    %v351 = vld [vmem:[#allocation2 + $0x40] sm:$0xf]
    %v352 = vld [vmem:[#allocation2 + $0x44] sm:$0xf]
    %v353 = vld [vmem:[#allocation2 + $0x48] sm:$0xf]
    %v354 = vld [vmem:[#allocation2 + $0x4c] sm:$0xf]
    %v355 = vld [vmem:[#allocation2 + $0x50] sm:$0xf]
    %v356 = vld [vmem:[#allocation2 + $0x54] sm:$0xf]
    %v357 = vld [vmem:[#allocation2 + $0x58] sm:$0xf]
    %v358 = vld [vmem:[#allocation2 + $0x5c] sm:$0xf]
    %v359 = vld [vmem:[#allocation2 + $0x60] sm:$0xf]
    %v360 = vld [vmem:[#allocation2 + $0x64] sm:$0xf]
    %v361 = vld [vmem:[#allocation2 + $0x68] sm:$0xf]
    %v362 = vld [vmem:[#allocation2 + $0x6c] sm:$0xf]
    %v363 = vld [vmem:[#allocation2 + $0x70] sm:$0xf]
    %v364 = vld [vmem:[#allocation2 + $0x74] sm:$0xf]
    %v365 = vld [vmem:[#allocation2 + $0x78] sm:$0xf]
    %v366 = vld [vmem:[#allocation2 + $0x7c] sm:$0xf]
    %v367 = vld [vmem:[#allocation2 + $0x80] sm:$0xf]
    %v368 = vld [vmem:[#allocation2 + $0x84] sm:$0xf]
    %v369 = vld [vmem:[#allocation2 + $0x88] sm:$0xf]
    %v370 = vld [vmem:[#allocation2 + $0x8c] sm:$0xf]
    %v371 = vld [vmem:[#allocation2 + $0x90] sm:$0xf]
    %v372 = vld [vmem:[#allocation2 + $0x94] sm:$0xf]
    %v373 = vld [vmem:[#allocation2 + $0x98] sm:$0xf]
    %v374 = vld [vmem:[#allocation2 + $0x9c] sm:$0xf]
    %v375 = vld [vmem:[#allocation2 + $0xa0] sm:$0xf]
    %v376 = vld [vmem:[#allocation2 + $0xa4] sm:$0xf]
    %v377 = vld [vmem:[#allocation2 + $0xa8] sm:$0xf]
    %v378 = vld [vmem:[#allocation2 + $0xac] sm:$0xf]
    %v379 = vld [vmem:[#allocation2 + $0xb0] sm:$0xf]
    %v380 = vld [vmem:[#allocation2 + $0xb4] sm:$0xf]
    %v381 = vld [vmem:[#allocation2 + $0xb8] sm:$0xf]
    %v382 = vld [vmem:[#allocation2 + $0xbc] sm:$0xf]
    %v383 = vld [vmem:[#allocation2 + $0xc0] sm:$0xf]
    %v384 = vld [vmem:[#allocation2 + $0xc4] sm:$0xf]
    %v385 = vld [vmem:[#allocation2 + $0xc8] sm:$0xf]
    %v386 = vld [vmem:[#allocation2 + $0xcc] sm:$0xf]
    %v387 = vld [vmem:[#allocation2 + $0xd0] sm:$0xf]
    %v388 = vld [vmem:[#allocation2 + $0xd4] sm:$0xf]
    %v389 = vld [vmem:[#allocation2 + $0xd8] sm:$0xf]
    %v390 = vld [vmem:[#allocation2 + $0xdc] sm:$0xf]
    %v391 = vld [vmem:[#allocation2 + $0xe0] sm:$0xf]
    %v392 = vld [vmem:[#allocation2 + $0xe4] sm:$0xf]
    %v393 = vld [vmem:[#allocation2 + $0xe8] sm:$0xf]
    %v394 = vld [vmem:[#allocation2 + $0xec] sm:$0xf]
    %v395 = vld [vmem:[#allocation2 + $0xf0] sm:$0xf]
    %v396 = vld [vmem:[#allocation2 + $0xf4] sm:$0xf]
    %v397 = vld [vmem:[#allocation2 + $0xf8] sm:$0xf]
    %v398 = vld [vmem:[#allocation2 + $0xfc] sm:$0xf]
    %v399 = vld [vmem:[#allocation2 + $0x100] sm:$0xf]
    %v400 = vld [vmem:[#allocation2 + $0x104] sm:$0xf]
    %v401 = vld [vmem:[#allocation2 + $0x108] sm:$0xf]
    %v402 = vld [vmem:[#allocation2 + $0x10c] sm:$0xf]
    %v403 = vld [vmem:[#allocation2 + $0x110] sm:$0xf]
    %v404 = vld [vmem:[#allocation2 + $0x114] sm:$0xf]
    %v405 = vld [vmem:[#allocation2 + $0x118] sm:$0xf]
    %v406 = vld [vmem:[#allocation2 + $0x11c] sm:$0xf]
    %v407 = vld [vmem:[#allocation2 + $0x120] sm:$0xf]
    %v408 = vld [vmem:[#allocation2 + $0x124] sm:$0xf]
    %v409 = vld [vmem:[#allocation2 + $0x128] sm:$0xf]
    %v410 = vld [vmem:[#allocation2 + $0x12c] sm:$0xf]
    %v411 = vld [vmem:[#allocation2 + $0x130] sm:$0xf]
    %v412 = vld [vmem:[#allocation2 + $0x134] sm:$0xf]
    %v413 = vld [vmem:[#allocation2 + $0x138] sm:$0xf]
    %v414 = vld [vmem:[#allocation2 + $0x13c] sm:$0xf]
    %v415 = vld [vmem:[#allocation2 + $0x140] sm:$0xf]
    %v416 = vld [vmem:[#allocation2 + $0x144] sm:$0xf]
    %v417 = vld [vmem:[#allocation2 + $0x148] sm:$0xf]
    %v418 = vld [vmem:[#allocation2 + $0x14c] sm:$0xf]
    %v419 = vld [vmem:[#allocation2 + $0x150] sm:$0xf]
    %v420 = vld [vmem:[#allocation2 + $0x154] sm:$0xf]
    %v421 = vld [vmem:[#allocation2 + $0x158] sm:$0xf]
    %v422 = vld [vmem:[#allocation2 + $0x15c] sm:$0xf]
    %v423 = vld [vmem:[#allocation2 + $0x160] sm:$0xf]
    %v424 = vld [vmem:[#allocation2 + $0x164] sm:$0xf]
    %v425 = vld [vmem:[#allocation2 + $0x168] sm:$0xf]
    %v426 = vld [vmem:[#allocation2 + $0x16c] sm:$0xf]
    %v427 = vld [vmem:[#allocation2 + $0x170] sm:$0xf]
    %v428 = vld [vmem:[#allocation2 + $0x174] sm:$0xf]
    %v429 = vld [vmem:[#allocation2 + $0x178] sm:$0xf]
    %v430 = vld [vmem:[#allocation2 + $0x17c] sm:$0xf]
    %v431 = vld [vmem:[#allocation2 + $0x180] sm:$0xf]
    %v432 = vld [vmem:[#allocation2 + $0x184] sm:$0xf]
    %v433 = vld [vmem:[#allocation2 + $0x188] sm:$0xf]
    %v434 = vld [vmem:[#allocation2 + $0x18c] sm:$0xf]
    %v435 = vld [vmem:[#allocation2 + $0x190] sm:$0xf]
    %v436 = vld [vmem:[#allocation2 + $0x194] sm:$0xf]
    %v437 = vld [vmem:[#allocation2 + $0x198] sm:$0xf]
    %v438 = vld [vmem:[#allocation2 + $0x19c] sm:$0xf]
    %v439 = vld [vmem:[#allocation2 + $0x1a0] sm:$0xf]
    %v440 = vld [vmem:[#allocation2 + $0x1a4] sm:$0xf]
    %v441 = vld [vmem:[#allocation2 + $0x1a8] sm:$0xf]
    %v442 = vld [vmem:[#allocation2 + $0x1ac] sm:$0xf]
    %v443 = vld [vmem:[#allocation2 + $0x1b0] sm:$0xf]
    %v444 = vld [vmem:[#allocation2 + $0x1b4] sm:$0xf]
    %v445 = vld [vmem:[#allocation2 + $0x1b8] sm:$0xf]
    %v446 = vld [vmem:[#allocation2 + $0x1bc] sm:$0xf]
    %v447 = vld [vmem:[#allocation2 + $0x1c0] sm:$0xf]
    %v448 = vld [vmem:[#allocation2 + $0x1c4] sm:$0xf]
    %v449 = vld [vmem:[#allocation2 + $0x1c8] sm:$0xf]
    %v450 = vld [vmem:[#allocation2 + $0x1cc] sm:$0xf]
    %v451 = vld [vmem:[#allocation2 + $0x1d0] sm:$0xf]
    %v452 = vld [vmem:[#allocation2 + $0x1d4] sm:$0xf]
    %v453 = vld [vmem:[#allocation2 + $0x1d8] sm:$0xf]
    %v454 = vld [vmem:[#allocation2 + $0x1dc] sm:$0xf]
    %v455 = vld [vmem:[#allocation2 + $0x1e0] sm:$0xf]
    %v456 = vld [vmem:[#allocation2 + $0x1e4] sm:$0xf]
    %v457 = vld [vmem:[#allocation2 + $0x1e8] sm:$0xf]
    %v458 = vld [vmem:[#allocation2 + $0x1ec] sm:$0xf]
    %v459 = vld [vmem:[#allocation2 + $0x1f0] sm:$0xf]
    %v460 = vld [vmem:[#allocation2 + $0x1f4] sm:$0xf]
    %v461 = vld [vmem:[#allocation2 + $0x1f8] sm:$0xf]
    %v462 = vld [vmem:[#allocation2 + $0x1fc] sm:$0xf]
    %v463 = vld [vmem:[#allocation2 + $0x200] sm:$0xf]
    %v464 = vld [vmem:[#allocation2 + $0x204] sm:$0xf]
    %v465 = vld [vmem:[#allocation2 + $0x208] sm:$0xf]
    %v466 = vld [vmem:[#allocation2 + $0x20c] sm:$0xf]
    %v467 = vld [vmem:[#allocation2 + $0x210] sm:$0xf]
    %v468 = vld [vmem:[#allocation2 + $0x214] sm:$0xf]
    %v469 = vld [vmem:[#allocation2 + $0x218] sm:$0xf]
    %v470 = vld [vmem:[#allocation2 + $0x21c] sm:$0xf]
    %v471 = vld [vmem:[#allocation2 + $0x220] sm:$0xf]
    %v472 = vld [vmem:[#allocation2 + $0x224] sm:$0xf]
    %v473 = vld [vmem:[#allocation2 + $0x228] sm:$0xf]
    %v474 = vld [vmem:[#allocation2 + $0x22c] sm:$0xf]
    %v475 = vld [vmem:[#allocation2 + $0x230] sm:$0xf]
    %v476 = vld [vmem:[#allocation2 + $0x234] sm:$0xf]
    %v477 = vld [vmem:[#allocation2 + $0x238] sm:$0xf]
    %v478 = vld [vmem:[#allocation2 + $0x23c] sm:$0xf]
    %v479 = vld [vmem:[#allocation2 + $0x240] sm:$0xf]
    %v480 = vld [vmem:[#allocation2 + $0x244] sm:$0xf]
    %v481 = vld [vmem:[#allocation2 + $0x248] sm:$0xf]
    %v482 = vld [vmem:[#allocation2 + $0x24c] sm:$0xf]
    %v483 = vld [vmem:[#allocation2 + $0x250] sm:$0xf]
    %v484 = vld [vmem:[#allocation2 + $0x254] sm:$0xf]
    %v485 = vld [vmem:[#allocation2 + $0x258] sm:$0xf]
    %v486 = vld [vmem:[#allocation2 + $0x25c] sm:$0xf]
    %v487 = vld [vmem:[#allocation2 + $0x260] sm:$0xf]
    %v488 = vld [vmem:[#allocation2 + $0x264] sm:$0xf]
    %v489 = vld [vmem:[#allocation2 + $0x268] sm:$0xf]
    %v490 = vld [vmem:[#allocation2 + $0x26c] sm:$0xf]
    %v491 = vld [vmem:[#allocation2 + $0x270] sm:$0xf]
    %v492 = vld [vmem:[#allocation2 + $0x274] sm:$0xf]
    %v493 = vld [vmem:[#allocation2 + $0x278] sm:$0xf]
    %v494 = vld [vmem:[#allocation2 + $0x27c] sm:$0xf]
    %v495 = vld [vmem:[#allocation2 + $0x280] sm:$0xf]
    %v496 = vld [vmem:[#allocation2 + $0x284] sm:$0xf]
    %v497 = vld [vmem:[#allocation2 + $0x288] sm:$0xf]
    %v498 = vld [vmem:[#allocation2 + $0x28c] sm:$0xf]
    %v499 = vld [vmem:[#allocation2 + $0x290] sm:$0xf]
    %v500 = vld [vmem:[#allocation2 + $0x294] sm:$0xf]
    %v501 = vld [vmem:[#allocation2 + $0x298] sm:$0xf]
    %v502 = vld [vmem:[#allocation2 + $0x29c] sm:$0xf]
    %v503 = vld [vmem:[#allocation2 + $0x2a0] sm:$0xf]
    %v504 = vld [vmem:[#allocation2 + $0x2a4] sm:$0xf]
    %v505 = vld [vmem:[#allocation2 + $0x2a8] sm:$0xf]
    %v506 = vld [vmem:[#allocation2 + $0x2ac] sm:$0xf]
    %v507 = vld [vmem:[#allocation2 + $0x2b0] sm:$0xf]
    %v508 = vld [vmem:[#allocation2 + $0x2b4] sm:$0xf]
    %v509 = vld [vmem:[#allocation2 + $0x2b8] sm:$0xf]
    %v510 = vld [vmem:[#allocation2 + $0x2bc] sm:$0xf]
    %v511 = vld [vmem:[#allocation2 + $0x2c0] sm:$0xf]
    %v512 = vld [vmem:[#allocation2 + $0x2c4] sm:$0xf]
    %v513 = vld [vmem:[#allocation2 + $0x2c8] sm:$0xf]
    %v514 = vld [vmem:[#allocation2 + $0x2cc] sm:$0xf]
    %v515 = vld [vmem:[#allocation2 + $0x2d0] sm:$0xf]
    %v516 = vld [vmem:[#allocation2 + $0x2d4] sm:$0xf]
    %v517 = vld [vmem:[#allocation2 + $0x2d8] sm:$0xf]
    %v518 = vld [vmem:[#allocation2 + $0x2dc] sm:$0xf]
    %v519 = vld [vmem:[#allocation2 + $0x2e0] sm:$0xf]
    %v520 = vld [vmem:[#allocation2 + $0x2e4] sm:$0xf]
    %v521 = vld [vmem:[#allocation2 + $0x2e8] sm:$0xf]
    %v522 = vld [vmem:[#allocation2 + $0x2ec] sm:$0xf]
    %v523 = vld [vmem:[#allocation2 + $0x2f0] sm:$0xf]
    %v524 = vld [vmem:[#allocation2 + $0x2f4] sm:$0xf]
    %v525 = vld [vmem:[#allocation2 + $0x2f8] sm:$0xf]
    %v526 = vld [vmem:[#allocation2 + $0x2fc] sm:$0xf]
    %v527 = vld [vmem:[#allocation2 + $0x300] sm:$0xf]
    %v528 = vld [vmem:[#allocation2 + $0x304] sm:$0xf]
    %v529 = vld [vmem:[#allocation2 + $0x308] sm:$0xf]
    %v530 = vld [vmem:[#allocation2 + $0x30c] sm:$0xf]
    %v531 = vld [vmem:[#allocation2 + $0x310] sm:$0xf]
    %v532 = vld [vmem:[#allocation2 + $0x314] sm:$0xf]
    %v533 = vld [vmem:[#allocation2 + $0x318] sm:$0xf]
    %v534 = vld [vmem:[#allocation2 + $0x31c] sm:$0xf]
    %v535 = vld [vmem:[#allocation2 + $0x320] sm:$0xf]
    %v536 = vld [vmem:[#allocation2 + $0x324] sm:$0xf]
    %v537 = vld [vmem:[#allocation2 + $0x328] sm:$0xf]
    %v538 = vld [vmem:[#allocation2 + $0x32c] sm:$0xf]
    %v539 = vld [vmem:[#allocation2 + $0x330] sm:$0xf]
    %v540 = vld [vmem:[#allocation2 + $0x334] sm:$0xf]
    %v541 = vld [vmem:[#allocation2 + $0x338] sm:$0xf]
    %v542 = vld [vmem:[#allocation2 + $0x33c] sm:$0xf]
    %v543 = vld [vmem:[#allocation2 + $0x340] sm:$0xf]
    %v544 = vld [vmem:[#allocation2 + $0x344] sm:$0xf]
    %v545 = vld [vmem:[#allocation2 + $0x348] sm:$0xf]
    %v546 = vld [vmem:[#allocation2 + $0x34c] sm:$0xf]
    %v547 = vld [vmem:[#allocation2 + $0x350] sm:$0xf]
    %v548 = vld [vmem:[#allocation2 + $0x354] sm:$0xf]
    %v549 = vld [vmem:[#allocation2 + $0x358] sm:$0xf]
    %v550 = vld [vmem:[#allocation2 + $0x35c] sm:$0xf]
    %v551 = vld [vmem:[#allocation2 + $0x360] sm:$0xf]
    %v552 = vld [vmem:[#allocation2 + $0x364] sm:$0xf]
    %v553 = vld [vmem:[#allocation2 + $0x368] sm:$0xf]
    %v554 = vld [vmem:[#allocation2 + $0x36c] sm:$0xf]
    %v555 = vld [vmem:[#allocation2 + $0x370] sm:$0xf]
    %v556 = vld [vmem:[#allocation2 + $0x374] sm:$0xf]
    %v557 = vld [vmem:[#allocation2 + $0x378] sm:$0xf]
    %v558 = vld [vmem:[#allocation2 + $0x37c] sm:$0xf]
    %v559 = vld [vmem:[#allocation2 + $0x380] sm:$0xf]
    %v560 = vld [vmem:[#allocation2 + $0x384] sm:$0xf]
    %v561 = vld [vmem:[#allocation2 + $0x388] sm:$0xf]
    %v562 = vld [vmem:[#allocation2 + $0x38c] sm:$0xf]
    %v563 = vld [vmem:[#allocation2 + $0x390] sm:$0xf]
    %v564 = vld [vmem:[#allocation2 + $0x394] sm:$0xf]
    %v565 = vld [vmem:[#allocation2 + $0x398] sm:$0xf]
    %v566 = vld [vmem:[#allocation2 + $0x39c] sm:$0xf]
    %v567 = vld [vmem:[#allocation2 + $0x3a0] sm:$0xf]
    %v568 = vld [vmem:[#allocation2 + $0x3a4] sm:$0xf]
    %v569 = vld [vmem:[#allocation2 + $0x3a8] sm:$0xf]
    %v570 = vld [vmem:[#allocation2 + $0x3ac] sm:$0xf]
    %v571 = vld [vmem:[#allocation2 + $0x3b0] sm:$0xf]
    %v572 = vld [vmem:[#allocation2 + $0x3b4] sm:$0xf]
    %v573 = vld [vmem:[#allocation2 + $0x3b8] sm:$0xf]
    %v574 = vld [vmem:[#allocation2 + $0x3bc] sm:$0xf]
    %v575 = vld [vmem:[#allocation2 + $0x3c0] sm:$0xf]
    %v576 = vld [vmem:[#allocation2 + $0x3c4] sm:$0xf]
    %v577 = vld [vmem:[#allocation2 + $0x3c8] sm:$0xf]
    %v578 = vld [vmem:[#allocation2 + $0x3cc] sm:$0xf]
    %v579 = vld [vmem:[#allocation2 + $0x3d0] sm:$0xf]
    %v580 = vld [vmem:[#allocation2 + $0x3d4] sm:$0xf]
    %v581 = vld [vmem:[#allocation2 + $0x3d8] sm:$0xf]
    %v582 = vld [vmem:[#allocation2 + $0x3dc] sm:$0xf]
    %v583 = vld [vmem:[#allocation2 + $0x3e0] sm:$0xf]
    %v584 = vld [vmem:[#allocation2 + $0x3e4] sm:$0xf]
    %v585 = vld [vmem:[#allocation2 + $0x3e8] sm:$0xf]
    %v586 = vld [vmem:[#allocation2 + $0x3ec] sm:$0xf]
    %v587 = vld [vmem:[#allocation2 + $0x3f0] sm:$0xf]
    %v588 = vld [vmem:[#allocation2 + $0x3f4] sm:$0xf]
    %v589 = vld [vmem:[#allocation2 + $0x3f8] sm:$0xf]
    %v590 = vld [vmem:[#allocation2 + $0x3fc] sm:$0xf]
    %v591 = vld [vmem:[#allocation2 + $0x400] sm:$0xf]
    %v592 = vld [vmem:[#allocation2 + $0x404] sm:$0xf]
    %v593 = vld [vmem:[#allocation2 + $0x408] sm:$0xf]
    %v594 = vld [vmem:[#allocation2 + $0x40c] sm:$0xf]
    %v595 = vld [vmem:[#allocation2 + $0x410] sm:$0xf]
    %v596 = vld [vmem:[#allocation2 + $0x414] sm:$0xf]
    %v597 = vld [vmem:[#allocation2 + $0x418] sm:$0xf]
    %v598 = vld [vmem:[#allocation2 + $0x41c] sm:$0xf]
    %v599 = vld [vmem:[#allocation2 + $0x420] sm:$0xf]
    %v600 = vld [vmem:[#allocation2 + $0x424] sm:$0xf]
    %v601 = vld [vmem:[#allocation2 + $0x428] sm:$0xf]
    %v602 = vld [vmem:[#allocation2 + $0x42c] sm:$0xf]
    %v603 = vld [vmem:[#allocation2 + $0x430] sm:$0xf]
    %v604 = vld [vmem:[#allocation2 + $0x434] sm:$0xf]
    %v605 = vld [vmem:[#allocation2 + $0x438] sm:$0xf]
    %v606 = vld [vmem:[#allocation2 + $0x43c] sm:$0xf]
    %v607 = vld [vmem:[#allocation2 + $0x440] sm:$0xf]
    %v608 = vld [vmem:[#allocation2 + $0x444] sm:$0xf]
    %v609 = vld [vmem:[#allocation2 + $0x448] sm:$0xf]
    %v610 = vld [vmem:[#allocation2 + $0x44c] sm:$0xf]
    %v611 = vld [vmem:[#allocation2 + $0x450] sm:$0xf]
    %v612 = vld [vmem:[#allocation2 + $0x454] sm:$0xf]
    %v613 = vld [vmem:[#allocation2 + $0x458] sm:$0xf]
    %v614 = vld [vmem:[#allocation2 + $0x45c] sm:$0xf]
    %v615 = vld [vmem:[#allocation2 + $0x460] sm:$0xf]
    %v616 = vld [vmem:[#allocation2 + $0x464] sm:$0xf]
    %v617 = vld [vmem:[#allocation2 + $0x468] sm:$0xf]
    %v618 = vld [vmem:[#allocation2 + $0x46c] sm:$0xf]
    %v619 = vld [vmem:[#allocation2 + $0x470] sm:$0xf]
    %v620 = vld [vmem:[#allocation2 + $0x474] sm:$0xf]
    %v621 = vld [vmem:[#allocation2 + $0x478] sm:$0xf]
    %v622 = vld [vmem:[#allocation2 + $0x47c] sm:$0xf]
    %v623 = vld [vmem:[#allocation2 + $0x480] sm:$0xf]
    %v624 = vld [vmem:[#allocation2 + $0x484] sm:$0xf]
    %v625 = vld [vmem:[#allocation2 + $0x488] sm:$0xf]
    %v626 = vld [vmem:[#allocation2 + $0x48c] sm:$0xf]
    %v627 = vld [vmem:[#allocation2 + $0x490] sm:$0xf]
    %v628 = vld [vmem:[#allocation2 + $0x494] sm:$0xf]
    %v629 = vld [vmem:[#allocation2 + $0x498] sm:$0xf]
    %v630 = vld [vmem:[#allocation2 + $0x49c] sm:$0xf]
    %v631 = vld [vmem:[#allocation2 + $0x4a0] sm:$0xf]
    %v632 = vld [vmem:[#allocation2 + $0x4a4] sm:$0xf]
    %v633 = vld [vmem:[#allocation2 + $0x4a8] sm:$0xf]
    %v634 = vld [vmem:[#allocation2 + $0x4ac] sm:$0xf]
    %v635 = vld [vmem:[#allocation2 + $0x4b0] sm:$0xf]
    %v636 = vld [vmem:[#allocation2 + $0x4b4] sm:$0xf]
    %v637 = vld [vmem:[#allocation2 + $0x4b8] sm:$0xf]
    %v638 = vld [vmem:[#allocation2 + $0x4bc] sm:$0xf]
    %v639 = vld [vmem:[#allocation2 + $0x4c0] sm:$0xf]
    %v640 = vld [vmem:[#allocation2 + $0x4c4] sm:$0xf]
    %v641 = vld [vmem:[#allocation2 + $0x4c8] sm:$0xf]
    %v642 = vld [vmem:[#allocation2 + $0x4cc] sm:$0xf]
    %v643 = vld [vmem:[#allocation2 + $0x4d0] sm:$0xf]
    %v644 = vld [vmem:[#allocation2 + $0x4d4] sm:$0xf]
    %v645 = vld [vmem:[#allocation2 + $0x4d8] sm:$0xf]
    %v646 = vld [vmem:[#allocation2 + $0x4dc] sm:$0xf]
    %v647 = vld [vmem:[#allocation2 + $0x4e0] sm:$0xf]
    %v648 = vld [vmem:[#allocation2 + $0x4e4] sm:$0xf]
    %v649 = vld [vmem:[#allocation2 + $0x4e8] sm:$0xf]
    %v650 = vld [vmem:[#allocation2 + $0x4ec] sm:$0xf]
    %v651 = vld [vmem:[#allocation2 + $0x4f0] sm:$0xf]
    %v652 = vld [vmem:[#allocation2 + $0x4f4] sm:$0xf]
    %v653 = vld [vmem:[#allocation2 + $0x4f8] sm:$0xf]
    %v654 = vld [vmem:[#allocation2 + $0x4fc] sm:$0xf]
    %v655 = vld [vmem:[#allocation2 + $0x500] sm:$0xf]
    %v656 = vld [vmem:[#allocation2 + $0x504] sm:$0xf]
    %v657 = vld [vmem:[#allocation2 + $0x508] sm:$0xf]
    %v658 = vld [vmem:[#allocation2 + $0x50c] sm:$0xf]
    %v659 = vld [vmem:[#allocation2 + $0x510] sm:$0xf]
    %v660 = vld [vmem:[#allocation2 + $0x514] sm:$0xf]
    %v661 = vld [vmem:[#allocation2 + $0x518] sm:$0xf]
    %v662 = vld [vmem:[#allocation2 + $0x51c] sm:$0xf]
    %v663 = vld [vmem:[#allocation2 + $0x520] sm:$0xf]
    %v664 = vld [vmem:[#allocation2 + $0x524] sm:$0xf]
    %v665 = vld [vmem:[#allocation2 + $0x528] sm:$0xf]
    %v666 = vld [vmem:[#allocation2 + $0x52c] sm:$0xf]
    %v667 = vld [vmem:[#allocation2 + $0x530] sm:$0xf]
    %v668 = vld [vmem:[#allocation2 + $0x534] sm:$0xf]
    %v669 = vld [vmem:[#allocation2 + $0x538] sm:$0xf]
    %v670 = vld [vmem:[#allocation2 + $0x53c] sm:$0xf]
    %v671 = vld [vmem:[#allocation2 + $0x540] sm:$0xf]
    %v672 = vld [vmem:[#allocation2 + $0x544] sm:$0xf]
    %v673 = vld [vmem:[#allocation2 + $0x548] sm:$0xf]
    %v674 = vld [vmem:[#allocation2 + $0x54c] sm:$0xf]
    %v675 = vld [vmem:[#allocation2 + $0x550] sm:$0xf]
    %v676 = vld [vmem:[#allocation2 + $0x554] sm:$0xf]
    %v677 = vld [vmem:[#allocation2 + $0x558] sm:$0xf]
    %v678 = vld [vmem:[#allocation2 + $0x55c] sm:$0xf]
    %v679 = vld [vmem:[#allocation2 + $0x560] sm:$0xf]
    %v680 = vld [vmem:[#allocation2 + $0x564] sm:$0xf]
    %v681 = vld [vmem:[#allocation2 + $0x568] sm:$0xf]
    %v682 = vld [vmem:[#allocation2 + $0x56c] sm:$0xf]
    %v683 = vld [vmem:[#allocation2 + $0x570] sm:$0xf]
    %v684 = vld [vmem:[#allocation2 + $0x574] sm:$0xf]
    %v685 = vld [vmem:[#allocation2 + $0x578] sm:$0xf]
    %v686 = vld [vmem:[#allocation2 + $0x57c] sm:$0xf]
    %v687 = vld [vmem:[#allocation2 + $0x580] sm:$0xf]
    %v688 = vld [vmem:[#allocation2 + $0x584] sm:$0xf]
    %v689 = vld [vmem:[#allocation2 + $0x588] sm:$0xf]
    %v690 = vld [vmem:[#allocation2 + $0x58c] sm:$0xf]
    %v691 = vld [vmem:[#allocation2 + $0x590] sm:$0xf]
    %v692 = vld [vmem:[#allocation2 + $0x594] sm:$0xf]
    %v693 = vld [vmem:[#allocation2 + $0x598] sm:$0xf]
    %v694 = vld [vmem:[#allocation2 + $0x59c] sm:$0xf]
    %v695 = vld [vmem:[#allocation2 + $0x5a0] sm:$0xf]
    %v696 = vld [vmem:[#allocation2 + $0x5a4] sm:$0xf]
    %v697 = vld [vmem:[#allocation2 + $0x5a8] sm:$0xf]
    %v698 = vld [vmem:[#allocation2 + $0x5ac] sm:$0xf]
    %v699 = vld [vmem:[#allocation2 + $0x5b0] sm:$0xf]
    %v700 = vld [vmem:[#allocation2 + $0x5b4] sm:$0xf]
    %v701 = vld [vmem:[#allocation2 + $0x5b8] sm:$0xf]
    %v702 = vld [vmem:[#allocation2 + $0x5bc] sm:$0xf]
    %v703 = vld [vmem:[#allocation2 + $0x5c0] sm:$0xf]
    %v704 = vld [vmem:[#allocation2 + $0x5c4] sm:$0xf]
    %v705 = vld [vmem:[#allocation2 + $0x5c8] sm:$0xf]
    %v706 = vld [vmem:[#allocation2 + $0x5cc] sm:$0xf]
    %v707 = vld [vmem:[#allocation2 + $0x5d0] sm:$0xf]
    %v708 = vld [vmem:[#allocation2 + $0x5d4] sm:$0xf]
    %v709 = vld [vmem:[#allocation2 + $0x5d8] sm:$0xf]
    %v710 = vld [vmem:[#allocation2 + $0x5dc] sm:$0xf]
    %v711 = vld [vmem:[#allocation2 + $0x5e0] sm:$0xf]
    %v712 = vld [vmem:[#allocation2 + $0x5e4] sm:$0xf]
    %v713 = vld [vmem:[#allocation2 + $0x5e8] sm:$0xf]
    %v714 = vld [vmem:[#allocation2 + $0x5ec] sm:$0xf]
    %v715 = vld [vmem:[#allocation2 + $0x5f0] sm:$0xf]
    %v716 = vld [vmem:[#allocation2 + $0x5f4] sm:$0xf]
    %v717 = vld [vmem:[#allocation2 + $0x5f8] sm:$0xf]
    %v718 = vld [vmem:[#allocation2 + $0x5fc] sm:$0xf]
    %v719 = vld [vmem:[#allocation2 + $0x600] sm:$0xf]
    %v720 = vld [vmem:[#allocation2 + $0x604] sm:$0xf]
    %v721 = vld [vmem:[#allocation2 + $0x608] sm:$0xf]
    %v722 = vld [vmem:[#allocation2 + $0x60c] sm:$0xf]
    %v723 = vld [vmem:[#allocation2 + $0x610] sm:$0xf]
    %v724 = vld [vmem:[#allocation2 + $0x614] sm:$0xf]
    %v725 = vld [vmem:[#allocation2 + $0x618] sm:$0xf]
    %v726 = vld [vmem:[#allocation2 + $0x61c] sm:$0xf]
    %v727 = vld [vmem:[#allocation2 + $0x620] sm:$0xf]
    %v728 = vld [vmem:[#allocation2 + $0x624] sm:$0xf]
    %v729 = vld [vmem:[#allocation2 + $0x628] sm:$0xf]
    %v730 = vld [vmem:[#allocation2 + $0x62c] sm:$0xf]
    %v731 = vld [vmem:[#allocation2 + $0x630] sm:$0xf]
    %v732 = vld [vmem:[#allocation2 + $0x634] sm:$0xf]
    %v733 = vld [vmem:[#allocation2 + $0x638] sm:$0xf]
    %v734 = vld [vmem:[#allocation2 + $0x63c] sm:$0xf]
    %v735 = vld [vmem:[#allocation2 + $0x640] sm:$0xf]
    %v736 = vld [vmem:[#allocation2 + $0x644] sm:$0xf]
    %v737 = vld [vmem:[#allocation2 + $0x648] sm:$0xf]
    %v738 = vld [vmem:[#allocation2 + $0x64c] sm:$0xf]
    %v739 = vld [vmem:[#allocation2 + $0x650] sm:$0xf]
    %v740 = vld [vmem:[#allocation2 + $0x654] sm:$0xf]
    %v741 = vld [vmem:[#allocation2 + $0x658] sm:$0xf]
    %v742 = vld [vmem:[#allocation2 + $0x65c] sm:$0xf]
    %v743 = vld [vmem:[#allocation2 + $0x660] sm:$0xf]
    %v744 = vld [vmem:[#allocation2 + $0x664] sm:$0xf]
    %v745 = vld [vmem:[#allocation2 + $0x668] sm:$0xf]
    %v746 = vld [vmem:[#allocation2 + $0x66c] sm:$0xf]
    %v747 = vld [vmem:[#allocation2 + $0x670] sm:$0xf]
    %v748 = vld [vmem:[#allocation2 + $0x674] sm:$0xf]
    %v749 = vld [vmem:[#allocation2 + $0x678] sm:$0xf]
    %v750 = vld [vmem:[#allocation2 + $0x67c] sm:$0xf]
    %v751 = vld [vmem:[#allocation2 + $0x680] sm:$0xf]
    %v752 = vld [vmem:[#allocation2 + $0x684] sm:$0xf]
    %v753 = vld [vmem:[#allocation2 + $0x688] sm:$0xf]
    %v754 = vld [vmem:[#allocation2 + $0x68c] sm:$0xf]
    %v755 = vld [vmem:[#allocation2 + $0x690] sm:$0xf]
    %v756 = vld [vmem:[#allocation2 + $0x694] sm:$0xf]
    %v757 = vld [vmem:[#allocation2 + $0x698] sm:$0xf]
    %v758 = vld [vmem:[#allocation2 + $0x69c] sm:$0xf]
    %v759 = vld [vmem:[#allocation2 + $0x6a0] sm:$0xf]
    %v760 = vld [vmem:[#allocation2 + $0x6a4] sm:$0xf]
    %v761 = vld [vmem:[#allocation2 + $0x6a8] sm:$0xf]
    %v762 = vld [vmem:[#allocation2 + $0x6ac] sm:$0xf]
    %v763 = vld [vmem:[#allocation2 + $0x6b0] sm:$0xf]
    %v764 = vld [vmem:[#allocation2 + $0x6b4] sm:$0xf]
    %v765 = vld [vmem:[#allocation2 + $0x6b8] sm:$0xf]
    %v766 = vld [vmem:[#allocation2 + $0x6bc] sm:$0xf]
    %v767 = vld [vmem:[#allocation2 + $0x6c0] sm:$0xf]
    %v768 = vld [vmem:[#allocation2 + $0x6c4] sm:$0xf]
    %v769 = vld [vmem:[#allocation2 + $0x6c8] sm:$0xf]
    %v770 = vld [vmem:[#allocation2 + $0x6cc] sm:$0xf]
    %v771 = vld [vmem:[#allocation2 + $0x6d0] sm:$0xf]
    %v772 = vld [vmem:[#allocation2 + $0x6d4] sm:$0xf]
    %v773 = vld [vmem:[#allocation2 + $0x6d8] sm:$0xf]
    %v774 = vld [vmem:[#allocation2 + $0x6dc] sm:$0xf]
    %v775 = vld [vmem:[#allocation2 + $0x6e0] sm:$0xf]
    %v776 = vld [vmem:[#allocation2 + $0x6e4] sm:$0xf]
    %v777 = vld [vmem:[#allocation2 + $0x6e8] sm:$0xf]
    %v778 = vld [vmem:[#allocation2 + $0x6ec] sm:$0xf]
    %v779 = vld [vmem:[#allocation2 + $0x6f0] sm:$0xf]
    %v780 = vld [vmem:[#allocation2 + $0x6f4] sm:$0xf]
    %v781 = vld [vmem:[#allocation2 + $0x6f8] sm:$0xf]
    %v782 = vld [vmem:[#allocation2 + $0x6fc] sm:$0xf]
    %v783 = vld [vmem:[#allocation2 + $0x700] sm:$0xf]
    %v784 = vld [vmem:[#allocation2 + $0x704] sm:$0xf]
    %v785 = vld [vmem:[#allocation2 + $0x708] sm:$0xf]
    %v786 = vld [vmem:[#allocation2 + $0x70c] sm:$0xf]
    %v787 = vld [vmem:[#allocation2 + $0x710] sm:$0xf]
    %v788 = vld [vmem:[#allocation2 + $0x714] sm:$0xf]
    %v789 = vld [vmem:[#allocation2 + $0x718] sm:$0xf]
    %v790 = vld [vmem:[#allocation2 + $0x71c] sm:$0xf]
    %v791 = vld [vmem:[#allocation2 + $0x720] sm:$0xf]
    %v792 = vld [vmem:[#allocation2 + $0x724] sm:$0xf]
    %v793 = vld [vmem:[#allocation2 + $0x728] sm:$0xf]
    %v794 = vld [vmem:[#allocation2 + $0x72c] sm:$0xf]
    %v795 = vld [vmem:[#allocation2 + $0x730] sm:$0xf]
    %v796 = vld [vmem:[#allocation2 + $0x734] sm:$0xf]
    %v797 = vld [vmem:[#allocation2 + $0x738] sm:$0xf]
    %v798 = vld [vmem:[#allocation2 + $0x73c] sm:$0xf]
    %v799 = vld [vmem:[#allocation2 + $0x740] sm:$0xf]
    %v800 = vld [vmem:[#allocation2 + $0x744] sm:$0xf]
    %v801 = vld [vmem:[#allocation2 + $0x748] sm:$0xf]
    %v802 = vld [vmem:[#allocation2 + $0x74c] sm:$0xf]
    %v803 = vld [vmem:[#allocation2 + $0x750] sm:$0xf]
    %v804 = vld [vmem:[#allocation2 + $0x754] sm:$0xf]
    %v805 = vld [vmem:[#allocation2 + $0x758] sm:$0xf]
    %v806 = vld [vmem:[#allocation2 + $0x75c] sm:$0xf]
    %v807 = vld [vmem:[#allocation2 + $0x760] sm:$0xf]
    %v808 = vld [vmem:[#allocation2 + $0x764] sm:$0xf]
    %v809 = vld [vmem:[#allocation2 + $0x768] sm:$0xf]
    %v810 = vld [vmem:[#allocation2 + $0x76c] sm:$0xf]
    %v811 = vld [vmem:[#allocation2 + $0x770] sm:$0xf]
    %v812 = vld [vmem:[#allocation2 + $0x774] sm:$0xf]
    %v813 = vld [vmem:[#allocation2 + $0x778] sm:$0xf]
    %v814 = vld [vmem:[#allocation2 + $0x77c] sm:$0xf]
    %v815 = vld [vmem:[#allocation2 + $0x780] sm:$0xf]
    %v816 = vld [vmem:[#allocation2 + $0x784] sm:$0xf]
    %v817 = vld [vmem:[#allocation2 + $0x788] sm:$0xf]
    %v818 = vld [vmem:[#allocation2 + $0x78c] sm:$0xf]
    %v819 = vld [vmem:[#allocation2 + $0x790] sm:$0xf]
    %v820 = vld [vmem:[#allocation2 + $0x794] sm:$0xf]
    %v821 = vld [vmem:[#allocation2 + $0x798] sm:$0xf]
    %v822 = vld [vmem:[#allocation2 + $0x79c] sm:$0xf]
    %v823 = vld [vmem:[#allocation2 + $0x7a0] sm:$0xf]
    %v824 = vld [vmem:[#allocation2 + $0x7a4] sm:$0xf]
    %v825 = vld [vmem:[#allocation2 + $0x7a8] sm:$0xf]
    %v826 = vld [vmem:[#allocation2 + $0x7ac] sm:$0xf]
    %v827 = vld [vmem:[#allocation2 + $0x7b0] sm:$0xf]
    %v828 = vld [vmem:[#allocation2 + $0x7b4] sm:$0xf]
    %v829 = vld [vmem:[#allocation2 + $0x7b8] sm:$0xf]
    %v830 = vld [vmem:[#allocation2 + $0x7bc] sm:$0xf]
    %v831 = vld [vmem:[#allocation2 + $0x7c0] sm:$0xf]
    %v832 = vld [vmem:[#allocation2 + $0x7c4] sm:$0xf]
    %v833 = vld [vmem:[#allocation2 + $0x7c8] sm:$0xf]
    %v834 = vld [vmem:[#allocation2 + $0x7cc] sm:$0xf]
    %v835 = vld [vmem:[#allocation2 + $0x7d0] sm:$0xf]
    %v836 = vld [vmem:[#allocation2 + $0x7d4] sm:$0xf]
    %v837 = vld [vmem:[#allocation2 + $0x7d8] sm:$0xf]
    %v838 = vld [vmem:[#allocation2 + $0x7dc] sm:$0xf]
    %v839 = vld [vmem:[#allocation2 + $0x7e0] sm:$0xf]
    %v840 = vld [vmem:[#allocation2 + $0x7e4] sm:$0xf]
    %v841 = vld [vmem:[#allocation2 + $0x7e8] sm:$0xf]
    %v842 = vld [vmem:[#allocation2 + $0x7ec] sm:$0xf]
    %v843 = vld [vmem:[#allocation2 + $0x7f0] sm:$0xf]
    %v844 = vld [vmem:[#allocation2 + $0x7f4] sm:$0xf]
    %v845 = vld [vmem:[#allocation2 + $0x7f8] sm:$0xf]
    %v846 = vld [vmem:[#allocation2 + $0x7fc] sm:$0xf]
    %v847 = vld [vmem:[#allocation2 + $0x800] sm:$0xf]
    %v848 = vld [vmem:[#allocation2 + $0x804] sm:$0xf]
    %v849 = vld [vmem:[#allocation2 + $0x808] sm:$0xf]
    %v850 = vld [vmem:[#allocation2 + $0x80c] sm:$0xf]
    %v851 = vld [vmem:[#allocation2 + $0x810] sm:$0xf]
    %v852 = vld [vmem:[#allocation2 + $0x814] sm:$0xf]
    %v853 = vld [vmem:[#allocation2 + $0x818] sm:$0xf]
    %v854 = vld [vmem:[#allocation2 + $0x81c] sm:$0xf]
    %v855 = vld [vmem:[#allocation2 + $0x820] sm:$0xf]
    %v856 = vld [vmem:[#allocation2 + $0x824] sm:$0xf]
    %v857 = vld [vmem:[#allocation2 + $0x828] sm:$0xf]
    %v858 = vld [vmem:[#allocation2 + $0x82c] sm:$0xf]
    %v859 = vld [vmem:[#allocation2 + $0x830] sm:$0xf]
    %v860 = vld [vmem:[#allocation2 + $0x834] sm:$0xf]
    %v861 = vld [vmem:[#allocation2 + $0x838] sm:$0xf]
    %v862 = vld [vmem:[#allocation2 + $0x83c] sm:$0xf]
    %v863 = vld [vmem:[#allocation2 + $0x840] sm:$0xf]
    %v864 = vld [vmem:[#allocation2 + $0x844] sm:$0xf]
    %v865 = vld [vmem:[#allocation2 + $0x848] sm:$0xf]
    %v866 = vld [vmem:[#allocation2 + $0x84c] sm:$0xf]
    %v867 = vld [vmem:[#allocation2 + $0x850] sm:$0xf]
    %v868 = vld [vmem:[#allocation2 + $0x854] sm:$0xf]
    %v869 = vld [vmem:[#allocation2 + $0x858] sm:$0xf]
    %v870 = vld [vmem:[#allocation2 + $0x85c] sm:$0xf]
    %v871 = vld [vmem:[#allocation2 + $0x860] sm:$0xf]
    %v872 = vld [vmem:[#allocation2 + $0x864] sm:$0xf]
    %v873 = vld [vmem:[#allocation2 + $0x868] sm:$0xf]
    %v874 = vld [vmem:[#allocation2 + $0x86c] sm:$0xf]
    %v875 = vld [vmem:[#allocation2 + $0x870] sm:$0xf]
    %v876 = vld [vmem:[#allocation2 + $0x874] sm:$0xf]
    %v877 = vld [vmem:[#allocation2 + $0x878] sm:$0xf]
    %v878 = vld [vmem:[#allocation2 + $0x87c] sm:$0xf]
    %v879 = vld [vmem:[#allocation2 + $0x880] sm:$0xf]
    %v880 = vld [vmem:[#allocation2 + $0x884] sm:$0xf]
    %v881 = vld [vmem:[#allocation2 + $0x888] sm:$0xf]
    %v882 = vld [vmem:[#allocation2 + $0x88c] sm:$0xf]
    %v883 = vld [vmem:[#allocation2 + $0x890] sm:$0xf]
    %v884 = vld [vmem:[#allocation2 + $0x894] sm:$0xf]
    %v885 = vld [vmem:[#allocation2 + $0x898] sm:$0xf]
    %v886 = vld [vmem:[#allocation2 + $0x89c] sm:$0xf]
    %v887 = vld [vmem:[#allocation2 + $0x8a0] sm:$0xf]
    %v888 = vld [vmem:[#allocation2 + $0x8a4] sm:$0xf]
    %v889 = vld [vmem:[#allocation2 + $0x8a8] sm:$0xf]
    %v890 = vld [vmem:[#allocation2 + $0x8ac] sm:$0xf]
    %v891 = vld [vmem:[#allocation2 + $0x8b0] sm:$0xf]
    %v892 = vld [vmem:[#allocation2 + $0x8b4] sm:$0xf]
    %v893 = vld [vmem:[#allocation2 + $0x8b8] sm:$0xf]
    %v894 = vld [vmem:[#allocation2 + $0x8bc] sm:$0xf]
    %v895 = vld [vmem:[#allocation2 + $0x8c0] sm:$0xf]
    %v896 = vld [vmem:[#allocation2 + $0x8c4] sm:$0xf]
    %v897 = vld [vmem:[#allocation2 + $0x8c8] sm:$0xf]
    %v898 = vld [vmem:[#allocation2 + $0x8cc] sm:$0xf]
    %v899 = vld [vmem:[#allocation2 + $0x8d0] sm:$0xf]
    %v900 = vld [vmem:[#allocation2 + $0x8d4] sm:$0xf]
    %v901 = vld [vmem:[#allocation2 + $0x8d8] sm:$0xf]
    %v902 = vld [vmem:[#allocation2 + $0x8dc] sm:$0xf]
    %v903 = vld [vmem:[#allocation2 + $0x8e0] sm:$0xf]
    %v904 = vld [vmem:[#allocation2 + $0x8e4] sm:$0xf]
    %v905 = vld [vmem:[#allocation2 + $0x8e8] sm:$0xf]
    %v906 = vld [vmem:[#allocation2 + $0x8ec] sm:$0xf]
    %v907 = vld [vmem:[#allocation2 + $0x8f0] sm:$0xf]
    %v908 = vld [vmem:[#allocation2 + $0x8f4] sm:$0xf]
    %v909 = vld [vmem:[#allocation2 + $0x8f8] sm:$0xf]
    %v910 = vld [vmem:[#allocation2 + $0x8fc] sm:$0xf]
    %v911 = vld [vmem:[#allocation2 + $0x900] sm:$0xf]
    %v912 = vld [vmem:[#allocation2 + $0x904] sm:$0xf]
    %v913 = vld [vmem:[#allocation2 + $0x908] sm:$0xf]
    %v914 = vld [vmem:[#allocation2 + $0x90c] sm:$0xf]
    %v915 = vld [vmem:[#allocation2 + $0x910] sm:$0xf]
    %v916 = vld [vmem:[#allocation2 + $0x914] sm:$0xf]
    %v917 = vld [vmem:[#allocation2 + $0x918] sm:$0xf]
    %v918 = vld [vmem:[#allocation2 + $0x91c] sm:$0xf]
    %v919 = vld [vmem:[#allocation2 + $0x920] sm:$0xf]
    %v920 = vld [vmem:[#allocation2 + $0x924] sm:$0xf]
    %v921 = vld [vmem:[#allocation2 + $0x928] sm:$0xf]
    %v922 = vld [vmem:[#allocation2 + $0x92c] sm:$0xf]
    %v923 = vld [vmem:[#allocation2 + $0x930] sm:$0xf]
    %v924 = vld [vmem:[#allocation2 + $0x934] sm:$0xf]
    %v925 = vld [vmem:[#allocation2 + $0x938] sm:$0xf]
    %v926 = vld [vmem:[#allocation2 + $0x93c] sm:$0xf]
    %v927 = vld [vmem:[#allocation2 + $0x940] sm:$0xf]
    %v928 = vld [vmem:[#allocation2 + $0x944] sm:$0xf]
    %v929 = vld [vmem:[#allocation2 + $0x948] sm:$0xf]
    %v930 = vld [vmem:[#allocation2 + $0x94c] sm:$0xf]
    %v931 = vld [vmem:[#allocation2 + $0x950] sm:$0xf]
    %v932 = vld [vmem:[#allocation2 + $0x954] sm:$0xf]
    %v933 = vld [vmem:[#allocation2 + $0x958] sm:$0xf]
    %v934 = vld [vmem:[#allocation2 + $0x95c] sm:$0xf]
    %v935 = vld [vmem:[#allocation2 + $0x960] sm:$0xf]
    %v936 = vld [vmem:[#allocation2 + $0x964] sm:$0xf]
    %v937 = vld [vmem:[#allocation2 + $0x968] sm:$0xf]
    %v938 = vld [vmem:[#allocation2 + $0x96c] sm:$0xf]
    %v939 = vld [vmem:[#allocation2 + $0x970] sm:$0xf]
    %v940 = vld [vmem:[#allocation2 + $0x974] sm:$0xf]
    %v941 = vld [vmem:[#allocation2 + $0x978] sm:$0xf]
    %v942 = vld [vmem:[#allocation2 + $0x97c] sm:$0xf]
    %v943 = vld [vmem:[#allocation2 + $0x980] sm:$0xf]
    %v944 = vld [vmem:[#allocation2 + $0x984] sm:$0xf]
    %v945 = vld [vmem:[#allocation2 + $0x988] sm:$0xf]
    %v946 = vld [vmem:[#allocation2 + $0x98c] sm:$0xf]
    %v947 = vld [vmem:[#allocation2 + $0x990] sm:$0xf]
    %v948 = vld [vmem:[#allocation2 + $0x994] sm:$0xf]
    %v949 = vld [vmem:[#allocation2 + $0x998] sm:$0xf]
    %v950 = vld [vmem:[#allocation2 + $0x99c] sm:$0xf]
    %v951 = vld [vmem:[#allocation2 + $0x9a0] sm:$0xf]
    %v952 = vld [vmem:[#allocation2 + $0x9a4] sm:$0xf]
    %v953 = vld [vmem:[#allocation2 + $0x9a8] sm:$0xf]
    %v954 = vld [vmem:[#allocation2 + $0x9ac] sm:$0xf]
    %v955 = vld [vmem:[#allocation2 + $0x9b0] sm:$0xf]
    %v956 = vld [vmem:[#allocation2 + $0x9b4] sm:$0xf]
    %v957 = vld [vmem:[#allocation2 + $0x9b8] sm:$0xf]
    %v958 = vld [vmem:[#allocation2 + $0x9bc] sm:$0xf]
    %v959 = vld [vmem:[#allocation2 + $0x9c0] sm:$0xf]
    %v960 = vld [vmem:[#allocation2 + $0x9c4] sm:$0xf]
    %v961 = vld [vmem:[#allocation2 + $0x9c8] sm:$0xf]
    %v962 = vld [vmem:[#allocation2 + $0x9cc] sm:$0xf]
    %v963 = vld [vmem:[#allocation2 + $0x9d0] sm:$0xf]
    %v964 = vld [vmem:[#allocation2 + $0x9d4] sm:$0xf]
    %v965 = vld [vmem:[#allocation2 + $0x9d8] sm:$0xf]
    %v966 = vld [vmem:[#allocation2 + $0x9dc] sm:$0xf]
    %v967 = vld [vmem:[#allocation2 + $0x9e0] sm:$0xf]
    %v968 = vld [vmem:[#allocation2 + $0x9e4] sm:$0xf]
    %v969 = vld [vmem:[#allocation2 + $0x9e8] sm:$0xf]
    %v970 = vld [vmem:[#allocation2 + $0x9ec] sm:$0xf]
    %v971 = vld [vmem:[#allocation2 + $0x9f0] sm:$0xf]
    %v972 = vld [vmem:[#allocation2 + $0x9f4] sm:$0xf]
    %v973 = vld [vmem:[#allocation2 + $0x9f8] sm:$0xf]
    %v974 = vld [vmem:[#allocation2 + $0x9fc] sm:$0xf]
    %v975 = vld [vmem:[#allocation2 + $0xa00] sm:$0xf]
    %v976 = vld [vmem:[#allocation2 + $0xa04] sm:$0xf]
    %v977 = vld [vmem:[#allocation2 + $0xa08] sm:$0xf]
    %v978 = vld [vmem:[#allocation2 + $0xa0c] sm:$0xf]
    %v979 = vld [vmem:[#allocation2 + $0xa10] sm:$0xf]
    %v980 = vld [vmem:[#allocation2 + $0xa14] sm:$0xf]
    %v981 = vld [vmem:[#allocation2 + $0xa18] sm:$0xf]
    %v982 = vld [vmem:[#allocation2 + $0xa1c] sm:$0xf]
    %v983 = vld [vmem:[#allocation2 + $0xa20] sm:$0xf]
    %v984 = vld [vmem:[#allocation2 + $0xa24] sm:$0xf]
    %v985 = vld [vmem:[#allocation2 + $0xa28] sm:$0xf]
    %v986 = vld [vmem:[#allocation2 + $0xa2c] sm:$0xf]
    %v987 = vld [vmem:[#allocation2 + $0xa30] sm:$0xf]
    %v988 = vld [vmem:[#allocation2 + $0xa34] sm:$0xf]
    %v989 = vld [vmem:[#allocation2 + $0xa38] sm:$0xf]
    %v990 = vld [vmem:[#allocation2 + $0xa3c] sm:$0xf]
    %v991 = vld [vmem:[#allocation2 + $0xa40] sm:$0xf]
    %v992 = vld [vmem:[#allocation2 + $0xa44] sm:$0xf]
    %v993 = vld [vmem:[#allocation2 + $0xa48] sm:$0xf]
    %v994 = vld [vmem:[#allocation2 + $0xa4c] sm:$0xf]
    %v995 = vld [vmem:[#allocation2 + $0xa50] sm:$0xf]
    %v996 = vld [vmem:[#allocation2 + $0xa54] sm:$0xf]
    %v997 = vld [vmem:[#allocation2 + $0xa58] sm:$0xf]
    %v998 = vld [vmem:[#allocation2 + $0xa5c] sm:$0xf]
    %v999 = vld [vmem:[#allocation2 + $0xa60] sm:$0xf]
    %v1000 = vld [vmem:[#allocation2 + $0xa64] sm:$0xf]
    %v1001 = vld [vmem:[#allocation2 + $0xa68] sm:$0xf]
    %v1002 = vld [vmem:[#allocation2 + $0xa6c] sm:$0xf]
    %v1003 = vld [vmem:[#allocation2 + $0xa70] sm:$0xf]
    %v1004 = vld [vmem:[#allocation2 + $0xa74] sm:$0xf]
    %v1005 = vld [vmem:[#allocation2 + $0xa78] sm:$0xf]
    %v1006 = vld [vmem:[#allocation2 + $0xa7c] sm:$0xf]
    %v1007 = vld [vmem:[#allocation2 + $0xa80] sm:$0xf]
    %v1008 = vld [vmem:[#allocation2 + $0xa84] sm:$0xf]
    %v1009 = vld [vmem:[#allocation2 + $0xa88] sm:$0xf]
    %v1010 = vld [vmem:[#allocation2 + $0xa8c] sm:$0xf]
    %v1011 = vld [vmem:[#allocation2 + $0xa90] sm:$0xf]
    %v1012 = vld [vmem:[#allocation2 + $0xa94] sm:$0xf]
    %v1013 = vld [vmem:[#allocation2 + $0xa98] sm:$0xf]
    %v1014 = vld [vmem:[#allocation2 + $0xa9c] sm:$0xf]
    %v1015 = vld [vmem:[#allocation2 + $0xaa0] sm:$0xf]
    %v1016 = vld [vmem:[#allocation2 + $0xaa4] sm:$0xf]
    %v1017 = vld [vmem:[#allocation2 + $0xaa8] sm:$0xf]
    %v1018 = vld [vmem:[#allocation2 + $0xaac] sm:$0xf]
    %v1019 = vld [vmem:[#allocation2 + $0xab0] sm:$0xf]
    %v1020 = vld [vmem:[#allocation2 + $0xab4] sm:$0xf]
    %v1021 = vld [vmem:[#allocation2 + $0xab8] sm:$0xf]
    %v1022 = vld [vmem:[#allocation2 + $0xabc] sm:$0xf]
    %v1023 = vld [vmem:[#allocation2 + $0xac0] sm:$0xf]
    %v1024 = vld [vmem:[#allocation2 + $0xac4] sm:$0xf]
    %v1025 = vld [vmem:[#allocation2 + $0xac8] sm:$0xf]
    %v1026 = vld [vmem:[#allocation2 + $0xacc] sm:$0xf]
    %v1027 = vld [vmem:[#allocation2 + $0xad0] sm:$0xf]
    %v1028 = vld [vmem:[#allocation2 + $0xad4] sm:$0xf]
    %v1029 = vld [vmem:[#allocation2 + $0xad8] sm:$0xf]
    %v1030 = vld [vmem:[#allocation2 + $0xadc] sm:$0xf]
    %v1031 = vld [vmem:[#allocation2 + $0xae0] sm:$0xf]
    %v1032 = vld [vmem:[#allocation2 + $0xae4] sm:$0xf]
    %v1033 = vld [vmem:[#allocation2 + $0xae8] sm:$0xf]
    %v1034 = vld [vmem:[#allocation2 + $0xaec] sm:$0xf]
    %v1035 = vld [vmem:[#allocation2 + $0xaf0] sm:$0xf]
    %v1036 = vld [vmem:[#allocation2 + $0xaf4] sm:$0xf]
    %v1037 = vld [vmem:[#allocation2 + $0xaf8] sm:$0xf]
    %v1038 = vld [vmem:[#allocation2 + $0xafc] sm:$0xf]
    %v1039 = vld [vmem:[#allocation2 + $0xb00] sm:$0xf]
    %v1040 = vld [vmem:[#allocation2 + $0xb04] sm:$0xf]
    %v1041 = vld [vmem:[#allocation2 + $0xb08] sm:$0xf]
    %v1042 = vld [vmem:[#allocation2 + $0xb0c] sm:$0xf]
    %v1043 = vld [vmem:[#allocation2 + $0xb10] sm:$0xf]
    %v1044 = vld [vmem:[#allocation2 + $0xb14] sm:$0xf]
    %v1045 = vld [vmem:[#allocation2 + $0xb18] sm:$0xf]
    %v1046 = vld [vmem:[#allocation2 + $0xb1c] sm:$0xf]
    %v1047 = vld [vmem:[#allocation2 + $0xb20] sm:$0xf]
    %v1048 = vld [vmem:[#allocation2 + $0xb24] sm:$0xf]
    %v1049 = vld [vmem:[#allocation2 + $0xb28] sm:$0xf]
    %v1050 = vld [vmem:[#allocation2 + $0xb2c] sm:$0xf]
    %v1051 = vld [vmem:[#allocation2 + $0xb30] sm:$0xf]
    %v1052 = vld [vmem:[#allocation2 + $0xb34] sm:$0xf]
    %v1053 = vld [vmem:[#allocation2 + $0xb38] sm:$0xf]
    %v1054 = vld [vmem:[#allocation2 + $0xb3c] sm:$0xf]
    %v1055 = vld [vmem:[#allocation2 + $0xb40] sm:$0xf]
    %v1056 = vld [vmem:[#allocation2 + $0xb44] sm:$0xf]
    %v1057 = vld [vmem:[#allocation2 + $0xb48] sm:$0xf]
    %v1058 = vld [vmem:[#allocation2 + $0xb4c] sm:$0xf]
    %v1059 = vld [vmem:[#allocation2 + $0xb50] sm:$0xf]
    %v1060 = vld [vmem:[#allocation2 + $0xb54] sm:$0xf]
    %v1061 = vld [vmem:[#allocation2 + $0xb58] sm:$0xf]
    %v1062 = vld [vmem:[#allocation2 + $0xb5c] sm:$0xf]
    %v1063 = vld [vmem:[#allocation2 + $0xb60] sm:$0xf]
    %v1064 = vld [vmem:[#allocation2 + $0xb64] sm:$0xf]
    %v1065 = vld [vmem:[#allocation2 + $0xb68] sm:$0xf]
    %v1066 = vld [vmem:[#allocation2 + $0xb6c] sm:$0xf]
    %v1067 = vld [vmem:[#allocation2 + $0xb70] sm:$0xf]
    %v1068 = vld [vmem:[#allocation2 + $0xb74] sm:$0xf]
    %v1069 = vld [vmem:[#allocation2 + $0xb78] sm:$0xf]
    %v1070 = vld [vmem:[#allocation2 + $0xb7c] sm:$0xf]
    %v1071 = vld [vmem:[#allocation2 + $0xb80] sm:$0xf]
    %v1072 = vld [vmem:[#allocation2 + $0xb84] sm:$0xf]
    %v1073 = vld [vmem:[#allocation2 + $0xb88] sm:$0xf]
    %v1074 = vld [vmem:[#allocation2 + $0xb8c] sm:$0xf]
    %v1075 = vld [vmem:[#allocation2 + $0xb90] sm:$0xf]
    %v1076 = vld [vmem:[#allocation2 + $0xb94] sm:$0xf]
    %v1077 = vld [vmem:[#allocation2 + $0xb98] sm:$0xf]
    %v1078 = vld [vmem:[#allocation2 + $0xb9c] sm:$0xf]
    %v1079 = vld [vmem:[#allocation2 + $0xba0] sm:$0xf]
    %v1080 = vld [vmem:[#allocation2 + $0xba4] sm:$0xf]
    %v1081 = vld [vmem:[#allocation2 + $0xba8] sm:$0xf]
    %v1082 = vld [vmem:[#allocation2 + $0xbac] sm:$0xf]
    %v1083 = vld [vmem:[#allocation2 + $0xbb0] sm:$0xf]
    %v1084 = vld [vmem:[#allocation2 + $0xbb4] sm:$0xf]
    %v1085 = vld [vmem:[#allocation2 + $0xbb8] sm:$0xf]
    %v1086 = vld [vmem:[#allocation2 + $0xbbc] sm:$0xf]
    %v1087 = vld [vmem:[#allocation2 + $0xbc0] sm:$0xf]
    %v1088 = vld [vmem:[#allocation2 + $0xbc4] sm:$0xf]
    %v1089 = vld [vmem:[#allocation2 + $0xbc8] sm:$0xf]
    %v1090 = vld [vmem:[#allocation2 + $0xbcc] sm:$0xf]
    %v1091 = vld [vmem:[#allocation2 + $0xbd0] sm:$0xf]
    %v1092 = vld [vmem:[#allocation2 + $0xbd4] sm:$0xf]
    %v1093 = vld [vmem:[#allocation2 + $0xbd8] sm:$0xf]
    %v1094 = vld [vmem:[#allocation2 + $0xbdc] sm:$0xf]
    %v1095 = vld [vmem:[#allocation2 + $0xbe0] sm:$0xf]
    %v1096 = vld [vmem:[#allocation2 + $0xbe4] sm:$0xf]
    %v1097 = vld [vmem:[#allocation2 + $0xbe8] sm:$0xf]
    %v1098 = vld [vmem:[#allocation2 + $0xbec] sm:$0xf]
    %v1099 = vld [vmem:[#allocation2 + $0xbf0] sm:$0xf]
    %v1100 = vld [vmem:[#allocation2 + $0xbf4] sm:$0xf]
    %v1101 = vld [vmem:[#allocation2 + $0xbf8] sm:$0xf]
    %v1102 = vld [vmem:[#allocation2 + $0xbfc] sm:$0xf]
    %v1103 = vld [vmem:[#allocation2 + $0xc00] sm:$0xf]
    %v1104 = vld [vmem:[#allocation2 + $0xc04] sm:$0xf]
    %v1105 = vld [vmem:[#allocation2 + $0xc08] sm:$0xf]
    %v1106 = vld [vmem:[#allocation2 + $0xc0c] sm:$0xf]
    %v1107 = vld [vmem:[#allocation2 + $0xc10] sm:$0xf]
    %v1108 = vld [vmem:[#allocation2 + $0xc14] sm:$0xf]
    %v1109 = vld [vmem:[#allocation2 + $0xc18] sm:$0xf]
    %v1110 = vld [vmem:[#allocation2 + $0xc1c] sm:$0xf]
    %v1111 = vld [vmem:[#allocation2 + $0xc20] sm:$0xf]
    %v1112 = vld [vmem:[#allocation2 + $0xc24] sm:$0xf]
    %v1113 = vld [vmem:[#allocation2 + $0xc28] sm:$0xf]
    %v1114 = vld [vmem:[#allocation2 + $0xc2c] sm:$0xf]
    %v1115 = vld [vmem:[#allocation2 + $0xc30] sm:$0xf]
    %v1116 = vld [vmem:[#allocation2 + $0xc34] sm:$0xf]
    %v1117 = vld [vmem:[#allocation2 + $0xc38] sm:$0xf]
    %v1118 = vld [vmem:[#allocation2 + $0xc3c] sm:$0xf]
    %v1119 = vld [vmem:[#allocation2 + $0xc40] sm:$0xf]
    %v1120 = vld [vmem:[#allocation2 + $0xc44] sm:$0xf]
    %v1121 = vld [vmem:[#allocation2 + $0xc48] sm:$0xf]
    %v1122 = vld [vmem:[#allocation2 + $0xc4c] sm:$0xf]
    %v1123 = vld [vmem:[#allocation2 + $0xc50] sm:$0xf]
    %v1124 = vld [vmem:[#allocation2 + $0xc54] sm:$0xf]
    %v1125 = vld [vmem:[#allocation2 + $0xc58] sm:$0xf]
    %v1126 = vld [vmem:[#allocation2 + $0xc5c] sm:$0xf]
    %v1127 = vld [vmem:[#allocation2 + $0xc60] sm:$0xf]
    %v1128 = vld [vmem:[#allocation2 + $0xc64] sm:$0xf]
    %v1129 = vld [vmem:[#allocation2 + $0xc68] sm:$0xf]
    %v1130 = vld [vmem:[#allocation2 + $0xc6c] sm:$0xf]
    %v1131 = vld [vmem:[#allocation2 + $0xc70] sm:$0xf]
    %v1132 = vld [vmem:[#allocation2 + $0xc74] sm:$0xf]
    %v1133 = vld [vmem:[#allocation2 + $0xc78] sm:$0xf]
    %v1134 = vld [vmem:[#allocation2 + $0xc7c] sm:$0xf]
    %v1135 = vld [vmem:[#allocation2 + $0xc80] sm:$0xf]
    %v1136 = vld [vmem:[#allocation2 + $0xc84] sm:$0xf]
    %v1137 = vld [vmem:[#allocation2 + $0xc88] sm:$0xf]
    %v1138 = vld [vmem:[#allocation2 + $0xc8c] sm:$0xf]
    %v1139 = vld [vmem:[#allocation2 + $0xc90] sm:$0xf]
    %v1140 = vld [vmem:[#allocation2 + $0xc94] sm:$0xf]
    %v1141 = vld [vmem:[#allocation2 + $0xc98] sm:$0xf]
    %v1142 = vld [vmem:[#allocation2 + $0xc9c] sm:$0xf]
    %v1143 = vld [vmem:[#allocation2 + $0xca0] sm:$0xf]
    %v1144 = vld [vmem:[#allocation2 + $0xca4] sm:$0xf]
    %v1145 = vld [vmem:[#allocation2 + $0xca8] sm:$0xf]
    %v1146 = vld [vmem:[#allocation2 + $0xcac] sm:$0xf]
    %v1147 = vld [vmem:[#allocation2 + $0xcb0] sm:$0xf]
    %v1148 = vld [vmem:[#allocation2 + $0xcb4] sm:$0xf]
    %v1149 = vld [vmem:[#allocation2 + $0xcb8] sm:$0xf]
    %v1150 = vld [vmem:[#allocation2 + $0xcbc] sm:$0xf]
    %v1151 = vld [vmem:[#allocation2 + $0xcc0] sm:$0xf]
    %v1152 = vld [vmem:[#allocation2 + $0xcc4] sm:$0xf]
    %v1153 = vld [vmem:[#allocation2 + $0xcc8] sm:$0xf]
    %v1154 = vld [vmem:[#allocation2 + $0xccc] sm:$0xf]
    %v1155 = vld [vmem:[#allocation2 + $0xcd0] sm:$0xf]
    %v1156 = vld [vmem:[#allocation2 + $0xcd4] sm:$0xf]
    %v1157 = vld [vmem:[#allocation2 + $0xcd8] sm:$0xf]
    %v1158 = vld [vmem:[#allocation2 + $0xcdc] sm:$0xf]
    %v1159 = vld [vmem:[#allocation2 + $0xce0] sm:$0xf]
    %v1160 = vld [vmem:[#allocation2 + $0xce4] sm:$0xf]
    %v1161 = vld [vmem:[#allocation2 + $0xce8] sm:$0xf]
    %v1162 = vld [vmem:[#allocation2 + $0xcec] sm:$0xf]
    %v1163 = vld [vmem:[#allocation2 + $0xcf0] sm:$0xf]
    %v1164 = vld [vmem:[#allocation2 + $0xcf4] sm:$0xf]
    %v1165 = vld [vmem:[#allocation2 + $0xcf8] sm:$0xf]
    %v1166 = vld [vmem:[#allocation2 + $0xcfc] sm:$0xf]
    %v1167 = vld [vmem:[#allocation2 + $0xd00] sm:$0xf]
    %v1168 = vld [vmem:[#allocation2 + $0xd04] sm:$0xf]
    %v1169 = vld [vmem:[#allocation2 + $0xd08] sm:$0xf]
    %v1170 = vld [vmem:[#allocation2 + $0xd0c] sm:$0xf]
    %v1171 = vld [vmem:[#allocation2 + $0xd10] sm:$0xf]
    %v1172 = vld [vmem:[#allocation2 + $0xd14] sm:$0xf]
    %v1173 = vld [vmem:[#allocation2 + $0xd18] sm:$0xf]
    %v1174 = vld [vmem:[#allocation2 + $0xd1c] sm:$0xf]
    %v1175 = vld [vmem:[#allocation2 + $0xd20] sm:$0xf]
    %v1176 = vld [vmem:[#allocation2 + $0xd24] sm:$0xf]
    %v1177 = vld [vmem:[#allocation2 + $0xd28] sm:$0xf]
    %v1178 = vld [vmem:[#allocation2 + $0xd2c] sm:$0xf]
    %v1179 = vld [vmem:[#allocation2 + $0xd30] sm:$0xf]
    %v1180 = vld [vmem:[#allocation2 + $0xd34] sm:$0xf]
    %v1181 = vld [vmem:[#allocation2 + $0xd38] sm:$0xf]
    %v1182 = vld [vmem:[#allocation2 + $0xd3c] sm:$0xf]
    %v1183 = vld [vmem:[#allocation2 + $0xd40] sm:$0xf]
    %v1184 = vld [vmem:[#allocation2 + $0xd44] sm:$0xf]
    %v1185 = vld [vmem:[#allocation2 + $0xd48] sm:$0xf]
    %v1186 = vld [vmem:[#allocation2 + $0xd4c] sm:$0xf]
    %v1187 = vld [vmem:[#allocation2 + $0xd50] sm:$0xf]
    %v1188 = vld [vmem:[#allocation2 + $0xd54] sm:$0xf]
    %v1189 = vld [vmem:[#allocation2 + $0xd58] sm:$0xf]
    %v1190 = vld [vmem:[#allocation2 + $0xd5c] sm:$0xf]
    %v1191 = vld [vmem:[#allocation2 + $0xd60] sm:$0xf]
    %v1192 = vld [vmem:[#allocation2 + $0xd64] sm:$0xf]
    %v1193 = vld [vmem:[#allocation2 + $0xd68] sm:$0xf]
    %v1194 = vld [vmem:[#allocation2 + $0xd6c] sm:$0xf]
    %v1195 = vld [vmem:[#allocation2 + $0xd70] sm:$0xf]
    %v1196 = vld [vmem:[#allocation2 + $0xd74] sm:$0xf]
    %v1197 = vld [vmem:[#allocation2 + $0xd78] sm:$0xf]
    %v1198 = vld [vmem:[#allocation2 + $0xd7c] sm:$0xf]
    %v1199 = vld [vmem:[#allocation2 + $0xd80] sm:$0xf]
    %v1200 = vld [vmem:[#allocation2 + $0xd84] sm:$0xf]
    %v1201 = vld [vmem:[#allocation2 + $0xd88] sm:$0xf]
    %v1202 = vld [vmem:[#allocation2 + $0xd8c] sm:$0xf]
    %v1203 = vld [vmem:[#allocation2 + $0xd90] sm:$0xf]
    %v1204 = vld [vmem:[#allocation2 + $0xd94] sm:$0xf]
    %v1205 = vld [vmem:[#allocation2 + $0xd98] sm:$0xf]
    %v1206 = vld [vmem:[#allocation2 + $0xd9c] sm:$0xf]
    %v1207 = vld [vmem:[#allocation2 + $0xda0] sm:$0xf]
    %v1208 = vld [vmem:[#allocation2 + $0xda4] sm:$0xf]
    %v1209 = vld [vmem:[#allocation2 + $0xda8] sm:$0xf]
    %v1210 = vld [vmem:[#allocation2 + $0xdac] sm:$0xf]
    %v1211 = vld [vmem:[#allocation2 + $0xdb0] sm:$0xf]
    %v1212 = vld [vmem:[#allocation2 + $0xdb4] sm:$0xf]
    %v1213 = vld [vmem:[#allocation2 + $0xdb8] sm:$0xf]
    %v1214 = vld [vmem:[#allocation2 + $0xdbc] sm:$0xf]
    %v1215 = vld [vmem:[#allocation2 + $0xdc0] sm:$0xf]
    %v1216 = vld [vmem:[#allocation2 + $0xdc4] sm:$0xf]
    %v1217 = vld [vmem:[#allocation2 + $0xdc8] sm:$0xf]
    %v1218 = vld [vmem:[#allocation2 + $0xdcc] sm:$0xf]
    %v1219 = vld [vmem:[#allocation2 + $0xdd0] sm:$0xf]
    %v1220 = vld [vmem:[#allocation2 + $0xdd4] sm:$0xf]
    %v1221 = vld [vmem:[#allocation2 + $0xdd8] sm:$0xf]
    %v1222 = vld [vmem:[#allocation2 + $0xddc] sm:$0xf]
    %v1223 = vld [vmem:[#allocation2 + $0xde0] sm:$0xf]
    %v1224 = vld [vmem:[#allocation2 + $0xde4] sm:$0xf]
    %v1225 = vld [vmem:[#allocation2 + $0xde8] sm:$0xf]
    %v1226 = vld [vmem:[#allocation2 + $0xdec] sm:$0xf]
    %v1227 = vld [vmem:[#allocation2 + $0xdf0] sm:$0xf]
    %v1228 = vld [vmem:[#allocation2 + $0xdf4] sm:$0xf]
    %v1229 = vld [vmem:[#allocation2 + $0xdf8] sm:$0xf]
    %v1230 = vld [vmem:[#allocation2 + $0xdfc] sm:$0xf]
    %v1231 = vld [vmem:[#allocation2 + $0xe00] sm:$0xf]
    %v1232 = vld [vmem:[#allocation2 + $0xe04] sm:$0xf]
    %v1233 = vld [vmem:[#allocation2 + $0xe08] sm:$0xf]
    %v1234 = vld [vmem:[#allocation2 + $0xe0c] sm:$0xf]
    %v1235 = vld [vmem:[#allocation2 + $0xe10] sm:$0xf]
    %v1236 = vld [vmem:[#allocation2 + $0xe14] sm:$0xf]
    %v1237 = vld [vmem:[#allocation2 + $0xe18] sm:$0xf]
    %v1238 = vld [vmem:[#allocation2 + $0xe1c] sm:$0xf]
    %v1239 = vld [vmem:[#allocation2 + $0xe20] sm:$0xf]
    %v1240 = vld [vmem:[#allocation2 + $0xe24] sm:$0xf]
    %v1241 = vld [vmem:[#allocation2 + $0xe28] sm:$0xf]
    %v1242 = vld [vmem:[#allocation2 + $0xe2c] sm:$0xf]
    %v1243 = vld [vmem:[#allocation2 + $0xe30] sm:$0xf]
    %v1244 = vld [vmem:[#allocation2 + $0xe34] sm:$0xf]
    %v1245 = vld [vmem:[#allocation2 + $0xe38] sm:$0xf]
    %v1246 = vld [vmem:[#allocation2 + $0xe3c] sm:$0xf]
    %v1247 = vld [vmem:[#allocation2 + $0xe40] sm:$0xf]
    %v1248 = vld [vmem:[#allocation2 + $0xe44] sm:$0xf]
    %v1249 = vld [vmem:[#allocation2 + $0xe48] sm:$0xf]
    %v1250 = vld [vmem:[#allocation2 + $0xe4c] sm:$0xf]
    %v1251 = vld [vmem:[#allocation2 + $0xe50] sm:$0xf]
    %v1252 = vld [vmem:[#allocation2 + $0xe54] sm:$0xf]
    %v1253 = vld [vmem:[#allocation2 + $0xe58] sm:$0xf]
    %v1254 = vld [vmem:[#allocation2 + $0xe5c] sm:$0xf]
    %v1255 = vld [vmem:[#allocation2 + $0xe60] sm:$0xf]
    %v1256 = vld [vmem:[#allocation2 + $0xe64] sm:$0xf]
    %v1257 = vld [vmem:[#allocation2 + $0xe68] sm:$0xf]
    %v1258 = vld [vmem:[#allocation2 + $0xe6c] sm:$0xf]
    %v1259 = vld [vmem:[#allocation2 + $0xe70] sm:$0xf]
    %v1260 = vld [vmem:[#allocation2 + $0xe74] sm:$0xf]
    %v1261 = vld [vmem:[#allocation2 + $0xe78] sm:$0xf]
    %v1262 = vld [vmem:[#allocation2 + $0xe7c] sm:$0xf]
    %v1263 = vld [vmem:[#allocation2 + $0xe80] sm:$0xf]
    %v1264 = vld [vmem:[#allocation2 + $0xe84] sm:$0xf]
    %v1265 = vld [vmem:[#allocation2 + $0xe88] sm:$0xf]
    %v1266 = vld [vmem:[#allocation2 + $0xe8c] sm:$0xf]
    %v1267 = vld [vmem:[#allocation2 + $0xe90] sm:$0xf]
    %v1268 = vld [vmem:[#allocation2 + $0xe94] sm:$0xf]
    %v1269 = vld [vmem:[#allocation2 + $0xe98] sm:$0xf]
    %v1270 = vld [vmem:[#allocation2 + $0xe9c] sm:$0xf]
    %v1271 = vld [vmem:[#allocation2 + $0xea0] sm:$0xf]
    %v1272 = vld [vmem:[#allocation2 + $0xea4] sm:$0xf]
    %v1273 = vld [vmem:[#allocation2 + $0xea8] sm:$0xf]
    %v1274 = vld [vmem:[#allocation2 + $0xeac] sm:$0xf]
    %v1275 = vld [vmem:[#allocation2 + $0xeb0] sm:$0xf]
    %v1276 = vld [vmem:[#allocation2 + $0xeb4] sm:$0xf]
    %v1277 = vld [vmem:[#allocation2 + $0xeb8] sm:$0xf]
    %v1278 = vld [vmem:[#allocation2 + $0xebc] sm:$0xf]
    %v1279 = vld [vmem:[#allocation2 + $0xec0] sm:$0xf]
    %v1280 = vld [vmem:[#allocation2 + $0xec4] sm:$0xf]
    %v1281 = vld [vmem:[#allocation2 + $0xec8] sm:$0xf]
    %v1282 = vld [vmem:[#allocation2 + $0xecc] sm:$0xf]
    %v1283 = vld [vmem:[#allocation2 + $0xed0] sm:$0xf]
    %v1284 = vld [vmem:[#allocation2 + $0xed4] sm:$0xf]
    %v1285 = vld [vmem:[#allocation2 + $0xed8] sm:$0xf]
    %v1286 = vld [vmem:[#allocation2 + $0xedc] sm:$0xf]
    %v1287 = vld [vmem:[#allocation2 + $0xee0] sm:$0xf]
    %v1288 = vld [vmem:[#allocation2 + $0xee4] sm:$0xf]
    %v1289 = vld [vmem:[#allocation2 + $0xee8] sm:$0xf]
    %v1290 = vld [vmem:[#allocation2 + $0xeec] sm:$0xf]
    %v1291 = vld [vmem:[#allocation2 + $0xef0] sm:$0xf]
    %v1292 = vld [vmem:[#allocation2 + $0xef4] sm:$0xf]
    %v1293 = vld [vmem:[#allocation2 + $0xef8] sm:$0xf]
    %v1294 = vld [vmem:[#allocation2 + $0xefc] sm:$0xf]
    %v1295 = vld [vmem:[#allocation2 + $0xf00] sm:$0xf]
    %v1296 = vld [vmem:[#allocation2 + $0xf04] sm:$0xf]
    %v1297 = vld [vmem:[#allocation2 + $0xf08] sm:$0xf]
    %v1298 = vld [vmem:[#allocation2 + $0xf0c] sm:$0xf]
    %v1299 = vld [vmem:[#allocation2 + $0xf10] sm:$0xf]
    %v1300 = vld [vmem:[#allocation2 + $0xf14] sm:$0xf]
    %v1301 = vld [vmem:[#allocation2 + $0xf18] sm:$0xf]
    %v1302 = vld [vmem:[#allocation2 + $0xf1c] sm:$0xf]
    %v1303 = vld [vmem:[#allocation2 + $0xf20] sm:$0xf]
    %v1304 = vld [vmem:[#allocation2 + $0xf24] sm:$0xf]
    %v1305 = vld [vmem:[#allocation2 + $0xf28] sm:$0xf]
    %v1306 = vld [vmem:[#allocation2 + $0xf2c] sm:$0xf]
    %v1307 = vld [vmem:[#allocation2 + $0xf30] sm:$0xf]
    %v1308 = vld [vmem:[#allocation2 + $0xf34] sm:$0xf]
    %v1309 = vld [vmem:[#allocation2 + $0xf38] sm:$0xf]
    %v1310 = vld [vmem:[#allocation2 + $0xf3c] sm:$0xf]
    %v1311 = vld [vmem:[#allocation2 + $0xf40] sm:$0xf]
    %v1312 = vld [vmem:[#allocation2 + $0xf44] sm:$0xf]
    %v1313 = vld [vmem:[#allocation2 + $0xf48] sm:$0xf]
    %v1314 = vld [vmem:[#allocation2 + $0xf4c] sm:$0xf]
    %v1315 = vld [vmem:[#allocation2 + $0xf50] sm:$0xf]
    %v1316 = vld [vmem:[#allocation2 + $0xf54] sm:$0xf]
    %v1317 = vld [vmem:[#allocation2 + $0xf58] sm:$0xf]
    %v1318 = vld [vmem:[#allocation2 + $0xf5c] sm:$0xf]
    %v1319 = vld [vmem:[#allocation2 + $0xf60] sm:$0xf]
    %v1320 = vld [vmem:[#allocation2 + $0xf64] sm:$0xf]
    %v1321 = vld [vmem:[#allocation2 + $0xf68] sm:$0xf]
    %v1322 = vld [vmem:[#allocation2 + $0xf6c] sm:$0xf]
    %v1323 = vld [vmem:[#allocation2 + $0xf70] sm:$0xf]
    %v1324 = vld [vmem:[#allocation2 + $0xf74] sm:$0xf]
    %v1325 = vld [vmem:[#allocation2 + $0xf78] sm:$0xf]
    %v1326 = vld [vmem:[#allocation2 + $0xf7c] sm:$0xf]
    %v1327 = vld [vmem:[#allocation2 + $0xf80] sm:$0xf]
    %v1328 = vld [vmem:[#allocation2 + $0xf84] sm:$0xf]
    %v1329 = vld [vmem:[#allocation2 + $0xf88] sm:$0xf]
    %v1330 = vld [vmem:[#allocation2 + $0xf8c] sm:$0xf]
    %v1331 = vld [vmem:[#allocation2 + $0xf90] sm:$0xf]
    %v1332 = vld [vmem:[#allocation2 + $0xf94] sm:$0xf]
    %v1333 = vld [vmem:[#allocation2 + $0xf98] sm:$0xf]
    %v1334 = vld [vmem:[#allocation2 + $0xf9c] sm:$0xf]
    %v1335 = vld [vmem:[#allocation2 + $0xfa0] sm:$0xf]
    %v1336 = vld [vmem:[#allocation2 + $0xfa4] sm:$0xf]
    %v1337 = vld [vmem:[#allocation2 + $0xfa8] sm:$0xf]
    %v1338 = vld [vmem:[#allocation2 + $0xfac] sm:$0xf]
    %v1339 = vld [vmem:[#allocation2 + $0xfb0] sm:$0xf]
    %v1340 = vld [vmem:[#allocation2 + $0xfb4] sm:$0xf]
    %v1341 = vld [vmem:[#allocation2 + $0xfb8] sm:$0xf]
    %v1342 = vld [vmem:[#allocation2 + $0xfbc] sm:$0xf]
    %v1343 = vld [vmem:[#allocation2 + $0xfc0] sm:$0xf]
    %v1344 = vld [vmem:[#allocation2 + $0xfc4] sm:$0xf]
    %v1345 = vld [vmem:[#allocation2 + $0xfc8] sm:$0xf]
    %v1346 = vld [vmem:[#allocation2 + $0xfcc] sm:$0xf]
    %v1347 = vld [vmem:[#allocation2 + $0xfd0] sm:$0xf]
    %v1348 = vld [vmem:[#allocation2 + $0xfd4] sm:$0xf]
    %v1349 = vld [vmem:[#allocation2 + $0xfd8] sm:$0xf]
    %v1350 = vld [vmem:[#allocation2 + $0xfdc] sm:$0xf]
    %v1351 = vld [vmem:[#allocation2 + $0xfe0] sm:$0xf]
    %v1352 = vld [vmem:[#allocation2 + $0xfe4] sm:$0xf]
    %v1353 = vld [vmem:[#allocation2 + $0xfe8] sm:$0xf]
    %v1354 = vld [vmem:[#allocation2 + $0xfec] sm:$0xf]
    %v1355 = vld [vmem:[#allocation2 + $0xff0] sm:$0xf]
    %v1356 = vld [vmem:[#allocation2 + $0xff4] sm:$0xf]
    %v1357 = vld [vmem:[#allocation2 + $0xff8] sm:$0xf]
    %v1358 = vld [vmem:[#allocation2 + $0xffc] sm:$0xf]
    %v1359 = vld [vmem:[#allocation2 + $0x1000] sm:$0xf]
    %v1360 = vld [vmem:[#allocation2 + $0x1004] sm:$0xf]
    %v1361 = vld [vmem:[#allocation2 + $0x1008] sm:$0xf]
    %v1362 = vld [vmem:[#allocation2 + $0x100c] sm:$0xf]
    %v1363 = vld [vmem:[#allocation2 + $0x1010] sm:$0xf]
    %v1364 = vld [vmem:[#allocation2 + $0x1014] sm:$0xf]
    %v1365 = vld [vmem:[#allocation2 + $0x1018] sm:$0xf]
    %v1366 = vld [vmem:[#allocation2 + $0x101c] sm:$0xf]
    %v1367 = vld [vmem:[#allocation2 + $0x1020] sm:$0xf]
    %v1368 = vld [vmem:[#allocation2 + $0x1024] sm:$0xf]
    %v1369 = vld [vmem:[#allocation2 + $0x1028] sm:$0xf]
    %v1370 = vld [vmem:[#allocation2 + $0x102c] sm:$0xf]
    %v1371 = vld [vmem:[#allocation2 + $0x1030] sm:$0xf]
    %v1372 = vld [vmem:[#allocation2 + $0x1034] sm:$0xf]
    %v1373 = vld [vmem:[#allocation2 + $0x1038] sm:$0xf]
    %v1374 = vld [vmem:[#allocation2 + $0x103c] sm:$0xf]
    %v1375 = vld [vmem:[#allocation2 + $0x1040] sm:$0xf]
    %v1376 = vld [vmem:[#allocation2 + $0x1044] sm:$0xf]
    %v1377 = vld [vmem:[#allocation2 + $0x1048] sm:$0xf]
    %v1378 = vld [vmem:[#allocation2 + $0x104c] sm:$0xf]
    %v1379 = vld [vmem:[#allocation2 + $0x1050] sm:$0xf]
    %v1380 = vld [vmem:[#allocation2 + $0x1054] sm:$0xf]
    %v1381 = vld [vmem:[#allocation2 + $0x1058] sm:$0xf]
    %v1382 = vld [vmem:[#allocation2 + $0x105c] sm:$0xf]
    %v1383 = vld [vmem:[#allocation2 + $0x1060] sm:$0xf]
    %v1384 = vld [vmem:[#allocation2 + $0x1064] sm:$0xf]
    %v1385 = vld [vmem:[#allocation2 + $0x1068] sm:$0xf]
    %v1386 = vld [vmem:[#allocation2 + $0x106c] sm:$0xf]
    %v1387 = vld [vmem:[#allocation2 + $0x1070] sm:$0xf]
    %v1388 = vld [vmem:[#allocation2 + $0x1074] sm:$0xf]
    %v1389 = vld [vmem:[#allocation2 + $0x1078] sm:$0xf]
    %v1390 = vld [vmem:[#allocation2 + $0x107c] sm:$0xf]
    %v1391 = vld [vmem:[#allocation2 + $0x1080] sm:$0xf]
    %v1392 = vld [vmem:[#allocation2 + $0x1084] sm:$0xf]
    %v1393 = vld [vmem:[#allocation2 + $0x1088] sm:$0xf]
    %v1394 = vld [vmem:[#allocation2 + $0x108c] sm:$0xf]
    %v1395 = vld [vmem:[#allocation2 + $0x1090] sm:$0xf]
    %v1396 = vld [vmem:[#allocation2 + $0x1094] sm:$0xf]
    %v1397 = vld [vmem:[#allocation2 + $0x1098] sm:$0xf]
    %v1398 = vld [vmem:[#allocation2 + $0x109c] sm:$0xf]
    %v1399 = vld [vmem:[#allocation2 + $0x10a0] sm:$0xf]
    %v1400 = vld [vmem:[#allocation2 + $0x10a4] sm:$0xf]
    %v1401 = vld [vmem:[#allocation2 + $0x10a8] sm:$0xf]
    %v1402 = vld [vmem:[#allocation2 + $0x10ac] sm:$0xf]
    %v1403 = vld [vmem:[#allocation2 + $0x10b0] sm:$0xf]
    %v1404 = vld [vmem:[#allocation2 + $0x10b4] sm:$0xf]
    %v1405 = vld [vmem:[#allocation2 + $0x10b8] sm:$0xf]
    %v1406 = vld [vmem:[#allocation2 + $0x10bc] sm:$0xf]
    %v1407 = vld [vmem:[#allocation2 + $0x10c0] sm:$0xf]
    %v1408 = vld [vmem:[#allocation2 + $0x10c4] sm:$0xf]
    %v1409 = vld [vmem:[#allocation2 + $0x10c8] sm:$0xf]
    %v1410 = vld [vmem:[#allocation2 + $0x10cc] sm:$0xf]
    %v1411 = vld [vmem:[#allocation2 + $0x10d0] sm:$0xf]
    %v1412 = vld [vmem:[#allocation2 + $0x10d4] sm:$0xf]
    %v1413 = vld [vmem:[#allocation2 + $0x10d8] sm:$0xf]
    %v1414 = vld [vmem:[#allocation2 + $0x10dc] sm:$0xf]
    %v1415 = vld [vmem:[#allocation2 + $0x10e0] sm:$0xf]
    %v1416 = vld [vmem:[#allocation2 + $0x10e4] sm:$0xf]
    %v1417 = vld [vmem:[#allocation2 + $0x10e8] sm:$0xf]
    %v1418 = vld [vmem:[#allocation2 + $0x10ec] sm:$0xf]
    %v1419 = vld [vmem:[#allocation2 + $0x10f0] sm:$0xf]
    %v1420 = vld [vmem:[#allocation2 + $0x10f4] sm:$0xf]
    %v1421 = vld [vmem:[#allocation2 + $0x10f8] sm:$0xf]
    %v1422 = vld [vmem:[#allocation2 + $0x10fc] sm:$0xf]
    %v1423 = vld [vmem:[#allocation2 + $0x1100] sm:$0xf]
    %v1424 = vld [vmem:[#allocation2 + $0x1104] sm:$0xf]
    %v1425 = vld [vmem:[#allocation2 + $0x1108] sm:$0xf]
    %v1426 = vld [vmem:[#allocation2 + $0x110c] sm:$0xf]
    %v1427 = vld [vmem:[#allocation2 + $0x1110] sm:$0xf]
    %v1428 = vld [vmem:[#allocation2 + $0x1114] sm:$0xf]
    %v1429 = vld [vmem:[#allocation2 + $0x1118] sm:$0xf]
    %v1430 = vld [vmem:[#allocation2 + $0x111c] sm:$0xf]
    %v1431 = vld [vmem:[#allocation2 + $0x1120] sm:$0xf]
    %v1432 = vld [vmem:[#allocation2 + $0x1124] sm:$0xf]
    %v1433 = vld [vmem:[#allocation2 + $0x1128] sm:$0xf]
    %v1434 = vld [vmem:[#allocation2 + $0x112c] sm:$0xf]
    %v1435 = vld [vmem:[#allocation2 + $0x1130] sm:$0xf]
    %v1436 = vld [vmem:[#allocation2 + $0x1134] sm:$0xf]
    %v1437 = vld [vmem:[#allocation2 + $0x1138] sm:$0xf]
    %v1438 = vld [vmem:[#allocation2 + $0x113c] sm:$0xf]
    %v1439 = vld [vmem:[#allocation2 + $0x1140] sm:$0xf]
    %v1440 = vld [vmem:[#allocation2 + $0x1144] sm:$0xf]
    %v1441 = vld [vmem:[#allocation2 + $0x1148] sm:$0xf]
    %v1442 = vld [vmem:[#allocation2 + $0x114c] sm:$0xf]
    %v1443 = vld [vmem:[#allocation2 + $0x1150] sm:$0xf]
    %v1444 = vld [vmem:[#allocation2 + $0x1154] sm:$0xf]
    %v1445 = vld [vmem:[#allocation2 + $0x1158] sm:$0xf]
    %v1446 = vld [vmem:[#allocation2 + $0x115c] sm:$0xf]
    %v1447 = vld [vmem:[#allocation2 + $0x1160] sm:$0xf]
    %v1448 = vld [vmem:[#allocation2 + $0x1164] sm:$0xf]
    %v1449 = vld [vmem:[#allocation2 + $0x1168] sm:$0xf]
    %v1450 = vld [vmem:[#allocation2 + $0x116c] sm:$0xf]
    %v1451 = vld [vmem:[#allocation2 + $0x1170] sm:$0xf]
    %v1452 = vld [vmem:[#allocation2 + $0x1174] sm:$0xf]
    %v1453 = vld [vmem:[#allocation2 + $0x1178] sm:$0xf]
    %v1454 = vld [vmem:[#allocation2 + $0x117c] sm:$0xf]
    %v1455 = vld [vmem:[#allocation2 + $0x1180] sm:$0xf]
    %v1456 = vld [vmem:[#allocation2 + $0x1184] sm:$0xf]
    %v1457 = vld [vmem:[#allocation2 + $0x1188] sm:$0xf]
    %v1458 = vld [vmem:[#allocation2 + $0x118c] sm:$0xf]
    %v1459 = vld [vmem:[#allocation2 + $0x1190] sm:$0xf]
    %v1460 = vld [vmem:[#allocation2 + $0x1194] sm:$0xf]
    %v1461 = vld [vmem:[#allocation2 + $0x1198] sm:$0xf]
    %v1462 = vld [vmem:[#allocation2 + $0x119c] sm:$0xf]
    %v1463 = vld [vmem:[#allocation2 + $0x11a0] sm:$0xf]
    %v1464 = vld [vmem:[#allocation2 + $0x11a4] sm:$0xf]
    %v1465 = vld [vmem:[#allocation2 + $0x11a8] sm:$0xf]
    %v1466 = vld [vmem:[#allocation2 + $0x11ac] sm:$0xf]
    %v1467 = vld [vmem:[#allocation2 + $0x11b0] sm:$0xf]
    %v1468 = vld [vmem:[#allocation2 + $0x11b4] sm:$0xf]
    %v1469 = vld [vmem:[#allocation2 + $0x11b8] sm:$0xf]
    %v1470 = vld [vmem:[#allocation2 + $0x11bc] sm:$0xf]
    %v1471 = vld [vmem:[#allocation2 + $0x11c0] sm:$0xf]
    %v1472 = vld [vmem:[#allocation2 + $0x11c4] sm:$0xf]
    %v1473 = vld [vmem:[#allocation2 + $0x11c8] sm:$0xf]
    %v1474 = vld [vmem:[#allocation2 + $0x11cc] sm:$0xf]
    %v1475 = vld [vmem:[#allocation2 + $0x11d0] sm:$0xf]
    %v1476 = vld [vmem:[#allocation2 + $0x11d4] sm:$0xf]
    %v1477 = vld [vmem:[#allocation2 + $0x11d8] sm:$0xf]
    %v1478 = vld [vmem:[#allocation2 + $0x11dc] sm:$0xf]
    %v1479 = vld [vmem:[#allocation2 + $0x11e0] sm:$0xf]
    %v1480 = vld [vmem:[#allocation2 + $0x11e4] sm:$0xf]
    %v1481 = vld [vmem:[#allocation2 + $0x11e8] sm:$0xf]
    %v1482 = vld [vmem:[#allocation2 + $0x11ec] sm:$0xf]
    %v1483 = vld [vmem:[#allocation2 + $0x11f0] sm:$0xf]
    %v1484 = vld [vmem:[#allocation2 + $0x11f4] sm:$0xf]
    %v1485 = vld [vmem:[#allocation2 + $0x11f8] sm:$0xf]
    %v1486 = vld [vmem:[#allocation2 + $0x11fc] sm:$0xf]
    %v1487 = vld [vmem:[#allocation5] sm:$0x1]
    %v1489 = vperm.slane %v1487, 0
    %v2643 = vunpack.c.l.b16 %v335
    %v2644 = vunpack.c.l.b16 %v336
    %v2645 = vunpack.c.l.b16 %v337
    %v2646 = vunpack.c.l.b16 %v338
    %v2647 = vunpack.c.l.b16 %v339
    %v2648 = vunpack.c.l.b16 %v340
    %v2649 = vunpack.c.l.b16 %v341
    %v2650 = vunpack.c.l.b16 %v342
    %v2651 = vunpack.c.l.b16 %v343
    %v2652 = vunpack.c.l.b16 %v344
    %v2653 = vunpack.c.l.b16 %v345
    %v2654 = vunpack.c.l.b16 %v346
    %v2655 = vunpack.c.l.b16 %v347
    %v2656 = vunpack.c.l.b16 %v348
    %v2657 = vunpack.c.l.b16 %v349
    %v2658 = vunpack.c.l.b16 %v350
    %v2659 = vunpack.c.l.b16 %v351
    %v2660 = vunpack.c.l.b16 %v352
    %v2661 = vunpack.c.l.b16 %v353
    %v2662 = vunpack.c.l.b16 %v354
    %v2663 = vunpack.c.l.b16 %v355
    %v2664 = vunpack.c.l.b16 %v356
    %v2665 = vunpack.c.l.b16 %v357
    %v2666 = vunpack.c.l.b16 %v358
    %v2667 = vunpack.c.l.b16 %v359
    %v2668 = vunpack.c.l.b16 %v360
    %v2669 = vunpack.c.l.b16 %v361
    %v2670 = vunpack.c.l.b16 %v362
    %v2671 = vunpack.c.l.b16 %v363
    %v2672 = vunpack.c.l.b16 %v364
    %v2673 = vunpack.c.l.b16 %v365
    %v2674 = vunpack.c.l.b16 %v366
    %v2675 = vunpack.c.l.b16 %v367
    %v2676 = vunpack.c.l.b16 %v368
    %v2677 = vunpack.c.l.b16 %v369
    %v2678 = vunpack.c.l.b16 %v370
    %v2679 = vunpack.c.l.b16 %v371
    %v2680 = vunpack.c.l.b16 %v372
    %v2681 = vunpack.c.l.b16 %v373
    %v2682 = vunpack.c.l.b16 %v374
    %v2683 = vunpack.c.l.b16 %v375
    %v2684 = vunpack.c.l.b16 %v376
    %v2685 = vunpack.c.l.b16 %v377
    %v2686 = vunpack.c.l.b16 %v378
    %v2687 = vunpack.c.l.b16 %v379
    %v2688 = vunpack.c.l.b16 %v380
    %v2689 = vunpack.c.l.b16 %v381
    %v2690 = vunpack.c.l.b16 %v382
    %v2691 = vunpack.c.l.b16 %v383
    %v2692 = vunpack.c.l.b16 %v384
    %v2693 = vunpack.c.l.b16 %v385
    %v2694 = vunpack.c.l.b16 %v386
    %v2695 = vunpack.c.l.b16 %v387
    %v2696 = vunpack.c.l.b16 %v388
    %v2697 = vunpack.c.l.b16 %v389
    %v2698 = vunpack.c.l.b16 %v390
    %v2699 = vunpack.c.l.b16 %v391
    %v2700 = vunpack.c.l.b16 %v392
    %v2701 = vunpack.c.l.b16 %v393
    %v2702 = vunpack.c.l.b16 %v394
    %v2703 = vunpack.c.l.b16 %v395
    %v2704 = vunpack.c.l.b16 %v396
    %v2705 = vunpack.c.l.b16 %v397
    %v2706 = vunpack.c.l.b16 %v398
    %v2707 = vunpack.c.l.b16 %v399
    %v2708 = vunpack.c.l.b16 %v400
    %v2709 = vunpack.c.l.b16 %v401
    %v2710 = vunpack.c.l.b16 %v402
    %v2711 = vunpack.c.l.b16 %v403
    %v2712 = vunpack.c.l.b16 %v404
    %v2713 = vunpack.c.l.b16 %v405
    %v2714 = vunpack.c.l.b16 %v406
    %v2715 = vunpack.c.l.b16 %v407
    %v2716 = vunpack.c.l.b16 %v408
    %v2717 = vunpack.c.l.b16 %v409
    %v2718 = vunpack.c.l.b16 %v410
    %v2719 = vunpack.c.l.b16 %v411
    %v2720 = vunpack.c.l.b16 %v412
    %v2721 = vunpack.c.l.b16 %v413
    %v2722 = vunpack.c.l.b16 %v414
    %v2723 = vunpack.c.l.b16 %v415
    %v2724 = vunpack.c.l.b16 %v416
    %v2725 = vunpack.c.l.b16 %v417
    %v2726 = vunpack.c.l.b16 %v418
    %v2727 = vunpack.c.l.b16 %v419
    %v2728 = vunpack.c.l.b16 %v420
    %v2729 = vunpack.c.l.b16 %v421
    %v2730 = vunpack.c.l.b16 %v422
    %v2731 = vunpack.c.l.b16 %v423
    %v2732 = vunpack.c.l.b16 %v424
    %v2733 = vunpack.c.l.b16 %v425
    %v2734 = vunpack.c.l.b16 %v426
    %v2735 = vunpack.c.l.b16 %v427
    %v2736 = vunpack.c.l.b16 %v428
    %v2737 = vunpack.c.l.b16 %v429
    %v2738 = vunpack.c.l.b16 %v430
    %v2739 = vunpack.c.l.b16 %v431
    %v2740 = vunpack.c.l.b16 %v432
    %v2741 = vunpack.c.l.b16 %v433
    %v2742 = vunpack.c.l.b16 %v434
    %v2743 = vunpack.c.l.b16 %v435
    %v2744 = vunpack.c.l.b16 %v436
    %v2745 = vunpack.c.l.b16 %v437
    %v2746 = vunpack.c.l.b16 %v438
    %v2747 = vunpack.c.l.b16 %v439
    %v2748 = vunpack.c.l.b16 %v440
    %v2749 = vunpack.c.l.b16 %v441
    %v2750 = vunpack.c.l.b16 %v442
    %v2751 = vunpack.c.l.b16 %v443
    %v2752 = vunpack.c.l.b16 %v444
    %v2753 = vunpack.c.l.b16 %v445
    %v2754 = vunpack.c.l.b16 %v446
    %v2755 = vunpack.c.l.b16 %v447
    %v2756 = vunpack.c.l.b16 %v448
    %v2757 = vunpack.c.l.b16 %v449
    %v2758 = vunpack.c.l.b16 %v450
    %v2759 = vunpack.c.l.b16 %v451
    %v2760 = vunpack.c.l.b16 %v452
    %v2761 = vunpack.c.l.b16 %v453
    %v2762 = vunpack.c.l.b16 %v454
    %v2763 = vunpack.c.l.b16 %v455
    %v2764 = vunpack.c.l.b16 %v456
    %v2765 = vunpack.c.l.b16 %v457
    %v2766 = vunpack.c.l.b16 %v458
    %v2767 = vunpack.c.l.b16 %v459
    %v2768 = vunpack.c.l.b16 %v460
    %v2769 = vunpack.c.l.b16 %v461
    %v2770 = vunpack.c.l.b16 %v462
    %v2771 = vunpack.c.l.b16 %v463
    %v2772 = vunpack.c.l.b16 %v464
    %v2773 = vunpack.c.l.b16 %v465
    %v2774 = vunpack.c.l.b16 %v466
    %v2775 = vunpack.c.l.b16 %v467
    %v2776 = vunpack.c.l.b16 %v468
    %v2777 = vunpack.c.l.b16 %v469
    %v2778 = vunpack.c.l.b16 %v470
    %v2779 = vunpack.c.l.b16 %v471
    %v2780 = vunpack.c.l.b16 %v472
    %v2781 = vunpack.c.l.b16 %v473
    %v2782 = vunpack.c.l.b16 %v474
    %v2783 = vunpack.c.l.b16 %v475
    %v2784 = vunpack.c.l.b16 %v476
    %v2785 = vunpack.c.l.b16 %v477
    %v2786 = vunpack.c.l.b16 %v478
    %v2787 = vunpack.c.l.b16 %v479
    %v2788 = vunpack.c.l.b16 %v480
    %v2789 = vunpack.c.l.b16 %v481
    %v2790 = vunpack.c.l.b16 %v482
    %v2791 = vunpack.c.l.b16 %v483
    %v2792 = vunpack.c.l.b16 %v484
    %v2793 = vunpack.c.l.b16 %v485
    %v2794 = vunpack.c.l.b16 %v486
    %v2795 = vunpack.c.l.b16 %v487
    %v2796 = vunpack.c.l.b16 %v488
    %v2797 = vunpack.c.l.b16 %v489
    %v2798 = vunpack.c.l.b16 %v490
    %v2799 = vunpack.c.l.b16 %v491
    %v2800 = vunpack.c.l.b16 %v492
    %v2801 = vunpack.c.l.b16 %v493
    %v2802 = vunpack.c.l.b16 %v494
    %v2803 = vunpack.c.l.b16 %v495
    %v2804 = vunpack.c.l.b16 %v496
    %v2805 = vunpack.c.l.b16 %v497
    %v2806 = vunpack.c.l.b16 %v498
    %v2807 = vunpack.c.l.b16 %v499
    %v2808 = vunpack.c.l.b16 %v500
    %v2809 = vunpack.c.l.b16 %v501
    %v2810 = vunpack.c.l.b16 %v502
    %v2811 = vunpack.c.l.b16 %v503
    %v2812 = vunpack.c.l.b16 %v504
    %v2813 = vunpack.c.l.b16 %v505
    %v2814 = vunpack.c.l.b16 %v506
    %v2815 = vunpack.c.l.b16 %v507
    %v2816 = vunpack.c.l.b16 %v508
    %v2817 = vunpack.c.l.b16 %v509
    %v2818 = vunpack.c.l.b16 %v510
    %v2819 = vunpack.c.l.b16 %v511
    %v2820 = vunpack.c.l.b16 %v512
    %v2821 = vunpack.c.l.b16 %v513
    %v2822 = vunpack.c.l.b16 %v514
    %v2823 = vunpack.c.l.b16 %v515
    %v2824 = vunpack.c.l.b16 %v516
    %v2825 = vunpack.c.l.b16 %v517
    %v2826 = vunpack.c.l.b16 %v518
    %v2827 = vunpack.c.l.b16 %v519
    %v2828 = vunpack.c.l.b16 %v520
    %v2829 = vunpack.c.l.b16 %v521
    %v2830 = vunpack.c.l.b16 %v522
    %v2831 = vunpack.c.l.b16 %v523
    %v2832 = vunpack.c.l.b16 %v524
    %v2833 = vunpack.c.l.b16 %v525
    %v2834 = vunpack.c.l.b16 %v526
    %v2835 = vunpack.c.l.b16 %v527
    %v2836 = vunpack.c.l.b16 %v528
    %v2837 = vunpack.c.l.b16 %v529
    %v2838 = vunpack.c.l.b16 %v530
    %v2839 = vunpack.c.l.b16 %v531
    %v2840 = vunpack.c.l.b16 %v532
    %v2841 = vunpack.c.l.b16 %v533
    %v2842 = vunpack.c.l.b16 %v534
    %v2843 = vunpack.c.l.b16 %v535
    %v2844 = vunpack.c.l.b16 %v536
    %v2845 = vunpack.c.l.b16 %v537
    %v2846 = vunpack.c.l.b16 %v538
    %v2847 = vunpack.c.l.b16 %v539
    %v2848 = vunpack.c.l.b16 %v540
    %v2849 = vunpack.c.l.b16 %v541
    %v2850 = vunpack.c.l.b16 %v542
    %v2851 = vunpack.c.l.b16 %v543
    %v2852 = vunpack.c.l.b16 %v544
    %v2853 = vunpack.c.l.b16 %v545
    %v2854 = vunpack.c.l.b16 %v546
    %v2855 = vunpack.c.l.b16 %v547
    %v2856 = vunpack.c.l.b16 %v548
    %v2857 = vunpack.c.l.b16 %v549
    %v2858 = vunpack.c.l.b16 %v550
    %v2859 = vunpack.c.l.b16 %v551
    %v2860 = vunpack.c.l.b16 %v552
    %v2861 = vunpack.c.l.b16 %v553
    %v2862 = vunpack.c.l.b16 %v554
    %v2863 = vunpack.c.l.b16 %v555
    %v2864 = vunpack.c.l.b16 %v556
    %v2865 = vunpack.c.l.b16 %v557
    %v2866 = vunpack.c.l.b16 %v558
    %v2867 = vunpack.c.l.b16 %v559
    %v2868 = vunpack.c.l.b16 %v560
    %v2869 = vunpack.c.l.b16 %v561
    %v2870 = vunpack.c.l.b16 %v562
    %v2871 = vunpack.c.l.b16 %v563
    %v2872 = vunpack.c.l.b16 %v564
    %v2873 = vunpack.c.l.b16 %v565
    %v2874 = vunpack.c.l.b16 %v566
    %v2875 = vunpack.c.l.b16 %v567
    %v2876 = vunpack.c.l.b16 %v568
    %v2877 = vunpack.c.l.b16 %v569
    %v2878 = vunpack.c.l.b16 %v570
    %v2879 = vunpack.c.l.b16 %v571
    %v2880 = vunpack.c.l.b16 %v572
    %v2881 = vunpack.c.l.b16 %v573
    %v2882 = vunpack.c.l.b16 %v574
    %v2883 = vunpack.c.l.b16 %v575
    %v2884 = vunpack.c.l.b16 %v576
    %v2885 = vunpack.c.l.b16 %v577
    %v2886 = vunpack.c.l.b16 %v578
    %v2887 = vunpack.c.l.b16 %v579
    %v2888 = vunpack.c.l.b16 %v580
    %v2889 = vunpack.c.l.b16 %v581
    %v2890 = vunpack.c.l.b16 %v582
    %v2891 = vunpack.c.l.b16 %v583
    %v2892 = vunpack.c.l.b16 %v584
    %v2893 = vunpack.c.l.b16 %v585
    %v2894 = vunpack.c.l.b16 %v586
    %v2895 = vunpack.c.l.b16 %v587
    %v2896 = vunpack.c.l.b16 %v588
    %v2897 = vunpack.c.l.b16 %v589
    %v2898 = vunpack.c.l.b16 %v590
    %v2899 = vunpack.c.l.b16 %v591
    %v2900 = vunpack.c.l.b16 %v592
    %v2901 = vunpack.c.l.b16 %v593
    %v2902 = vunpack.c.l.b16 %v594
    %v2903 = vunpack.c.l.b16 %v595
    %v2904 = vunpack.c.l.b16 %v596
    %v2905 = vunpack.c.l.b16 %v597
    %v2906 = vunpack.c.l.b16 %v598
    %v2907 = vunpack.c.l.b16 %v599
    %v2908 = vunpack.c.l.b16 %v600
    %v2909 = vunpack.c.l.b16 %v601
    %v2910 = vunpack.c.l.b16 %v602
    %v2911 = vunpack.c.l.b16 %v603
    %v2912 = vunpack.c.l.b16 %v604
    %v2913 = vunpack.c.l.b16 %v605
    %v2914 = vunpack.c.l.b16 %v606
    %v2915 = vunpack.c.l.b16 %v607
    %v2916 = vunpack.c.l.b16 %v608
    %v2917 = vunpack.c.l.b16 %v609
    %v2918 = vunpack.c.l.b16 %v610
    %v2919 = vunpack.c.l.b16 %v611
    %v2920 = vunpack.c.l.b16 %v612
    %v2921 = vunpack.c.l.b16 %v613
    %v2922 = vunpack.c.l.b16 %v614
    %v2923 = vunpack.c.l.b16 %v615
    %v2924 = vunpack.c.l.b16 %v616
    %v2925 = vunpack.c.l.b16 %v617
    %v2926 = vunpack.c.l.b16 %v618
    %v2927 = vunpack.c.l.b16 %v619
    %v2928 = vunpack.c.l.b16 %v620
    %v2929 = vunpack.c.l.b16 %v621
    %v2930 = vunpack.c.l.b16 %v622
    %v2931 = vunpack.c.l.b16 %v623
    %v2932 = vunpack.c.l.b16 %v624
    %v2933 = vunpack.c.l.b16 %v625
    %v2934 = vunpack.c.l.b16 %v626
    %v2935 = vunpack.c.l.b16 %v627
    %v2936 = vunpack.c.l.b16 %v628
    %v2937 = vunpack.c.l.b16 %v629
    %v2938 = vunpack.c.l.b16 %v630
    %v2939 = vunpack.c.l.b16 %v631
    %v2940 = vunpack.c.l.b16 %v632
    %v2941 = vunpack.c.l.b16 %v633
    %v2942 = vunpack.c.l.b16 %v634
    %v2943 = vunpack.c.l.b16 %v635
    %v2944 = vunpack.c.l.b16 %v636
    %v2945 = vunpack.c.l.b16 %v637
    %v2946 = vunpack.c.l.b16 %v638
    %v2947 = vunpack.c.l.b16 %v639
    %v2948 = vunpack.c.l.b16 %v640
    %v2949 = vunpack.c.l.b16 %v641
    %v2950 = vunpack.c.l.b16 %v642
    %v2951 = vunpack.c.l.b16 %v643
    %v2952 = vunpack.c.l.b16 %v644
    %v2953 = vunpack.c.l.b16 %v645
    %v2954 = vunpack.c.l.b16 %v646
    %v2955 = vunpack.c.l.b16 %v647
    %v2956 = vunpack.c.l.b16 %v648
    %v2957 = vunpack.c.l.b16 %v649
    %v2958 = vunpack.c.l.b16 %v650
    %v2959 = vunpack.c.l.b16 %v651
    %v2960 = vunpack.c.l.b16 %v652
    %v2961 = vunpack.c.l.b16 %v653
    %v2962 = vunpack.c.l.b16 %v654
    %v2963 = vunpack.c.l.b16 %v655
    %v2964 = vunpack.c.l.b16 %v656
    %v2965 = vunpack.c.l.b16 %v657
    %v2966 = vunpack.c.l.b16 %v658
    %v2967 = vunpack.c.l.b16 %v659
    %v2968 = vunpack.c.l.b16 %v660
    %v2969 = vunpack.c.l.b16 %v661
    %v2970 = vunpack.c.l.b16 %v662
    %v2971 = vunpack.c.l.b16 %v663
    %v2972 = vunpack.c.l.b16 %v664
    %v2973 = vunpack.c.l.b16 %v665
    %v2974 = vunpack.c.l.b16 %v666
    %v2975 = vunpack.c.l.b16 %v667
    %v2976 = vunpack.c.l.b16 %v668
    %v2977 = vunpack.c.l.b16 %v669
    %v2978 = vunpack.c.l.b16 %v670
    %v2979 = vunpack.c.l.b16 %v671
    %v2980 = vunpack.c.l.b16 %v672
    %v2981 = vunpack.c.l.b16 %v673
    %v2982 = vunpack.c.l.b16 %v674
    %v2983 = vunpack.c.l.b16 %v675
    %v2984 = vunpack.c.l.b16 %v676
    %v2985 = vunpack.c.l.b16 %v677
    %v2986 = vunpack.c.l.b16 %v678
    %v2987 = vunpack.c.l.b16 %v679
    %v2988 = vunpack.c.l.b16 %v680
    %v2989 = vunpack.c.l.b16 %v681
    %v2990 = vunpack.c.l.b16 %v682
    %v2991 = vunpack.c.l.b16 %v683
    %v2992 = vunpack.c.l.b16 %v684
    %v2993 = vunpack.c.l.b16 %v685
    %v2994 = vunpack.c.l.b16 %v686
    %v2995 = vunpack.c.l.b16 %v687
    %v2996 = vunpack.c.l.b16 %v688
    %v2997 = vunpack.c.l.b16 %v689
    %v2998 = vunpack.c.l.b16 %v690
    %v2999 = vunpack.c.l.b16 %v691
    %v3000 = vunpack.c.l.b16 %v692
    %v3001 = vunpack.c.l.b16 %v693
    %v3002 = vunpack.c.l.b16 %v694
    %v3003 = vunpack.c.l.b16 %v695
    %v3004 = vunpack.c.l.b16 %v696
    %v3005 = vunpack.c.l.b16 %v697
    %v3006 = vunpack.c.l.b16 %v698
    %v3007 = vunpack.c.l.b16 %v699
    %v3008 = vunpack.c.l.b16 %v700
    %v3009 = vunpack.c.l.b16 %v701
    %v3010 = vunpack.c.l.b16 %v702
    %v3011 = vunpack.c.l.b16 %v703
    %v3012 = vunpack.c.l.b16 %v704
    %v3013 = vunpack.c.l.b16 %v705
    %v3014 = vunpack.c.l.b16 %v706
    %v3015 = vunpack.c.l.b16 %v707
    %v3016 = vunpack.c.l.b16 %v708
    %v3017 = vunpack.c.l.b16 %v709
    %v3018 = vunpack.c.l.b16 %v710
    %v3019 = vunpack.c.l.b16 %v711
    %v3020 = vunpack.c.l.b16 %v712
    %v3021 = vunpack.c.l.b16 %v713
    %v3022 = vunpack.c.l.b16 %v714
    %v3023 = vunpack.c.l.b16 %v715
    %v3024 = vunpack.c.l.b16 %v716
    %v3025 = vunpack.c.l.b16 %v717
    %v3026 = vunpack.c.l.b16 %v718
    %v3027 = vunpack.c.l.b16 %v719
    %v3028 = vunpack.c.l.b16 %v720
    %v3029 = vunpack.c.l.b16 %v721
    %v3030 = vunpack.c.l.b16 %v722
    %v3031 = vunpack.c.l.b16 %v723
    %v3032 = vunpack.c.l.b16 %v724
    %v3033 = vunpack.c.l.b16 %v725
    %v3034 = vunpack.c.l.b16 %v726
    %v3035 = vunpack.c.l.b16 %v727
    %v3036 = vunpack.c.l.b16 %v728
    %v3037 = vunpack.c.l.b16 %v729
    %v3038 = vunpack.c.l.b16 %v730
    %v3039 = vunpack.c.l.b16 %v731
    %v3040 = vunpack.c.l.b16 %v732
    %v3041 = vunpack.c.l.b16 %v733
    %v3042 = vunpack.c.l.b16 %v734
    %v3043 = vunpack.c.l.b16 %v735
    %v3044 = vunpack.c.l.b16 %v736
    %v3045 = vunpack.c.l.b16 %v737
    %v3046 = vunpack.c.l.b16 %v738
    %v3047 = vunpack.c.l.b16 %v739
    %v3048 = vunpack.c.l.b16 %v740
    %v3049 = vunpack.c.l.b16 %v741
    %v3050 = vunpack.c.l.b16 %v742
    %v3051 = vunpack.c.l.b16 %v743
    %v3052 = vunpack.c.l.b16 %v744
    %v3053 = vunpack.c.l.b16 %v745
    %v3054 = vunpack.c.l.b16 %v746
    %v3055 = vunpack.c.l.b16 %v747
    %v3056 = vunpack.c.l.b16 %v748
    %v3057 = vunpack.c.l.b16 %v749
    %v3058 = vunpack.c.l.b16 %v750
    %v3059 = vunpack.c.l.b16 %v751
    %v3060 = vunpack.c.l.b16 %v752
    %v3061 = vunpack.c.l.b16 %v753
    %v3062 = vunpack.c.l.b16 %v754
    %v3063 = vunpack.c.l.b16 %v755
    %v3064 = vunpack.c.l.b16 %v756
    %v3065 = vunpack.c.l.b16 %v757
    %v3066 = vunpack.c.l.b16 %v758
    %v3067 = vunpack.c.l.b16 %v759
    %v3068 = vunpack.c.l.b16 %v760
    %v3069 = vunpack.c.l.b16 %v761
    %v3070 = vunpack.c.l.b16 %v762
    %v3071 = vunpack.c.l.b16 %v763
    %v3072 = vunpack.c.l.b16 %v764
    %v3073 = vunpack.c.l.b16 %v765
    %v3074 = vunpack.c.l.b16 %v766
    %v3075 = vunpack.c.l.b16 %v767
    %v3076 = vunpack.c.l.b16 %v768
    %v3077 = vunpack.c.l.b16 %v769
    %v3078 = vunpack.c.l.b16 %v770
    %v3079 = vunpack.c.l.b16 %v771
    %v3080 = vunpack.c.l.b16 %v772
    %v3081 = vunpack.c.l.b16 %v773
    %v3082 = vunpack.c.l.b16 %v774
    %v3083 = vunpack.c.l.b16 %v775
    %v3084 = vunpack.c.l.b16 %v776
    %v3085 = vunpack.c.l.b16 %v777
    %v3086 = vunpack.c.l.b16 %v778
    %v3087 = vunpack.c.l.b16 %v779
    %v3088 = vunpack.c.l.b16 %v780
    %v3089 = vunpack.c.l.b16 %v781
    %v3090 = vunpack.c.l.b16 %v782
    %v3091 = vunpack.c.l.b16 %v783
    %v3092 = vunpack.c.l.b16 %v784
    %v3093 = vunpack.c.l.b16 %v785
    %v3094 = vunpack.c.l.b16 %v786
    %v3095 = vunpack.c.l.b16 %v787
    %v3096 = vunpack.c.l.b16 %v788
    %v3097 = vunpack.c.l.b16 %v789
    %v3098 = vunpack.c.l.b16 %v790
    %v3099 = vunpack.c.l.b16 %v791
    %v3100 = vunpack.c.l.b16 %v792
    %v3101 = vunpack.c.l.b16 %v793
    %v3102 = vunpack.c.l.b16 %v794
    %v3103 = vunpack.c.l.b16 %v795
    %v3104 = vunpack.c.l.b16 %v796
    %v3105 = vunpack.c.l.b16 %v797
    %v3106 = vunpack.c.l.b16 %v798
    %v3107 = vunpack.c.l.b16 %v799
    %v3108 = vunpack.c.l.b16 %v800
    %v3109 = vunpack.c.l.b16 %v801
    %v3110 = vunpack.c.l.b16 %v802
    %v3111 = vunpack.c.l.b16 %v803
    %v3112 = vunpack.c.l.b16 %v804
    %v3113 = vunpack.c.l.b16 %v805
    %v3114 = vunpack.c.l.b16 %v806
    %v3115 = vunpack.c.l.b16 %v807
    %v3116 = vunpack.c.l.b16 %v808
    %v3117 = vunpack.c.l.b16 %v809
    %v3118 = vunpack.c.l.b16 %v810
    %v3119 = vunpack.c.l.b16 %v811
    %v3120 = vunpack.c.l.b16 %v812
    %v3121 = vunpack.c.l.b16 %v813
    %v3122 = vunpack.c.l.b16 %v814
    %v3123 = vunpack.c.l.b16 %v815
    %v3124 = vunpack.c.l.b16 %v816
    %v3125 = vunpack.c.l.b16 %v817
    %v3126 = vunpack.c.l.b16 %v818
    %v3127 = vunpack.c.l.b16 %v819
    %v3128 = vunpack.c.l.b16 %v820
    %v3129 = vunpack.c.l.b16 %v821
    %v3130 = vunpack.c.l.b16 %v822
    %v3131 = vunpack.c.l.b16 %v823
    %v3132 = vunpack.c.l.b16 %v824
    %v3133 = vunpack.c.l.b16 %v825
    %v3134 = vunpack.c.l.b16 %v826
    %v3135 = vunpack.c.l.b16 %v827
    %v3136 = vunpack.c.l.b16 %v828
    %v3137 = vunpack.c.l.b16 %v829
    %v3138 = vunpack.c.l.b16 %v830
    %v3139 = vunpack.c.l.b16 %v831
    %v3140 = vunpack.c.l.b16 %v832
    %v3141 = vunpack.c.l.b16 %v833
    %v3142 = vunpack.c.l.b16 %v834
    %v3143 = vunpack.c.l.b16 %v835
    %v3144 = vunpack.c.l.b16 %v836
    %v3145 = vunpack.c.l.b16 %v837
    %v3146 = vunpack.c.l.b16 %v838
    %v3147 = vunpack.c.l.b16 %v839
    %v3148 = vunpack.c.l.b16 %v840
    %v3149 = vunpack.c.l.b16 %v841
    %v3150 = vunpack.c.l.b16 %v842
    %v3151 = vunpack.c.l.b16 %v843
    %v3152 = vunpack.c.l.b16 %v844
    %v3153 = vunpack.c.l.b16 %v845
    %v3154 = vunpack.c.l.b16 %v846
    %v3155 = vunpack.c.l.b16 %v847
    %v3156 = vunpack.c.l.b16 %v848
    %v3157 = vunpack.c.l.b16 %v849
    %v3158 = vunpack.c.l.b16 %v850
    %v3159 = vunpack.c.l.b16 %v851
    %v3160 = vunpack.c.l.b16 %v852
    %v3161 = vunpack.c.l.b16 %v853
    %v3162 = vunpack.c.l.b16 %v854
    %v3163 = vunpack.c.l.b16 %v855
    %v3164 = vunpack.c.l.b16 %v856
    %v3165 = vunpack.c.l.b16 %v857
    %v3166 = vunpack.c.l.b16 %v858
    %v3167 = vunpack.c.l.b16 %v859
    %v3168 = vunpack.c.l.b16 %v860
    %v3169 = vunpack.c.l.b16 %v861
    %v3170 = vunpack.c.l.b16 %v862
    %v3171 = vunpack.c.l.b16 %v863
    %v3172 = vunpack.c.l.b16 %v864
    %v3173 = vunpack.c.l.b16 %v865
    %v3174 = vunpack.c.l.b16 %v866
    %v3175 = vunpack.c.l.b16 %v867
    %v3176 = vunpack.c.l.b16 %v868
    %v3177 = vunpack.c.l.b16 %v869
    %v3178 = vunpack.c.l.b16 %v870
    %v3179 = vunpack.c.l.b16 %v871
    %v3180 = vunpack.c.l.b16 %v872
    %v3181 = vunpack.c.l.b16 %v873
    %v3182 = vunpack.c.l.b16 %v874
    %v3183 = vunpack.c.l.b16 %v875
    %v3184 = vunpack.c.l.b16 %v876
    %v3185 = vunpack.c.l.b16 %v877
    %v3186 = vunpack.c.l.b16 %v878
    %v3187 = vunpack.c.l.b16 %v879
    %v3188 = vunpack.c.l.b16 %v880
    %v3189 = vunpack.c.l.b16 %v881
    %v3190 = vunpack.c.l.b16 %v882
    %v3191 = vunpack.c.l.b16 %v883
    %v3192 = vunpack.c.l.b16 %v884
    %v3193 = vunpack.c.l.b16 %v885
    %v3194 = vunpack.c.l.b16 %v886
    %v3195 = vunpack.c.l.b16 %v887
    %v3196 = vunpack.c.l.b16 %v888
    %v3197 = vunpack.c.l.b16 %v889
    %v3198 = vunpack.c.l.b16 %v890
    %v3199 = vunpack.c.l.b16 %v891
    %v3200 = vunpack.c.l.b16 %v892
    %v3201 = vunpack.c.l.b16 %v893
    %v3202 = vunpack.c.l.b16 %v894
    %v3203 = vunpack.c.l.b16 %v895
    %v3204 = vunpack.c.l.b16 %v896
    %v3205 = vunpack.c.l.b16 %v897
    %v3206 = vunpack.c.l.b16 %v898
    %v3207 = vunpack.c.l.b16 %v899
    %v3208 = vunpack.c.l.b16 %v900
    %v3209 = vunpack.c.l.b16 %v901
    %v3210 = vunpack.c.l.b16 %v902
    %v3211 = vunpack.c.l.b16 %v903
    %v3212 = vunpack.c.l.b16 %v904
    %v3213 = vunpack.c.l.b16 %v905
    %v3214 = vunpack.c.l.b16 %v906
    %v3215 = vunpack.c.l.b16 %v907
    %v3216 = vunpack.c.l.b16 %v908
    %v3217 = vunpack.c.l.b16 %v909
    %v3218 = vunpack.c.l.b16 %v910
    %v3219 = vunpack.c.l.b16 %v911
    %v3220 = vunpack.c.l.b16 %v912
    %v3221 = vunpack.c.l.b16 %v913
    %v3222 = vunpack.c.l.b16 %v914
    %v3223 = vunpack.c.l.b16 %v915
    %v3224 = vunpack.c.l.b16 %v916
    %v3225 = vunpack.c.l.b16 %v917
    %v3226 = vunpack.c.l.b16 %v918
    %v3227 = vunpack.c.l.b16 %v919
    %v3228 = vunpack.c.l.b16 %v920
    %v3229 = vunpack.c.l.b16 %v921
    %v3230 = vunpack.c.l.b16 %v922
    %v3231 = vunpack.c.l.b16 %v923
    %v3232 = vunpack.c.l.b16 %v924
    %v3233 = vunpack.c.l.b16 %v925
    %v3234 = vunpack.c.l.b16 %v926
    %v3235 = vunpack.c.l.b16 %v927
    %v3236 = vunpack.c.l.b16 %v928
    %v3237 = vunpack.c.l.b16 %v929
    %v3238 = vunpack.c.l.b16 %v930
    %v3239 = vunpack.c.l.b16 %v931
    %v3240 = vunpack.c.l.b16 %v932
    %v3241 = vunpack.c.l.b16 %v933
    %v3242 = vunpack.c.l.b16 %v934
    %v3243 = vunpack.c.l.b16 %v935
    %v3244 = vunpack.c.l.b16 %v936
    %v3245 = vunpack.c.l.b16 %v937
    %v3246 = vunpack.c.l.b16 %v938
    %v3247 = vunpack.c.l.b16 %v939
    %v3248 = vunpack.c.l.b16 %v940
    %v3249 = vunpack.c.l.b16 %v941
    %v3250 = vunpack.c.l.b16 %v942
    %v3251 = vunpack.c.l.b16 %v943
    %v3252 = vunpack.c.l.b16 %v944
    %v3253 = vunpack.c.l.b16 %v945
    %v3254 = vunpack.c.l.b16 %v946
    %v3255 = vunpack.c.l.b16 %v947
    %v3256 = vunpack.c.l.b16 %v948
    %v3257 = vunpack.c.l.b16 %v949
    %v3258 = vunpack.c.l.b16 %v950
    %v3259 = vunpack.c.l.b16 %v951
    %v3260 = vunpack.c.l.b16 %v952
    %v3261 = vunpack.c.l.b16 %v953
    %v3262 = vunpack.c.l.b16 %v954
    %v3263 = vunpack.c.l.b16 %v955
    %v3264 = vunpack.c.l.b16 %v956
    %v3265 = vunpack.c.l.b16 %v957
    %v3266 = vunpack.c.l.b16 %v958
    %v3267 = vunpack.c.l.b16 %v959
    %v3268 = vunpack.c.l.b16 %v960
    %v3269 = vunpack.c.l.b16 %v961
    %v3270 = vunpack.c.l.b16 %v962
    %v3271 = vunpack.c.l.b16 %v963
    %v3272 = vunpack.c.l.b16 %v964
    %v3273 = vunpack.c.l.b16 %v965
    %v3274 = vunpack.c.l.b16 %v966
    %v3275 = vunpack.c.l.b16 %v967
    %v3276 = vunpack.c.l.b16 %v968
    %v3277 = vunpack.c.l.b16 %v969
    %v3278 = vunpack.c.l.b16 %v970
    %v3279 = vunpack.c.l.b16 %v971
    %v3280 = vunpack.c.l.b16 %v972
    %v3281 = vunpack.c.l.b16 %v973
    %v3282 = vunpack.c.l.b16 %v974
    %v3283 = vunpack.c.l.b16 %v975
    %v3284 = vunpack.c.l.b16 %v976
    %v3285 = vunpack.c.l.b16 %v977
    %v3286 = vunpack.c.l.b16 %v978
    %v3287 = vunpack.c.l.b16 %v979
    %v3288 = vunpack.c.l.b16 %v980
    %v3289 = vunpack.c.l.b16 %v981
    %v3290 = vunpack.c.l.b16 %v982
    %v3291 = vunpack.c.l.b16 %v983
    %v3292 = vunpack.c.l.b16 %v984
    %v3293 = vunpack.c.l.b16 %v985
    %v3294 = vunpack.c.l.b16 %v986
    %v3295 = vunpack.c.l.b16 %v987
    %v3296 = vunpack.c.l.b16 %v988
    %v3297 = vunpack.c.l.b16 %v989
    %v3298 = vunpack.c.l.b16 %v990
    %v3299 = vunpack.c.l.b16 %v991
    %v3300 = vunpack.c.l.b16 %v992
    %v3301 = vunpack.c.l.b16 %v993
    %v3302 = vunpack.c.l.b16 %v994
    %v3303 = vunpack.c.l.b16 %v995
    %v3304 = vunpack.c.l.b16 %v996
    %v3305 = vunpack.c.l.b16 %v997
    %v3306 = vunpack.c.l.b16 %v998
    %v3307 = vunpack.c.l.b16 %v999
    %v3308 = vunpack.c.l.b16 %v1000
    %v3309 = vunpack.c.l.b16 %v1001
    %v3310 = vunpack.c.l.b16 %v1002
    %v3311 = vunpack.c.l.b16 %v1003
    %v3312 = vunpack.c.l.b16 %v1004
    %v3313 = vunpack.c.l.b16 %v1005
    %v3314 = vunpack.c.l.b16 %v1006
    %v3315 = vunpack.c.l.b16 %v1007
    %v3316 = vunpack.c.l.b16 %v1008
    %v3317 = vunpack.c.l.b16 %v1009
    %v3318 = vunpack.c.l.b16 %v1010
    %v3319 = vunpack.c.l.b16 %v1011
    %v3320 = vunpack.c.l.b16 %v1012
    %v3321 = vunpack.c.l.b16 %v1013
    %v3322 = vunpack.c.l.b16 %v1014
    %v3323 = vunpack.c.l.b16 %v1015
    %v3324 = vunpack.c.l.b16 %v1016
    %v3325 = vunpack.c.l.b16 %v1017
    %v3326 = vunpack.c.l.b16 %v1018
    %v3327 = vunpack.c.l.b16 %v1019
    %v3328 = vunpack.c.l.b16 %v1020
    %v3329 = vunpack.c.l.b16 %v1021
    %v3330 = vunpack.c.l.b16 %v1022
    %v3331 = vunpack.c.l.b16 %v1023
    %v3332 = vunpack.c.l.b16 %v1024
    %v3333 = vunpack.c.l.b16 %v1025
    %v3334 = vunpack.c.l.b16 %v1026
    %v3335 = vunpack.c.l.b16 %v1027
    %v3336 = vunpack.c.l.b16 %v1028
    %v3337 = vunpack.c.l.b16 %v1029
    %v3338 = vunpack.c.l.b16 %v1030
    %v3339 = vunpack.c.l.b16 %v1031
    %v3340 = vunpack.c.l.b16 %v1032
    %v3341 = vunpack.c.l.b16 %v1033
    %v3342 = vunpack.c.l.b16 %v1034
    %v3343 = vunpack.c.l.b16 %v1035
    %v3344 = vunpack.c.l.b16 %v1036
    %v3345 = vunpack.c.l.b16 %v1037
    %v3346 = vunpack.c.l.b16 %v1038
    %v3347 = vunpack.c.l.b16 %v1039
    %v3348 = vunpack.c.l.b16 %v1040
    %v3349 = vunpack.c.l.b16 %v1041
    %v3350 = vunpack.c.l.b16 %v1042
    %v3351 = vunpack.c.l.b16 %v1043
    %v3352 = vunpack.c.l.b16 %v1044
    %v3353 = vunpack.c.l.b16 %v1045
    %v3354 = vunpack.c.l.b16 %v1046
    %v3355 = vunpack.c.l.b16 %v1047
    %v3356 = vunpack.c.l.b16 %v1048
    %v3357 = vunpack.c.l.b16 %v1049
    %v3358 = vunpack.c.l.b16 %v1050
    %v3359 = vunpack.c.l.b16 %v1051
    %v3360 = vunpack.c.l.b16 %v1052
    %v3361 = vunpack.c.l.b16 %v1053
    %v3362 = vunpack.c.l.b16 %v1054
    %v3363 = vunpack.c.l.b16 %v1055
    %v3364 = vunpack.c.l.b16 %v1056
    %v3365 = vunpack.c.l.b16 %v1057
    %v3366 = vunpack.c.l.b16 %v1058
    %v3367 = vunpack.c.l.b16 %v1059
    %v3368 = vunpack.c.l.b16 %v1060
    %v3369 = vunpack.c.l.b16 %v1061
    %v3370 = vunpack.c.l.b16 %v1062
    %v3371 = vunpack.c.l.b16 %v1063
    %v3372 = vunpack.c.l.b16 %v1064
    %v3373 = vunpack.c.l.b16 %v1065
    %v3374 = vunpack.c.l.b16 %v1066
    %v3375 = vunpack.c.l.b16 %v1067
    %v3376 = vunpack.c.l.b16 %v1068
    %v3377 = vunpack.c.l.b16 %v1069
    %v3378 = vunpack.c.l.b16 %v1070
    %v3379 = vunpack.c.l.b16 %v1071
    %v3380 = vunpack.c.l.b16 %v1072
    %v3381 = vunpack.c.l.b16 %v1073
    %v3382 = vunpack.c.l.b16 %v1074
    %v3383 = vunpack.c.l.b16 %v1075
    %v3384 = vunpack.c.l.b16 %v1076
    %v3385 = vunpack.c.l.b16 %v1077
    %v3386 = vunpack.c.l.b16 %v1078
    %v3387 = vunpack.c.l.b16 %v1079
    %v3388 = vunpack.c.l.b16 %v1080
    %v3389 = vunpack.c.l.b16 %v1081
    %v3390 = vunpack.c.l.b16 %v1082
    %v3391 = vunpack.c.l.b16 %v1083
    %v3392 = vunpack.c.l.b16 %v1084
    %v3393 = vunpack.c.l.b16 %v1085
    %v3394 = vunpack.c.l.b16 %v1086
    %v3395 = vunpack.c.l.b16 %v1087
    %v3396 = vunpack.c.l.b16 %v1088
    %v3397 = vunpack.c.l.b16 %v1089
    %v3398 = vunpack.c.l.b16 %v1090
    %v3399 = vunpack.c.l.b16 %v1091
    %v3400 = vunpack.c.l.b16 %v1092
    %v3401 = vunpack.c.l.b16 %v1093
    %v3402 = vunpack.c.l.b16 %v1094
    %v3403 = vunpack.c.l.b16 %v1095
    %v3404 = vunpack.c.l.b16 %v1096
    %v3405 = vunpack.c.l.b16 %v1097
    %v3406 = vunpack.c.l.b16 %v1098
    %v3407 = vunpack.c.l.b16 %v1099
    %v3408 = vunpack.c.l.b16 %v1100
    %v3409 = vunpack.c.l.b16 %v1101
    %v3410 = vunpack.c.l.b16 %v1102
    %v3411 = vunpack.c.l.b16 %v1103
    %v3412 = vunpack.c.l.b16 %v1104
    %v3413 = vunpack.c.l.b16 %v1105
    %v3414 = vunpack.c.l.b16 %v1106
    %v3415 = vunpack.c.l.b16 %v1107
    %v3416 = vunpack.c.l.b16 %v1108
    %v3417 = vunpack.c.l.b16 %v1109
    %v3418 = vunpack.c.l.b16 %v1110
    %v3419 = vunpack.c.l.b16 %v1111
    %v3420 = vunpack.c.l.b16 %v1112
    %v3421 = vunpack.c.l.b16 %v1113
    %v3422 = vunpack.c.l.b16 %v1114
    %v3423 = vunpack.c.l.b16 %v1115
    %v3424 = vunpack.c.l.b16 %v1116
    %v3425 = vunpack.c.l.b16 %v1117
    %v3426 = vunpack.c.l.b16 %v1118
    %v3427 = vunpack.c.l.b16 %v1119
    %v3428 = vunpack.c.l.b16 %v1120
    %v3429 = vunpack.c.l.b16 %v1121
    %v3430 = vunpack.c.l.b16 %v1122
    %v3431 = vunpack.c.l.b16 %v1123
    %v3432 = vunpack.c.l.b16 %v1124
    %v3433 = vunpack.c.l.b16 %v1125
    %v3434 = vunpack.c.l.b16 %v1126
    %v3435 = vunpack.c.l.b16 %v1127
    %v3436 = vunpack.c.l.b16 %v1128
    %v3437 = vunpack.c.l.b16 %v1129
    %v3438 = vunpack.c.l.b16 %v1130
    %v3439 = vunpack.c.l.b16 %v1131
    %v3440 = vunpack.c.l.b16 %v1132
    %v3441 = vunpack.c.l.b16 %v1133
    %v3442 = vunpack.c.l.b16 %v1134
    %v3443 = vunpack.c.l.b16 %v1135
    %v3444 = vunpack.c.l.b16 %v1136
    %v3445 = vunpack.c.l.b16 %v1137
    %v3446 = vunpack.c.l.b16 %v1138
    %v3447 = vunpack.c.l.b16 %v1139
    %v3448 = vunpack.c.l.b16 %v1140
    %v3449 = vunpack.c.l.b16 %v1141
    %v3450 = vunpack.c.l.b16 %v1142
    %v3451 = vunpack.c.l.b16 %v1143
    %v3452 = vunpack.c.l.b16 %v1144
    %v3453 = vunpack.c.l.b16 %v1145
    %v3454 = vunpack.c.l.b16 %v1146
    %v3455 = vunpack.c.l.b16 %v1147
    %v3456 = vunpack.c.l.b16 %v1148
    %v3457 = vunpack.c.l.b16 %v1149
    %v3458 = vunpack.c.l.b16 %v1150
    %v3459 = vunpack.c.l.b16 %v1151
    %v3460 = vunpack.c.l.b16 %v1152
    %v3461 = vunpack.c.l.b16 %v1153
    %v3462 = vunpack.c.l.b16 %v1154
    %v3463 = vunpack.c.l.b16 %v1155
    %v3464 = vunpack.c.l.b16 %v1156
    %v3465 = vunpack.c.l.b16 %v1157
    %v3466 = vunpack.c.l.b16 %v1158
    %v3467 = vunpack.c.l.b16 %v1159
    %v3468 = vunpack.c.l.b16 %v1160
    %v3469 = vunpack.c.l.b16 %v1161
    %v3470 = vunpack.c.l.b16 %v1162
    %v3471 = vunpack.c.l.b16 %v1163
    %v3472 = vunpack.c.l.b16 %v1164
    %v3473 = vunpack.c.l.b16 %v1165
    %v3474 = vunpack.c.l.b16 %v1166
    %v3475 = vunpack.c.l.b16 %v1167
    %v3476 = vunpack.c.l.b16 %v1168
    %v3477 = vunpack.c.l.b16 %v1169
    %v3478 = vunpack.c.l.b16 %v1170
    %v3479 = vunpack.c.l.b16 %v1171
    %v3480 = vunpack.c.l.b16 %v1172
    %v3481 = vunpack.c.l.b16 %v1173
    %v3482 = vunpack.c.l.b16 %v1174
    %v3483 = vunpack.c.l.b16 %v1175
    %v3484 = vunpack.c.l.b16 %v1176
    %v3485 = vunpack.c.l.b16 %v1177
    %v3486 = vunpack.c.l.b16 %v1178
    %v3487 = vunpack.c.l.b16 %v1179
    %v3488 = vunpack.c.l.b16 %v1180
    %v3489 = vunpack.c.l.b16 %v1181
    %v3490 = vunpack.c.l.b16 %v1182
    %v3491 = vunpack.c.l.b16 %v1183
    %v3492 = vunpack.c.l.b16 %v1184
    %v3493 = vunpack.c.l.b16 %v1185
    %v3494 = vunpack.c.l.b16 %v1186
    %v3495 = vunpack.c.l.b16 %v1187
    %v3496 = vunpack.c.l.b16 %v1188
    %v3497 = vunpack.c.l.b16 %v1189
    %v3498 = vunpack.c.l.b16 %v1190
    %v3499 = vunpack.c.l.b16 %v1191
    %v3500 = vunpack.c.l.b16 %v1192
    %v3501 = vunpack.c.l.b16 %v1193
    %v3502 = vunpack.c.l.b16 %v1194
    %v3503 = vunpack.c.l.b16 %v1195
    %v3504 = vunpack.c.l.b16 %v1196
    %v3505 = vunpack.c.l.b16 %v1197
    %v3506 = vunpack.c.l.b16 %v1198
    %v3507 = vunpack.c.l.b16 %v1199
    %v3508 = vunpack.c.l.b16 %v1200
    %v3509 = vunpack.c.l.b16 %v1201
    %v3510 = vunpack.c.l.b16 %v1202
    %v3511 = vunpack.c.l.b16 %v1203
    %v3512 = vunpack.c.l.b16 %v1204
    %v3513 = vunpack.c.l.b16 %v1205
    %v3514 = vunpack.c.l.b16 %v1206
    %v3515 = vunpack.c.l.b16 %v1207
    %v3516 = vunpack.c.l.b16 %v1208
    %v3517 = vunpack.c.l.b16 %v1209
    %v3518 = vunpack.c.l.b16 %v1210
    %v3519 = vunpack.c.l.b16 %v1211
    %v3520 = vunpack.c.l.b16 %v1212
    %v3521 = vunpack.c.l.b16 %v1213
    %v3522 = vunpack.c.l.b16 %v1214
    %v3523 = vunpack.c.l.b16 %v1215
    %v3524 = vunpack.c.l.b16 %v1216
    %v3525 = vunpack.c.l.b16 %v1217
    %v3526 = vunpack.c.l.b16 %v1218
    %v3527 = vunpack.c.l.b16 %v1219
    %v3528 = vunpack.c.l.b16 %v1220
    %v3529 = vunpack.c.l.b16 %v1221
    %v3530 = vunpack.c.l.b16 %v1222
    %v3531 = vunpack.c.l.b16 %v1223
    %v3532 = vunpack.c.l.b16 %v1224
    %v3533 = vunpack.c.l.b16 %v1225
    %v3534 = vunpack.c.l.b16 %v1226
    %v3535 = vunpack.c.l.b16 %v1227
    %v3536 = vunpack.c.l.b16 %v1228
    %v3537 = vunpack.c.l.b16 %v1229
    %v3538 = vunpack.c.l.b16 %v1230
    %v3539 = vunpack.c.l.b16 %v1231
    %v3540 = vunpack.c.l.b16 %v1232
    %v3541 = vunpack.c.l.b16 %v1233
    %v3542 = vunpack.c.l.b16 %v1234
    %v3543 = vunpack.c.l.b16 %v1235
    %v3544 = vunpack.c.l.b16 %v1236
    %v3545 = vunpack.c.l.b16 %v1237
    %v3546 = vunpack.c.l.b16 %v1238
    %v3547 = vunpack.c.l.b16 %v1239
    %v3548 = vunpack.c.l.b16 %v1240
    %v3549 = vunpack.c.l.b16 %v1241
    %v3550 = vunpack.c.l.b16 %v1242
    %v3551 = vunpack.c.l.b16 %v1243
    %v3552 = vunpack.c.l.b16 %v1244
    %v3553 = vunpack.c.l.b16 %v1245
    %v3554 = vunpack.c.l.b16 %v1246
    %v3555 = vunpack.c.l.b16 %v1247
    %v3556 = vunpack.c.l.b16 %v1248
    %v3557 = vunpack.c.l.b16 %v1249
    %v3558 = vunpack.c.l.b16 %v1250
    %v3559 = vunpack.c.l.b16 %v1251
    %v3560 = vunpack.c.l.b16 %v1252
    %v3561 = vunpack.c.l.b16 %v1253
    %v3562 = vunpack.c.l.b16 %v1254
    %v3563 = vunpack.c.l.b16 %v1255
    %v3564 = vunpack.c.l.b16 %v1256
    %v3565 = vunpack.c.l.b16 %v1257
    %v3566 = vunpack.c.l.b16 %v1258
    %v3567 = vunpack.c.l.b16 %v1259
    %v3568 = vunpack.c.l.b16 %v1260
    %v3569 = vunpack.c.l.b16 %v1261
    %v3570 = vunpack.c.l.b16 %v1262
    %v3571 = vunpack.c.l.b16 %v1263
    %v3572 = vunpack.c.l.b16 %v1264
    %v3573 = vunpack.c.l.b16 %v1265
    %v3574 = vunpack.c.l.b16 %v1266
    %v3575 = vunpack.c.l.b16 %v1267
    %v3576 = vunpack.c.l.b16 %v1268
    %v3577 = vunpack.c.l.b16 %v1269
    %v3578 = vunpack.c.l.b16 %v1270
    %v3579 = vunpack.c.l.b16 %v1271
    %v3580 = vunpack.c.l.b16 %v1272
    %v3581 = vunpack.c.l.b16 %v1273
    %v3582 = vunpack.c.l.b16 %v1274
    %v3583 = vunpack.c.l.b16 %v1275
    %v3584 = vunpack.c.l.b16 %v1276
    %v3585 = vunpack.c.l.b16 %v1277
    %v3586 = vunpack.c.l.b16 %v1278
    %v3587 = vunpack.c.l.b16 %v1279
    %v3588 = vunpack.c.l.b16 %v1280
    %v3589 = vunpack.c.l.b16 %v1281
    %v3590 = vunpack.c.l.b16 %v1282
    %v3591 = vunpack.c.l.b16 %v1283
    %v3592 = vunpack.c.l.b16 %v1284
    %v3593 = vunpack.c.l.b16 %v1285
    %v3594 = vunpack.c.l.b16 %v1286
    %v3595 = vunpack.c.l.b16 %v1287
    %v3596 = vunpack.c.l.b16 %v1288
    %v3597 = vunpack.c.l.b16 %v1289
    %v3598 = vunpack.c.l.b16 %v1290
    %v3599 = vunpack.c.l.b16 %v1291
    %v3600 = vunpack.c.l.b16 %v1292
    %v3601 = vunpack.c.l.b16 %v1293
    %v3602 = vunpack.c.l.b16 %v1294
    %v3603 = vunpack.c.l.b16 %v1295
    %v3604 = vunpack.c.l.b16 %v1296
    %v3605 = vunpack.c.l.b16 %v1297
    %v3606 = vunpack.c.l.b16 %v1298
    %v3607 = vunpack.c.l.b16 %v1299
    %v3608 = vunpack.c.l.b16 %v1300
    %v3609 = vunpack.c.l.b16 %v1301
    %v3610 = vunpack.c.l.b16 %v1302
    %v3611 = vunpack.c.l.b16 %v1303
    %v3612 = vunpack.c.l.b16 %v1304
    %v3613 = vunpack.c.l.b16 %v1305
    %v3614 = vunpack.c.l.b16 %v1306
    %v3615 = vunpack.c.l.b16 %v1307
    %v3616 = vunpack.c.l.b16 %v1308
    %v3617 = vunpack.c.l.b16 %v1309
    %v3618 = vunpack.c.l.b16 %v1310
    %v3619 = vunpack.c.l.b16 %v1311
    %v3620 = vunpack.c.l.b16 %v1312
    %v3621 = vunpack.c.l.b16 %v1313
    %v3622 = vunpack.c.l.b16 %v1314
    %v3623 = vunpack.c.l.b16 %v1315
    %v3624 = vunpack.c.l.b16 %v1316
    %v3625 = vunpack.c.l.b16 %v1317
    %v3626 = vunpack.c.l.b16 %v1318
    %v3627 = vunpack.c.l.b16 %v1319
    %v3628 = vunpack.c.l.b16 %v1320
    %v3629 = vunpack.c.l.b16 %v1321
    %v3630 = vunpack.c.l.b16 %v1322
    %v3631 = vunpack.c.l.b16 %v1323
    %v3632 = vunpack.c.l.b16 %v1324
    %v3633 = vunpack.c.l.b16 %v1325
    %v3634 = vunpack.c.l.b16 %v1326
    %v3635 = vunpack.c.l.b16 %v1327
    %v3636 = vunpack.c.l.b16 %v1328
    %v3637 = vunpack.c.l.b16 %v1329
    %v3638 = vunpack.c.l.b16 %v1330
    %v3639 = vunpack.c.l.b16 %v1331
    %v3640 = vunpack.c.l.b16 %v1332
    %v3641 = vunpack.c.l.b16 %v1333
    %v3642 = vunpack.c.l.b16 %v1334
    %v3643 = vunpack.c.l.b16 %v1335
    %v3644 = vunpack.c.l.b16 %v1336
    %v3645 = vunpack.c.l.b16 %v1337
    %v3646 = vunpack.c.l.b16 %v1338
    %v3647 = vunpack.c.l.b16 %v1339
    %v3648 = vunpack.c.l.b16 %v1340
    %v3649 = vunpack.c.l.b16 %v1341
    %v3650 = vunpack.c.l.b16 %v1342
    %v3651 = vunpack.c.l.b16 %v1343
    %v3652 = vunpack.c.l.b16 %v1344
    %v3653 = vunpack.c.l.b16 %v1345
    %v3654 = vunpack.c.l.b16 %v1346
    %v3655 = vunpack.c.l.b16 %v1347
    %v3656 = vunpack.c.l.b16 %v1348
    %v3657 = vunpack.c.l.b16 %v1349
    %v3658 = vunpack.c.l.b16 %v1350
    %v3659 = vunpack.c.l.b16 %v1351
    %v3660 = vunpack.c.l.b16 %v1352
    %v3661 = vunpack.c.l.b16 %v1353
    %v3662 = vunpack.c.l.b16 %v1354
    %v3663 = vunpack.c.l.b16 %v1355
    %v3664 = vunpack.c.l.b16 %v1356
    %v3665 = vunpack.c.l.b16 %v1357
    %v3666 = vunpack.c.l.b16 %v1358
    %v3667 = vunpack.c.l.b16 %v1359
    %v3668 = vunpack.c.l.b16 %v1360
    %v3669 = vunpack.c.l.b16 %v1361
    %v3670 = vunpack.c.l.b16 %v1362
    %v3671 = vunpack.c.l.b16 %v1363
    %v3672 = vunpack.c.l.b16 %v1364
    %v3673 = vunpack.c.l.b16 %v1365
    %v3674 = vunpack.c.l.b16 %v1366
    %v3675 = vunpack.c.l.b16 %v1367
    %v3676 = vunpack.c.l.b16 %v1368
    %v3677 = vunpack.c.l.b16 %v1369
    %v3678 = vunpack.c.l.b16 %v1370
    %v3679 = vunpack.c.l.b16 %v1371
    %v3680 = vunpack.c.l.b16 %v1372
    %v3681 = vunpack.c.l.b16 %v1373
    %v3682 = vunpack.c.l.b16 %v1374
    %v3683 = vunpack.c.l.b16 %v1375
    %v3684 = vunpack.c.l.b16 %v1376
    %v3685 = vunpack.c.l.b16 %v1377
    %v3686 = vunpack.c.l.b16 %v1378
    %v3687 = vunpack.c.l.b16 %v1379
    %v3688 = vunpack.c.l.b16 %v1380
    %v3689 = vunpack.c.l.b16 %v1381
    %v3690 = vunpack.c.l.b16 %v1382
    %v3691 = vunpack.c.l.b16 %v1383
    %v3692 = vunpack.c.l.b16 %v1384
    %v3693 = vunpack.c.l.b16 %v1385
    %v3694 = vunpack.c.l.b16 %v1386
    %v3695 = vunpack.c.l.b16 %v1387
    %v3696 = vunpack.c.l.b16 %v1388
    %v3697 = vunpack.c.l.b16 %v1389
    %v3698 = vunpack.c.l.b16 %v1390
    %v3699 = vunpack.c.l.b16 %v1391
    %v3700 = vunpack.c.l.b16 %v1392
    %v3701 = vunpack.c.l.b16 %v1393
    %v3702 = vunpack.c.l.b16 %v1394
    %v3703 = vunpack.c.l.b16 %v1395
    %v3704 = vunpack.c.l.b16 %v1396
    %v3705 = vunpack.c.l.b16 %v1397
    %v3706 = vunpack.c.l.b16 %v1398
    %v3707 = vunpack.c.l.b16 %v1399
    %v3708 = vunpack.c.l.b16 %v1400
    %v3709 = vunpack.c.l.b16 %v1401
    %v3710 = vunpack.c.l.b16 %v1402
    %v3711 = vunpack.c.l.b16 %v1403
    %v3712 = vunpack.c.l.b16 %v1404
    %v3713 = vunpack.c.l.b16 %v1405
    %v3714 = vunpack.c.l.b16 %v1406
    %v3715 = vunpack.c.l.b16 %v1407
    %v3716 = vunpack.c.l.b16 %v1408
    %v3717 = vunpack.c.l.b16 %v1409
    %v3718 = vunpack.c.l.b16 %v1410
    %v3719 = vunpack.c.l.b16 %v1411
    %v3720 = vunpack.c.l.b16 %v1412
    %v3721 = vunpack.c.l.b16 %v1413
    %v3722 = vunpack.c.l.b16 %v1414
    %v3723 = vunpack.c.l.b16 %v1415
    %v3724 = vunpack.c.l.b16 %v1416
    %v3725 = vunpack.c.l.b16 %v1417
    %v3726 = vunpack.c.l.b16 %v1418
    %v3727 = vunpack.c.l.b16 %v1419
    %v3728 = vunpack.c.l.b16 %v1420
    %v3729 = vunpack.c.l.b16 %v1421
    %v3730 = vunpack.c.l.b16 %v1422
    %v3731 = vunpack.c.l.b16 %v1423
    %v3732 = vunpack.c.l.b16 %v1424
    %v3733 = vunpack.c.l.b16 %v1425
    %v3734 = vunpack.c.l.b16 %v1426
    %v3735 = vunpack.c.l.b16 %v1427
    %v3736 = vunpack.c.l.b16 %v1428
    %v3737 = vunpack.c.l.b16 %v1429
    %v3738 = vunpack.c.l.b16 %v1430
    %v3739 = vunpack.c.l.b16 %v1431
    %v3740 = vunpack.c.l.b16 %v1432
    %v3741 = vunpack.c.l.b16 %v1433
    %v3742 = vunpack.c.l.b16 %v1434
    %v3743 = vunpack.c.l.b16 %v1435
    %v3744 = vunpack.c.l.b16 %v1436
    %v3745 = vunpack.c.l.b16 %v1437
    %v3746 = vunpack.c.l.b16 %v1438
    %v3747 = vunpack.c.l.b16 %v1439
    %v3748 = vunpack.c.l.b16 %v1440
    %v3749 = vunpack.c.l.b16 %v1441
    %v3750 = vunpack.c.l.b16 %v1442
    %v3751 = vunpack.c.l.b16 %v1443
    %v3752 = vunpack.c.l.b16 %v1444
    %v3753 = vunpack.c.l.b16 %v1445
    %v3754 = vunpack.c.l.b16 %v1446
    %v3755 = vunpack.c.l.b16 %v1447
    %v3756 = vunpack.c.l.b16 %v1448
    %v3757 = vunpack.c.l.b16 %v1449
    %v3758 = vunpack.c.l.b16 %v1450
    %v3759 = vunpack.c.l.b16 %v1451
    %v3760 = vunpack.c.l.b16 %v1452
    %v3761 = vunpack.c.l.b16 %v1453
    %v3762 = vunpack.c.l.b16 %v1454
    %v3763 = vunpack.c.l.b16 %v1455
    %v3764 = vunpack.c.l.b16 %v1456
    %v3765 = vunpack.c.l.b16 %v1457
    %v3766 = vunpack.c.l.b16 %v1458
    %v3767 = vunpack.c.l.b16 %v1459
    %v3768 = vunpack.c.l.b16 %v1460
    %v3769 = vunpack.c.l.b16 %v1461
    %v3770 = vunpack.c.l.b16 %v1462
    %v3771 = vunpack.c.l.b16 %v1463
    %v3772 = vunpack.c.l.b16 %v1464
    %v3773 = vunpack.c.l.b16 %v1465
    %v3774 = vunpack.c.l.b16 %v1466
    %v3775 = vunpack.c.l.b16 %v1467
    %v3776 = vunpack.c.l.b16 %v1468
    %v3777 = vunpack.c.l.b16 %v1469
    %v3778 = vunpack.c.l.b16 %v1470
    %v3779 = vunpack.c.l.b16 %v1471
    %v3780 = vunpack.c.l.b16 %v1472
    %v3781 = vunpack.c.l.b16 %v1473
    %v3782 = vunpack.c.l.b16 %v1474
    %v3783 = vunpack.c.l.b16 %v1475
    %v3784 = vunpack.c.l.b16 %v1476
    %v3785 = vunpack.c.l.b16 %v1477
    %v3786 = vunpack.c.l.b16 %v1478
    %v3787 = vunpack.c.l.b16 %v1479
    %v3788 = vunpack.c.l.b16 %v1480
    %v3789 = vunpack.c.l.b16 %v1481
    %v3790 = vunpack.c.l.b16 %v1482
    %v3791 = vunpack.c.l.b16 %v1483
    %v3792 = vunpack.c.l.b16 %v1484
    %v3793 = vunpack.c.l.b16 %v1485
    %v3794 = vunpack.c.l.b16 %v1486
    %v3795 = vpack.c.b16 %v2644, %v2643
    %v3796 = vpack.c.b16 %v2646, %v2645
    %v3797 = vpack.c.b16 %v2648, %v2647
    %v3798 = vpack.c.b16 %v2650, %v2649
    %v3799 = vpack.c.b16 %v2652, %v2651
    %v3800 = vpack.c.b16 %v2654, %v2653
    %v3801 = vpack.c.b16 %v2656, %v2655
    %v3802 = vpack.c.b16 %v2658, %v2657
    %v3803 = vpack.c.b16 %v2660, %v2659
    %v3804 = vpack.c.b16 %v2662, %v2661
    %v3805 = vpack.c.b16 %v2664, %v2663
    %v3806 = vpack.c.b16 %v2666, %v2665
    %v3807 = vpack.c.b16 %v2668, %v2667
    %v3808 = vpack.c.b16 %v2670, %v2669
    %v3809 = vpack.c.b16 %v2672, %v2671
    %v3810 = vpack.c.b16 %v2674, %v2673
    %v3811 = vpack.c.b16 %v2676, %v2675
    %v3812 = vpack.c.b16 %v2678, %v2677
    %v3813 = vpack.c.b16 %v2680, %v2679
    %v3814 = vpack.c.b16 %v2682, %v2681
    %v3815 = vpack.c.b16 %v2684, %v2683
    %v3816 = vpack.c.b16 %v2686, %v2685
    %v3817 = vpack.c.b16 %v2688, %v2687
    %v3818 = vpack.c.b16 %v2690, %v2689
    %v3819 = vpack.c.b16 %v2692, %v2691
    %v3820 = vpack.c.b16 %v2694, %v2693
    %v3821 = vpack.c.b16 %v2696, %v2695
    %v3822 = vpack.c.b16 %v2698, %v2697
    %v3823 = vpack.c.b16 %v2700, %v2699
    %v3824 = vpack.c.b16 %v2702, %v2701
    %v3825 = vpack.c.b16 %v2704, %v2703
    %v3826 = vpack.c.b16 %v2706, %v2705
    %v3827 = vpack.c.b16 %v2708, %v2707
    %v3828 = vpack.c.b16 %v2710, %v2709
    %v3829 = vpack.c.b16 %v2712, %v2711
    %v3830 = vpack.c.b16 %v2714, %v2713
    %v3831 = vpack.c.b16 %v2716, %v2715
    %v3832 = vpack.c.b16 %v2718, %v2717
    %v3833 = vpack.c.b16 %v2720, %v2719
    %v3834 = vpack.c.b16 %v2722, %v2721
    %v3835 = vpack.c.b16 %v2724, %v2723
    %v3836 = vpack.c.b16 %v2726, %v2725
    %v3837 = vpack.c.b16 %v2728, %v2727
    %v3838 = vpack.c.b16 %v2730, %v2729
    %v3839 = vpack.c.b16 %v2732, %v2731
    %v3840 = vpack.c.b16 %v2734, %v2733
    %v3841 = vpack.c.b16 %v2736, %v2735
    %v3842 = vpack.c.b16 %v2738, %v2737
    %v3843 = vpack.c.b16 %v2740, %v2739
    %v3844 = vpack.c.b16 %v2742, %v2741
    %v3845 = vpack.c.b16 %v2744, %v2743
    %v3846 = vpack.c.b16 %v2746, %v2745
    %v3847 = vpack.c.b16 %v2748, %v2747
    %v3848 = vpack.c.b16 %v2750, %v2749
    %v3849 = vpack.c.b16 %v2752, %v2751
    %v3850 = vpack.c.b16 %v2754, %v2753
    %v3851 = vpack.c.b16 %v2756, %v2755
    %v3852 = vpack.c.b16 %v2758, %v2757
    %v3853 = vpack.c.b16 %v2760, %v2759
    %v3854 = vpack.c.b16 %v2762, %v2761
    %v3855 = vpack.c.b16 %v2764, %v2763
    %v3856 = vpack.c.b16 %v2766, %v2765
    %v3857 = vpack.c.b16 %v2768, %v2767
    %v3858 = vpack.c.b16 %v2770, %v2769
    %v3859 = vpack.c.b16 %v2772, %v2771
    %v3860 = vpack.c.b16 %v2774, %v2773
    %v3861 = vpack.c.b16 %v2776, %v2775
    %v3862 = vpack.c.b16 %v2778, %v2777
    %v3863 = vpack.c.b16 %v2780, %v2779
    %v3864 = vpack.c.b16 %v2782, %v2781
    %v3865 = vpack.c.b16 %v2784, %v2783
    %v3866 = vpack.c.b16 %v2786, %v2785
    %v3867 = vpack.c.b16 %v2788, %v2787
    %v3868 = vpack.c.b16 %v2790, %v2789
    %v3869 = vpack.c.b16 %v2792, %v2791
    %v3870 = vpack.c.b16 %v2794, %v2793
    %v3871 = vpack.c.b16 %v2796, %v2795
    %v3872 = vpack.c.b16 %v2798, %v2797
    %v3873 = vpack.c.b16 %v2800, %v2799
    %v3874 = vpack.c.b16 %v2802, %v2801
    %v3875 = vpack.c.b16 %v2804, %v2803
    %v3876 = vpack.c.b16 %v2806, %v2805
    %v3877 = vpack.c.b16 %v2808, %v2807
    %v3878 = vpack.c.b16 %v2810, %v2809
    %v3879 = vpack.c.b16 %v2812, %v2811
    %v3880 = vpack.c.b16 %v2814, %v2813
    %v3881 = vpack.c.b16 %v2816, %v2815
    %v3882 = vpack.c.b16 %v2818, %v2817
    %v3883 = vpack.c.b16 %v2820, %v2819
    %v3884 = vpack.c.b16 %v2822, %v2821
    %v3885 = vpack.c.b16 %v2824, %v2823
    %v3886 = vpack.c.b16 %v2826, %v2825
    %v3887 = vpack.c.b16 %v2828, %v2827
    %v3888 = vpack.c.b16 %v2830, %v2829
    %v3889 = vpack.c.b16 %v2832, %v2831
    %v3890 = vpack.c.b16 %v2834, %v2833
    %v3891 = vpack.c.b16 %v2836, %v2835
    %v3892 = vpack.c.b16 %v2838, %v2837
    %v3893 = vpack.c.b16 %v2840, %v2839
    %v3894 = vpack.c.b16 %v2842, %v2841
    %v3895 = vpack.c.b16 %v2844, %v2843
    %v3896 = vpack.c.b16 %v2846, %v2845
    %v3897 = vpack.c.b16 %v2848, %v2847
    %v3898 = vpack.c.b16 %v2850, %v2849
    %v3899 = vpack.c.b16 %v2852, %v2851
    %v3900 = vpack.c.b16 %v2854, %v2853
    %v3901 = vpack.c.b16 %v2856, %v2855
    %v3902 = vpack.c.b16 %v2858, %v2857
    %v3903 = vpack.c.b16 %v2860, %v2859
    %v3904 = vpack.c.b16 %v2862, %v2861
    %v3905 = vpack.c.b16 %v2864, %v2863
    %v3906 = vpack.c.b16 %v2866, %v2865
    %v3907 = vpack.c.b16 %v2868, %v2867
    %v3908 = vpack.c.b16 %v2870, %v2869
    %v3909 = vpack.c.b16 %v2872, %v2871
    %v3910 = vpack.c.b16 %v2874, %v2873
    %v3911 = vpack.c.b16 %v2876, %v2875
    %v3912 = vpack.c.b16 %v2878, %v2877
    %v3913 = vpack.c.b16 %v2880, %v2879
    %v3914 = vpack.c.b16 %v2882, %v2881
    %v3915 = vpack.c.b16 %v2884, %v2883
    %v3916 = vpack.c.b16 %v2886, %v2885
    %v3917 = vpack.c.b16 %v2888, %v2887
    %v3918 = vpack.c.b16 %v2890, %v2889
    %v3919 = vpack.c.b16 %v2892, %v2891
    %v3920 = vpack.c.b16 %v2894, %v2893
    %v3921 = vpack.c.b16 %v2896, %v2895
    %v3922 = vpack.c.b16 %v2898, %v2897
    %v3923 = vpack.c.b16 %v2900, %v2899
    %v3924 = vpack.c.b16 %v2902, %v2901
    %v3925 = vpack.c.b16 %v2904, %v2903
    %v3926 = vpack.c.b16 %v2906, %v2905
    %v3927 = vpack.c.b16 %v2908, %v2907
    %v3928 = vpack.c.b16 %v2910, %v2909
    %v3929 = vpack.c.b16 %v2912, %v2911
    %v3930 = vpack.c.b16 %v2914, %v2913
    %v3931 = vpack.c.b16 %v2916, %v2915
    %v3932 = vpack.c.b16 %v2918, %v2917
    %v3933 = vpack.c.b16 %v2920, %v2919
    %v3934 = vpack.c.b16 %v2922, %v2921
    %v3935 = vpack.c.b16 %v2924, %v2923
    %v3936 = vpack.c.b16 %v2926, %v2925
    %v3937 = vpack.c.b16 %v2928, %v2927
    %v3938 = vpack.c.b16 %v2930, %v2929
    %v3939 = vpack.c.b16 %v2932, %v2931
    %v3940 = vpack.c.b16 %v2934, %v2933
    %v3941 = vpack.c.b16 %v2936, %v2935
    %v3942 = vpack.c.b16 %v2938, %v2937
    %v3943 = vpack.c.b16 %v2940, %v2939
    %v3944 = vpack.c.b16 %v2942, %v2941
    %v3945 = vpack.c.b16 %v2944, %v2943
    %v3946 = vpack.c.b16 %v2946, %v2945
    %v3947 = vpack.c.b16 %v2948, %v2947
    %v3948 = vpack.c.b16 %v2950, %v2949
    %v3949 = vpack.c.b16 %v2952, %v2951
    %v3950 = vpack.c.b16 %v2954, %v2953
    %v3951 = vpack.c.b16 %v2956, %v2955
    %v3952 = vpack.c.b16 %v2958, %v2957
    %v3953 = vpack.c.b16 %v2960, %v2959
    %v3954 = vpack.c.b16 %v2962, %v2961
    %v3955 = vpack.c.b16 %v2964, %v2963
    %v3956 = vpack.c.b16 %v2966, %v2965
    %v3957 = vpack.c.b16 %v2968, %v2967
    %v3958 = vpack.c.b16 %v2970, %v2969
    %v3959 = vpack.c.b16 %v2972, %v2971
    %v3960 = vpack.c.b16 %v2974, %v2973
    %v3961 = vpack.c.b16 %v2976, %v2975
    %v3962 = vpack.c.b16 %v2978, %v2977
    %v3963 = vpack.c.b16 %v2980, %v2979
    %v3964 = vpack.c.b16 %v2982, %v2981
    %v3965 = vpack.c.b16 %v2984, %v2983
    %v3966 = vpack.c.b16 %v2986, %v2985
    %v3967 = vpack.c.b16 %v2988, %v2987
    %v3968 = vpack.c.b16 %v2990, %v2989
    %v3969 = vpack.c.b16 %v2992, %v2991
    %v3970 = vpack.c.b16 %v2994, %v2993
    %v3971 = vpack.c.b16 %v2996, %v2995
    %v3972 = vpack.c.b16 %v2998, %v2997
    %v3973 = vpack.c.b16 %v3000, %v2999
    %v3974 = vpack.c.b16 %v3002, %v3001
    %v3975 = vpack.c.b16 %v3004, %v3003
    %v3976 = vpack.c.b16 %v3006, %v3005
    %v3977 = vpack.c.b16 %v3008, %v3007
    %v3978 = vpack.c.b16 %v3010, %v3009
    %v3979 = vpack.c.b16 %v3012, %v3011
    %v3980 = vpack.c.b16 %v3014, %v3013
    %v3981 = vpack.c.b16 %v3016, %v3015
    %v3982 = vpack.c.b16 %v3018, %v3017
    %v3983 = vpack.c.b16 %v3020, %v3019
    %v3984 = vpack.c.b16 %v3022, %v3021
    %v3985 = vpack.c.b16 %v3024, %v3023
    %v3986 = vpack.c.b16 %v3026, %v3025
    %v3987 = vpack.c.b16 %v3028, %v3027
    %v3988 = vpack.c.b16 %v3030, %v3029
    %v3989 = vpack.c.b16 %v3032, %v3031
    %v3990 = vpack.c.b16 %v3034, %v3033
    %v3991 = vpack.c.b16 %v3036, %v3035
    %v3992 = vpack.c.b16 %v3038, %v3037
    %v3993 = vpack.c.b16 %v3040, %v3039
    %v3994 = vpack.c.b16 %v3042, %v3041
    %v3995 = vpack.c.b16 %v3044, %v3043
    %v3996 = vpack.c.b16 %v3046, %v3045
    %v3997 = vpack.c.b16 %v3048, %v3047
    %v3998 = vpack.c.b16 %v3050, %v3049
    %v3999 = vpack.c.b16 %v3052, %v3051
    %v4000 = vpack.c.b16 %v3054, %v3053
    %v4001 = vpack.c.b16 %v3056, %v3055
    %v4002 = vpack.c.b16 %v3058, %v3057
    %v4003 = vpack.c.b16 %v3060, %v3059
    %v4004 = vpack.c.b16 %v3062, %v3061
    %v4005 = vpack.c.b16 %v3064, %v3063
    %v4006 = vpack.c.b16 %v3066, %v3065
    %v4007 = vpack.c.b16 %v3068, %v3067
    %v4008 = vpack.c.b16 %v3070, %v3069
    %v4009 = vpack.c.b16 %v3072, %v3071
    %v4010 = vpack.c.b16 %v3074, %v3073
    %v4011 = vpack.c.b16 %v3076, %v3075
    %v4012 = vpack.c.b16 %v3078, %v3077
    %v4013 = vpack.c.b16 %v3080, %v3079
    %v4014 = vpack.c.b16 %v3082, %v3081
    %v4015 = vpack.c.b16 %v3084, %v3083
    %v4016 = vpack.c.b16 %v3086, %v3085
    %v4017 = vpack.c.b16 %v3088, %v3087
    %v4018 = vpack.c.b16 %v3090, %v3089
    %v4019 = vpack.c.b16 %v3092, %v3091
    %v4020 = vpack.c.b16 %v3094, %v3093
    %v4021 = vpack.c.b16 %v3096, %v3095
    %v4022 = vpack.c.b16 %v3098, %v3097
    %v4023 = vpack.c.b16 %v3100, %v3099
    %v4024 = vpack.c.b16 %v3102, %v3101
    %v4025 = vpack.c.b16 %v3104, %v3103
    %v4026 = vpack.c.b16 %v3106, %v3105
    %v4027 = vpack.c.b16 %v3108, %v3107
    %v4028 = vpack.c.b16 %v3110, %v3109
    %v4029 = vpack.c.b16 %v3112, %v3111
    %v4030 = vpack.c.b16 %v3114, %v3113
    %v4031 = vpack.c.b16 %v3116, %v3115
    %v4032 = vpack.c.b16 %v3118, %v3117
    %v4033 = vpack.c.b16 %v3120, %v3119
    %v4034 = vpack.c.b16 %v3122, %v3121
    %v4035 = vpack.c.b16 %v3124, %v3123
    %v4036 = vpack.c.b16 %v3126, %v3125
    %v4037 = vpack.c.b16 %v3128, %v3127
    %v4038 = vpack.c.b16 %v3130, %v3129
    %v4039 = vpack.c.b16 %v3132, %v3131
    %v4040 = vpack.c.b16 %v3134, %v3133
    %v4041 = vpack.c.b16 %v3136, %v3135
    %v4042 = vpack.c.b16 %v3138, %v3137
    %v4043 = vpack.c.b16 %v3140, %v3139
    %v4044 = vpack.c.b16 %v3142, %v3141
    %v4045 = vpack.c.b16 %v3144, %v3143
    %v4046 = vpack.c.b16 %v3146, %v3145
    %v4047 = vpack.c.b16 %v3148, %v3147
    %v4048 = vpack.c.b16 %v3150, %v3149
    %v4049 = vpack.c.b16 %v3152, %v3151
    %v4050 = vpack.c.b16 %v3154, %v3153
    %v4051 = vpack.c.b16 %v3156, %v3155
    %v4052 = vpack.c.b16 %v3158, %v3157
    %v4053 = vpack.c.b16 %v3160, %v3159
    %v4054 = vpack.c.b16 %v3162, %v3161
    %v4055 = vpack.c.b16 %v3164, %v3163
    %v4056 = vpack.c.b16 %v3166, %v3165
    %v4057 = vpack.c.b16 %v3168, %v3167
    %v4058 = vpack.c.b16 %v3170, %v3169
    %v4059 = vpack.c.b16 %v3172, %v3171
    %v4060 = vpack.c.b16 %v3174, %v3173
    %v4061 = vpack.c.b16 %v3176, %v3175
    %v4062 = vpack.c.b16 %v3178, %v3177
    %v4063 = vpack.c.b16 %v3180, %v3179
    %v4064 = vpack.c.b16 %v3182, %v3181
    %v4065 = vpack.c.b16 %v3184, %v3183
    %v4066 = vpack.c.b16 %v3186, %v3185
    %v4067 = vpack.c.b16 %v3188, %v3187
    %v4068 = vpack.c.b16 %v3190, %v3189
    %v4069 = vpack.c.b16 %v3192, %v3191
    %v4070 = vpack.c.b16 %v3194, %v3193
    %v4071 = vpack.c.b16 %v3196, %v3195
    %v4072 = vpack.c.b16 %v3198, %v3197
    %v4073 = vpack.c.b16 %v3200, %v3199
    %v4074 = vpack.c.b16 %v3202, %v3201
    %v4075 = vpack.c.b16 %v3204, %v3203
    %v4076 = vpack.c.b16 %v3206, %v3205
    %v4077 = vpack.c.b16 %v3208, %v3207
    %v4078 = vpack.c.b16 %v3210, %v3209
    %v4079 = vpack.c.b16 %v3212, %v3211
    %v4080 = vpack.c.b16 %v3214, %v3213
    %v4081 = vpack.c.b16 %v3216, %v3215
    %v4082 = vpack.c.b16 %v3218, %v3217
    %v4083 = vpack.c.b16 %v3220, %v3219
    %v4084 = vpack.c.b16 %v3222, %v3221
    %v4085 = vpack.c.b16 %v3224, %v3223
    %v4086 = vpack.c.b16 %v3226, %v3225
    %v4087 = vpack.c.b16 %v3228, %v3227
    %v4088 = vpack.c.b16 %v3230, %v3229
    %v4089 = vpack.c.b16 %v3232, %v3231
    %v4090 = vpack.c.b16 %v3234, %v3233
    %v4091 = vpack.c.b16 %v3236, %v3235
    %v4092 = vpack.c.b16 %v3238, %v3237
    %v4093 = vpack.c.b16 %v3240, %v3239
    %v4094 = vpack.c.b16 %v3242, %v3241
    %v4095 = vpack.c.b16 %v3244, %v3243
    %v4096 = vpack.c.b16 %v3246, %v3245
    %v4097 = vpack.c.b16 %v3248, %v3247
    %v4098 = vpack.c.b16 %v3250, %v3249
    %v4099 = vpack.c.b16 %v3252, %v3251
    %v4100 = vpack.c.b16 %v3254, %v3253
    %v4101 = vpack.c.b16 %v3256, %v3255
    %v4102 = vpack.c.b16 %v3258, %v3257
    %v4103 = vpack.c.b16 %v3260, %v3259
    %v4104 = vpack.c.b16 %v3262, %v3261
    %v4105 = vpack.c.b16 %v3264, %v3263
    %v4106 = vpack.c.b16 %v3266, %v3265
    %v4107 = vpack.c.b16 %v3268, %v3267
    %v4108 = vpack.c.b16 %v3270, %v3269
    %v4109 = vpack.c.b16 %v3272, %v3271
    %v4110 = vpack.c.b16 %v3274, %v3273
    %v4111 = vpack.c.b16 %v3276, %v3275
    %v4112 = vpack.c.b16 %v3278, %v3277
    %v4113 = vpack.c.b16 %v3280, %v3279
    %v4114 = vpack.c.b16 %v3282, %v3281
    %v4115 = vpack.c.b16 %v3284, %v3283
    %v4116 = vpack.c.b16 %v3286, %v3285
    %v4117 = vpack.c.b16 %v3288, %v3287
    %v4118 = vpack.c.b16 %v3290, %v3289
    %v4119 = vpack.c.b16 %v3292, %v3291
    %v4120 = vpack.c.b16 %v3294, %v3293
    %v4121 = vpack.c.b16 %v3296, %v3295
    %v4122 = vpack.c.b16 %v3298, %v3297
    %v4123 = vpack.c.b16 %v3300, %v3299
    %v4124 = vpack.c.b16 %v3302, %v3301
    %v4125 = vpack.c.b16 %v3304, %v3303
    %v4126 = vpack.c.b16 %v3306, %v3305
    %v4127 = vpack.c.b16 %v3308, %v3307
    %v4128 = vpack.c.b16 %v3310, %v3309
    %v4129 = vpack.c.b16 %v3312, %v3311
    %v4130 = vpack.c.b16 %v3314, %v3313
    %v4131 = vpack.c.b16 %v3316, %v3315
    %v4132 = vpack.c.b16 %v3318, %v3317
    %v4133 = vpack.c.b16 %v3320, %v3319
    %v4134 = vpack.c.b16 %v3322, %v3321
    %v4135 = vpack.c.b16 %v3324, %v3323
    %v4136 = vpack.c.b16 %v3326, %v3325
    %v4137 = vpack.c.b16 %v3328, %v3327
    %v4138 = vpack.c.b16 %v3330, %v3329
    %v4139 = vpack.c.b16 %v3332, %v3331
    %v4140 = vpack.c.b16 %v3334, %v3333
    %v4141 = vpack.c.b16 %v3336, %v3335
    %v4142 = vpack.c.b16 %v3338, %v3337
    %v4143 = vpack.c.b16 %v3340, %v3339
    %v4144 = vpack.c.b16 %v3342, %v3341
    %v4145 = vpack.c.b16 %v3344, %v3343
    %v4146 = vpack.c.b16 %v3346, %v3345
    %v4147 = vpack.c.b16 %v3348, %v3347
    %v4148 = vpack.c.b16 %v3350, %v3349
    %v4149 = vpack.c.b16 %v3352, %v3351
    %v4150 = vpack.c.b16 %v3354, %v3353
    %v4151 = vpack.c.b16 %v3356, %v3355
    %v4152 = vpack.c.b16 %v3358, %v3357
    %v4153 = vpack.c.b16 %v3360, %v3359
    %v4154 = vpack.c.b16 %v3362, %v3361
    %v4155 = vpack.c.b16 %v3364, %v3363
    %v4156 = vpack.c.b16 %v3366, %v3365
    %v4157 = vpack.c.b16 %v3368, %v3367
    %v4158 = vpack.c.b16 %v3370, %v3369
    %v4159 = vpack.c.b16 %v3372, %v3371
    %v4160 = vpack.c.b16 %v3374, %v3373
    %v4161 = vpack.c.b16 %v3376, %v3375
    %v4162 = vpack.c.b16 %v3378, %v3377
    %v4163 = vpack.c.b16 %v3380, %v3379
    %v4164 = vpack.c.b16 %v3382, %v3381
    %v4165 = vpack.c.b16 %v3384, %v3383
    %v4166 = vpack.c.b16 %v3386, %v3385
    %v4167 = vpack.c.b16 %v3388, %v3387
    %v4168 = vpack.c.b16 %v3390, %v3389
    %v4169 = vpack.c.b16 %v3392, %v3391
    %v4170 = vpack.c.b16 %v3394, %v3393
    %v4171 = vpack.c.b16 %v3396, %v3395
    %v4172 = vpack.c.b16 %v3398, %v3397
    %v4173 = vpack.c.b16 %v3400, %v3399
    %v4174 = vpack.c.b16 %v3402, %v3401
    %v4175 = vpack.c.b16 %v3404, %v3403
    %v4176 = vpack.c.b16 %v3406, %v3405
    %v4177 = vpack.c.b16 %v3408, %v3407
    %v4178 = vpack.c.b16 %v3410, %v3409
    %v4179 = vpack.c.b16 %v3412, %v3411
    %v4180 = vpack.c.b16 %v3414, %v3413
    %v4181 = vpack.c.b16 %v3416, %v3415
    %v4182 = vpack.c.b16 %v3418, %v3417
    %v4183 = vpack.c.b16 %v3420, %v3419
    %v4184 = vpack.c.b16 %v3422, %v3421
    %v4185 = vpack.c.b16 %v3424, %v3423
    %v4186 = vpack.c.b16 %v3426, %v3425
    %v4187 = vpack.c.b16 %v3428, %v3427
    %v4188 = vpack.c.b16 %v3430, %v3429
    %v4189 = vpack.c.b16 %v3432, %v3431
    %v4190 = vpack.c.b16 %v3434, %v3433
    %v4191 = vpack.c.b16 %v3436, %v3435
    %v4192 = vpack.c.b16 %v3438, %v3437
    %v4193 = vpack.c.b16 %v3440, %v3439
    %v4194 = vpack.c.b16 %v3442, %v3441
    %v4195 = vpack.c.b16 %v3444, %v3443
    %v4196 = vpack.c.b16 %v3446, %v3445
    %v4197 = vpack.c.b16 %v3448, %v3447
    %v4198 = vpack.c.b16 %v3450, %v3449
    %v4199 = vpack.c.b16 %v3452, %v3451
    %v4200 = vpack.c.b16 %v3454, %v3453
    %v4201 = vpack.c.b16 %v3456, %v3455
    %v4202 = vpack.c.b16 %v3458, %v3457
    %v4203 = vpack.c.b16 %v3460, %v3459
    %v4204 = vpack.c.b16 %v3462, %v3461
    %v4205 = vpack.c.b16 %v3464, %v3463
    %v4206 = vpack.c.b16 %v3466, %v3465
    %v4207 = vpack.c.b16 %v3468, %v3467
    %v4208 = vpack.c.b16 %v3470, %v3469
    %v4209 = vpack.c.b16 %v3472, %v3471
    %v4210 = vpack.c.b16 %v3474, %v3473
    %v4211 = vpack.c.b16 %v3476, %v3475
    %v4212 = vpack.c.b16 %v3478, %v3477
    %v4213 = vpack.c.b16 %v3480, %v3479
    %v4214 = vpack.c.b16 %v3482, %v3481
    %v4215 = vpack.c.b16 %v3484, %v3483
    %v4216 = vpack.c.b16 %v3486, %v3485
    %v4217 = vpack.c.b16 %v3488, %v3487
    %v4218 = vpack.c.b16 %v3490, %v3489
    %v4219 = vpack.c.b16 %v3492, %v3491
    %v4220 = vpack.c.b16 %v3494, %v3493
    %v4221 = vpack.c.b16 %v3496, %v3495
    %v4222 = vpack.c.b16 %v3498, %v3497
    %v4223 = vpack.c.b16 %v3500, %v3499
    %v4224 = vpack.c.b16 %v3502, %v3501
    %v4225 = vpack.c.b16 %v3504, %v3503
    %v4226 = vpack.c.b16 %v3506, %v3505
    %v4227 = vpack.c.b16 %v3508, %v3507
    %v4228 = vpack.c.b16 %v3510, %v3509
    %v4229 = vpack.c.b16 %v3512, %v3511
    %v4230 = vpack.c.b16 %v3514, %v3513
    %v4231 = vpack.c.b16 %v3516, %v3515
    %v4232 = vpack.c.b16 %v3518, %v3517
    %v4233 = vpack.c.b16 %v3520, %v3519
    %v4234 = vpack.c.b16 %v3522, %v3521
    %v4235 = vpack.c.b16 %v3524, %v3523
    %v4236 = vpack.c.b16 %v3526, %v3525
    %v4237 = vpack.c.b16 %v3528, %v3527
    %v4238 = vpack.c.b16 %v3530, %v3529
    %v4239 = vpack.c.b16 %v3532, %v3531
    %v4240 = vpack.c.b16 %v3534, %v3533
    %v4241 = vpack.c.b16 %v3536, %v3535
    %v4242 = vpack.c.b16 %v3538, %v3537
    %v4243 = vpack.c.b16 %v3540, %v3539
    %v4244 = vpack.c.b16 %v3542, %v3541
    %v4245 = vpack.c.b16 %v3544, %v3543
    %v4246 = vpack.c.b16 %v3546, %v3545
    %v4247 = vpack.c.b16 %v3548, %v3547
    %v4248 = vpack.c.b16 %v3550, %v3549
    %v4249 = vpack.c.b16 %v3552, %v3551
    %v4250 = vpack.c.b16 %v3554, %v3553
    %v4251 = vpack.c.b16 %v3556, %v3555
    %v4252 = vpack.c.b16 %v3558, %v3557
    %v4253 = vpack.c.b16 %v3560, %v3559
    %v4254 = vpack.c.b16 %v3562, %v3561
    %v4255 = vpack.c.b16 %v3564, %v3563
    %v4256 = vpack.c.b16 %v3566, %v3565
    %v4257 = vpack.c.b16 %v3568, %v3567
    %v4258 = vpack.c.b16 %v3570, %v3569
    %v4259 = vpack.c.b16 %v3572, %v3571
    %v4260 = vpack.c.b16 %v3574, %v3573
    %v4261 = vpack.c.b16 %v3576, %v3575
    %v4262 = vpack.c.b16 %v3578, %v3577
    %v4263 = vpack.c.b16 %v3580, %v3579
    %v4264 = vpack.c.b16 %v3582, %v3581
    %v4265 = vpack.c.b16 %v3584, %v3583
    %v4266 = vpack.c.b16 %v3586, %v3585
    %v4267 = vpack.c.b16 %v3588, %v3587
    %v4268 = vpack.c.b16 %v3590, %v3589
    %v4269 = vpack.c.b16 %v3592, %v3591
    %v4270 = vpack.c.b16 %v3594, %v3593
    %v4271 = vpack.c.b16 %v3596, %v3595
    %v4272 = vpack.c.b16 %v3598, %v3597
    %v4273 = vpack.c.b16 %v3600, %v3599
    %v4274 = vpack.c.b16 %v3602, %v3601
    %v4275 = vpack.c.b16 %v3604, %v3603
    %v4276 = vpack.c.b16 %v3606, %v3605
    %v4277 = vpack.c.b16 %v3608, %v3607
    %v4278 = vpack.c.b16 %v3610, %v3609
    %v4279 = vpack.c.b16 %v3612, %v3611
    %v4280 = vpack.c.b16 %v3614, %v3613
    %v4281 = vpack.c.b16 %v3616, %v3615
    %v4282 = vpack.c.b16 %v3618, %v3617
    %v4283 = vpack.c.b16 %v3620, %v3619
    %v4284 = vpack.c.b16 %v3622, %v3621
    %v4285 = vpack.c.b16 %v3624, %v3623
    %v4286 = vpack.c.b16 %v3626, %v3625
    %v4287 = vpack.c.b16 %v3628, %v3627
    %v4288 = vpack.c.b16 %v3630, %v3629
    %v4289 = vpack.c.b16 %v3632, %v3631
    %v4290 = vpack.c.b16 %v3634, %v3633
    %v4291 = vpack.c.b16 %v3636, %v3635
    %v4292 = vpack.c.b16 %v3638, %v3637
    %v4293 = vpack.c.b16 %v3640, %v3639
    %v4294 = vpack.c.b16 %v3642, %v3641
    %v4295 = vpack.c.b16 %v3644, %v3643
    %v4296 = vpack.c.b16 %v3646, %v3645
    %v4297 = vpack.c.b16 %v3648, %v3647
    %v4298 = vpack.c.b16 %v3650, %v3649
    %v4299 = vpack.c.b16 %v3652, %v3651
    %v4300 = vpack.c.b16 %v3654, %v3653
    %v4301 = vpack.c.b16 %v3656, %v3655
    %v4302 = vpack.c.b16 %v3658, %v3657
    %v4303 = vpack.c.b16 %v3660, %v3659
    %v4304 = vpack.c.b16 %v3662, %v3661
    %v4305 = vpack.c.b16 %v3664, %v3663
    %v4306 = vpack.c.b16 %v3666, %v3665
    %v4307 = vpack.c.b16 %v3668, %v3667
    %v4308 = vpack.c.b16 %v3670, %v3669
    %v4309 = vpack.c.b16 %v3672, %v3671
    %v4310 = vpack.c.b16 %v3674, %v3673
    %v4311 = vpack.c.b16 %v3676, %v3675
    %v4312 = vpack.c.b16 %v3678, %v3677
    %v4313 = vpack.c.b16 %v3680, %v3679
    %v4314 = vpack.c.b16 %v3682, %v3681
    %v4315 = vpack.c.b16 %v3684, %v3683
    %v4316 = vpack.c.b16 %v3686, %v3685
    %v4317 = vpack.c.b16 %v3688, %v3687
    %v4318 = vpack.c.b16 %v3690, %v3689
    %v4319 = vpack.c.b16 %v3692, %v3691
    %v4320 = vpack.c.b16 %v3694, %v3693
    %v4321 = vpack.c.b16 %v3696, %v3695
    %v4322 = vpack.c.b16 %v3698, %v3697
    %v4323 = vpack.c.b16 %v3700, %v3699
    %v4324 = vpack.c.b16 %v3702, %v3701
    %v4325 = vpack.c.b16 %v3704, %v3703
    %v4326 = vpack.c.b16 %v3706, %v3705
    %v4327 = vpack.c.b16 %v3708, %v3707
    %v4328 = vpack.c.b16 %v3710, %v3709
    %v4329 = vpack.c.b16 %v3712, %v3711
    %v4330 = vpack.c.b16 %v3714, %v3713
    %v4331 = vpack.c.b16 %v3716, %v3715
    %v4332 = vpack.c.b16 %v3718, %v3717
    %v4333 = vpack.c.b16 %v3720, %v3719
    %v4334 = vpack.c.b16 %v3722, %v3721
    %v4335 = vpack.c.b16 %v3724, %v3723
    %v4336 = vpack.c.b16 %v3726, %v3725
    %v4337 = vpack.c.b16 %v3728, %v3727
    %v4338 = vpack.c.b16 %v3730, %v3729
    %v4339 = vpack.c.b16 %v3732, %v3731
    %v4340 = vpack.c.b16 %v3734, %v3733
    %v4341 = vpack.c.b16 %v3736, %v3735
    %v4342 = vpack.c.b16 %v3738, %v3737
    %v4343 = vpack.c.b16 %v3740, %v3739
    %v4344 = vpack.c.b16 %v3742, %v3741
    %v4345 = vpack.c.b16 %v3744, %v3743
    %v4346 = vpack.c.b16 %v3746, %v3745
    %v4347 = vpack.c.b16 %v3748, %v3747
    %v4348 = vpack.c.b16 %v3750, %v3749
    %v4349 = vpack.c.b16 %v3752, %v3751
    %v4350 = vpack.c.b16 %v3754, %v3753
    %v4351 = vpack.c.b16 %v3756, %v3755
    %v4352 = vpack.c.b16 %v3758, %v3757
    %v4353 = vpack.c.b16 %v3760, %v3759
    %v4354 = vpack.c.b16 %v3762, %v3761
    %v4355 = vpack.c.b16 %v3764, %v3763
    %v4356 = vpack.c.b16 %v3766, %v3765
    %v4357 = vpack.c.b16 %v3768, %v3767
    %v4358 = vpack.c.b16 %v3770, %v3769
    %v4359 = vpack.c.b16 %v3772, %v3771
    %v4360 = vpack.c.b16 %v3774, %v3773
    %v4361 = vpack.c.b16 %v3776, %v3775
    %v4362 = vpack.c.b16 %v3778, %v3777
    %v4363 = vpack.c.b16 %v3780, %v3779
    %v4364 = vpack.c.b16 %v3782, %v3781
    %v4365 = vpack.c.b16 %v3784, %v3783
    %v4366 = vpack.c.b16 %v3786, %v3785
    %v4367 = vpack.c.b16 %v3788, %v3787
    %v4368 = vpack.c.b16 %v3790, %v3789
    %v4369 = vpack.c.b16 %v3792, %v3791
    %v4370 = vpack.c.b16 %v3794, %v3793
    %4947 = vmatpush.bf16.msra.mxu0 %v3802
    %4948 = vmatpush.bf16.msra.mxu0 %v3801
    %4949 = vmatpush.bf16.msra.mxu0 %v3800
    %4950 = vmatpush.bf16.msra.mxu0 %v3799
    %4951 = vmatpush.bf16.msra.mxu0 %v3798
    %4952 = vmatpush.bf16.msra.mxu0 %v3797
    %4953 = vmatpush.bf16.msra.mxu0 %v3796
    %4954 = vmatpush.bf16.msra.mxu0 %v3795
    %4955 = vmatmul.bf16.gmra.mxu0 %v263
    %v4956 = vpop.f32.mrf.mxu0
    %v4957 = vadd.f32 %v1489, %v4956
    %v4958 = vpop.f32.mrf.mxu0
    %4959 = vdwg.mxu0
    %4960 = vmatpush.bf16.msra.mxu0 %v3810
    %4961 = vmatpush.bf16.msra.mxu0 %v3809
    %4962 = vmatpush.bf16.msra.mxu0 %v3808
    %4963 = vmatpush.bf16.msra.mxu0 %v3807
    %4964 = vmatpush.bf16.msra.mxu0 %v3806
    %4965 = vmatpush.bf16.msra.mxu0 %v3805
    %4966 = vmatpush.bf16.msra.mxu0 %v3804
    %4967 = vmatpush.bf16.msra.mxu0 %v3803
    %4968 = vmatmul.bf16.gmra.mxu0 %v264
    %v4969 = vpop.f32.mrf.mxu0
    %v4970 = vadd.f32 %v4957, %v4969
    %v4971 = vpop.f32.mrf.mxu0
    %4972 = vdwg.mxu0
    %4973 = vmatpush.bf16.msra.mxu0 %v3818
    %4974 = vmatpush.bf16.msra.mxu0 %v3817
    %4975 = vmatpush.bf16.msra.mxu0 %v3816
    %4976 = vmatpush.bf16.msra.mxu0 %v3815
    %4977 = vmatpush.bf16.msra.mxu0 %v3814
    %4978 = vmatpush.bf16.msra.mxu0 %v3813
    %4979 = vmatpush.bf16.msra.mxu0 %v3812
    %4980 = vmatpush.bf16.msra.mxu0 %v3811
    %4981 = vmatmul.bf16.gmra.mxu0 %v265
    %v4982 = vpop.f32.mrf.mxu0
    %v4983 = vadd.f32 %v4970, %v4982
    %v4984 = vpop.f32.mrf.mxu0
    %4985 = vdwg.mxu0
    %4986 = vmatpush.bf16.msra.mxu0 %v3826
    %4987 = vmatpush.bf16.msra.mxu0 %v3825
    %4988 = vmatpush.bf16.msra.mxu0 %v3824
    %4989 = vmatpush.bf16.msra.mxu0 %v3823
    %4990 = vmatpush.bf16.msra.mxu0 %v3822
    %4991 = vmatpush.bf16.msra.mxu0 %v3821
    %4992 = vmatpush.bf16.msra.mxu0 %v3820
    %4993 = vmatpush.bf16.msra.mxu0 %v3819
    %4994 = vmatmul.bf16.gmra.mxu0 %v266
    %v4995 = vpop.f32.mrf.mxu0
    %v4996 = vadd.f32 %v4983, %v4995
    %v4997 = vpop.f32.mrf.mxu0
    %4998 = vdwg.mxu0
    %4999 = vmatpush.bf16.msra.mxu0 %v3834
    %5000 = vmatpush.bf16.msra.mxu0 %v3833
    %5001 = vmatpush.bf16.msra.mxu0 %v3832
    %5002 = vmatpush.bf16.msra.mxu0 %v3831
    %5003 = vmatpush.bf16.msra.mxu0 %v3830
    %5004 = vmatpush.bf16.msra.mxu0 %v3829
    %5005 = vmatpush.bf16.msra.mxu0 %v3828
    %5006 = vmatpush.bf16.msra.mxu0 %v3827
    %5007 = vmatmul.bf16.gmra.mxu0 %v267
    %v5008 = vpop.f32.mrf.mxu0
    %v5009 = vadd.f32 %v4996, %v5008
    %v5010 = vpop.f32.mrf.mxu0
    %5011 = vdwg.mxu0
    %5012 = vmatpush.bf16.msra.mxu0 %v3842
    %5013 = vmatpush.bf16.msra.mxu0 %v3841
    %5014 = vmatpush.bf16.msra.mxu0 %v3840
    %5015 = vmatpush.bf16.msra.mxu0 %v3839
    %5016 = vmatpush.bf16.msra.mxu0 %v3838
    %5017 = vmatpush.bf16.msra.mxu0 %v3837
    %5018 = vmatpush.bf16.msra.mxu0 %v3836
    %5019 = vmatpush.bf16.msra.mxu0 %v3835
    %5020 = vmatmul.bf16.gmra.mxu0 %v268
    %v5021 = vpop.f32.mrf.mxu0
    %v5022 = vadd.f32 %v5009, %v5021
    %v5023 = vpop.f32.mrf.mxu0
    %5024 = vdwg.mxu0
    %5025 = vmatpush.bf16.msra.mxu0 %v3850
    %5026 = vmatpush.bf16.msra.mxu0 %v3849
    %5027 = vmatpush.bf16.msra.mxu0 %v3848
    %5028 = vmatpush.bf16.msra.mxu0 %v3847
    %5029 = vmatpush.bf16.msra.mxu0 %v3846
    %5030 = vmatpush.bf16.msra.mxu0 %v3845
    %5031 = vmatpush.bf16.msra.mxu0 %v3844
    %5032 = vmatpush.bf16.msra.mxu0 %v3843
    %5033 = vmatmul.bf16.gmra.mxu0 %v269
    %v5034 = vpop.f32.mrf.mxu0
    %v5035 = vadd.f32 %v5022, %v5034
    %v5036 = vpop.f32.mrf.mxu0
    %5037 = vdwg.mxu0
    %5038 = vmatpush.bf16.msra.mxu0 %v3858
    %5039 = vmatpush.bf16.msra.mxu0 %v3857
    %5040 = vmatpush.bf16.msra.mxu0 %v3856
    %5041 = vmatpush.bf16.msra.mxu0 %v3855
    %5042 = vmatpush.bf16.msra.mxu0 %v3854
    %5043 = vmatpush.bf16.msra.mxu0 %v3853
    %5044 = vmatpush.bf16.msra.mxu0 %v3852
    %5045 = vmatpush.bf16.msra.mxu0 %v3851
    %5046 = vmatmul.bf16.gmra.mxu0 %v270
    %v5047 = vpop.f32.mrf.mxu0
    %v5048 = vadd.f32 %v5035, %v5047
    %v5049 = vpop.f32.mrf.mxu0
    %5050 = vdwg.mxu0
    %5051 = vmatpush.bf16.msra.mxu0 %v3866
    %5052 = vmatpush.bf16.msra.mxu0 %v3865
    %5053 = vmatpush.bf16.msra.mxu0 %v3864
    %5054 = vmatpush.bf16.msra.mxu0 %v3863
    %5055 = vmatpush.bf16.msra.mxu0 %v3862
    %5056 = vmatpush.bf16.msra.mxu0 %v3861
    %5057 = vmatpush.bf16.msra.mxu0 %v3860
    %5058 = vmatpush.bf16.msra.mxu0 %v3859
    %5059 = vmatmul.bf16.gmra.mxu0 %v271
    %v5060 = vpop.f32.mrf.mxu0
    %v5061 = vadd.f32 %v5048, %v5060
    %v5062 = vpop.f32.mrf.mxu0
    %5063 = vdwg.mxu0
    %5064 = vmatpush.bf16.msra.mxu0 %v3874
    %5065 = vmatpush.bf16.msra.mxu0 %v3873
    %5066 = vmatpush.bf16.msra.mxu0 %v3872
    %5067 = vmatpush.bf16.msra.mxu0 %v3871
    %5068 = vmatpush.bf16.msra.mxu0 %v3870
    %5069 = vmatpush.bf16.msra.mxu0 %v3869
    %5070 = vmatpush.bf16.msra.mxu0 %v3868
    %5071 = vmatpush.bf16.msra.mxu0 %v3867
    %5072 = vmatmul.bf16.gmra.mxu0 %v272
    %v5073 = vpop.f32.mrf.mxu0
    %v5074 = vadd.f32 %v5061, %v5073
    %v5075 = vpop.f32.mrf.mxu0
    %5076 = vdwg.mxu0
    %5077 = vmatpush.bf16.msra.mxu0 %v3882
    %5078 = vmatpush.bf16.msra.mxu0 %v3881
    %5079 = vmatpush.bf16.msra.mxu0 %v3880
    %5080 = vmatpush.bf16.msra.mxu0 %v3879
    %5081 = vmatpush.bf16.msra.mxu0 %v3878
    %5082 = vmatpush.bf16.msra.mxu0 %v3877
    %5083 = vmatpush.bf16.msra.mxu0 %v3876
    %5084 = vmatpush.bf16.msra.mxu0 %v3875
    %5085 = vmatmul.bf16.gmra.mxu0 %v273
    %v5086 = vpop.f32.mrf.mxu0
    %v5087 = vadd.f32 %v5074, %v5086
    %v5088 = vpop.f32.mrf.mxu0
    %5089 = vdwg.mxu0
    %5090 = vmatpush.bf16.msra.mxu0 %v3890
    %5091 = vmatpush.bf16.msra.mxu0 %v3889
    %5092 = vmatpush.bf16.msra.mxu0 %v3888
    %5093 = vmatpush.bf16.msra.mxu0 %v3887
    %5094 = vmatpush.bf16.msra.mxu0 %v3886
    %5095 = vmatpush.bf16.msra.mxu0 %v3885
    %5096 = vmatpush.bf16.msra.mxu0 %v3884
    %5097 = vmatpush.bf16.msra.mxu0 %v3883
    %5098 = vmatmul.bf16.gmra.mxu0 %v274
    %v5099 = vpop.f32.mrf.mxu0
    %v5100 = vadd.f32 %v5087, %v5099
    %v5101 = vpop.f32.mrf.mxu0
    %5102 = vdwg.mxu0
    %5103 = vmatpush.bf16.msra.mxu0 %v3898
    %5104 = vmatpush.bf16.msra.mxu0 %v3897
    %5105 = vmatpush.bf16.msra.mxu0 %v3896
    %5106 = vmatpush.bf16.msra.mxu0 %v3895
    %5107 = vmatpush.bf16.msra.mxu0 %v3894
    %5108 = vmatpush.bf16.msra.mxu0 %v3893
    %5109 = vmatpush.bf16.msra.mxu0 %v3892
    %5110 = vmatpush.bf16.msra.mxu0 %v3891
    %5111 = vmatmul.bf16.gmra.mxu0 %v275
    %v5112 = vpop.f32.mrf.mxu0
    %v5113 = vadd.f32 %v5100, %v5112
    %v5114 = vpop.f32.mrf.mxu0
    %5115 = vdwg.mxu0
    %5116 = vmatpush.bf16.msra.mxu0 %v3906
    %5117 = vmatpush.bf16.msra.mxu0 %v3905
    %5118 = vmatpush.bf16.msra.mxu0 %v3904
    %5119 = vmatpush.bf16.msra.mxu0 %v3903
    %5120 = vmatpush.bf16.msra.mxu0 %v3902
    %5121 = vmatpush.bf16.msra.mxu0 %v3901
    %5122 = vmatpush.bf16.msra.mxu0 %v3900
    %5123 = vmatpush.bf16.msra.mxu0 %v3899
    %5124 = vmatmul.bf16.gmra.mxu0 %v276
    %v5125 = vpop.f32.mrf.mxu0
    %v5126 = vadd.f32 %v5113, %v5125
    %v5127 = vpop.f32.mrf.mxu0
    %5128 = vdwg.mxu0
    %5129 = vmatpush.bf16.msra.mxu0 %v3914
    %5130 = vmatpush.bf16.msra.mxu0 %v3913
    %5131 = vmatpush.bf16.msra.mxu0 %v3912
    %5132 = vmatpush.bf16.msra.mxu0 %v3911
    %5133 = vmatpush.bf16.msra.mxu0 %v3910
    %5134 = vmatpush.bf16.msra.mxu0 %v3909
    %5135 = vmatpush.bf16.msra.mxu0 %v3908
    %5136 = vmatpush.bf16.msra.mxu0 %v3907
    %5137 = vmatmul.bf16.gmra.mxu0 %v277
    %v5138 = vpop.f32.mrf.mxu0
    %v5139 = vadd.f32 %v5126, %v5138
    %v5140 = vpop.f32.mrf.mxu0
    %5141 = vdwg.mxu0
    %5142 = vmatpush.bf16.msra.mxu0 %v3922
    %5143 = vmatpush.bf16.msra.mxu0 %v3921
    %5144 = vmatpush.bf16.msra.mxu0 %v3920
    %5145 = vmatpush.bf16.msra.mxu0 %v3919
    %5146 = vmatpush.bf16.msra.mxu0 %v3918
    %5147 = vmatpush.bf16.msra.mxu0 %v3917
    %5148 = vmatpush.bf16.msra.mxu0 %v3916
    %5149 = vmatpush.bf16.msra.mxu0 %v3915
    %5150 = vmatmul.bf16.gmra.mxu0 %v278
    %v5151 = vpop.f32.mrf.mxu0
    %v5152 = vadd.f32 %v5139, %v5151
    %v5153 = vpop.f32.mrf.mxu0
    %5154 = vdwg.mxu0
    %5155 = vmatpush.bf16.msra.mxu0 %v3930
    %5156 = vmatpush.bf16.msra.mxu0 %v3929
    %5157 = vmatpush.bf16.msra.mxu0 %v3928
    %5158 = vmatpush.bf16.msra.mxu0 %v3927
    %5159 = vmatpush.bf16.msra.mxu0 %v3926
    %5160 = vmatpush.bf16.msra.mxu0 %v3925
    %5161 = vmatpush.bf16.msra.mxu0 %v3924
    %5162 = vmatpush.bf16.msra.mxu0 %v3923
    %5163 = vmatmul.bf16.gmra.mxu0 %v279
    %v5164 = vpop.f32.mrf.mxu0
    %v5165 = vadd.f32 %v5152, %v5164
    %v5166 = vpop.f32.mrf.mxu0
    %5167 = vdwg.mxu0
    %5168 = vmatpush.bf16.msra.mxu0 %v3938
    %5169 = vmatpush.bf16.msra.mxu0 %v3937
    %5170 = vmatpush.bf16.msra.mxu0 %v3936
    %5171 = vmatpush.bf16.msra.mxu0 %v3935
    %5172 = vmatpush.bf16.msra.mxu0 %v3934
    %5173 = vmatpush.bf16.msra.mxu0 %v3933
    %5174 = vmatpush.bf16.msra.mxu0 %v3932
    %5175 = vmatpush.bf16.msra.mxu0 %v3931
    %5176 = vmatmul.bf16.gmra.mxu0 %v280
    %v5177 = vpop.f32.mrf.mxu0
    %v5178 = vadd.f32 %v5165, %v5177
    %v5179 = vpop.f32.mrf.mxu0
    %5180 = vdwg.mxu0
    %5181 = vmatpush.bf16.msra.mxu0 %v3946
    %5182 = vmatpush.bf16.msra.mxu0 %v3945
    %5183 = vmatpush.bf16.msra.mxu0 %v3944
    %5184 = vmatpush.bf16.msra.mxu0 %v3943
    %5185 = vmatpush.bf16.msra.mxu0 %v3942
    %5186 = vmatpush.bf16.msra.mxu0 %v3941
    %5187 = vmatpush.bf16.msra.mxu0 %v3940
    %5188 = vmatpush.bf16.msra.mxu0 %v3939
    %5189 = vmatmul.bf16.gmra.mxu0 %v281
    %v5190 = vpop.f32.mrf.mxu0
    %v5191 = vadd.f32 %v5178, %v5190
    %v5192 = vpop.f32.mrf.mxu0
    %5193 = vdwg.mxu0
    %5194 = vmatpush.bf16.msra.mxu0 %v3954
    %5195 = vmatpush.bf16.msra.mxu0 %v3953
    %5196 = vmatpush.bf16.msra.mxu0 %v3952
    %5197 = vmatpush.bf16.msra.mxu0 %v3951
    %5198 = vmatpush.bf16.msra.mxu0 %v3950
    %5199 = vmatpush.bf16.msra.mxu0 %v3949
    %5200 = vmatpush.bf16.msra.mxu0 %v3948
    %5201 = vmatpush.bf16.msra.mxu0 %v3947
    %5202 = vmatmul.bf16.gmra.mxu0 %v282
    %v5203 = vpop.f32.mrf.mxu0
    %v5204 = vadd.f32 %v5191, %v5203
    %v5205 = vpop.f32.mrf.mxu0
    %5206 = vdwg.mxu0
    %5207 = vmatpush.bf16.msra.mxu0 %v3962
    %5208 = vmatpush.bf16.msra.mxu0 %v3961
    %5209 = vmatpush.bf16.msra.mxu0 %v3960
    %5210 = vmatpush.bf16.msra.mxu0 %v3959
    %5211 = vmatpush.bf16.msra.mxu0 %v3958
    %5212 = vmatpush.bf16.msra.mxu0 %v3957
    %5213 = vmatpush.bf16.msra.mxu0 %v3956
    %5214 = vmatpush.bf16.msra.mxu0 %v3955
    %5215 = vmatmul.bf16.gmra.mxu0 %v283
    %v5216 = vpop.f32.mrf.mxu0
    %v5217 = vadd.f32 %v5204, %v5216
    %v5218 = vpop.f32.mrf.mxu0
    %5219 = vdwg.mxu0
    %5220 = vmatpush.bf16.msra.mxu0 %v3970
    %5221 = vmatpush.bf16.msra.mxu0 %v3969
    %5222 = vmatpush.bf16.msra.mxu0 %v3968
    %5223 = vmatpush.bf16.msra.mxu0 %v3967
    %5224 = vmatpush.bf16.msra.mxu0 %v3966
    %5225 = vmatpush.bf16.msra.mxu0 %v3965
    %5226 = vmatpush.bf16.msra.mxu0 %v3964
    %5227 = vmatpush.bf16.msra.mxu0 %v3963
    %5228 = vmatmul.bf16.gmra.mxu0 %v284
    %v5229 = vpop.f32.mrf.mxu0
    %v5230 = vadd.f32 %v5217, %v5229
    %v5231 = vpop.f32.mrf.mxu0
    %5232 = vdwg.mxu0
    %5233 = vmatpush.bf16.msra.mxu0 %v3978
    %5234 = vmatpush.bf16.msra.mxu0 %v3977
    %5235 = vmatpush.bf16.msra.mxu0 %v3976
    %5236 = vmatpush.bf16.msra.mxu0 %v3975
    %5237 = vmatpush.bf16.msra.mxu0 %v3974
    %5238 = vmatpush.bf16.msra.mxu0 %v3973
    %5239 = vmatpush.bf16.msra.mxu0 %v3972
    %5240 = vmatpush.bf16.msra.mxu0 %v3971
    %5241 = vmatmul.bf16.gmra.mxu0 %v285
    %v5242 = vpop.f32.mrf.mxu0
    %v5243 = vadd.f32 %v5230, %v5242
    %v5244 = vpop.f32.mrf.mxu0
    %5245 = vdwg.mxu0
    %5246 = vmatpush.bf16.msra.mxu0 %v3986
    %5247 = vmatpush.bf16.msra.mxu0 %v3985
    %5248 = vmatpush.bf16.msra.mxu0 %v3984
    %5249 = vmatpush.bf16.msra.mxu0 %v3983
    %5250 = vmatpush.bf16.msra.mxu0 %v3982
    %5251 = vmatpush.bf16.msra.mxu0 %v3981
    %5252 = vmatpush.bf16.msra.mxu0 %v3980
    %5253 = vmatpush.bf16.msra.mxu0 %v3979
    %5254 = vmatmul.bf16.gmra.mxu0 %v286
    %v5255 = vpop.f32.mrf.mxu0
    %v5256 = vadd.f32 %v5243, %v5255
    %v5257 = vpop.f32.mrf.mxu0
    %5258 = vdwg.mxu0
    %5259 = vmatpush.bf16.msra.mxu0 %v3994
    %5260 = vmatpush.bf16.msra.mxu0 %v3993
    %5261 = vmatpush.bf16.msra.mxu0 %v3992
    %5262 = vmatpush.bf16.msra.mxu0 %v3991
    %5263 = vmatpush.bf16.msra.mxu0 %v3990
    %5264 = vmatpush.bf16.msra.mxu0 %v3989
    %5265 = vmatpush.bf16.msra.mxu0 %v3988
    %5266 = vmatpush.bf16.msra.mxu0 %v3987
    %5267 = vmatmul.bf16.gmra.mxu0 %v287
    %v5268 = vpop.f32.mrf.mxu0
    %v5269 = vadd.f32 %v5256, %v5268
    %v5270 = vpop.f32.mrf.mxu0
    %5271 = vdwg.mxu0
    %5272 = vmatpush.bf16.msra.mxu0 %v4002
    %5273 = vmatpush.bf16.msra.mxu0 %v4001
    %5274 = vmatpush.bf16.msra.mxu0 %v4000
    %5275 = vmatpush.bf16.msra.mxu0 %v3999
    %5276 = vmatpush.bf16.msra.mxu0 %v3998
    %5277 = vmatpush.bf16.msra.mxu0 %v3997
    %5278 = vmatpush.bf16.msra.mxu0 %v3996
    %5279 = vmatpush.bf16.msra.mxu0 %v3995
    %5280 = vmatmul.bf16.gmra.mxu0 %v288
    %v5281 = vpop.f32.mrf.mxu0
    %v5282 = vadd.f32 %v5269, %v5281
    %v5283 = vpop.f32.mrf.mxu0
    %5284 = vdwg.mxu0
    %5285 = vmatpush.bf16.msra.mxu0 %v4010
    %5286 = vmatpush.bf16.msra.mxu0 %v4009
    %5287 = vmatpush.bf16.msra.mxu0 %v4008
    %5288 = vmatpush.bf16.msra.mxu0 %v4007
    %5289 = vmatpush.bf16.msra.mxu0 %v4006
    %5290 = vmatpush.bf16.msra.mxu0 %v4005
    %5291 = vmatpush.bf16.msra.mxu0 %v4004
    %5292 = vmatpush.bf16.msra.mxu0 %v4003
    %5293 = vmatmul.bf16.gmra.mxu0 %v289
    %v5294 = vpop.f32.mrf.mxu0
    %v5295 = vadd.f32 %v5282, %v5294
    %v5296 = vpop.f32.mrf.mxu0
    %5297 = vdwg.mxu0
    %5298 = vmatpush.bf16.msra.mxu0 %v4018
    %5299 = vmatpush.bf16.msra.mxu0 %v4017
    %5300 = vmatpush.bf16.msra.mxu0 %v4016
    %5301 = vmatpush.bf16.msra.mxu0 %v4015
    %5302 = vmatpush.bf16.msra.mxu0 %v4014
    %5303 = vmatpush.bf16.msra.mxu0 %v4013
    %5304 = vmatpush.bf16.msra.mxu0 %v4012
    %5305 = vmatpush.bf16.msra.mxu0 %v4011
    %5306 = vmatmul.bf16.gmra.mxu0 %v290
    %v5307 = vpop.f32.mrf.mxu0
    %v5308 = vadd.f32 %v5295, %v5307
    %v5309 = vpop.f32.mrf.mxu0
    %5310 = vdwg.mxu0
    %5311 = vmatpush.bf16.msra.mxu0 %v4026
    %5312 = vmatpush.bf16.msra.mxu0 %v4025
    %5313 = vmatpush.bf16.msra.mxu0 %v4024
    %5314 = vmatpush.bf16.msra.mxu0 %v4023
    %5315 = vmatpush.bf16.msra.mxu0 %v4022
    %5316 = vmatpush.bf16.msra.mxu0 %v4021
    %5317 = vmatpush.bf16.msra.mxu0 %v4020
    %5318 = vmatpush.bf16.msra.mxu0 %v4019
    %5319 = vmatmul.bf16.gmra.mxu0 %v291
    %v5320 = vpop.f32.mrf.mxu0
    %v5321 = vadd.f32 %v5308, %v5320
    %v5322 = vpop.f32.mrf.mxu0
    %5323 = vdwg.mxu0
    %5324 = vmatpush.bf16.msra.mxu0 %v4034
    %5325 = vmatpush.bf16.msra.mxu0 %v4033
    %5326 = vmatpush.bf16.msra.mxu0 %v4032
    %5327 = vmatpush.bf16.msra.mxu0 %v4031
    %5328 = vmatpush.bf16.msra.mxu0 %v4030
    %5329 = vmatpush.bf16.msra.mxu0 %v4029
    %5330 = vmatpush.bf16.msra.mxu0 %v4028
    %5331 = vmatpush.bf16.msra.mxu0 %v4027
    %5332 = vmatmul.bf16.gmra.mxu0 %v292
    %v5333 = vpop.f32.mrf.mxu0
    %v5334 = vadd.f32 %v5321, %v5333
    %v5335 = vpop.f32.mrf.mxu0
    %5336 = vdwg.mxu0
    %5337 = vmatpush.bf16.msra.mxu0 %v4042
    %5338 = vmatpush.bf16.msra.mxu0 %v4041
    %5339 = vmatpush.bf16.msra.mxu0 %v4040
    %5340 = vmatpush.bf16.msra.mxu0 %v4039
    %5341 = vmatpush.bf16.msra.mxu0 %v4038
    %5342 = vmatpush.bf16.msra.mxu0 %v4037
    %5343 = vmatpush.bf16.msra.mxu0 %v4036
    %5344 = vmatpush.bf16.msra.mxu0 %v4035
    %5345 = vmatmul.bf16.gmra.mxu0 %v293
    %v5346 = vpop.f32.mrf.mxu0
    %v5347 = vadd.f32 %v5334, %v5346
    %v5348 = vpop.f32.mrf.mxu0
    %5349 = vdwg.mxu0
    %5350 = vmatpush.bf16.msra.mxu0 %v4050
    %5351 = vmatpush.bf16.msra.mxu0 %v4049
    %5352 = vmatpush.bf16.msra.mxu0 %v4048
    %5353 = vmatpush.bf16.msra.mxu0 %v4047
    %5354 = vmatpush.bf16.msra.mxu0 %v4046
    %5355 = vmatpush.bf16.msra.mxu0 %v4045
    %5356 = vmatpush.bf16.msra.mxu0 %v4044
    %5357 = vmatpush.bf16.msra.mxu0 %v4043
    %5358 = vmatmul.bf16.gmra.mxu0 %v294
    %v5359 = vpop.f32.mrf.mxu0
    %v5360 = vadd.f32 %v5347, %v5359
    %v5361 = vpop.f32.mrf.mxu0
    %5362 = vdwg.mxu0
    %5363 = vmatpush.bf16.msra.mxu0 %v4058
    %5364 = vmatpush.bf16.msra.mxu0 %v4057
    %5365 = vmatpush.bf16.msra.mxu0 %v4056
    %5366 = vmatpush.bf16.msra.mxu0 %v4055
    %5367 = vmatpush.bf16.msra.mxu0 %v4054
    %5368 = vmatpush.bf16.msra.mxu0 %v4053
    %5369 = vmatpush.bf16.msra.mxu0 %v4052
    %5370 = vmatpush.bf16.msra.mxu0 %v4051
    %5371 = vmatmul.bf16.gmra.mxu0 %v295
    %v5372 = vpop.f32.mrf.mxu0
    %v5373 = vadd.f32 %v5360, %v5372
    %v5374 = vpop.f32.mrf.mxu0
    %5375 = vdwg.mxu0
    %5376 = vmatpush.bf16.msra.mxu0 %v4066
    %5377 = vmatpush.bf16.msra.mxu0 %v4065
    %5378 = vmatpush.bf16.msra.mxu0 %v4064
    %5379 = vmatpush.bf16.msra.mxu0 %v4063
    %5380 = vmatpush.bf16.msra.mxu0 %v4062
    %5381 = vmatpush.bf16.msra.mxu0 %v4061
    %5382 = vmatpush.bf16.msra.mxu0 %v4060
    %5383 = vmatpush.bf16.msra.mxu0 %v4059
    %5384 = vmatmul.bf16.gmra.mxu0 %v296
    %v5385 = vpop.f32.mrf.mxu0
    %v5386 = vadd.f32 %v5373, %v5385
    %v5387 = vpop.f32.mrf.mxu0
    %5388 = vdwg.mxu0
    %5389 = vmatpush.bf16.msra.mxu0 %v4074
    %5390 = vmatpush.bf16.msra.mxu0 %v4073
    %5391 = vmatpush.bf16.msra.mxu0 %v4072
    %5392 = vmatpush.bf16.msra.mxu0 %v4071
    %5393 = vmatpush.bf16.msra.mxu0 %v4070
    %5394 = vmatpush.bf16.msra.mxu0 %v4069
    %5395 = vmatpush.bf16.msra.mxu0 %v4068
    %5396 = vmatpush.bf16.msra.mxu0 %v4067
    %5397 = vmatmul.bf16.gmra.mxu0 %v297
    %v5398 = vpop.f32.mrf.mxu0
    %v5399 = vadd.f32 %v5386, %v5398
    %v5400 = vpop.f32.mrf.mxu0
    %5401 = vdwg.mxu0
    %5402 = vmatpush.bf16.msra.mxu0 %v4082
    %5403 = vmatpush.bf16.msra.mxu0 %v4081
    %5404 = vmatpush.bf16.msra.mxu0 %v4080
    %5405 = vmatpush.bf16.msra.mxu0 %v4079
    %5406 = vmatpush.bf16.msra.mxu0 %v4078
    %5407 = vmatpush.bf16.msra.mxu0 %v4077
    %5408 = vmatpush.bf16.msra.mxu0 %v4076
    %5409 = vmatpush.bf16.msra.mxu0 %v4075
    %5410 = vmatmul.bf16.gmra.mxu0 %v298
    %v5411 = vpop.f32.mrf.mxu0
    %v5412 = vadd.f32 %v5399, %v5411
    %v5413 = vpop.f32.mrf.mxu0
    %5414 = vdwg.mxu0
    %5415 = vmatpush.bf16.msra.mxu0 %v4090
    %5416 = vmatpush.bf16.msra.mxu0 %v4089
    %5417 = vmatpush.bf16.msra.mxu0 %v4088
    %5418 = vmatpush.bf16.msra.mxu0 %v4087
    %5419 = vmatpush.bf16.msra.mxu0 %v4086
    %5420 = vmatpush.bf16.msra.mxu0 %v4085
    %5421 = vmatpush.bf16.msra.mxu0 %v4084
    %5422 = vmatpush.bf16.msra.mxu0 %v4083
    %5423 = vmatmul.bf16.gmra.mxu0 %v299
    %v5424 = vpop.f32.mrf.mxu0
    %v5425 = vadd.f32 %v5412, %v5424
    %v5426 = vpop.f32.mrf.mxu0
    %5427 = vdwg.mxu0
    %5428 = vmatpush.bf16.msra.mxu0 %v4098
    %5429 = vmatpush.bf16.msra.mxu0 %v4097
    %5430 = vmatpush.bf16.msra.mxu0 %v4096
    %5431 = vmatpush.bf16.msra.mxu0 %v4095
    %5432 = vmatpush.bf16.msra.mxu0 %v4094
    %5433 = vmatpush.bf16.msra.mxu0 %v4093
    %5434 = vmatpush.bf16.msra.mxu0 %v4092
    %5435 = vmatpush.bf16.msra.mxu0 %v4091
    %5436 = vmatmul.bf16.gmra.mxu0 %v300
    %v5437 = vpop.f32.mrf.mxu0
    %v5438 = vadd.f32 %v5425, %v5437
    %v5439 = vpop.f32.mrf.mxu0
    %5440 = vdwg.mxu0
    %5441 = vmatpush.bf16.msra.mxu0 %v4106
    %5442 = vmatpush.bf16.msra.mxu0 %v4105
    %5443 = vmatpush.bf16.msra.mxu0 %v4104
    %5444 = vmatpush.bf16.msra.mxu0 %v4103
    %5445 = vmatpush.bf16.msra.mxu0 %v4102
    %5446 = vmatpush.bf16.msra.mxu0 %v4101
    %5447 = vmatpush.bf16.msra.mxu0 %v4100
    %5448 = vmatpush.bf16.msra.mxu0 %v4099
    %5449 = vmatmul.bf16.gmra.mxu0 %v301
    %v5450 = vpop.f32.mrf.mxu0
    %v5451 = vadd.f32 %v5438, %v5450
    %v5452 = vpop.f32.mrf.mxu0
    %5453 = vdwg.mxu0
    %5454 = vmatpush.bf16.msra.mxu0 %v4114
    %5455 = vmatpush.bf16.msra.mxu0 %v4113
    %5456 = vmatpush.bf16.msra.mxu0 %v4112
    %5457 = vmatpush.bf16.msra.mxu0 %v4111
    %5458 = vmatpush.bf16.msra.mxu0 %v4110
    %5459 = vmatpush.bf16.msra.mxu0 %v4109
    %5460 = vmatpush.bf16.msra.mxu0 %v4108
    %5461 = vmatpush.bf16.msra.mxu0 %v4107
    %5462 = vmatmul.bf16.gmra.mxu0 %v302
    %v5463 = vpop.f32.mrf.mxu0
    %v5464 = vadd.f32 %v5451, %v5463
    %v5465 = vpop.f32.mrf.mxu0
    %5466 = vdwg.mxu0
    %5467 = vmatpush.bf16.msra.mxu0 %v4122
    %5468 = vmatpush.bf16.msra.mxu0 %v4121
    %5469 = vmatpush.bf16.msra.mxu0 %v4120
    %5470 = vmatpush.bf16.msra.mxu0 %v4119
    %5471 = vmatpush.bf16.msra.mxu0 %v4118
    %5472 = vmatpush.bf16.msra.mxu0 %v4117
    %5473 = vmatpush.bf16.msra.mxu0 %v4116
    %5474 = vmatpush.bf16.msra.mxu0 %v4115
    %5475 = vmatmul.bf16.gmra.mxu0 %v303
    %v5476 = vpop.f32.mrf.mxu0
    %v5477 = vadd.f32 %v5464, %v5476
    %v5478 = vpop.f32.mrf.mxu0
    %5479 = vdwg.mxu0
    %5480 = vmatpush.bf16.msra.mxu0 %v4130
    %5481 = vmatpush.bf16.msra.mxu0 %v4129
    %5482 = vmatpush.bf16.msra.mxu0 %v4128
    %5483 = vmatpush.bf16.msra.mxu0 %v4127
    %5484 = vmatpush.bf16.msra.mxu0 %v4126
    %5485 = vmatpush.bf16.msra.mxu0 %v4125
    %5486 = vmatpush.bf16.msra.mxu0 %v4124
    %5487 = vmatpush.bf16.msra.mxu0 %v4123
    %5488 = vmatmul.bf16.gmra.mxu0 %v304
    %v5489 = vpop.f32.mrf.mxu0
    %v5490 = vadd.f32 %v5477, %v5489
    %v5491 = vpop.f32.mrf.mxu0
    %5492 = vdwg.mxu0
    %5493 = vmatpush.bf16.msra.mxu0 %v4138
    %5494 = vmatpush.bf16.msra.mxu0 %v4137
    %5495 = vmatpush.bf16.msra.mxu0 %v4136
    %5496 = vmatpush.bf16.msra.mxu0 %v4135
    %5497 = vmatpush.bf16.msra.mxu0 %v4134
    %5498 = vmatpush.bf16.msra.mxu0 %v4133
    %5499 = vmatpush.bf16.msra.mxu0 %v4132
    %5500 = vmatpush.bf16.msra.mxu0 %v4131
    %5501 = vmatmul.bf16.gmra.mxu0 %v305
    %v5502 = vpop.f32.mrf.mxu0
    %v5503 = vadd.f32 %v5490, %v5502
    %v5504 = vpop.f32.mrf.mxu0
    %5505 = vdwg.mxu0
    %5506 = vmatpush.bf16.msra.mxu0 %v4146
    %5507 = vmatpush.bf16.msra.mxu0 %v4145
    %5508 = vmatpush.bf16.msra.mxu0 %v4144
    %5509 = vmatpush.bf16.msra.mxu0 %v4143
    %5510 = vmatpush.bf16.msra.mxu0 %v4142
    %5511 = vmatpush.bf16.msra.mxu0 %v4141
    %5512 = vmatpush.bf16.msra.mxu0 %v4140
    %5513 = vmatpush.bf16.msra.mxu0 %v4139
    %5514 = vmatmul.bf16.gmra.mxu0 %v306
    %v5515 = vpop.f32.mrf.mxu0
    %v5516 = vadd.f32 %v5503, %v5515
    %v5517 = vpop.f32.mrf.mxu0
    %5518 = vdwg.mxu0
    %5519 = vmatpush.bf16.msra.mxu0 %v4154
    %5520 = vmatpush.bf16.msra.mxu0 %v4153
    %5521 = vmatpush.bf16.msra.mxu0 %v4152
    %5522 = vmatpush.bf16.msra.mxu0 %v4151
    %5523 = vmatpush.bf16.msra.mxu0 %v4150
    %5524 = vmatpush.bf16.msra.mxu0 %v4149
    %5525 = vmatpush.bf16.msra.mxu0 %v4148
    %5526 = vmatpush.bf16.msra.mxu0 %v4147
    %5527 = vmatmul.bf16.gmra.mxu0 %v307
    %v5528 = vpop.f32.mrf.mxu0
    %v5529 = vadd.f32 %v5516, %v5528
    %v5530 = vpop.f32.mrf.mxu0
    %5531 = vdwg.mxu0
    %5532 = vmatpush.bf16.msra.mxu0 %v4162
    %5533 = vmatpush.bf16.msra.mxu0 %v4161
    %5534 = vmatpush.bf16.msra.mxu0 %v4160
    %5535 = vmatpush.bf16.msra.mxu0 %v4159
    %5536 = vmatpush.bf16.msra.mxu0 %v4158
    %5537 = vmatpush.bf16.msra.mxu0 %v4157
    %5538 = vmatpush.bf16.msra.mxu0 %v4156
    %5539 = vmatpush.bf16.msra.mxu0 %v4155
    %5540 = vmatmul.bf16.gmra.mxu0 %v308
    %v5541 = vpop.f32.mrf.mxu0
    %v5542 = vadd.f32 %v5529, %v5541
    %v5543 = vpop.f32.mrf.mxu0
    %5544 = vdwg.mxu0
    %5545 = vmatpush.bf16.msra.mxu0 %v4170
    %5546 = vmatpush.bf16.msra.mxu0 %v4169
    %5547 = vmatpush.bf16.msra.mxu0 %v4168
    %5548 = vmatpush.bf16.msra.mxu0 %v4167
    %5549 = vmatpush.bf16.msra.mxu0 %v4166
    %5550 = vmatpush.bf16.msra.mxu0 %v4165
    %5551 = vmatpush.bf16.msra.mxu0 %v4164
    %5552 = vmatpush.bf16.msra.mxu0 %v4163
    %5553 = vmatmul.bf16.gmra.mxu0 %v309
    %v5554 = vpop.f32.mrf.mxu0
    %v5555 = vadd.f32 %v5542, %v5554
    %v5556 = vpop.f32.mrf.mxu0
    %5557 = vdwg.mxu0
    %5558 = vmatpush.bf16.msra.mxu0 %v4178
    %5559 = vmatpush.bf16.msra.mxu0 %v4177
    %5560 = vmatpush.bf16.msra.mxu0 %v4176
    %5561 = vmatpush.bf16.msra.mxu0 %v4175
    %5562 = vmatpush.bf16.msra.mxu0 %v4174
    %5563 = vmatpush.bf16.msra.mxu0 %v4173
    %5564 = vmatpush.bf16.msra.mxu0 %v4172
    %5565 = vmatpush.bf16.msra.mxu0 %v4171
    %5566 = vmatmul.bf16.gmra.mxu0 %v310
    %v5567 = vpop.f32.mrf.mxu0
    %v5568 = vadd.f32 %v5555, %v5567
    %v5569 = vpop.f32.mrf.mxu0
    %5570 = vdwg.mxu0
    %5571 = vmatpush.bf16.msra.mxu0 %v4186
    %5572 = vmatpush.bf16.msra.mxu0 %v4185
    %5573 = vmatpush.bf16.msra.mxu0 %v4184
    %5574 = vmatpush.bf16.msra.mxu0 %v4183
    %5575 = vmatpush.bf16.msra.mxu0 %v4182
    %5576 = vmatpush.bf16.msra.mxu0 %v4181
    %5577 = vmatpush.bf16.msra.mxu0 %v4180
    %5578 = vmatpush.bf16.msra.mxu0 %v4179
    %5579 = vmatmul.bf16.gmra.mxu0 %v311
    %v5580 = vpop.f32.mrf.mxu0
    %v5581 = vadd.f32 %v5568, %v5580
    %v5582 = vpop.f32.mrf.mxu0
    %5583 = vdwg.mxu0
    %5584 = vmatpush.bf16.msra.mxu0 %v4194
    %5585 = vmatpush.bf16.msra.mxu0 %v4193
    %5586 = vmatpush.bf16.msra.mxu0 %v4192
    %5587 = vmatpush.bf16.msra.mxu0 %v4191
    %5588 = vmatpush.bf16.msra.mxu0 %v4190
    %5589 = vmatpush.bf16.msra.mxu0 %v4189
    %5590 = vmatpush.bf16.msra.mxu0 %v4188
    %5591 = vmatpush.bf16.msra.mxu0 %v4187
    %5592 = vmatmul.bf16.gmra.mxu0 %v312
    %v5593 = vpop.f32.mrf.mxu0
    %v5594 = vadd.f32 %v5581, %v5593
    %v5595 = vpop.f32.mrf.mxu0
    %5596 = vdwg.mxu0
    %5597 = vmatpush.bf16.msra.mxu0 %v4202
    %5598 = vmatpush.bf16.msra.mxu0 %v4201
    %5599 = vmatpush.bf16.msra.mxu0 %v4200
    %5600 = vmatpush.bf16.msra.mxu0 %v4199
    %5601 = vmatpush.bf16.msra.mxu0 %v4198
    %5602 = vmatpush.bf16.msra.mxu0 %v4197
    %5603 = vmatpush.bf16.msra.mxu0 %v4196
    %5604 = vmatpush.bf16.msra.mxu0 %v4195
    %5605 = vmatmul.bf16.gmra.mxu0 %v313
    %v5606 = vpop.f32.mrf.mxu0
    %v5607 = vadd.f32 %v5594, %v5606
    %v5608 = vpop.f32.mrf.mxu0
    %5609 = vdwg.mxu0
    %5610 = vmatpush.bf16.msra.mxu0 %v4210
    %5611 = vmatpush.bf16.msra.mxu0 %v4209
    %5612 = vmatpush.bf16.msra.mxu0 %v4208
    %5613 = vmatpush.bf16.msra.mxu0 %v4207
    %5614 = vmatpush.bf16.msra.mxu0 %v4206
    %5615 = vmatpush.bf16.msra.mxu0 %v4205
    %5616 = vmatpush.bf16.msra.mxu0 %v4204
    %5617 = vmatpush.bf16.msra.mxu0 %v4203
    %5618 = vmatmul.bf16.gmra.mxu0 %v314
    %v5619 = vpop.f32.mrf.mxu0
    %v5620 = vadd.f32 %v5607, %v5619
    %v5621 = vpop.f32.mrf.mxu0
    %5622 = vdwg.mxu0
    %5623 = vmatpush.bf16.msra.mxu0 %v4218
    %5624 = vmatpush.bf16.msra.mxu0 %v4217
    %5625 = vmatpush.bf16.msra.mxu0 %v4216
    %5626 = vmatpush.bf16.msra.mxu0 %v4215
    %5627 = vmatpush.bf16.msra.mxu0 %v4214
    %5628 = vmatpush.bf16.msra.mxu0 %v4213
    %5629 = vmatpush.bf16.msra.mxu0 %v4212
    %5630 = vmatpush.bf16.msra.mxu0 %v4211
    %5631 = vmatmul.bf16.gmra.mxu0 %v315
    %v5632 = vpop.f32.mrf.mxu0
    %v5633 = vadd.f32 %v5620, %v5632
    %v5634 = vpop.f32.mrf.mxu0
    %5635 = vdwg.mxu0
    %5636 = vmatpush.bf16.msra.mxu0 %v4226
    %5637 = vmatpush.bf16.msra.mxu0 %v4225
    %5638 = vmatpush.bf16.msra.mxu0 %v4224
    %5639 = vmatpush.bf16.msra.mxu0 %v4223
    %5640 = vmatpush.bf16.msra.mxu0 %v4222
    %5641 = vmatpush.bf16.msra.mxu0 %v4221
    %5642 = vmatpush.bf16.msra.mxu0 %v4220
    %5643 = vmatpush.bf16.msra.mxu0 %v4219
    %5644 = vmatmul.bf16.gmra.mxu0 %v316
    %v5645 = vpop.f32.mrf.mxu0
    %v5646 = vadd.f32 %v5633, %v5645
    %v5647 = vpop.f32.mrf.mxu0
    %5648 = vdwg.mxu0
    %5649 = vmatpush.bf16.msra.mxu0 %v4234
    %5650 = vmatpush.bf16.msra.mxu0 %v4233
    %5651 = vmatpush.bf16.msra.mxu0 %v4232
    %5652 = vmatpush.bf16.msra.mxu0 %v4231
    %5653 = vmatpush.bf16.msra.mxu0 %v4230
    %5654 = vmatpush.bf16.msra.mxu0 %v4229
    %5655 = vmatpush.bf16.msra.mxu0 %v4228
    %5656 = vmatpush.bf16.msra.mxu0 %v4227
    %5657 = vmatmul.bf16.gmra.mxu0 %v317
    %v5658 = vpop.f32.mrf.mxu0
    %v5659 = vadd.f32 %v5646, %v5658
    %v5660 = vpop.f32.mrf.mxu0
    %5661 = vdwg.mxu0
    %5662 = vmatpush.bf16.msra.mxu0 %v4242
    %5663 = vmatpush.bf16.msra.mxu0 %v4241
    %5664 = vmatpush.bf16.msra.mxu0 %v4240
    %5665 = vmatpush.bf16.msra.mxu0 %v4239
    %5666 = vmatpush.bf16.msra.mxu0 %v4238
    %5667 = vmatpush.bf16.msra.mxu0 %v4237
    %5668 = vmatpush.bf16.msra.mxu0 %v4236
    %5669 = vmatpush.bf16.msra.mxu0 %v4235
    %5670 = vmatmul.bf16.gmra.mxu0 %v318
    %v5671 = vpop.f32.mrf.mxu0
    %v5672 = vadd.f32 %v5659, %v5671
    %v5673 = vpop.f32.mrf.mxu0
    %5674 = vdwg.mxu0
    %5675 = vmatpush.bf16.msra.mxu0 %v4250
    %5676 = vmatpush.bf16.msra.mxu0 %v4249
    %5677 = vmatpush.bf16.msra.mxu0 %v4248
    %5678 = vmatpush.bf16.msra.mxu0 %v4247
    %5679 = vmatpush.bf16.msra.mxu0 %v4246
    %5680 = vmatpush.bf16.msra.mxu0 %v4245
    %5681 = vmatpush.bf16.msra.mxu0 %v4244
    %5682 = vmatpush.bf16.msra.mxu0 %v4243
    %5683 = vmatmul.bf16.gmra.mxu0 %v319
    %v5684 = vpop.f32.mrf.mxu0
    %v5685 = vadd.f32 %v5672, %v5684
    %v5686 = vpop.f32.mrf.mxu0
    %5687 = vdwg.mxu0
    %5688 = vmatpush.bf16.msra.mxu0 %v4258
    %5689 = vmatpush.bf16.msra.mxu0 %v4257
    %5690 = vmatpush.bf16.msra.mxu0 %v4256
    %5691 = vmatpush.bf16.msra.mxu0 %v4255
    %5692 = vmatpush.bf16.msra.mxu0 %v4254
    %5693 = vmatpush.bf16.msra.mxu0 %v4253
    %5694 = vmatpush.bf16.msra.mxu0 %v4252
    %5695 = vmatpush.bf16.msra.mxu0 %v4251
    %5696 = vmatmul.bf16.gmra.mxu0 %v320
    %v5697 = vpop.f32.mrf.mxu0
    %v5698 = vadd.f32 %v5685, %v5697
    %v5699 = vpop.f32.mrf.mxu0
    %5700 = vdwg.mxu0
    %5701 = vmatpush.bf16.msra.mxu0 %v4266
    %5702 = vmatpush.bf16.msra.mxu0 %v4265
    %5703 = vmatpush.bf16.msra.mxu0 %v4264
    %5704 = vmatpush.bf16.msra.mxu0 %v4263
    %5705 = vmatpush.bf16.msra.mxu0 %v4262
    %5706 = vmatpush.bf16.msra.mxu0 %v4261
    %5707 = vmatpush.bf16.msra.mxu0 %v4260
    %5708 = vmatpush.bf16.msra.mxu0 %v4259
    %5709 = vmatmul.bf16.gmra.mxu0 %v321
    %v5710 = vpop.f32.mrf.mxu0
    %v5711 = vadd.f32 %v5698, %v5710
    %v5712 = vpop.f32.mrf.mxu0
    %5713 = vdwg.mxu0
    %5714 = vmatpush.bf16.msra.mxu0 %v4274
    %5715 = vmatpush.bf16.msra.mxu0 %v4273
    %5716 = vmatpush.bf16.msra.mxu0 %v4272
    %5717 = vmatpush.bf16.msra.mxu0 %v4271
    %5718 = vmatpush.bf16.msra.mxu0 %v4270
    %5719 = vmatpush.bf16.msra.mxu0 %v4269
    %5720 = vmatpush.bf16.msra.mxu0 %v4268
    %5721 = vmatpush.bf16.msra.mxu0 %v4267
    %5722 = vmatmul.bf16.gmra.mxu0 %v322
    %v5723 = vpop.f32.mrf.mxu0
    %v5724 = vadd.f32 %v5711, %v5723
    %v5725 = vpop.f32.mrf.mxu0
    %5726 = vdwg.mxu0
    %5727 = vmatpush.bf16.msra.mxu0 %v4282
    %5728 = vmatpush.bf16.msra.mxu0 %v4281
    %5729 = vmatpush.bf16.msra.mxu0 %v4280
    %5730 = vmatpush.bf16.msra.mxu0 %v4279
    %5731 = vmatpush.bf16.msra.mxu0 %v4278
    %5732 = vmatpush.bf16.msra.mxu0 %v4277
    %5733 = vmatpush.bf16.msra.mxu0 %v4276
    %5734 = vmatpush.bf16.msra.mxu0 %v4275
    %5735 = vmatmul.bf16.gmra.mxu0 %v323
    %v5736 = vpop.f32.mrf.mxu0
    %v5737 = vadd.f32 %v5724, %v5736
    %v5738 = vpop.f32.mrf.mxu0
    %5739 = vdwg.mxu0
    %5740 = vmatpush.bf16.msra.mxu0 %v4290
    %5741 = vmatpush.bf16.msra.mxu0 %v4289
    %5742 = vmatpush.bf16.msra.mxu0 %v4288
    %5743 = vmatpush.bf16.msra.mxu0 %v4287
    %5744 = vmatpush.bf16.msra.mxu0 %v4286
    %5745 = vmatpush.bf16.msra.mxu0 %v4285
    %5746 = vmatpush.bf16.msra.mxu0 %v4284
    %5747 = vmatpush.bf16.msra.mxu0 %v4283
    %5748 = vmatmul.bf16.gmra.mxu0 %v324
    %v5749 = vpop.f32.mrf.mxu0
    %v5750 = vadd.f32 %v5737, %v5749
    %v5751 = vpop.f32.mrf.mxu0
    %5752 = vdwg.mxu0
    %5753 = vmatpush.bf16.msra.mxu0 %v4298
    %5754 = vmatpush.bf16.msra.mxu0 %v4297
    %5755 = vmatpush.bf16.msra.mxu0 %v4296
    %5756 = vmatpush.bf16.msra.mxu0 %v4295
    %5757 = vmatpush.bf16.msra.mxu0 %v4294
    %5758 = vmatpush.bf16.msra.mxu0 %v4293
    %5759 = vmatpush.bf16.msra.mxu0 %v4292
    %5760 = vmatpush.bf16.msra.mxu0 %v4291
    %5761 = vmatmul.bf16.gmra.mxu0 %v325
    %v5762 = vpop.f32.mrf.mxu0
    %v5763 = vadd.f32 %v5750, %v5762
    %v5764 = vpop.f32.mrf.mxu0
    %5765 = vdwg.mxu0
    %5766 = vmatpush.bf16.msra.mxu0 %v4306
    %5767 = vmatpush.bf16.msra.mxu0 %v4305
    %5768 = vmatpush.bf16.msra.mxu0 %v4304
    %5769 = vmatpush.bf16.msra.mxu0 %v4303
    %5770 = vmatpush.bf16.msra.mxu0 %v4302
    %5771 = vmatpush.bf16.msra.mxu0 %v4301
    %5772 = vmatpush.bf16.msra.mxu0 %v4300
    %5773 = vmatpush.bf16.msra.mxu0 %v4299
    %5774 = vmatmul.bf16.gmra.mxu0 %v326
    %v5775 = vpop.f32.mrf.mxu0
    %v5776 = vadd.f32 %v5763, %v5775
    %v5777 = vpop.f32.mrf.mxu0
    %5778 = vdwg.mxu0
    %5779 = vmatpush.bf16.msra.mxu0 %v4314
    %5780 = vmatpush.bf16.msra.mxu0 %v4313
    %5781 = vmatpush.bf16.msra.mxu0 %v4312
    %5782 = vmatpush.bf16.msra.mxu0 %v4311
    %5783 = vmatpush.bf16.msra.mxu0 %v4310
    %5784 = vmatpush.bf16.msra.mxu0 %v4309
    %5785 = vmatpush.bf16.msra.mxu0 %v4308
    %5786 = vmatpush.bf16.msra.mxu0 %v4307
    %5787 = vmatmul.bf16.gmra.mxu0 %v327
    %v5788 = vpop.f32.mrf.mxu0
    %v5789 = vadd.f32 %v5776, %v5788
    %v5790 = vpop.f32.mrf.mxu0
    %5791 = vdwg.mxu0
    %5792 = vmatpush.bf16.msra.mxu0 %v4322
    %5793 = vmatpush.bf16.msra.mxu0 %v4321
    %5794 = vmatpush.bf16.msra.mxu0 %v4320
    %5795 = vmatpush.bf16.msra.mxu0 %v4319
    %5796 = vmatpush.bf16.msra.mxu0 %v4318
    %5797 = vmatpush.bf16.msra.mxu0 %v4317
    %5798 = vmatpush.bf16.msra.mxu0 %v4316
    %5799 = vmatpush.bf16.msra.mxu0 %v4315
    %5800 = vmatmul.bf16.gmra.mxu0 %v328
    %v5801 = vpop.f32.mrf.mxu0
    %v5802 = vadd.f32 %v5789, %v5801
    %v5803 = vpop.f32.mrf.mxu0
    %5804 = vdwg.mxu0
    %5805 = vmatpush.bf16.msra.mxu0 %v4330
    %5806 = vmatpush.bf16.msra.mxu0 %v4329
    %5807 = vmatpush.bf16.msra.mxu0 %v4328
    %5808 = vmatpush.bf16.msra.mxu0 %v4327
    %5809 = vmatpush.bf16.msra.mxu0 %v4326
    %5810 = vmatpush.bf16.msra.mxu0 %v4325
    %5811 = vmatpush.bf16.msra.mxu0 %v4324
    %5812 = vmatpush.bf16.msra.mxu0 %v4323
    %5813 = vmatmul.bf16.gmra.mxu0 %v329
    %v5814 = vpop.f32.mrf.mxu0
    %v5815 = vadd.f32 %v5802, %v5814
    %v5816 = vpop.f32.mrf.mxu0
    %5817 = vdwg.mxu0
    %5818 = vmatpush.bf16.msra.mxu0 %v4338
    %5819 = vmatpush.bf16.msra.mxu0 %v4337
    %5820 = vmatpush.bf16.msra.mxu0 %v4336
    %5821 = vmatpush.bf16.msra.mxu0 %v4335
    %5822 = vmatpush.bf16.msra.mxu0 %v4334
    %5823 = vmatpush.bf16.msra.mxu0 %v4333
    %5824 = vmatpush.bf16.msra.mxu0 %v4332
    %5825 = vmatpush.bf16.msra.mxu0 %v4331
    %5826 = vmatmul.bf16.gmra.mxu0 %v330
    %v5827 = vpop.f32.mrf.mxu0
    %v5828 = vadd.f32 %v5815, %v5827
    %v5829 = vpop.f32.mrf.mxu0
    %5830 = vdwg.mxu0
    %5831 = vmatpush.bf16.msra.mxu0 %v4346
    %5832 = vmatpush.bf16.msra.mxu0 %v4345
    %5833 = vmatpush.bf16.msra.mxu0 %v4344
    %5834 = vmatpush.bf16.msra.mxu0 %v4343
    %5835 = vmatpush.bf16.msra.mxu0 %v4342
    %5836 = vmatpush.bf16.msra.mxu0 %v4341
    %5837 = vmatpush.bf16.msra.mxu0 %v4340
    %5838 = vmatpush.bf16.msra.mxu0 %v4339
    %5839 = vmatmul.bf16.gmra.mxu0 %v331
    %v5840 = vpop.f32.mrf.mxu0
    %v5841 = vadd.f32 %v5828, %v5840
    %v5842 = vpop.f32.mrf.mxu0
    %5843 = vdwg.mxu0
    %5844 = vmatpush.bf16.msra.mxu0 %v4354
    %5845 = vmatpush.bf16.msra.mxu0 %v4353
    %5846 = vmatpush.bf16.msra.mxu0 %v4352
    %5847 = vmatpush.bf16.msra.mxu0 %v4351
    %5848 = vmatpush.bf16.msra.mxu0 %v4350
    %5849 = vmatpush.bf16.msra.mxu0 %v4349
    %5850 = vmatpush.bf16.msra.mxu0 %v4348
    %5851 = vmatpush.bf16.msra.mxu0 %v4347
    %5852 = vmatmul.bf16.gmra.mxu0 %v332
    %v5853 = vpop.f32.mrf.mxu0
    %v5854 = vadd.f32 %v5841, %v5853
    %v5855 = vpop.f32.mrf.mxu0
    %5856 = vdwg.mxu0
    %5857 = vmatpush.bf16.msra.mxu0 %v4362
    %5858 = vmatpush.bf16.msra.mxu0 %v4361
    %5859 = vmatpush.bf16.msra.mxu0 %v4360
    %5860 = vmatpush.bf16.msra.mxu0 %v4359
    %5861 = vmatpush.bf16.msra.mxu0 %v4358
    %5862 = vmatpush.bf16.msra.mxu0 %v4357
    %5863 = vmatpush.bf16.msra.mxu0 %v4356
    %5864 = vmatpush.bf16.msra.mxu0 %v4355
    %5865 = vmatmul.bf16.gmra.mxu0 %v333
    %v5866 = vpop.f32.mrf.mxu0
    %v5867 = vadd.f32 %v5854, %v5866
    %v5868 = vpop.f32.mrf.mxu0
    %5869 = vdwg.mxu0
    %5870 = vmatpush.bf16.msra.mxu0 %v4370
    %5871 = vmatpush.bf16.msra.mxu0 %v4369
    %5872 = vmatpush.bf16.msra.mxu0 %v4368
    %5873 = vmatpush.bf16.msra.mxu0 %v4367
    %5874 = vmatpush.bf16.msra.mxu0 %v4366
    %5875 = vmatpush.bf16.msra.mxu0 %v4365
    %5876 = vmatpush.bf16.msra.mxu0 %v4364
    %5877 = vmatpush.bf16.msra.mxu0 %v4363
    %5878 = vmatmul.bf16.gmra.mxu0 %v334
    %v5879 = vpop.f32.mrf.mxu0
    %v5880 = vadd.f32 %v5867, %v5879
    %v5881 = vpop.f32.mrf.mxu0
    %5882 = vdwg.mxu0
    %v5883 = vmax.f32 %v5880, 0.0
    %v5884 = vld [vmem:[%s3] sm:$0xff]
    %v5885 = vld [vmem:[%s3 + $0x8] sm:$0xff]
    %v5886 = vld [vmem:[%s3 + $0x10] sm:$0xff]
    %v5887 = vld [vmem:[%s3 + $0x18] sm:$0xff]
    %v5888 = vld [vmem:[%s3 + $0x20] sm:$0xff]
    %v5889 = vld [vmem:[%s3 + $0x28] sm:$0xff]
    %v5890 = vld [vmem:[%s3 + $0x30] sm:$0xff]
    %v5891 = vld [vmem:[%s3 + $0x38] sm:$0xff]
    %v5892 = vld [vmem:[%s3 + $0x40] sm:$0xff]
    %v5893 = vld [vmem:[%s3 + $0x48] sm:$0xff]
    %v5894 = vld [vmem:[%s3 + $0x50] sm:$0xff]
    %v5895 = vld [vmem:[%s3 + $0x58] sm:$0xff]
    %v5896 = vld [vmem:[%s3 + $0x60] sm:$0xff]
    %v5897 = vld [vmem:[%s3 + $0x68] sm:$0xff]
    %v5898 = vld [vmem:[%s3 + $0x70] sm:$0xff]
    %v5899 = vld [vmem:[%s3 + $0x78] sm:$0xff]
    %v5900 = vld [vmem:[#allocation7] sm:$0x1]
    %v5902 = vperm.slane %v5900, 0
    %5904 = vmatpush.msra.mxu0 %v5899
    %5905 = vmatpush.msra.mxu0 %v5898
    %5906 = vmatpush.msra.mxu0 %v5897
    %5907 = vmatpush.msra.mxu0 %v5896
    %5908 = vmatpush.msra.mxu0 %v5895
    %5909 = vmatpush.msra.mxu0 %v5894
    %5910 = vmatpush.msra.mxu0 %v5893
    %5911 = vmatpush.msra.mxu0 %v5892
    %5912 = vmatpush.msra.mxu0 %v5891
    %5913 = vmatpush.msra.mxu0 %v5890
    %5914 = vmatpush.msra.mxu0 %v5889
    %5915 = vmatpush.msra.mxu0 %v5888
    %5916 = vmatpush.msra.mxu0 %v5887
    %5917 = vmatpush.msra.mxu0 %v5886
    %5918 = vmatpush.msra.mxu0 %v5885
    %5919 = vmatpush.msra.mxu0 %v5884
    %5920 = vmatmul.f32.gmra.mxu0 %v5883
    %v5921 = vpop.f32.mrf.mxu0
    %v5922 = vadd.f32 %v5902, %v5921
    %5923 = vdwg.mxu0
    %vm5924 = vcmask 74752
    %5925 = vst.msk [vmem:[#allocation8] sm:$0x3] %vm5924, %v5922
    // Predicated region
    $region34: #{forward.3} parent=1 // pred_check
      _
    $region35: #{forward.3} parent=1 // pred_check_branch
      %5927 = sbr.rel (0) target = $region37
    $region36: #{forward.3} parent=1 // pred_region
      %5929 = vsyncadd [#allocation4], 0
      %s5931 = sshll.u32 [#allocation8], 4
      %s5932 = int_to_ptr.vmem [resolvable:$true] %s5931
      %s5933 = sshll.u32 %s5, 4
      %s5934 = int_to_ptr.hbm [resolvable:$true] %s5933
      %5936 = dma.vmem_to_hbm [thread:$0]  %s5932, 32, %s5934, [#allocation4]
    $region37: #{forward.3} parent=1 // pred_fallthru
      _
    // Predicated region
    $region38: #{forward.3} parent=1 // pred_check
      _
    $region39: #{forward.3} parent=1 // pred_check_branch
      %5938 = sbr.rel (0) target = $region41
    $region40: #{forward.3} parent=1 // pred_region
      %5940 = dma.done [#allocation4], 32
    $region41: #{forward.3} parent=1 // pred_fallthru
      _
    %5941 = vsyncpa [#allocation3], 1
    %5942 = vsyncpa [#allocation6], 1
    %5943 = vsyncpa [#allocation4], 1

</llo_original>
